<compile_context>
chip_gen: v5e
topology: v5e:2x2
jax: 0.10.0
libtpu: 0.0.40
codegen_flags: <defaults>
</compile_context>

<pallas_src>
import functools

import jax
import jax.numpy as jnp
from jax import lax
from jax.experimental import pallas as pl
from jax.experimental.pallas import tpu as pltpu

MNIST_PROTOTYPE_SIZE = 50
NUM_CLASSES = 10                                      # args.num_classes
IN_FEATURES = MNIST_PROTOTYPE_SIZE + NUM_CLASSES      # 60
IN_FEATURES_PADDED = 64                               # zero-padded K for layer 1
LAYER_DIMS = [IN_FEATURES, 512, 256, 64, 32, 1]

_INV_SQRT2 = 0.7071067811865476


def _round_up(n, m):
    return ((n + m - 1) // m) * m


def _gelu_exact(x):
    # PyTorch default nn.GELU() is the exact (erf-based) GELU.
    return 0.5 * x * (1.0 + lax.erf(x * _INV_SQRT2))


def d_mnist_kernel(x_ref,
                   w1_ref, b1_ref,
                   w2_ref, b2_ref,
                   w3_ref, b3_ref,
                   w4_ref, b4_ref,
                   w5_ref, b5_ref,
                   out_ref):
    """One batch tile; activations are (features, batch) with batch on lanes."""
    cdt = w1_ref.dtype      # MXU compute dtype (f32 or bf16); accumulation is f32

    h = x_ref[...]                                                       # (64, bt)
    h = jnp.dot(w1_ref[...], h, preferred_element_type=jnp.float32) + b1_ref[...]
    h = _gelu_exact(h)                                                   # (512, bt) f32
    h = jnp.dot(w2_ref[...], h.astype(cdt),
                preferred_element_type=jnp.float32) + b2_ref[...]
    h = _gelu_exact(h)                                                   # (256, bt)
    h = jnp.dot(w3_ref[...], h.astype(cdt),
                preferred_element_type=jnp.float32) + b3_ref[...]
    h = _gelu_exact(h)                                                   # (64, bt)
    h = jnp.dot(w4_ref[...], h.astype(cdt),
                preferred_element_type=jnp.float32) + b4_ref[...]
    h = _gelu_exact(h)                                                   # (32, bt)

    # Final 32 -> 1 layer: VPU multiply + sublane (XLU) reduction -- avoids an
    # M=1 MXU matmul and produces a lane-dense (1, bt) row.
    w5 = w5_ref[...].astype(jnp.float32)                                 # (32, 1)
    logits = jnp.sum(w5 * h, axis=0, keepdims=True) + b5_ref[...]        # (1, bt)

    # Exact sigmoid (exp goes to the EUP; the divide is a single-sublane row).
    out_ref[...] = (1.0 / (1.0 + jnp.exp(-logits))).astype(out_ref.dtype)


def init_params(key):
    """PyTorch-Linear-style init: weight (out, in), bias (out, 1),
    both U(-1/sqrt(fan_in), 1/sqrt(fan_in))."""
    params = []
    for fan_in, fan_out in zip(LAYER_DIMS[:-1], LAYER_DIMS[1:]):
        key, kw, kb = jax.random.split(key, 3)
        bound = 1.0 / float(fan_in) ** 0.5
        w = jax.random.uniform(kw, (fan_out, fan_in), jnp.float32, -bound, bound)
        b = jax.random.uniform(kb, (fan_out, 1), jnp.float32, -bound, bound)
        params.append((w, b))
    return params


@functools.partial(jax.jit, static_argnames=("batch_tile", "compute_dtype"))
def d_mnist_forward(x, params, *, batch_tile=256, compute_dtype="float32"):
    B, F = x.shape
    assert F == IN_FEATURES
    assert batch_tile % 128 == 0, "batch_tile must be a multiple of 128"
    cdt = jnp.dtype(compute_dtype)

    # Effective tile: never larger than the (128-lane-rounded) batch, so small
    # demo batches run as a single lane-aligned full-array block.
    tile = min(batch_tile, _round_up(B, 128))
    padded_b = _round_up(B, tile)
    num_tiles = padded_b // tile

    # Transpose input to (features, batch): batch on the lane axis.  Zero-pad
    # the feature (K) dim 60 -> 64 and the batch up to a multiple of the tile.
    x_t = jnp.transpose(x).astype(cdt)
    x_t = jnp.pad(x_t, ((0, IN_FEATURES_PADDED - F), (0, padded_b - B)))

    (w1, b1), (w2, b2), (w3, b3), (w4, b4), (w5, b5) = params
    w1p = jnp.pad(w1, ((0, 0), (0, IN_FEATURES_PADDED - F)))          # (512, 64)
    flat_params = [
        w1p.astype(cdt), b1,
        w2.astype(cdt), b2,
        w3.astype(cdt), b3,
        w4.astype(cdt), b4,
        jnp.transpose(w5).astype(cdt), b5,      # w5 stored as a (32, 1) column
    ]

    x_spec = pl.BlockSpec((IN_FEATURES_PADDED, tile), lambda i: (0, i))
    out_spec = pl.BlockSpec((1, tile), lambda i: (0, i))
    # Full-array blocks with a constant index map: the Pallas pipeline keeps
    # them resident in VMEM across batch tiles (re-DMA skipped when the block
    # index does not change).
    param_specs = [pl.BlockSpec(p.shape, lambda i: (0, 0)) for p in flat_params]

    out_t = pl.pallas_call(
        d_mnist_kernel,
        out_shape=jax.ShapeDtypeStruct((1, padded_b), jnp.float32),
        grid=(num_tiles,),
        in_specs=[x_spec] + param_specs,
        out_specs=out_spec,
        compiler_params=pltpu.CompilerParams(
            dimension_semantics=("parallel",)),
    )(x_t, *flat_params)

    return jnp.transpose(out_t)[:B]      # (B, 1)


def d_mnist_reference(x, params):
    h = x
    for idx, (w, b) in enumerate(params):
        h = h @ w.T + b.T
        if idx < len(params) - 1:
            h = _gelu_exact(h)
    return 1.0 / (1.0 + jnp.exp(-h))


if __name__ == "__main__":
    key = jax.random.PRNGKey(0)
    k_params, k_x1, k_x2 = jax.random.split(key, 3)

    params = init_params(k_params)

    # Small-shape check (single lane-aligned tile; tile shrinks to 128).
    x_small = jax.random.normal(k_x1, (16, IN_FEATURES), jnp.float32)
    out_small = jax.block_until_ready(d_mnist_forward(x_small, params))
    ref_small = d_mnist_reference(x_small, params)
    assert out_small.shape == (16, 1)
    assert jnp.allclose(out_small, ref_small, atol=1e-5, rtol=1e-5), \
        "f32 small-batch mismatch vs reference"

    # Larger batch: exercises the multi-tile grid (grid=2 at tile=256) and the
    # zero-pad path for B not divisible by the tile.
    x_big = jax.random.normal(k_x2, (384, IN_FEATURES), jnp.float32)
    out_big = jax.block_until_ready(d_mnist_forward(x_big, params))
    ref_big = d_mnist_reference(x_big, params)
    assert out_big.shape == (384, 1)
    assert jnp.allclose(out_big, ref_big, atol=1e-5, rtol=1e-5), \
        "f32 multi-tile mismatch vs reference"

    # Optional bf16 MXU path (v6e/v7x throughput option); relaxed tolerance
    # because it intentionally changes numerics vs the f32 reference.
    out_bf16 = jax.block_until_ready(
        d_mnist_forward(x_small, params, compute_dtype="bfloat16"))
    assert out_bf16.shape == (16, 1)
    assert jnp.allclose(out_bf16, ref_small, atol=5e-2), \
        "bf16 path mismatch vs f32 reference"

    print("KERNEL_OK")
</pallas_src>

<mosaic_0001>
module attributes {stable_mosaic.version = 11 : i64} {
  func.func @d_mnist_kernel(%arg0: i32, %arg1: memref<64x128xf32, #tpu.memory_space<vmem>>, %arg2: memref<512x64xf32, #tpu.memory_space<vmem>>, %arg3: memref<512x1xf32, #tpu.memory_space<vmem>>, %arg4: memref<256x512xf32, #tpu.memory_space<vmem>>, %arg5: memref<256x1xf32, #tpu.memory_space<vmem>>, %arg6: memref<64x256xf32, #tpu.memory_space<vmem>>, %arg7: memref<64x1xf32, #tpu.memory_space<vmem>>, %arg8: memref<32x64xf32, #tpu.memory_space<vmem>>, %arg9: memref<32x1xf32, #tpu.memory_space<vmem>>, %arg10: memref<32x1xf32, #tpu.memory_space<vmem>>, %arg11: memref<1x1xf32, #tpu.memory_space<vmem>>, %arg12: memref<1x128xf32, #tpu.memory_space<vmem>>) attributes {dimension_semantics = [#tpu.dimension_semantics<parallel>], iteration_bounds = array<i64: 1>, scalar_prefetch = 0 : i64, scratch_operands = 0 : i64, tpu.core_type = #tpu.core_type<tc>, window_params = [{transform_indices = @transform_0, window_bounds = array<i64: 64, 128>}, {pipeline_mode = #tpu.pipeline_mode<synchronous>, transform_indices = @transform_1, window_bounds = array<i64: 512, 64>}, {pipeline_mode = #tpu.pipeline_mode<synchronous>, transform_indices = @transform_2, window_bounds = array<i64: 512, 1>}, {pipeline_mode = #tpu.pipeline_mode<synchronous>, transform_indices = @transform_3, window_bounds = array<i64: 256, 512>}, {pipeline_mode = #tpu.pipeline_mode<synchronous>, transform_indices = @transform_4, window_bounds = array<i64: 256, 1>}, {pipeline_mode = #tpu.pipeline_mode<synchronous>, transform_indices = @transform_5, window_bounds = array<i64: 64, 256>}, {pipeline_mode = #tpu.pipeline_mode<synchronous>, transform_indices = @transform_6, window_bounds = array<i64: 64, 1>}, {pipeline_mode = #tpu.pipeline_mode<synchronous>, transform_indices = @transform_7, window_bounds = array<i64: 32, 64>}, {pipeline_mode = #tpu.pipeline_mode<synchronous>, transform_indices = @transform_8, window_bounds = array<i64: 32, 1>}, {pipeline_mode = #tpu.pipeline_mode<synchronous>, transform_indices = @transform_9, window_bounds = array<i64: 32, 1>}, {pipeline_mode = #tpu.pipeline_mode<synchronous>, transform_indices = @transform_10, window_bounds = array<i64: 1, 1>}, {transform_indices = @transform_11, window_bounds = array<i64: 1, 128>}]} {
    %c0 = arith.constant 0 : index
    %c0_0 = arith.constant 0 : index
    %0 = vector.load %arg1[%c0, %c0_0] : memref<64x128xf32, #tpu.memory_space<vmem>>, vector<64x128xf32>
    %c0_1 = arith.constant 0 : index
    %c0_2 = arith.constant 0 : index
    %1 = vector.load %arg2[%c0_1, %c0_2] : memref<512x64xf32, #tpu.memory_space<vmem>>, vector<512x64xf32>
    %cst = arith.constant dense<0.000000e+00> : vector<512x128xf32>
    %2 = tpu.matmul %1, %0, %cst {dimension_numbers = #tpu.dot_dimension_numbers<[1], [0], [0], [1], [0, 0, 1, 1], [], []>} : vector<512x64xf32>, vector<64x128xf32>, vector<512x128xf32> -> vector<512x128xf32>
    %c0_3 = arith.constant 0 : index
    %c0_4 = arith.constant 0 : index
    %3 = vector.load %arg3[%c0_3, %c0_4] : memref<512x1xf32, #tpu.memory_space<vmem>>, vector<512x1xf32>
    %4 = vector.broadcast %3 : vector<512x1xf32> to vector<512x128xf32>
    %5 = arith.addf %2, %4 : vector<512x128xf32>
    %cst_5 = arith.constant 5.000000e-01 : f32
    %6 = vector.broadcast %cst_5 : f32 to vector<512x128xf32>
    %7 = arith.mulf %6, %5 : vector<512x128xf32>
    %cst_6 = arith.constant 0.707106769 : f32
    %8 = vector.broadcast %cst_6 : f32 to vector<512x128xf32>
    %9 = arith.mulf %5, %8 : vector<512x128xf32>
    %10 = math.erf %9 : vector<512x128xf32>
    %cst_7 = arith.constant 1.000000e+00 : f32
    %11 = vector.broadcast %cst_7 : f32 to vector<512x128xf32>
    %12 = arith.addf %11, %10 : vector<512x128xf32>
    %13 = arith.mulf %7, %12 : vector<512x128xf32>
    %c0_8 = arith.constant 0 : index
    %c0_9 = arith.constant 0 : index
    %14 = vector.load %arg4[%c0_8, %c0_9] : memref<256x512xf32, #tpu.memory_space<vmem>>, vector<256x512xf32>
    %cst_10 = arith.constant dense<0.000000e+00> : vector<256x128xf32>
    %15 = tpu.matmul %14, %13, %cst_10 {dimension_numbers = #tpu.dot_dimension_numbers<[1], [0], [0], [1], [0, 0, 1, 1], [], []>} : vector<256x512xf32>, vector<512x128xf32>, vector<256x128xf32> -> vector<256x128xf32>
    %c0_11 = arith.constant 0 : index
    %c0_12 = arith.constant 0 : index
    %16 = vector.load %arg5[%c0_11, %c0_12] : memref<256x1xf32, #tpu.memory_space<vmem>>, vector<256x1xf32>
    %17 = vector.broadcast %16 : vector<256x1xf32> to vector<256x128xf32>
    %18 = arith.addf %15, %17 : vector<256x128xf32>
    %cst_13 = arith.constant 5.000000e-01 : f32
    %19 = vector.broadcast %cst_13 : f32 to vector<256x128xf32>
    %20 = arith.mulf %19, %18 : vector<256x128xf32>
    %cst_14 = arith.constant 0.707106769 : f32
    %21 = vector.broadcast %cst_14 : f32 to vector<256x128xf32>
    %22 = arith.mulf %18, %21 : vector<256x128xf32>
    %23 = math.erf %22 : vector<256x128xf32>
    %cst_15 = arith.constant 1.000000e+00 : f32
    %24 = vector.broadcast %cst_15 : f32 to vector<256x128xf32>
    %25 = arith.addf %24, %23 : vector<256x128xf32>
    %26 = arith.mulf %20, %25 : vector<256x128xf32>
    %c0_16 = arith.constant 0 : index
    %c0_17 = arith.constant 0 : index
    %27 = vector.load %arg6[%c0_16, %c0_17] : memref<64x256xf32, #tpu.memory_space<vmem>>, vector<64x256xf32>
    %cst_18 = arith.constant dense<0.000000e+00> : vector<64x128xf32>
    %28 = tpu.matmul %27, %26, %cst_18 {dimension_numbers = #tpu.dot_dimension_numbers<[1], [0], [0], [1], [0, 0, 1, 1], [], []>} : vector<64x256xf32>, vector<256x128xf32>, vector<64x128xf32> -> vector<64x128xf32>
    %c0_19 = arith.constant 0 : index
    %c0_20 = arith.constant 0 : index
    %29 = vector.load %arg7[%c0_19, %c0_20] : memref<64x1xf32, #tpu.memory_space<vmem>>, vector<64x1xf32>
    %30 = vector.broadcast %29 : vector<64x1xf32> to vector<64x128xf32>
    %31 = arith.addf %28, %30 : vector<64x128xf32>
    %cst_21 = arith.constant 5.000000e-01 : f32
    %32 = vector.broadcast %cst_21 : f32 to vector<64x128xf32>
    %33 = arith.mulf %32, %31 : vector<64x128xf32>
    %cst_22 = arith.constant 0.707106769 : f32
    %34 = vector.broadcast %cst_22 : f32 to vector<64x128xf32>
    %35 = arith.mulf %31, %34 : vector<64x128xf32>
    %36 = math.erf %35 : vector<64x128xf32>
    %cst_23 = arith.constant 1.000000e+00 : f32
    %37 = vector.broadcast %cst_23 : f32 to vector<64x128xf32>
    %38 = arith.addf %37, %36 : vector<64x128xf32>
    %39 = arith.mulf %33, %38 : vector<64x128xf32>
    %c0_24 = arith.constant 0 : index
    %c0_25 = arith.constant 0 : index
    %40 = vector.load %arg8[%c0_24, %c0_25] : memref<32x64xf32, #tpu.memory_space<vmem>>, vector<32x64xf32>
    %cst_26 = arith.constant dense<0.000000e+00> : vector<32x128xf32>
    %41 = tpu.matmul %40, %39, %cst_26 {dimension_numbers = #tpu.dot_dimension_numbers<[1], [0], [0], [1], [0, 0, 1, 1], [], []>} : vector<32x64xf32>, vector<64x128xf32>, vector<32x128xf32> -> vector<32x128xf32>
    %c0_27 = arith.constant 0 : index
    %c0_28 = arith.constant 0 : index
    %42 = vector.load %arg9[%c0_27, %c0_28] : memref<32x1xf32, #tpu.memory_space<vmem>>, vector<32x1xf32>
    %43 = vector.broadcast %42 : vector<32x1xf32> to vector<32x128xf32>
    %44 = arith.addf %41, %43 : vector<32x128xf32>
    %cst_29 = arith.constant 5.000000e-01 : f32
    %45 = vector.broadcast %cst_29 : f32 to vector<32x128xf32>
    %46 = arith.mulf %45, %44 : vector<32x128xf32>
    %cst_30 = arith.constant 0.707106769 : f32
    %47 = vector.broadcast %cst_30 : f32 to vector<32x128xf32>
    %48 = arith.mulf %44, %47 : vector<32x128xf32>
    %49 = math.erf %48 : vector<32x128xf32>
    %cst_31 = arith.constant 1.000000e+00 : f32
    %50 = vector.broadcast %cst_31 : f32 to vector<32x128xf32>
    %51 = arith.addf %50, %49 : vector<32x128xf32>
    %52 = arith.mulf %46, %51 : vector<32x128xf32>
    %c0_32 = arith.constant 0 : index
    %c0_33 = arith.constant 0 : index
    %53 = vector.load %arg10[%c0_32, %c0_33] : memref<32x1xf32, #tpu.memory_space<vmem>>, vector<32x1xf32>
    %54 = vector.broadcast %53 : vector<32x1xf32> to vector<32x128xf32>
    %55 = arith.mulf %54, %52 : vector<32x128xf32>
    %cst_34 = arith.constant dense<0.000000e+00> : vector<128xf32>
    %56 = vector.multi_reduction <add>, %55, %cst_34 [0] : vector<32x128xf32> to vector<128xf32>
    %57 = vector.shape_cast %56 : vector<128xf32> to vector<1x128xf32>
    %c0_35 = arith.constant 0 : index
    %c0_36 = arith.constant 0 : index
    %58 = vector.load %arg11[%c0_35, %c0_36] : memref<1x1xf32, #tpu.memory_space<vmem>>, vector<1x1xf32>
    %59 = vector.broadcast %58 : vector<1x1xf32> to vector<1x128xf32>
    %60 = arith.addf %57, %59 : vector<1x128xf32>
    %cst_37 = arith.constant 0.000000e+00 : f32
    %61 = vector.broadcast %cst_37 : f32 to vector<1x128xf32>
    %62 = arith.subf %61, %60 : vector<1x128xf32>
    %63 = math.exp %62 : vector<1x128xf32>
    %cst_38 = arith.constant 1.000000e+00 : f32
    %64 = vector.broadcast %cst_38 : f32 to vector<1x128xf32>
    %65 = arith.addf %64, %63 : vector<1x128xf32>
    %cst_39 = arith.constant 1.000000e+00 : f32
    %66 = vector.broadcast %cst_39 : f32 to vector<1x128xf32>
    %67 = arith.divf %66, %65 : vector<1x128xf32>
    %c0_40 = arith.constant 0 : index
    %c0_41 = arith.constant 0 : index
    %68 = vector.load %arg12[%c0_40, %c0_41] : memref<1x128xf32, #tpu.memory_space<vmem>>, vector<1x128xf32>
    tpu.vector_store %arg12[%c0_40, %c0_41], %67 {strides = array<i32>} : memref<1x128xf32, #tpu.memory_space<vmem>>, vector<1x128xf32>,
    return
  }
  func.func @transform_0(%arg0: i32) -> (i32, i32) {
    %c0_i32 = arith.constant 0 : i32
    %c0_i32_0 = arith.constant 0 : i32
    return %c0_i32, %arg0 : i32, i32
  }
  func.func @transform_1(%arg0: i32) -> (i32, i32) {
    %c0_i32 = arith.constant 0 : i32
    %c0_i32_0 = arith.constant 0 : i32
    %c0_i32_1 = arith.constant 0 : i32
    return %c0_i32, %c0_i32_0 : i32, i32
  }
  func.func @transform_2(%arg0: i32) -> (i32, i32) {
    %c0_i32 = arith.constant 0 : i32
    %c0_i32_0 = arith.constant 0 : i32
    %c0_i32_1 = arith.constant 0 : i32
    return %c0_i32, %c0_i32_0 : i32, i32
  }
  func.func @transform_3(%arg0: i32) -> (i32, i32) {
    %c0_i32 = arith.constant 0 : i32
    %c0_i32_0 = arith.constant 0 : i32
    %c0_i32_1 = arith.constant 0 : i32
    return %c0_i32, %c0_i32_0 : i32, i32
  }
  func.func @transform_4(%arg0: i32) -> (i32, i32) {
    %c0_i32 = arith.constant 0 : i32
    %c0_i32_0 = arith.constant 0 : i32
    %c0_i32_1 = arith.constant 0 : i32
    return %c0_i32, %c0_i32_0 : i32, i32
  }
  func.func @transform_5(%arg0: i32) -> (i32, i32) {
    %c0_i32 = arith.constant 0 : i32
    %c0_i32_0 = arith.constant 0 : i32
    %c0_i32_1 = arith.constant 0 : i32
    return %c0_i32, %c0_i32_0 : i32, i32
  }
  func.func @transform_6(%arg0: i32) -> (i32, i32) {
    %c0_i32 = arith.constant 0 : i32
    %c0_i32_0 = arith.constant 0 : i32
    %c0_i32_1 = arith.constant 0 : i32
    return %c0_i32, %c0_i32_0 : i32, i32
  }
  func.func @transform_7(%arg0: i32) -> (i32, i32) {
    %c0_i32 = arith.constant 0 : i32
    %c0_i32_0 = arith.constant 0 : i32
    %c0_i32_1 = arith.constant 0 : i32
    return %c0_i32, %c0_i32_0 : i32, i32
  }
  func.func @transform_8(%arg0: i32) -> (i32, i32) {
    %c0_i32 = arith.constant 0 : i32
    %c0_i32_0 = arith.constant 0 : i32
    %c0_i32_1 = arith.constant 0 : i32
    return %c0_i32, %c0_i32_0 : i32, i32
  }
  func.func @transform_9(%arg0: i32) -> (i32, i32) {
    %c0_i32 = arith.constant 0 : i32
    %c0_i32_0 = arith.constant 0 : i32
    %c0_i32_1 = arith.constant 0 : i32
    return %c0_i32, %c0_i32_0 : i32, i32
  }
  func.func @transform_10(%arg0: i32) -> (i32, i32) {
    %c0_i32 = arith.constant 0 : i32
    %c0_i32_0 = arith.constant 0 : i32
    %c0_i32_1 = arith.constant 0 : i32
    return %c0_i32, %c0_i32_0 : i32, i32
  }
  func.func @transform_11(%arg0: i32) -> (i32, i32) {
    %c0_i32 = arith.constant 0 : i32
    %c0_i32_0 = arith.constant 0 : i32
    return %c0_i32, %arg0 : i32, i32
  }
}

</mosaic_0001>

<llo_original>
// kernel: d_mnist_forward.1
$region0: #{d_mnist_forward.1}
  #allocation0 [shape = 'u32[]', space=smem, size = 0x4, offset = 0x4, fixed_abs, tag = 'smem constant byte address 0x4 - core index']
  #allocation1 [shape = 'u32[72,128]{1,0:T(1,128)}', space=vmem, size = 0x9000, scoped, tag = 'internal scratch']
  #allocation2 [shape = 'f32[1,1]{1,0:T(1,128)S(1)}', space=vmem, size = 0x200, scoped, tag = 'scoped memory for d_mnist_forward.1']
  %s0 = inlined_call_operand.vmem [shape: f32[64,128], index: 0, kind: input, shape index: {}]
  %s1 = inlined_call_operand.vmem [shape: f32[512,64], index: 1, kind: input, shape index: {}]
  %s2 = inlined_call_operand.vmem [shape: f32[512,1], index: 2, kind: input, shape index: {}]
  %s3 = inlined_call_operand.vmem [shape: f32[256,512], index: 3, kind: input, shape index: {}]
  %s4 = inlined_call_operand.vmem [shape: f32[256,1], index: 4, kind: input, shape index: {}]
  %s5 = inlined_call_operand.vmem [shape: f32[64,256], index: 5, kind: input, shape index: {}]
  %s6 = inlined_call_operand.vmem [shape: f32[64,1], index: 6, kind: input, shape index: {}]
  %s7 = inlined_call_operand.vmem [shape: f32[32,64], index: 7, kind: input, shape index: {}]
  %s8 = inlined_call_operand.vmem [shape: f32[32,1], index: 8, kind: input, shape index: {}]
  %s9 = inlined_call_operand.vmem [shape: f32[32,1], index: 9, kind: input, shape index: {}]
  %s10 = inlined_call_operand.<no memory space> [shape: f32[1,1], index: 10, kind: input, shape index: {}]
  %s11 = inlined_call_operand.vmem [shape: f32[1,128], index: 11, kind: output, shape index: {}]
  %s12 = sld [smem:[#allocation0]]
  $region54: #{d_mnist_forward.1} parent=0
    _
  %s14 = ssub.s32 1, %s12
  %s15 = scalar_select 0, %s14, %s12
  %v16 = vstv %s10
  %17 = vst [vmem:[#allocation2] sm:$0x1] %v16
  // Predicated region
  $region2: #{d_mnist_forward.1} parent=0 // pred_check
    _
  $region3: #{d_mnist_forward.1} parent=0 // pred_check_branch
    %19 = sbr.rel (0) target = $region5
  $region4: #{d_mnist_forward.1} parent=0 // pred_region
    _
  $region5: #{d_mnist_forward.1} parent=0 // pred_fallthru
    _
  // Predicated region
  $region6: #{d_mnist_forward.1} parent=0 // pred_check
    _
  $region7: #{d_mnist_forward.1} parent=0 // pred_check_branch
    %21 = sbr.rel (0) target = $region9
  $region8: #{d_mnist_forward.1} parent=0 // pred_region
    _
  $region9: #{d_mnist_forward.1} parent=0 // pred_fallthru
    _
  // Predicated region
  $region10: #{d_mnist_forward.1} parent=0 // pred_check
    _
  $region11: #{d_mnist_forward.1} parent=0 // pred_check_branch
    %23 = sbr.rel (0) target = $region13
  $region12: #{d_mnist_forward.1} parent=0 // pred_region
    _
  $region13: #{d_mnist_forward.1} parent=0 // pred_fallthru
    _
  // Predicated region
  $region14: #{d_mnist_forward.1} parent=0 // pred_check
    _
  $region15: #{d_mnist_forward.1} parent=0 // pred_check_branch
    %25 = sbr.rel (0) target = $region17
  $region16: #{d_mnist_forward.1} parent=0 // pred_region
    _
  $region17: #{d_mnist_forward.1} parent=0 // pred_fallthru
    _
  // Predicated region
  $region18: #{d_mnist_forward.1} parent=0 // pred_check
    _
  $region19: #{d_mnist_forward.1} parent=0 // pred_check_branch
    %27 = sbr.rel (0) target = $region21
  $region20: #{d_mnist_forward.1} parent=0 // pred_region
    _
  $region21: #{d_mnist_forward.1} parent=0 // pred_fallthru
    _
  // Predicated region
  $region22: #{d_mnist_forward.1} parent=0 // pred_check
    _
  $region23: #{d_mnist_forward.1} parent=0 // pred_check_branch
    %29 = sbr.rel (0) target = $region25
  $region24: #{d_mnist_forward.1} parent=0 // pred_region
    _
  $region25: #{d_mnist_forward.1} parent=0 // pred_fallthru
    _
  // Predicated region
  $region26: #{d_mnist_forward.1} parent=0 // pred_check
    _
  $region27: #{d_mnist_forward.1} parent=0 // pred_check_branch
    %31 = sbr.rel (0) target = $region29
  $region28: #{d_mnist_forward.1} parent=0 // pred_region
    _
  $region29: #{d_mnist_forward.1} parent=0 // pred_fallthru
    _
  // Predicated region
  $region30: #{d_mnist_forward.1} parent=0 // pred_check
    _
  $region31: #{d_mnist_forward.1} parent=0 // pred_check_branch
    %33 = sbr.rel (0) target = $region33
  $region32: #{d_mnist_forward.1} parent=0 // pred_region
    _
  $region33: #{d_mnist_forward.1} parent=0 // pred_fallthru
    _
  // Predicated region
  $region34: #{d_mnist_forward.1} parent=0 // pred_check
    _
  $region35: #{d_mnist_forward.1} parent=0 // pred_check_branch
    %35 = sbr.rel (0) target = $region37
  $region36: #{d_mnist_forward.1} parent=0 // pred_region
    _
  $region37: #{d_mnist_forward.1} parent=0 // pred_fallthru
    _
  // Predicated region
  $region38: #{d_mnist_forward.1} parent=0 // pred_check
    _
  $region39: #{d_mnist_forward.1} parent=0 // pred_check_branch
    %37 = sbr.rel (0) target = $region41
  $region40: #{d_mnist_forward.1} parent=0 // pred_region
    _
  $region41: #{d_mnist_forward.1} parent=0 // pred_fallthru
    _
  // Predicated region
  $region42: #{d_mnist_forward.1} parent=0 // pred_check
    _
  $region43: #{d_mnist_forward.1} parent=0 // pred_check_branch
    %39 = sbr.rel (0) target = $region45
  $region44: #{d_mnist_forward.1} parent=0 // pred_region
    _
  $region45: #{d_mnist_forward.1} parent=0 // pred_fallthru
    _
  %v40 = vld [vmem:[%s0] sm:$0xff]
  %v41 = vld [vmem:[%s0 + $0x8] sm:$0xff]
  %v42 = vld [vmem:[%s0 + $0x10] sm:$0xff]
  %v43 = vld [vmem:[%s0 + $0x18] sm:$0xff]
  %v44 = vld [vmem:[%s0 + $0x20] sm:$0xff]
  %v45 = vld [vmem:[%s0 + $0x28] sm:$0xff]
  %v46 = vld [vmem:[%s0 + $0x30] sm:$0xff]
  %v47 = vld [vmem:[%s0 + $0x38] sm:$0xff]
  %v48 = vld [vmem:[%s1] sm:$0xff]
  %v49 = vld [vmem:[%s1 + $0x8] sm:$0xff]
  %v50 = vld [vmem:[%s1 + $0x10] sm:$0xff]
  %v51 = vld [vmem:[%s1 + $0x18] sm:$0xff]
  %v52 = vld [vmem:[%s1 + $0x20] sm:$0xff]
  %v53 = vld [vmem:[%s1 + $0x28] sm:$0xff]
  %v54 = vld [vmem:[%s1 + $0x30] sm:$0xff]
  %v55 = vld [vmem:[%s1 + $0x38] sm:$0xff]
  %v56 = vld [vmem:[%s1 + $0x40] sm:$0xff]
  %v57 = vld [vmem:[%s1 + $0x48] sm:$0xff]
  %v58 = vld [vmem:[%s1 + $0x50] sm:$0xff]
  %v59 = vld [vmem:[%s1 + $0x58] sm:$0xff]
  %v60 = vld [vmem:[%s1 + $0x60] sm:$0xff]
  %v61 = vld [vmem:[%s1 + $0x68] sm:$0xff]
  %v62 = vld [vmem:[%s1 + $0x70] sm:$0xff]
  %v63 = vld [vmem:[%s1 + $0x78] sm:$0xff]
  %v64 = vld [vmem:[%s1 + $0x80] sm:$0xff]
  %v65 = vld [vmem:[%s1 + $0x88] sm:$0xff]
  %v66 = vld [vmem:[%s1 + $0x90] sm:$0xff]
  %v67 = vld [vmem:[%s1 + $0x98] sm:$0xff]
  %v68 = vld [vmem:[%s1 + $0xa0] sm:$0xff]
  %v69 = vld [vmem:[%s1 + $0xa8] sm:$0xff]
  %v70 = vld [vmem:[%s1 + $0xb0] sm:$0xff]
  %v71 = vld [vmem:[%s1 + $0xb8] sm:$0xff]
  %v72 = vld [vmem:[%s1 + $0xc0] sm:$0xff]
  %v73 = vld [vmem:[%s1 + $0xc8] sm:$0xff]
  %v74 = vld [vmem:[%s1 + $0xd0] sm:$0xff]
  %v75 = vld [vmem:[%s1 + $0xd8] sm:$0xff]
  %v76 = vld [vmem:[%s1 + $0xe0] sm:$0xff]
  %v77 = vld [vmem:[%s1 + $0xe8] sm:$0xff]
  %v78 = vld [vmem:[%s1 + $0xf0] sm:$0xff]
  %v79 = vld [vmem:[%s1 + $0xf8] sm:$0xff]
  %v80 = vld [vmem:[%s1 + $0x100] sm:$0xff]
  %v81 = vld [vmem:[%s1 + $0x108] sm:$0xff]
  %v82 = vld [vmem:[%s1 + $0x110] sm:$0xff]
  %v83 = vld [vmem:[%s1 + $0x118] sm:$0xff]
  %v84 = vld [vmem:[%s1 + $0x120] sm:$0xff]
  %v85 = vld [vmem:[%s1 + $0x128] sm:$0xff]
  %v86 = vld [vmem:[%s1 + $0x130] sm:$0xff]
  %v87 = vld [vmem:[%s1 + $0x138] sm:$0xff]
  %v88 = vld [vmem:[%s1 + $0x140] sm:$0xff]
  %v89 = vld [vmem:[%s1 + $0x148] sm:$0xff]
  %v90 = vld [vmem:[%s1 + $0x150] sm:$0xff]
  %v91 = vld [vmem:[%s1 + $0x158] sm:$0xff]
  %v92 = vld [vmem:[%s1 + $0x160] sm:$0xff]
  %v93 = vld [vmem:[%s1 + $0x168] sm:$0xff]
  %v94 = vld [vmem:[%s1 + $0x170] sm:$0xff]
  %v95 = vld [vmem:[%s1 + $0x178] sm:$0xff]
  %v96 = vld [vmem:[%s1 + $0x180] sm:$0xff]
  %v97 = vld [vmem:[%s1 + $0x188] sm:$0xff]
  %v98 = vld [vmem:[%s1 + $0x190] sm:$0xff]
  %v99 = vld [vmem:[%s1 + $0x198] sm:$0xff]
  %v100 = vld [vmem:[%s1 + $0x1a0] sm:$0xff]
  %v101 = vld [vmem:[%s1 + $0x1a8] sm:$0xff]
  %v102 = vld [vmem:[%s1 + $0x1b0] sm:$0xff]
  %v103 = vld [vmem:[%s1 + $0x1b8] sm:$0xff]
  %v104 = vld [vmem:[%s1 + $0x1c0] sm:$0xff]
  %v105 = vld [vmem:[%s1 + $0x1c8] sm:$0xff]
  %v106 = vld [vmem:[%s1 + $0x1d0] sm:$0xff]
  %v107 = vld [vmem:[%s1 + $0x1d8] sm:$0xff]
  %v108 = vld [vmem:[%s1 + $0x1e0] sm:$0xff]
  %v109 = vld [vmem:[%s1 + $0x1e8] sm:$0xff]
  %v110 = vld [vmem:[%s1 + $0x1f0] sm:$0xff]
  %v111 = vld [vmem:[%s1 + $0x1f8] sm:$0xff]
  %v112 = vld [vmem:[%s2] sm:$0xff]
  %v113 = vld [vmem:[%s2 + $0x8] sm:$0xff]
  %v114 = vld [vmem:[%s2 + $0x10] sm:$0xff]
  %v115 = vld [vmem:[%s2 + $0x18] sm:$0xff]
  %v116 = vld [vmem:[%s2 + $0x20] sm:$0xff]
  %v117 = vld [vmem:[%s2 + $0x28] sm:$0xff]
  %v118 = vld [vmem:[%s2 + $0x30] sm:$0xff]
  %v119 = vld [vmem:[%s2 + $0x38] sm:$0xff]
  %v120 = vld [vmem:[%s2 + $0x40] sm:$0xff]
  %v121 = vld [vmem:[%s2 + $0x48] sm:$0xff]
  %v122 = vld [vmem:[%s2 + $0x50] sm:$0xff]
  %v123 = vld [vmem:[%s2 + $0x58] sm:$0xff]
  %v124 = vld [vmem:[%s2 + $0x60] sm:$0xff]
  %v125 = vld [vmem:[%s2 + $0x68] sm:$0xff]
  %v126 = vld [vmem:[%s2 + $0x70] sm:$0xff]
  %v127 = vld [vmem:[%s2 + $0x78] sm:$0xff]
  %v128 = vld [vmem:[%s2 + $0x80] sm:$0xff]
  %v129 = vld [vmem:[%s2 + $0x88] sm:$0xff]
  %v130 = vld [vmem:[%s2 + $0x90] sm:$0xff]
  %v131 = vld [vmem:[%s2 + $0x98] sm:$0xff]
  %v132 = vld [vmem:[%s2 + $0xa0] sm:$0xff]
  %v133 = vld [vmem:[%s2 + $0xa8] sm:$0xff]
  %v134 = vld [vmem:[%s2 + $0xb0] sm:$0xff]
  %v135 = vld [vmem:[%s2 + $0xb8] sm:$0xff]
  %v136 = vld [vmem:[%s2 + $0xc0] sm:$0xff]
  %v137 = vld [vmem:[%s2 + $0xc8] sm:$0xff]
  %v138 = vld [vmem:[%s2 + $0xd0] sm:$0xff]
  %v139 = vld [vmem:[%s2 + $0xd8] sm:$0xff]
  %v140 = vld [vmem:[%s2 + $0xe0] sm:$0xff]
  %v141 = vld [vmem:[%s2 + $0xe8] sm:$0xff]
  %v142 = vld [vmem:[%s2 + $0xf0] sm:$0xff]
  %v143 = vld [vmem:[%s2 + $0xf8] sm:$0xff]
  %v144 = vld [vmem:[%s2 + $0x100] sm:$0xff]
  %v145 = vld [vmem:[%s2 + $0x108] sm:$0xff]
  %v146 = vld [vmem:[%s2 + $0x110] sm:$0xff]
  %v147 = vld [vmem:[%s2 + $0x118] sm:$0xff]
  %v148 = vld [vmem:[%s2 + $0x120] sm:$0xff]
  %v149 = vld [vmem:[%s2 + $0x128] sm:$0xff]
  %v150 = vld [vmem:[%s2 + $0x130] sm:$0xff]
  %v151 = vld [vmem:[%s2 + $0x138] sm:$0xff]
  %v152 = vld [vmem:[%s2 + $0x140] sm:$0xff]
  %v153 = vld [vmem:[%s2 + $0x148] sm:$0xff]
  %v154 = vld [vmem:[%s2 + $0x150] sm:$0xff]
  %v155 = vld [vmem:[%s2 + $0x158] sm:$0xff]
  %v156 = vld [vmem:[%s2 + $0x160] sm:$0xff]
  %v157 = vld [vmem:[%s2 + $0x168] sm:$0xff]
  %v158 = vld [vmem:[%s2 + $0x170] sm:$0xff]
  %v159 = vld [vmem:[%s2 + $0x178] sm:$0xff]
  %v160 = vld [vmem:[%s2 + $0x180] sm:$0xff]
  %v161 = vld [vmem:[%s2 + $0x188] sm:$0xff]
  %v162 = vld [vmem:[%s2 + $0x190] sm:$0xff]
  %v163 = vld [vmem:[%s2 + $0x198] sm:$0xff]
  %v164 = vld [vmem:[%s2 + $0x1a0] sm:$0xff]
  %v165 = vld [vmem:[%s2 + $0x1a8] sm:$0xff]
  %v166 = vld [vmem:[%s2 + $0x1b0] sm:$0xff]
  %v167 = vld [vmem:[%s2 + $0x1b8] sm:$0xff]
  %v168 = vld [vmem:[%s2 + $0x1c0] sm:$0xff]
  %v169 = vld [vmem:[%s2 + $0x1c8] sm:$0xff]
  %v170 = vld [vmem:[%s2 + $0x1d0] sm:$0xff]
  %v171 = vld [vmem:[%s2 + $0x1d8] sm:$0xff]
  %v172 = vld [vmem:[%s2 + $0x1e0] sm:$0xff]
  %v173 = vld [vmem:[%s2 + $0x1e8] sm:$0xff]
  %v174 = vld [vmem:[%s2 + $0x1f0] sm:$0xff]
  %v175 = vld [vmem:[%s2 + $0x1f8] sm:$0xff]
  %177 = vset.pattern.permute.xlu0 0
  %178 = vperm.xlu0 %177, %v112
  %v179 = vpop.permute.xlu0 %178
  %182 = vset.pattern.permute.xlu0 0
  %183 = vperm.xlu0 %182, %v113
  %v184 = vpop.permute.xlu0 %183
  %187 = vset.pattern.permute.xlu0 0
  %188 = vperm.xlu0 %187, %v114
  %v189 = vpop.permute.xlu0 %188
  %192 = vset.pattern.permute.xlu0 0
  %193 = vperm.xlu0 %192, %v115
  %v194 = vpop.permute.xlu0 %193
  %197 = vset.pattern.permute.xlu0 0
  %198 = vperm.xlu0 %197, %v116
  %v199 = vpop.permute.xlu0 %198
  %202 = vset.pattern.permute.xlu0 0
  %203 = vperm.xlu0 %202, %v117
  %v204 = vpop.permute.xlu0 %203
  %207 = vset.pattern.permute.xlu0 0
  %208 = vperm.xlu0 %207, %v118
  %v209 = vpop.permute.xlu0 %208
  %212 = vset.pattern.permute.xlu0 0
  %213 = vperm.xlu0 %212, %v119
  %v214 = vpop.permute.xlu0 %213
  %217 = vset.pattern.permute.xlu0 0
  %218 = vperm.xlu0 %217, %v120
  %v219 = vpop.permute.xlu0 %218
  %222 = vset.pattern.permute.xlu0 0
  %223 = vperm.xlu0 %222, %v121
  %v224 = vpop.permute.xlu0 %223
  %227 = vset.pattern.permute.xlu0 0
  %228 = vperm.xlu0 %227, %v122
  %v229 = vpop.permute.xlu0 %228
  %232 = vset.pattern.permute.xlu0 0
  %233 = vperm.xlu0 %232, %v123
  %v234 = vpop.permute.xlu0 %233
  %237 = vset.pattern.permute.xlu0 0
  %238 = vperm.xlu0 %237, %v124
  %v239 = vpop.permute.xlu0 %238
  %242 = vset.pattern.permute.xlu0 0
  %243 = vperm.xlu0 %242, %v125
  %v244 = vpop.permute.xlu0 %243
  %247 = vset.pattern.permute.xlu0 0
  %248 = vperm.xlu0 %247, %v126
  %v249 = vpop.permute.xlu0 %248
  %252 = vset.pattern.permute.xlu0 0
  %253 = vperm.xlu0 %252, %v127
  %v254 = vpop.permute.xlu0 %253
  %257 = vset.pattern.permute.xlu0 0
  %258 = vperm.xlu0 %257, %v128
  %v259 = vpop.permute.xlu0 %258
  %262 = vset.pattern.permute.xlu0 0
  %263 = vperm.xlu0 %262, %v129
  %v264 = vpop.permute.xlu0 %263
  %267 = vset.pattern.permute.xlu0 0
  %268 = vperm.xlu0 %267, %v130
  %v269 = vpop.permute.xlu0 %268
  %272 = vset.pattern.permute.xlu0 0
  %273 = vperm.xlu0 %272, %v131
  %v274 = vpop.permute.xlu0 %273
  %277 = vset.pattern.permute.xlu0 0
  %278 = vperm.xlu0 %277, %v132
  %v279 = vpop.permute.xlu0 %278
  %282 = vset.pattern.permute.xlu0 0
  %283 = vperm.xlu0 %282, %v133
  %v284 = vpop.permute.xlu0 %283
  %287 = vset.pattern.permute.xlu0 0
  %288 = vperm.xlu0 %287, %v134
  %v289 = vpop.permute.xlu0 %288
  %292 = vset.pattern.permute.xlu0 0
  %293 = vperm.xlu0 %292, %v135
  %v294 = vpop.permute.xlu0 %293
  %297 = vset.pattern.permute.xlu0 0
  %298 = vperm.xlu0 %297, %v136
  %v299 = vpop.permute.xlu0 %298
  %302 = vset.pattern.permute.xlu0 0
  %303 = vperm.xlu0 %302, %v137
  %v304 = vpop.permute.xlu0 %303
  %307 = vset.pattern.permute.xlu0 0
  %308 = vperm.xlu0 %307, %v138
  %v309 = vpop.permute.xlu0 %308
  %312 = vset.pattern.permute.xlu0 0
  %313 = vperm.xlu0 %312, %v139
  %v314 = vpop.permute.xlu0 %313
  %317 = vset.pattern.permute.xlu0 0
  %318 = vperm.xlu0 %317, %v140
  %v319 = vpop.permute.xlu0 %318
  %322 = vset.pattern.permute.xlu0 0
  %323 = vperm.xlu0 %322, %v141
  %v324 = vpop.permute.xlu0 %323
  %327 = vset.pattern.permute.xlu0 0
  %328 = vperm.xlu0 %327, %v142
  %v329 = vpop.permute.xlu0 %328
  %332 = vset.pattern.permute.xlu0 0
  %333 = vperm.xlu0 %332, %v143
  %v334 = vpop.permute.xlu0 %333
  %337 = vset.pattern.permute.xlu0 0
  %338 = vperm.xlu0 %337, %v144
  %v339 = vpop.permute.xlu0 %338
  %342 = vset.pattern.permute.xlu0 0
  %343 = vperm.xlu0 %342, %v145
  %v344 = vpop.permute.xlu0 %343
  %347 = vset.pattern.permute.xlu0 0
  %348 = vperm.xlu0 %347, %v146
  %v349 = vpop.permute.xlu0 %348
  %352 = vset.pattern.permute.xlu0 0
  %353 = vperm.xlu0 %352, %v147
  %v354 = vpop.permute.xlu0 %353
  %357 = vset.pattern.permute.xlu0 0
  %358 = vperm.xlu0 %357, %v148
  %v359 = vpop.permute.xlu0 %358
  %362 = vset.pattern.permute.xlu0 0
  %363 = vperm.xlu0 %362, %v149
  %v364 = vpop.permute.xlu0 %363
  %367 = vset.pattern.permute.xlu0 0
  %368 = vperm.xlu0 %367, %v150
  %v369 = vpop.permute.xlu0 %368
  %372 = vset.pattern.permute.xlu0 0
  %373 = vperm.xlu0 %372, %v151
  %v374 = vpop.permute.xlu0 %373
  %377 = vset.pattern.permute.xlu0 0
  %378 = vperm.xlu0 %377, %v152
  %v379 = vpop.permute.xlu0 %378
  %382 = vset.pattern.permute.xlu0 0
  %383 = vperm.xlu0 %382, %v153
  %v384 = vpop.permute.xlu0 %383
  %387 = vset.pattern.permute.xlu0 0
  %388 = vperm.xlu0 %387, %v154
  %v389 = vpop.permute.xlu0 %388
  %392 = vset.pattern.permute.xlu0 0
  %393 = vperm.xlu0 %392, %v155
  %v394 = vpop.permute.xlu0 %393
  %397 = vset.pattern.permute.xlu0 0
  %398 = vperm.xlu0 %397, %v156
  %v399 = vpop.permute.xlu0 %398
  %402 = vset.pattern.permute.xlu0 0
  %403 = vperm.xlu0 %402, %v157
  %v404 = vpop.permute.xlu0 %403
  %407 = vset.pattern.permute.xlu0 0
  %408 = vperm.xlu0 %407, %v158
  %v409 = vpop.permute.xlu0 %408
  %412 = vset.pattern.permute.xlu0 0
  %413 = vperm.xlu0 %412, %v159
  %v414 = vpop.permute.xlu0 %413
  %417 = vset.pattern.permute.xlu0 0
  %418 = vperm.xlu0 %417, %v160
  %v419 = vpop.permute.xlu0 %418
  %422 = vset.pattern.permute.xlu0 0
  %423 = vperm.xlu0 %422, %v161
  %v424 = vpop.permute.xlu0 %423
  %427 = vset.pattern.permute.xlu0 0
  %428 = vperm.xlu0 %427, %v162
  %v429 = vpop.permute.xlu0 %428
  %432 = vset.pattern.permute.xlu0 0
  %433 = vperm.xlu0 %432, %v163
  %v434 = vpop.permute.xlu0 %433
  %437 = vset.pattern.permute.xlu0 0
  %438 = vperm.xlu0 %437, %v164
  %v439 = vpop.permute.xlu0 %438
  %442 = vset.pattern.permute.xlu0 0
  %443 = vperm.xlu0 %442, %v165
  %v444 = vpop.permute.xlu0 %443
  %447 = vset.pattern.permute.xlu0 0
  %448 = vperm.xlu0 %447, %v166
  %v449 = vpop.permute.xlu0 %448
  %452 = vset.pattern.permute.xlu0 0
  %453 = vperm.xlu0 %452, %v167
  %v454 = vpop.permute.xlu0 %453
  %457 = vset.pattern.permute.xlu0 0
  %458 = vperm.xlu0 %457, %v168
  %v459 = vpop.permute.xlu0 %458
  %462 = vset.pattern.permute.xlu0 0
  %463 = vperm.xlu0 %462, %v169
  %v464 = vpop.permute.xlu0 %463
  %467 = vset.pattern.permute.xlu0 0
  %468 = vperm.xlu0 %467, %v170
  %v469 = vpop.permute.xlu0 %468
  %472 = vset.pattern.permute.xlu0 0
  %473 = vperm.xlu0 %472, %v171
  %v474 = vpop.permute.xlu0 %473
  %477 = vset.pattern.permute.xlu0 0
  %478 = vperm.xlu0 %477, %v172
  %v479 = vpop.permute.xlu0 %478
  %482 = vset.pattern.permute.xlu0 0
  %483 = vperm.xlu0 %482, %v173
  %v484 = vpop.permute.xlu0 %483
  %487 = vset.pattern.permute.xlu0 0
  %488 = vperm.xlu0 %487, %v174
  %v489 = vpop.permute.xlu0 %488
  %492 = vset.pattern.permute.xlu0 0
  %493 = vperm.xlu0 %492, %v175
  %v494 = vpop.permute.xlu0 %493
  %vm496 = vcmask 523264
  %v498 = vsel %vm496, %v48, 0
  %v501 = vsel %vm496, %v49, 0
  %v504 = vsel %vm496, %v50, 0
  %v507 = vsel %vm496, %v51, 0
  %v510 = vsel %vm496, %v52, 0
  %v513 = vsel %vm496, %v53, 0
  %v516 = vsel %vm496, %v54, 0
  %v519 = vsel %vm496, %v55, 0
  %v522 = vsel %vm496, %v56, 0
  %v525 = vsel %vm496, %v57, 0
  %v528 = vsel %vm496, %v58, 0
  %v531 = vsel %vm496, %v59, 0
  %v534 = vsel %vm496, %v60, 0
  %v537 = vsel %vm496, %v61, 0
  %v540 = vsel %vm496, %v62, 0
  %v543 = vsel %vm496, %v63, 0
  %v546 = vsel %vm496, %v64, 0
  %v549 = vsel %vm496, %v65, 0
  %v552 = vsel %vm496, %v66, 0
  %v555 = vsel %vm496, %v67, 0
  %v558 = vsel %vm496, %v68, 0
  %v561 = vsel %vm496, %v69, 0
  %v564 = vsel %vm496, %v70, 0
  %v567 = vsel %vm496, %v71, 0
  %v570 = vsel %vm496, %v72, 0
  %v573 = vsel %vm496, %v73, 0
  %v576 = vsel %vm496, %v74, 0
  %v579 = vsel %vm496, %v75, 0
  %v582 = vsel %vm496, %v76, 0
  %v585 = vsel %vm496, %v77, 0
  %v588 = vsel %vm496, %v78, 0
  %v591 = vsel %vm496, %v79, 0
  %v594 = vsel %vm496, %v80, 0
  %v597 = vsel %vm496, %v81, 0
  %v600 = vsel %vm496, %v82, 0
  %v603 = vsel %vm496, %v83, 0
  %v606 = vsel %vm496, %v84, 0
  %v609 = vsel %vm496, %v85, 0
  %v612 = vsel %vm496, %v86, 0
  %v615 = vsel %vm496, %v87, 0
  %v618 = vsel %vm496, %v88, 0
  %v621 = vsel %vm496, %v89, 0
  %v624 = vsel %vm496, %v90, 0
  %v627 = vsel %vm496, %v91, 0
  %v630 = vsel %vm496, %v92, 0
  %v633 = vsel %vm496, %v93, 0
  %v636 = vsel %vm496, %v94, 0
  %v639 = vsel %vm496, %v95, 0
  %v642 = vsel %vm496, %v96, 0
  %v645 = vsel %vm496, %v97, 0
  %v648 = vsel %vm496, %v98, 0
  %v651 = vsel %vm496, %v99, 0
  %v654 = vsel %vm496, %v100, 0
  %v657 = vsel %vm496, %v101, 0
  %v660 = vsel %vm496, %v102, 0
  %v663 = vsel %vm496, %v103, 0
  %v666 = vsel %vm496, %v104, 0
  %v669 = vsel %vm496, %v105, 0
  %v672 = vsel %vm496, %v106, 0
  %v675 = vsel %vm496, %v107, 0
  %v678 = vsel %vm496, %v108, 0
  %v681 = vsel %vm496, %v109, 0
  %v684 = vsel %vm496, %v110, 0
  %v687 = vsel %vm496, %v111, 0
  %689 = vmatpush.msra.mxu0 0.0
  %690 = vmatpush.msra.mxu0 0.0
  %691 = vmatpush.msra.mxu0 0.0
  %692 = vmatpush.msra.mxu0 0.0
  %693 = vmatpush.msra.mxu0 0.0
  %694 = vmatpush.msra.mxu0 0.0
  %695 = vmatpush.msra.mxu0 0.0
  %696 = vmatpush.msra.mxu0 0.0
  %697 = vmatpush.msra.mxu0 %v47
  %698 = vmatpush.msra.mxu0 %v46
  %699 = vmatpush.msra.mxu0 %v45
  %700 = vmatpush.msra.mxu0 %v44
  %701 = vmatpush.msra.mxu0 %v43
  %702 = vmatpush.msra.mxu0 %v42
  %703 = vmatpush.msra.mxu0 %v41
  %704 = vmatpush.msra.mxu0 %v40
  %705 = vmatmul.f32.gmra.mxu0 %v498
  %v706 = vpop.f32.mrf.mxu0
  %v707 = vadd.f32 %v179, %v706
  %708 = vmatmul.f32.gmra.mxu0 %v501
  %v709 = vpop.f32.mrf.mxu0
  %v710 = vadd.f32 %v184, %v709
  %711 = vmatmul.f32.gmra.mxu0 %v504
  %v712 = vpop.f32.mrf.mxu0
  %v713 = vadd.f32 %v189, %v712
  %714 = vmatmul.f32.gmra.mxu0 %v507
  %v715 = vpop.f32.mrf.mxu0
  %v716 = vadd.f32 %v194, %v715
  %717 = vmatmul.f32.gmra.mxu0 %v510
  %v718 = vpop.f32.mrf.mxu0
  %v719 = vadd.f32 %v199, %v718
  %720 = vmatmul.f32.gmra.mxu0 %v513
  %v721 = vpop.f32.mrf.mxu0
  %v722 = vadd.f32 %v204, %v721
  %723 = vmatmul.f32.gmra.mxu0 %v516
  %v724 = vpop.f32.mrf.mxu0
  %v725 = vadd.f32 %v209, %v724
  %726 = vmatmul.f32.gmra.mxu0 %v519
  %v727 = vpop.f32.mrf.mxu0
  %v728 = vadd.f32 %v214, %v727
  %729 = vmatmul.f32.gmra.mxu0 %v522
  %v730 = vpop.f32.mrf.mxu0
  %v731 = vadd.f32 %v219, %v730
  %732 = vmatmul.f32.gmra.mxu0 %v525
  %v733 = vpop.f32.mrf.mxu0
  %v734 = vadd.f32 %v224, %v733
  %735 = vmatmul.f32.gmra.mxu0 %v528
  %v736 = vpop.f32.mrf.mxu0
  %v737 = vadd.f32 %v229, %v736
  %738 = vmatmul.f32.gmra.mxu0 %v531
  %v739 = vpop.f32.mrf.mxu0
  %v740 = vadd.f32 %v234, %v739
  %741 = vmatmul.f32.gmra.mxu0 %v534
  %v742 = vpop.f32.mrf.mxu0
  %v743 = vadd.f32 %v239, %v742
  %744 = vmatmul.f32.gmra.mxu0 %v537
  %v745 = vpop.f32.mrf.mxu0
  %v746 = vadd.f32 %v244, %v745
  %747 = vmatmul.f32.gmra.mxu0 %v540
  %v748 = vpop.f32.mrf.mxu0
  %v749 = vadd.f32 %v249, %v748
  %750 = vmatmul.f32.gmra.mxu0 %v543
  %v751 = vpop.f32.mrf.mxu0
  %v752 = vadd.f32 %v254, %v751
  %753 = vmatmul.f32.gmra.mxu0 %v546
  %v754 = vpop.f32.mrf.mxu0
  %v755 = vadd.f32 %v259, %v754
  %756 = vmatmul.f32.gmra.mxu0 %v549
  %v757 = vpop.f32.mrf.mxu0
  %v758 = vadd.f32 %v264, %v757
  %759 = vmatmul.f32.gmra.mxu0 %v552
  %v760 = vpop.f32.mrf.mxu0
  %v761 = vadd.f32 %v269, %v760
  %762 = vmatmul.f32.gmra.mxu0 %v555
  %v763 = vpop.f32.mrf.mxu0
  %v764 = vadd.f32 %v274, %v763
  %765 = vmatmul.f32.gmra.mxu0 %v558
  %v766 = vpop.f32.mrf.mxu0
  %v767 = vadd.f32 %v279, %v766
  %768 = vmatmul.f32.gmra.mxu0 %v561
  %v769 = vpop.f32.mrf.mxu0
  %v770 = vadd.f32 %v284, %v769
  %771 = vmatmul.f32.gmra.mxu0 %v564
  %v772 = vpop.f32.mrf.mxu0
  %v773 = vadd.f32 %v289, %v772
  %774 = vmatmul.f32.gmra.mxu0 %v567
  %v775 = vpop.f32.mrf.mxu0
  %v776 = vadd.f32 %v294, %v775
  %777 = vmatmul.f32.gmra.mxu0 %v570
  %v778 = vpop.f32.mrf.mxu0
  %v779 = vadd.f32 %v299, %v778
  %780 = vmatmul.f32.gmra.mxu0 %v573
  %v781 = vpop.f32.mrf.mxu0
  %v782 = vadd.f32 %v304, %v781
  %783 = vmatmul.f32.gmra.mxu0 %v576
  %v784 = vpop.f32.mrf.mxu0
  %v785 = vadd.f32 %v309, %v784
  %786 = vmatmul.f32.gmra.mxu0 %v579
  %v787 = vpop.f32.mrf.mxu0
  %v788 = vadd.f32 %v314, %v787
  %789 = vmatmul.f32.gmra.mxu0 %v582
  %v790 = vpop.f32.mrf.mxu0
  %v791 = vadd.f32 %v319, %v790
  %792 = vmatmul.f32.gmra.mxu0 %v585
  %v793 = vpop.f32.mrf.mxu0
  %v794 = vadd.f32 %v324, %v793
  %795 = vmatmul.f32.gmra.mxu0 %v588
  %v796 = vpop.f32.mrf.mxu0
  %v797 = vadd.f32 %v329, %v796
  %798 = vmatmul.f32.gmra.mxu0 %v591
  %v799 = vpop.f32.mrf.mxu0
  %v800 = vadd.f32 %v334, %v799
  %801 = vmatmul.f32.gmra.mxu0 %v594
  %v802 = vpop.f32.mrf.mxu0
  %v803 = vadd.f32 %v339, %v802
  %804 = vmatmul.f32.gmra.mxu0 %v597
  %v805 = vpop.f32.mrf.mxu0
  %v806 = vadd.f32 %v344, %v805
  %807 = vmatmul.f32.gmra.mxu0 %v600
  %v808 = vpop.f32.mrf.mxu0
  %v809 = vadd.f32 %v349, %v808
  %810 = vmatmul.f32.gmra.mxu0 %v603
  %v811 = vpop.f32.mrf.mxu0
  %v812 = vadd.f32 %v354, %v811
  %813 = vmatmul.f32.gmra.mxu0 %v606
  %v814 = vpop.f32.mrf.mxu0
  %v815 = vadd.f32 %v359, %v814
  %816 = vmatmul.f32.gmra.mxu0 %v609
  %v817 = vpop.f32.mrf.mxu0
  %v818 = vadd.f32 %v364, %v817
  %819 = vmatmul.f32.gmra.mxu0 %v612
  %v820 = vpop.f32.mrf.mxu0
  %v821 = vadd.f32 %v369, %v820
  %822 = vmatmul.f32.gmra.mxu0 %v615
  %v823 = vpop.f32.mrf.mxu0
  %v824 = vadd.f32 %v374, %v823
  %825 = vmatmul.f32.gmra.mxu0 %v618
  %v826 = vpop.f32.mrf.mxu0
  %v827 = vadd.f32 %v379, %v826
  %828 = vmatmul.f32.gmra.mxu0 %v621
  %v829 = vpop.f32.mrf.mxu0
  %v830 = vadd.f32 %v384, %v829
  %831 = vmatmul.f32.gmra.mxu0 %v624
  %v832 = vpop.f32.mrf.mxu0
  %v833 = vadd.f32 %v389, %v832
  %834 = vmatmul.f32.gmra.mxu0 %v627
  %v835 = vpop.f32.mrf.mxu0
  %v836 = vadd.f32 %v394, %v835
  %837 = vmatmul.f32.gmra.mxu0 %v630
  %v838 = vpop.f32.mrf.mxu0
  %v839 = vadd.f32 %v399, %v838
  %840 = vmatmul.f32.gmra.mxu0 %v633
  %v841 = vpop.f32.mrf.mxu0
  %v842 = vadd.f32 %v404, %v841
  %843 = vmatmul.f32.gmra.mxu0 %v636
  %v844 = vpop.f32.mrf.mxu0
  %v845 = vadd.f32 %v409, %v844
  %846 = vmatmul.f32.gmra.mxu0 %v639
  %v847 = vpop.f32.mrf.mxu0
  %v848 = vadd.f32 %v414, %v847
  %849 = vmatmul.f32.gmra.mxu0 %v642
  %v850 = vpop.f32.mrf.mxu0
  %v851 = vadd.f32 %v419, %v850
  %852 = vmatmul.f32.gmra.mxu0 %v645
  %v853 = vpop.f32.mrf.mxu0
  %v854 = vadd.f32 %v424, %v853
  %855 = vmatmul.f32.gmra.mxu0 %v648
  %v856 = vpop.f32.mrf.mxu0
  %v857 = vadd.f32 %v429, %v856
  %858 = vmatmul.f32.gmra.mxu0 %v651
  %v859 = vpop.f32.mrf.mxu0
  %v860 = vadd.f32 %v434, %v859
  %861 = vmatmul.f32.gmra.mxu0 %v654
  %v862 = vpop.f32.mrf.mxu0
  %v863 = vadd.f32 %v439, %v862
  %864 = vmatmul.f32.gmra.mxu0 %v657
  %v865 = vpop.f32.mrf.mxu0
  %v866 = vadd.f32 %v444, %v865
  %867 = vmatmul.f32.gmra.mxu0 %v660
  %v868 = vpop.f32.mrf.mxu0
  %v869 = vadd.f32 %v449, %v868
  %870 = vmatmul.f32.gmra.mxu0 %v663
  %v871 = vpop.f32.mrf.mxu0
  %v872 = vadd.f32 %v454, %v871
  %873 = vmatmul.f32.gmra.mxu0 %v666
  %v874 = vpop.f32.mrf.mxu0
  %v875 = vadd.f32 %v459, %v874
  %876 = vmatmul.f32.gmra.mxu0 %v669
  %v877 = vpop.f32.mrf.mxu0
  %v878 = vadd.f32 %v464, %v877
  %879 = vmatmul.f32.gmra.mxu0 %v672
  %v880 = vpop.f32.mrf.mxu0
  %v881 = vadd.f32 %v469, %v880
  %882 = vmatmul.f32.gmra.mxu0 %v675
  %v883 = vpop.f32.mrf.mxu0
  %v884 = vadd.f32 %v474, %v883
  %885 = vmatmul.f32.gmra.mxu0 %v678
  %v886 = vpop.f32.mrf.mxu0
  %v887 = vadd.f32 %v479, %v886
  %888 = vmatmul.f32.gmra.mxu0 %v681
  %v889 = vpop.f32.mrf.mxu0
  %v890 = vadd.f32 %v484, %v889
  %891 = vmatmul.f32.gmra.mxu0 %v684
  %v892 = vpop.f32.mrf.mxu0
  %v893 = vadd.f32 %v489, %v892
  %894 = vmatmul.f32.gmra.mxu0 %v687
  %v895 = vpop.f32.mrf.mxu0
  %v896 = vadd.f32 %v494, %v895
  %897 = vdwg.mxu0
  %v898 = vmul.f32 %v707, 0.5
  %v899 = vmul.f32 %v710, 0.5
  %v900 = vmul.f32 %v713, 0.5
  %v901 = vmul.f32 %v716, 0.5
  %v902 = vmul.f32 %v719, 0.5
  %v903 = vmul.f32 %v722, 0.5
  %v904 = vmul.f32 %v725, 0.5
  %v905 = vmul.f32 %v728, 0.5
  %v906 = vmul.f32 %v731, 0.5
  %v907 = vmul.f32 %v734, 0.5
  %v908 = vmul.f32 %v737, 0.5
  %v909 = vmul.f32 %v740, 0.5
  %v910 = vmul.f32 %v743, 0.5
  %v911 = vmul.f32 %v746, 0.5
  %v912 = vmul.f32 %v749, 0.5
  %v913 = vmul.f32 %v752, 0.5
  %v914 = vmul.f32 %v755, 0.5
  %v915 = vmul.f32 %v758, 0.5
  %v916 = vmul.f32 %v761, 0.5
  %v917 = vmul.f32 %v764, 0.5
  %v918 = vmul.f32 %v767, 0.5
  %v919 = vmul.f32 %v770, 0.5
  %v920 = vmul.f32 %v773, 0.5
  %v921 = vmul.f32 %v776, 0.5
  %v922 = vmul.f32 %v779, 0.5
  %v923 = vmul.f32 %v782, 0.5
  %v924 = vmul.f32 %v785, 0.5
  %v925 = vmul.f32 %v788, 0.5
  %v926 = vmul.f32 %v791, 0.5
  %v927 = vmul.f32 %v794, 0.5
  %v928 = vmul.f32 %v797, 0.5
  %v929 = vmul.f32 %v800, 0.5
  %v930 = vmul.f32 %v803, 0.5
  %v931 = vmul.f32 %v806, 0.5
  %v932 = vmul.f32 %v809, 0.5
  %v933 = vmul.f32 %v812, 0.5
  %v934 = vmul.f32 %v815, 0.5
  %v935 = vmul.f32 %v818, 0.5
  %v936 = vmul.f32 %v821, 0.5
  %v937 = vmul.f32 %v824, 0.5
  %v938 = vmul.f32 %v827, 0.5
  %v939 = vmul.f32 %v830, 0.5
  %v940 = vmul.f32 %v833, 0.5
  %v941 = vmul.f32 %v836, 0.5
  %v942 = vmul.f32 %v839, 0.5
  %v943 = vmul.f32 %v842, 0.5
  %v944 = vmul.f32 %v845, 0.5
  %v945 = vmul.f32 %v848, 0.5
  %v946 = vmul.f32 %v851, 0.5
  %v947 = vmul.f32 %v854, 0.5
  %v948 = vmul.f32 %v857, 0.5
  %v949 = vmul.f32 %v860, 0.5
  %v950 = vmul.f32 %v863, 0.5
  %v951 = vmul.f32 %v866, 0.5
  %v952 = vmul.f32 %v869, 0.5
  %v953 = vmul.f32 %v872, 0.5
  %v954 = vmul.f32 %v875, 0.5
  %v955 = vmul.f32 %v878, 0.5
  %v956 = vmul.f32 %v881, 0.5
  %v957 = vmul.f32 %v884, 0.5
  %v958 = vmul.f32 %v887, 0.5
  %v959 = vmul.f32 %v890, 0.5
  %v960 = vmul.f32 %v893, 0.5
  %v961 = vmul.f32 %v896, 0.5
  %v962 = vmul.f32 %v707, 0.70710677
  %v963 = vmul.f32 %v710, 0.70710677
  %v964 = vmul.f32 %v713, 0.70710677
  %v965 = vmul.f32 %v716, 0.70710677
  %v966 = vmul.f32 %v719, 0.70710677
  %v967 = vmul.f32 %v722, 0.70710677
  %v968 = vmul.f32 %v725, 0.70710677
  %v969 = vmul.f32 %v728, 0.70710677
  %v970 = vmul.f32 %v731, 0.70710677
  %v971 = vmul.f32 %v734, 0.70710677
  %v972 = vmul.f32 %v737, 0.70710677
  %v973 = vmul.f32 %v740, 0.70710677
  %v974 = vmul.f32 %v743, 0.70710677
  %v975 = vmul.f32 %v746, 0.70710677
  %v976 = vmul.f32 %v749, 0.70710677
  %v977 = vmul.f32 %v752, 0.70710677
  %v978 = vmul.f32 %v755, 0.70710677
  %v979 = vmul.f32 %v758, 0.70710677
  %v980 = vmul.f32 %v761, 0.70710677
  %v981 = vmul.f32 %v764, 0.70710677
  %v982 = vmul.f32 %v767, 0.70710677
  %v983 = vmul.f32 %v770, 0.70710677
  %v984 = vmul.f32 %v773, 0.70710677
  %v985 = vmul.f32 %v776, 0.70710677
  %v986 = vmul.f32 %v779, 0.70710677
  %v987 = vmul.f32 %v782, 0.70710677
  %v988 = vmul.f32 %v785, 0.70710677
  %v989 = vmul.f32 %v788, 0.70710677
  %v990 = vmul.f32 %v791, 0.70710677
  %v991 = vmul.f32 %v794, 0.70710677
  %v992 = vmul.f32 %v797, 0.70710677
  %v993 = vmul.f32 %v800, 0.70710677
  %v994 = vmul.f32 %v803, 0.70710677
  %v995 = vmul.f32 %v806, 0.70710677
  %v996 = vmul.f32 %v809, 0.70710677
  %v997 = vmul.f32 %v812, 0.70710677
  %v998 = vmul.f32 %v815, 0.70710677
  %v999 = vmul.f32 %v818, 0.70710677
  %v1000 = vmul.f32 %v821, 0.70710677
  %v1001 = vmul.f32 %v824, 0.70710677
  %v1002 = vmul.f32 %v827, 0.70710677
  %v1003 = vmul.f32 %v830, 0.70710677
  %v1004 = vmul.f32 %v833, 0.70710677
  %v1005 = vmul.f32 %v836, 0.70710677
  %v1006 = vmul.f32 %v839, 0.70710677
  %v1007 = vmul.f32 %v842, 0.70710677
  %v1008 = vmul.f32 %v845, 0.70710677
  %v1009 = vmul.f32 %v848, 0.70710677
  %v1010 = vmul.f32 %v851, 0.70710677
  %v1011 = vmul.f32 %v854, 0.70710677
  %v1012 = vmul.f32 %v857, 0.70710677
  %v1013 = vmul.f32 %v860, 0.70710677
  %v1014 = vmul.f32 %v863, 0.70710677
  %v1015 = vmul.f32 %v866, 0.70710677
  %v1016 = vmul.f32 %v869, 0.70710677
  %v1017 = vmul.f32 %v872, 0.70710677
  %v1018 = vmul.f32 %v875, 0.70710677
  %v1019 = vmul.f32 %v878, 0.70710677
  %v1020 = vmul.f32 %v881, 0.70710677
  %v1021 = vmul.f32 %v884, 0.70710677
  %v1022 = vmul.f32 %v887, 0.70710677
  %v1023 = vmul.f32 %v890, 0.70710677
  %v1024 = vmul.f32 %v893, 0.70710677
  %v1025 = vmul.f32 %v896, 0.70710677
  %v1026 = vmul.f32 %v962, %v962
  %v1027 = vmin.f32 16.0, %v1026
  %v1028 = vmul.f32 %v1027, 2.1237322e-06
  %v1029 = vadd.f32 %v1028, 0.00028619796
  %v1030 = vmul.f32 %v1027, %v1029
  %v1031 = vadd.f32 %v1030, 0.0036580483
  %v1032 = vmul.f32 %v1027, %v1031
  %v1033 = vadd.f32 %v1032, 0.05243302
  %v1034 = vmul.f32 %v1027, %v1033
  %v1035 = vadd.f32 %v1034, 0.18741608
  %v1036 = vmul.f32 %v1027, %v1035
  %v1037 = vadd.f32 %v1036, 1.1283791
  %v1038 = vmul.f32 %v962, %v1037
  %v1039 = vmul.f32 %v1027, 3.8918573e-05
  %v1040 = vadd.f32 %v1039, 0.001143296
  %v1041 = vmul.f32 %v1027, %v1040
  %v1042 = vadd.f32 %v1041, 0.014752088
  %v1043 = vmul.f32 %v1027, %v1042
  %v1044 = vadd.f32 %v1043, 0.112945676
  %v1045 = vmul.f32 %v1027, %v1044
  %v1046 = vadd.f32 %v1045, 0.4994258
  %v1047 = vmul.f32 %v1027, %v1046
  %v1048 = vadd.f32 %v1047, 1.0
  %v1049 = vrcp.pop %v1048
  %v1050 = vmul.f32 %v1048, %v1049
  %v1051 = vsub.f32 1.0, %v1050
  %v1052 = vmul.f32 %v1049, %v1051
  %v1053 = vadd.f32 %v1049, %v1052
  %vm1054 = vweird.f32 %v1048
  %vm1055 = vweird.f32 %v1049
  %vm1056 = vmor %vm1054, %vm1055
  %v1057 = vsel %vm1056, %v1049, %v1053
  %v1058 = vand.u32 2147483647, %v1048
  %vm1059 = vcmp.eq.f32.partialorder %v1058, 8.507059e+37
  %v1060 = vand.u32 %v1048, 2147483648
  %v1061 = vor.u32 1.1754944e-38, %v1060
  %v1062 = vsel %vm1059, %v1061, %v1057
  %v1063 = vmul.f32 %v1038, %v1062
  %v1064 = vmin.f32 %v1063, 1.0
  %v1065 = vmax.f32 %v1064, -1.0
  %v1066 = vmul.f32 %v963, %v963
  %v1067 = vmin.f32 16.0, %v1066
  %v1068 = vmul.f32 %v1067, 2.1237322e-06
  %v1069 = vadd.f32 %v1068, 0.00028619796
  %v1070 = vmul.f32 %v1067, %v1069
  %v1071 = vadd.f32 %v1070, 0.0036580483
  %v1072 = vmul.f32 %v1067, %v1071
  %v1073 = vadd.f32 %v1072, 0.05243302
  %v1074 = vmul.f32 %v1067, %v1073
  %v1075 = vadd.f32 %v1074, 0.18741608
  %v1076 = vmul.f32 %v1067, %v1075
  %v1077 = vadd.f32 %v1076, 1.1283791
  %v1078 = vmul.f32 %v963, %v1077
  %v1079 = vmul.f32 %v1067, 3.8918573e-05
  %v1080 = vadd.f32 %v1079, 0.001143296
  %v1081 = vmul.f32 %v1067, %v1080
  %v1082 = vadd.f32 %v1081, 0.014752088
  %v1083 = vmul.f32 %v1067, %v1082
  %v1084 = vadd.f32 %v1083, 0.112945676
  %v1085 = vmul.f32 %v1067, %v1084
  %v1086 = vadd.f32 %v1085, 0.4994258
  %v1087 = vmul.f32 %v1067, %v1086
  %v1088 = vadd.f32 %v1087, 1.0
  %v1089 = vrcp.pop %v1088
  %v1090 = vmul.f32 %v1088, %v1089
  %v1091 = vsub.f32 1.0, %v1090
  %v1092 = vmul.f32 %v1089, %v1091
  %v1093 = vadd.f32 %v1089, %v1092
  %vm1094 = vweird.f32 %v1088
  %vm1095 = vweird.f32 %v1089
  %vm1096 = vmor %vm1094, %vm1095
  %v1097 = vsel %vm1096, %v1089, %v1093
  %v1098 = vand.u32 2147483647, %v1088
  %vm1099 = vcmp.eq.f32.partialorder %v1098, 8.507059e+37
  %v1100 = vand.u32 %v1088, 2147483648
  %v1101 = vor.u32 1.1754944e-38, %v1100
  %v1102 = vsel %vm1099, %v1101, %v1097
  %v1103 = vmul.f32 %v1078, %v1102
  %v1104 = vmin.f32 %v1103, 1.0
  %v1105 = vmax.f32 %v1104, -1.0
  %v1106 = vmul.f32 %v964, %v964
  %v1107 = vmin.f32 16.0, %v1106
  %v1108 = vmul.f32 %v1107, 2.1237322e-06
  %v1109 = vadd.f32 %v1108, 0.00028619796
  %v1110 = vmul.f32 %v1107, %v1109
  %v1111 = vadd.f32 %v1110, 0.0036580483
  %v1112 = vmul.f32 %v1107, %v1111
  %v1113 = vadd.f32 %v1112, 0.05243302
  %v1114 = vmul.f32 %v1107, %v1113
  %v1115 = vadd.f32 %v1114, 0.18741608
  %v1116 = vmul.f32 %v1107, %v1115
  %v1117 = vadd.f32 %v1116, 1.1283791
  %v1118 = vmul.f32 %v964, %v1117
  %v1119 = vmul.f32 %v1107, 3.8918573e-05
  %v1120 = vadd.f32 %v1119, 0.001143296
  %v1121 = vmul.f32 %v1107, %v1120
  %v1122 = vadd.f32 %v1121, 0.014752088
  %v1123 = vmul.f32 %v1107, %v1122
  %v1124 = vadd.f32 %v1123, 0.112945676
  %v1125 = vmul.f32 %v1107, %v1124
  %v1126 = vadd.f32 %v1125, 0.4994258
  %v1127 = vmul.f32 %v1107, %v1126
  %v1128 = vadd.f32 %v1127, 1.0
  %v1129 = vrcp.pop %v1128
  %v1130 = vmul.f32 %v1128, %v1129
  %v1131 = vsub.f32 1.0, %v1130
  %v1132 = vmul.f32 %v1129, %v1131
  %v1133 = vadd.f32 %v1129, %v1132
  %vm1134 = vweird.f32 %v1128
  %vm1135 = vweird.f32 %v1129
  %vm1136 = vmor %vm1134, %vm1135
  %v1137 = vsel %vm1136, %v1129, %v1133
  %v1138 = vand.u32 2147483647, %v1128
  %vm1139 = vcmp.eq.f32.partialorder %v1138, 8.507059e+37
  %v1140 = vand.u32 %v1128, 2147483648
  %v1141 = vor.u32 1.1754944e-38, %v1140
  %v1142 = vsel %vm1139, %v1141, %v1137
  %v1143 = vmul.f32 %v1118, %v1142
  %v1144 = vmin.f32 %v1143, 1.0
  %v1145 = vmax.f32 %v1144, -1.0
  %v1146 = vmul.f32 %v965, %v965
  %v1147 = vmin.f32 16.0, %v1146
  %v1148 = vmul.f32 %v1147, 2.1237322e-06
  %v1149 = vadd.f32 %v1148, 0.00028619796
  %v1150 = vmul.f32 %v1147, %v1149
  %v1151 = vadd.f32 %v1150, 0.0036580483
  %v1152 = vmul.f32 %v1147, %v1151
  %v1153 = vadd.f32 %v1152, 0.05243302
  %v1154 = vmul.f32 %v1147, %v1153
  %v1155 = vadd.f32 %v1154, 0.18741608
  %v1156 = vmul.f32 %v1147, %v1155
  %v1157 = vadd.f32 %v1156, 1.1283791
  %v1158 = vmul.f32 %v965, %v1157
  %v1159 = vmul.f32 %v1147, 3.8918573e-05
  %v1160 = vadd.f32 %v1159, 0.001143296
  %v1161 = vmul.f32 %v1147, %v1160
  %v1162 = vadd.f32 %v1161, 0.014752088
  %v1163 = vmul.f32 %v1147, %v1162
  %v1164 = vadd.f32 %v1163, 0.112945676
  %v1165 = vmul.f32 %v1147, %v1164
  %v1166 = vadd.f32 %v1165, 0.4994258
  %v1167 = vmul.f32 %v1147, %v1166
  %v1168 = vadd.f32 %v1167, 1.0
  %v1169 = vrcp.pop %v1168
  %v1170 = vmul.f32 %v1168, %v1169
  %v1171 = vsub.f32 1.0, %v1170
  %v1172 = vmul.f32 %v1169, %v1171
  %v1173 = vadd.f32 %v1169, %v1172
  %vm1174 = vweird.f32 %v1168
  %vm1175 = vweird.f32 %v1169
  %vm1176 = vmor %vm1174, %vm1175
  %v1177 = vsel %vm1176, %v1169, %v1173
  %v1178 = vand.u32 2147483647, %v1168
  %vm1179 = vcmp.eq.f32.partialorder %v1178, 8.507059e+37
  %v1180 = vand.u32 %v1168, 2147483648
  %v1181 = vor.u32 1.1754944e-38, %v1180
  %v1182 = vsel %vm1179, %v1181, %v1177
  %v1183 = vmul.f32 %v1158, %v1182
  %v1184 = vmin.f32 %v1183, 1.0
  %v1185 = vmax.f32 %v1184, -1.0
  %v1186 = vmul.f32 %v966, %v966
  %v1187 = vmin.f32 16.0, %v1186
  %v1188 = vmul.f32 %v1187, 2.1237322e-06
  %v1189 = vadd.f32 %v1188, 0.00028619796
  %v1190 = vmul.f32 %v1187, %v1189
  %v1191 = vadd.f32 %v1190, 0.0036580483
  %v1192 = vmul.f32 %v1187, %v1191
  %v1193 = vadd.f32 %v1192, 0.05243302
  %v1194 = vmul.f32 %v1187, %v1193
  %v1195 = vadd.f32 %v1194, 0.18741608
  %v1196 = vmul.f32 %v1187, %v1195
  %v1197 = vadd.f32 %v1196, 1.1283791
  %v1198 = vmul.f32 %v966, %v1197
  %v1199 = vmul.f32 %v1187, 3.8918573e-05
  %v1200 = vadd.f32 %v1199, 0.001143296
  %v1201 = vmul.f32 %v1187, %v1200
  %v1202 = vadd.f32 %v1201, 0.014752088
  %v1203 = vmul.f32 %v1187, %v1202
  %v1204 = vadd.f32 %v1203, 0.112945676
  %v1205 = vmul.f32 %v1187, %v1204
  %v1206 = vadd.f32 %v1205, 0.4994258
  %v1207 = vmul.f32 %v1187, %v1206
  %v1208 = vadd.f32 %v1207, 1.0
  %v1209 = vrcp.pop %v1208
  %v1210 = vmul.f32 %v1208, %v1209
  %v1211 = vsub.f32 1.0, %v1210
  %v1212 = vmul.f32 %v1209, %v1211
  %v1213 = vadd.f32 %v1209, %v1212
  %vm1214 = vweird.f32 %v1208
  %vm1215 = vweird.f32 %v1209
  %vm1216 = vmor %vm1214, %vm1215
  %v1217 = vsel %vm1216, %v1209, %v1213
  %v1218 = vand.u32 2147483647, %v1208
  %vm1219 = vcmp.eq.f32.partialorder %v1218, 8.507059e+37
  %v1220 = vand.u32 %v1208, 2147483648
  %v1221 = vor.u32 1.1754944e-38, %v1220
  %v1222 = vsel %vm1219, %v1221, %v1217
  %v1223 = vmul.f32 %v1198, %v1222
  %v1224 = vmin.f32 %v1223, 1.0
  %v1225 = vmax.f32 %v1224, -1.0
  %v1226 = vmul.f32 %v967, %v967
  %v1227 = vmin.f32 16.0, %v1226
  %v1228 = vmul.f32 %v1227, 2.1237322e-06
  %v1229 = vadd.f32 %v1228, 0.00028619796
  %v1230 = vmul.f32 %v1227, %v1229
  %v1231 = vadd.f32 %v1230, 0.0036580483
  %v1232 = vmul.f32 %v1227, %v1231
  %v1233 = vadd.f32 %v1232, 0.05243302
  %v1234 = vmul.f32 %v1227, %v1233
  %v1235 = vadd.f32 %v1234, 0.18741608
  %v1236 = vmul.f32 %v1227, %v1235
  %v1237 = vadd.f32 %v1236, 1.1283791
  %v1238 = vmul.f32 %v967, %v1237
  %v1239 = vmul.f32 %v1227, 3.8918573e-05
  %v1240 = vadd.f32 %v1239, 0.001143296
  %v1241 = vmul.f32 %v1227, %v1240
  %v1242 = vadd.f32 %v1241, 0.014752088
  %v1243 = vmul.f32 %v1227, %v1242
  %v1244 = vadd.f32 %v1243, 0.112945676
  %v1245 = vmul.f32 %v1227, %v1244
  %v1246 = vadd.f32 %v1245, 0.4994258
  %v1247 = vmul.f32 %v1227, %v1246
  %v1248 = vadd.f32 %v1247, 1.0
  %v1249 = vrcp.pop %v1248
  %v1250 = vmul.f32 %v1248, %v1249
  %v1251 = vsub.f32 1.0, %v1250
  %v1252 = vmul.f32 %v1249, %v1251
  %v1253 = vadd.f32 %v1249, %v1252
  %vm1254 = vweird.f32 %v1248
  %vm1255 = vweird.f32 %v1249
  %vm1256 = vmor %vm1254, %vm1255
  %v1257 = vsel %vm1256, %v1249, %v1253
  %v1258 = vand.u32 2147483647, %v1248
  %vm1259 = vcmp.eq.f32.partialorder %v1258, 8.507059e+37
  %v1260 = vand.u32 %v1248, 2147483648
  %v1261 = vor.u32 1.1754944e-38, %v1260
  %v1262 = vsel %vm1259, %v1261, %v1257
  %v1263 = vmul.f32 %v1238, %v1262
  %v1264 = vmin.f32 %v1263, 1.0
  %v1265 = vmax.f32 %v1264, -1.0
  %v1266 = vmul.f32 %v968, %v968
  %v1267 = vmin.f32 16.0, %v1266
  %v1268 = vmul.f32 %v1267, 2.1237322e-06
  %v1269 = vadd.f32 %v1268, 0.00028619796
  %v1270 = vmul.f32 %v1267, %v1269
  %v1271 = vadd.f32 %v1270, 0.0036580483
  %v1272 = vmul.f32 %v1267, %v1271
  %v1273 = vadd.f32 %v1272, 0.05243302
  %v1274 = vmul.f32 %v1267, %v1273
  %v1275 = vadd.f32 %v1274, 0.18741608
  %v1276 = vmul.f32 %v1267, %v1275
  %v1277 = vadd.f32 %v1276, 1.1283791
  %v1278 = vmul.f32 %v968, %v1277
  %v1279 = vmul.f32 %v1267, 3.8918573e-05
  %v1280 = vadd.f32 %v1279, 0.001143296
  %v1281 = vmul.f32 %v1267, %v1280
  %v1282 = vadd.f32 %v1281, 0.014752088
  %v1283 = vmul.f32 %v1267, %v1282
  %v1284 = vadd.f32 %v1283, 0.112945676
  %v1285 = vmul.f32 %v1267, %v1284
  %v1286 = vadd.f32 %v1285, 0.4994258
  %v1287 = vmul.f32 %v1267, %v1286
  %v1288 = vadd.f32 %v1287, 1.0
  %v1289 = vrcp.pop %v1288
  %v1290 = vmul.f32 %v1288, %v1289
  %v1291 = vsub.f32 1.0, %v1290
  %v1292 = vmul.f32 %v1289, %v1291
  %v1293 = vadd.f32 %v1289, %v1292
  %vm1294 = vweird.f32 %v1288
  %vm1295 = vweird.f32 %v1289
  %vm1296 = vmor %vm1294, %vm1295
  %v1297 = vsel %vm1296, %v1289, %v1293
  %v1298 = vand.u32 2147483647, %v1288
  %vm1299 = vcmp.eq.f32.partialorder %v1298, 8.507059e+37
  %v1300 = vand.u32 %v1288, 2147483648
  %v1301 = vor.u32 1.1754944e-38, %v1300
  %v1302 = vsel %vm1299, %v1301, %v1297
  %v1303 = vmul.f32 %v1278, %v1302
  %v1304 = vmin.f32 %v1303, 1.0
  %v1305 = vmax.f32 %v1304, -1.0
  %v1306 = vmul.f32 %v969, %v969
  %v1307 = vmin.f32 16.0, %v1306
  %v1308 = vmul.f32 %v1307, 2.1237322e-06
  %v1309 = vadd.f32 %v1308, 0.00028619796
  %v1310 = vmul.f32 %v1307, %v1309
  %v1311 = vadd.f32 %v1310, 0.0036580483
  %v1312 = vmul.f32 %v1307, %v1311
  %v1313 = vadd.f32 %v1312, 0.05243302
  %v1314 = vmul.f32 %v1307, %v1313
  %v1315 = vadd.f32 %v1314, 0.18741608
  %v1316 = vmul.f32 %v1307, %v1315
  %v1317 = vadd.f32 %v1316, 1.1283791
  %v1318 = vmul.f32 %v969, %v1317
  %v1319 = vmul.f32 %v1307, 3.8918573e-05
  %v1320 = vadd.f32 %v1319, 0.001143296
  %v1321 = vmul.f32 %v1307, %v1320
  %v1322 = vadd.f32 %v1321, 0.014752088
  %v1323 = vmul.f32 %v1307, %v1322
  %v1324 = vadd.f32 %v1323, 0.112945676
  %v1325 = vmul.f32 %v1307, %v1324
  %v1326 = vadd.f32 %v1325, 0.4994258
  %v1327 = vmul.f32 %v1307, %v1326
  %v1328 = vadd.f32 %v1327, 1.0
  %v1329 = vrcp.pop %v1328
  %v1330 = vmul.f32 %v1328, %v1329
  %v1331 = vsub.f32 1.0, %v1330
  %v1332 = vmul.f32 %v1329, %v1331
  %v1333 = vadd.f32 %v1329, %v1332
  %vm1334 = vweird.f32 %v1328
  %vm1335 = vweird.f32 %v1329
  %vm1336 = vmor %vm1334, %vm1335
  %v1337 = vsel %vm1336, %v1329, %v1333
  %v1338 = vand.u32 2147483647, %v1328
  %vm1339 = vcmp.eq.f32.partialorder %v1338, 8.507059e+37
  %v1340 = vand.u32 %v1328, 2147483648
  %v1341 = vor.u32 1.1754944e-38, %v1340
  %v1342 = vsel %vm1339, %v1341, %v1337
  %v1343 = vmul.f32 %v1318, %v1342
  %v1344 = vmin.f32 %v1343, 1.0
  %v1345 = vmax.f32 %v1344, -1.0
  %v1346 = vmul.f32 %v970, %v970
  %v1347 = vmin.f32 16.0, %v1346
  %v1348 = vmul.f32 %v1347, 2.1237322e-06
  %v1349 = vadd.f32 %v1348, 0.00028619796
  %v1350 = vmul.f32 %v1347, %v1349
  %v1351 = vadd.f32 %v1350, 0.0036580483
  %v1352 = vmul.f32 %v1347, %v1351
  %v1353 = vadd.f32 %v1352, 0.05243302
  %v1354 = vmul.f32 %v1347, %v1353
  %v1355 = vadd.f32 %v1354, 0.18741608
  %v1356 = vmul.f32 %v1347, %v1355
  %v1357 = vadd.f32 %v1356, 1.1283791
  %v1358 = vmul.f32 %v970, %v1357
  %v1359 = vmul.f32 %v1347, 3.8918573e-05
  %v1360 = vadd.f32 %v1359, 0.001143296
  %v1361 = vmul.f32 %v1347, %v1360
  %v1362 = vadd.f32 %v1361, 0.014752088
  %v1363 = vmul.f32 %v1347, %v1362
  %v1364 = vadd.f32 %v1363, 0.112945676
  %v1365 = vmul.f32 %v1347, %v1364
  %v1366 = vadd.f32 %v1365, 0.4994258
  %v1367 = vmul.f32 %v1347, %v1366
  %v1368 = vadd.f32 %v1367, 1.0
  %v1369 = vrcp.pop %v1368
  %v1370 = vmul.f32 %v1368, %v1369
  %v1371 = vsub.f32 1.0, %v1370
  %v1372 = vmul.f32 %v1369, %v1371
  %v1373 = vadd.f32 %v1369, %v1372
  %vm1374 = vweird.f32 %v1368
  %vm1375 = vweird.f32 %v1369
  %vm1376 = vmor %vm1374, %vm1375
  %v1377 = vsel %vm1376, %v1369, %v1373
  %v1378 = vand.u32 2147483647, %v1368
  %vm1379 = vcmp.eq.f32.partialorder %v1378, 8.507059e+37
  %v1380 = vand.u32 %v1368, 2147483648
  %v1381 = vor.u32 1.1754944e-38, %v1380
  %v1382 = vsel %vm1379, %v1381, %v1377
  %v1383 = vmul.f32 %v1358, %v1382
  %v1384 = vmin.f32 %v1383, 1.0
  %v1385 = vmax.f32 %v1384, -1.0
  %v1386 = vmul.f32 %v971, %v971
  %v1387 = vmin.f32 16.0, %v1386
  %v1388 = vmul.f32 %v1387, 2.1237322e-06
  %v1389 = vadd.f32 %v1388, 0.00028619796
  %v1390 = vmul.f32 %v1387, %v1389
  %v1391 = vadd.f32 %v1390, 0.0036580483
  %v1392 = vmul.f32 %v1387, %v1391
  %v1393 = vadd.f32 %v1392, 0.05243302
  %v1394 = vmul.f32 %v1387, %v1393
  %v1395 = vadd.f32 %v1394, 0.18741608
  %v1396 = vmul.f32 %v1387, %v1395
  %v1397 = vadd.f32 %v1396, 1.1283791
  %v1398 = vmul.f32 %v971, %v1397
  %v1399 = vmul.f32 %v1387, 3.8918573e-05
  %v1400 = vadd.f32 %v1399, 0.001143296
  %v1401 = vmul.f32 %v1387, %v1400
  %v1402 = vadd.f32 %v1401, 0.014752088
  %v1403 = vmul.f32 %v1387, %v1402
  %v1404 = vadd.f32 %v1403, 0.112945676
  %v1405 = vmul.f32 %v1387, %v1404
  %v1406 = vadd.f32 %v1405, 0.4994258
  %v1407 = vmul.f32 %v1387, %v1406
  %v1408 = vadd.f32 %v1407, 1.0
  %v1409 = vrcp.pop %v1408
  %v1410 = vmul.f32 %v1408, %v1409
  %v1411 = vsub.f32 1.0, %v1410
  %v1412 = vmul.f32 %v1409, %v1411
  %v1413 = vadd.f32 %v1409, %v1412
  %vm1414 = vweird.f32 %v1408
  %vm1415 = vweird.f32 %v1409
  %vm1416 = vmor %vm1414, %vm1415
  %v1417 = vsel %vm1416, %v1409, %v1413
  %v1418 = vand.u32 2147483647, %v1408
  %vm1419 = vcmp.eq.f32.partialorder %v1418, 8.507059e+37
  %v1420 = vand.u32 %v1408, 2147483648
  %v1421 = vor.u32 1.1754944e-38, %v1420
  %v1422 = vsel %vm1419, %v1421, %v1417
  %v1423 = vmul.f32 %v1398, %v1422
  %v1424 = vmin.f32 %v1423, 1.0
  %v1425 = vmax.f32 %v1424, -1.0
  %v1426 = vmul.f32 %v972, %v972
  %v1427 = vmin.f32 16.0, %v1426
  %v1428 = vmul.f32 %v1427, 2.1237322e-06
  %v1429 = vadd.f32 %v1428, 0.00028619796
  %v1430 = vmul.f32 %v1427, %v1429
  %v1431 = vadd.f32 %v1430, 0.0036580483
  %v1432 = vmul.f32 %v1427, %v1431
  %v1433 = vadd.f32 %v1432, 0.05243302
  %v1434 = vmul.f32 %v1427, %v1433
  %v1435 = vadd.f32 %v1434, 0.18741608
  %v1436 = vmul.f32 %v1427, %v1435
  %v1437 = vadd.f32 %v1436, 1.1283791
  %v1438 = vmul.f32 %v972, %v1437
  %v1439 = vmul.f32 %v1427, 3.8918573e-05
  %v1440 = vadd.f32 %v1439, 0.001143296
  %v1441 = vmul.f32 %v1427, %v1440
  %v1442 = vadd.f32 %v1441, 0.014752088
  %v1443 = vmul.f32 %v1427, %v1442
  %v1444 = vadd.f32 %v1443, 0.112945676
  %v1445 = vmul.f32 %v1427, %v1444
  %v1446 = vadd.f32 %v1445, 0.4994258
  %v1447 = vmul.f32 %v1427, %v1446
  %v1448 = vadd.f32 %v1447, 1.0
  %v1449 = vrcp.pop %v1448
  %v1450 = vmul.f32 %v1448, %v1449
  %v1451 = vsub.f32 1.0, %v1450
  %v1452 = vmul.f32 %v1449, %v1451
  %v1453 = vadd.f32 %v1449, %v1452
  %vm1454 = vweird.f32 %v1448
  %vm1455 = vweird.f32 %v1449
  %vm1456 = vmor %vm1454, %vm1455
  %v1457 = vsel %vm1456, %v1449, %v1453
  %v1458 = vand.u32 2147483647, %v1448
  %vm1459 = vcmp.eq.f32.partialorder %v1458, 8.507059e+37
  %v1460 = vand.u32 %v1448, 2147483648
  %v1461 = vor.u32 1.1754944e-38, %v1460
  %v1462 = vsel %vm1459, %v1461, %v1457
  %v1463 = vmul.f32 %v1438, %v1462
  %v1464 = vmin.f32 %v1463, 1.0
  %v1465 = vmax.f32 %v1464, -1.0
  %v1466 = vmul.f32 %v973, %v973
  %v1467 = vmin.f32 16.0, %v1466
  %v1468 = vmul.f32 %v1467, 2.1237322e-06
  %v1469 = vadd.f32 %v1468, 0.00028619796
  %v1470 = vmul.f32 %v1467, %v1469
  %v1471 = vadd.f32 %v1470, 0.0036580483
  %v1472 = vmul.f32 %v1467, %v1471
  %v1473 = vadd.f32 %v1472, 0.05243302
  %v1474 = vmul.f32 %v1467, %v1473
  %v1475 = vadd.f32 %v1474, 0.18741608
  %v1476 = vmul.f32 %v1467, %v1475
  %v1477 = vadd.f32 %v1476, 1.1283791
  %v1478 = vmul.f32 %v973, %v1477
  %v1479 = vmul.f32 %v1467, 3.8918573e-05
  %v1480 = vadd.f32 %v1479, 0.001143296
  %v1481 = vmul.f32 %v1467, %v1480
  %v1482 = vadd.f32 %v1481, 0.014752088
  %v1483 = vmul.f32 %v1467, %v1482
  %v1484 = vadd.f32 %v1483, 0.112945676
  %v1485 = vmul.f32 %v1467, %v1484
  %v1486 = vadd.f32 %v1485, 0.4994258
  %v1487 = vmul.f32 %v1467, %v1486
  %v1488 = vadd.f32 %v1487, 1.0
  %v1489 = vrcp.pop %v1488
  %v1490 = vmul.f32 %v1488, %v1489
  %v1491 = vsub.f32 1.0, %v1490
  %v1492 = vmul.f32 %v1489, %v1491
  %v1493 = vadd.f32 %v1489, %v1492
  %vm1494 = vweird.f32 %v1488
  %vm1495 = vweird.f32 %v1489
  %vm1496 = vmor %vm1494, %vm1495
  %v1497 = vsel %vm1496, %v1489, %v1493
  %v1498 = vand.u32 2147483647, %v1488
  %vm1499 = vcmp.eq.f32.partialorder %v1498, 8.507059e+37
  %v1500 = vand.u32 %v1488, 2147483648
  %v1501 = vor.u32 1.1754944e-38, %v1500
  %v1502 = vsel %vm1499, %v1501, %v1497
  %v1503 = vmul.f32 %v1478, %v1502
  %v1504 = vmin.f32 %v1503, 1.0
  %v1505 = vmax.f32 %v1504, -1.0
  %v1506 = vmul.f32 %v974, %v974
  %v1507 = vmin.f32 16.0, %v1506
  %v1508 = vmul.f32 %v1507, 2.1237322e-06
  %v1509 = vadd.f32 %v1508, 0.00028619796
  %v1510 = vmul.f32 %v1507, %v1509
  %v1511 = vadd.f32 %v1510, 0.0036580483
  %v1512 = vmul.f32 %v1507, %v1511
  %v1513 = vadd.f32 %v1512, 0.05243302
  %v1514 = vmul.f32 %v1507, %v1513
  %v1515 = vadd.f32 %v1514, 0.18741608
  %v1516 = vmul.f32 %v1507, %v1515
  %v1517 = vadd.f32 %v1516, 1.1283791
  %v1518 = vmul.f32 %v974, %v1517
  %v1519 = vmul.f32 %v1507, 3.8918573e-05
  %v1520 = vadd.f32 %v1519, 0.001143296
  %v1521 = vmul.f32 %v1507, %v1520
  %v1522 = vadd.f32 %v1521, 0.014752088
  %v1523 = vmul.f32 %v1507, %v1522
  %v1524 = vadd.f32 %v1523, 0.112945676
  %v1525 = vmul.f32 %v1507, %v1524
  %v1526 = vadd.f32 %v1525, 0.4994258
  %v1527 = vmul.f32 %v1507, %v1526
  %v1528 = vadd.f32 %v1527, 1.0
  %v1529 = vrcp.pop %v1528
  %v1530 = vmul.f32 %v1528, %v1529
  %v1531 = vsub.f32 1.0, %v1530
  %v1532 = vmul.f32 %v1529, %v1531
  %v1533 = vadd.f32 %v1529, %v1532
  %vm1534 = vweird.f32 %v1528
  %vm1535 = vweird.f32 %v1529
  %vm1536 = vmor %vm1534, %vm1535
  %v1537 = vsel %vm1536, %v1529, %v1533
  %v1538 = vand.u32 2147483647, %v1528
  %vm1539 = vcmp.eq.f32.partialorder %v1538, 8.507059e+37
  %v1540 = vand.u32 %v1528, 2147483648
  %v1541 = vor.u32 1.1754944e-38, %v1540
  %v1542 = vsel %vm1539, %v1541, %v1537
  %v1543 = vmul.f32 %v1518, %v1542
  %v1544 = vmin.f32 %v1543, 1.0
  %v1545 = vmax.f32 %v1544, -1.0
  %v1546 = vmul.f32 %v975, %v975
  %v1547 = vmin.f32 16.0, %v1546
  %v1548 = vmul.f32 %v1547, 2.1237322e-06
  %v1549 = vadd.f32 %v1548, 0.00028619796
  %v1550 = vmul.f32 %v1547, %v1549
  %v1551 = vadd.f32 %v1550, 0.0036580483
  %v1552 = vmul.f32 %v1547, %v1551
  %v1553 = vadd.f32 %v1552, 0.05243302
  %v1554 = vmul.f32 %v1547, %v1553
  %v1555 = vadd.f32 %v1554, 0.18741608
  %v1556 = vmul.f32 %v1547, %v1555
  %v1557 = vadd.f32 %v1556, 1.1283791
  %v1558 = vmul.f32 %v975, %v1557
  %v1559 = vmul.f32 %v1547, 3.8918573e-05
  %v1560 = vadd.f32 %v1559, 0.001143296
  %v1561 = vmul.f32 %v1547, %v1560
  %v1562 = vadd.f32 %v1561, 0.014752088
  %v1563 = vmul.f32 %v1547, %v1562
  %v1564 = vadd.f32 %v1563, 0.112945676
  %v1565 = vmul.f32 %v1547, %v1564
  %v1566 = vadd.f32 %v1565, 0.4994258
  %v1567 = vmul.f32 %v1547, %v1566
  %v1568 = vadd.f32 %v1567, 1.0
  %v1569 = vrcp.pop %v1568
  %v1570 = vmul.f32 %v1568, %v1569
  %v1571 = vsub.f32 1.0, %v1570
  %v1572 = vmul.f32 %v1569, %v1571
  %v1573 = vadd.f32 %v1569, %v1572
  %vm1574 = vweird.f32 %v1568
  %vm1575 = vweird.f32 %v1569
  %vm1576 = vmor %vm1574, %vm1575
  %v1577 = vsel %vm1576, %v1569, %v1573
  %v1578 = vand.u32 2147483647, %v1568
  %vm1579 = vcmp.eq.f32.partialorder %v1578, 8.507059e+37
  %v1580 = vand.u32 %v1568, 2147483648
  %v1581 = vor.u32 1.1754944e-38, %v1580
  %v1582 = vsel %vm1579, %v1581, %v1577
  %v1583 = vmul.f32 %v1558, %v1582
  %v1584 = vmin.f32 %v1583, 1.0
  %v1585 = vmax.f32 %v1584, -1.0
  %v1586 = vmul.f32 %v976, %v976
  %v1587 = vmin.f32 16.0, %v1586
  %v1588 = vmul.f32 %v1587, 2.1237322e-06
  %v1589 = vadd.f32 %v1588, 0.00028619796
  %v1590 = vmul.f32 %v1587, %v1589
  %v1591 = vadd.f32 %v1590, 0.0036580483
  %v1592 = vmul.f32 %v1587, %v1591
  %v1593 = vadd.f32 %v1592, 0.05243302
  %v1594 = vmul.f32 %v1587, %v1593
  %v1595 = vadd.f32 %v1594, 0.18741608
  %v1596 = vmul.f32 %v1587, %v1595
  %v1597 = vadd.f32 %v1596, 1.1283791
  %v1598 = vmul.f32 %v976, %v1597
  %v1599 = vmul.f32 %v1587, 3.8918573e-05
  %v1600 = vadd.f32 %v1599, 0.001143296
  %v1601 = vmul.f32 %v1587, %v1600
  %v1602 = vadd.f32 %v1601, 0.014752088
  %v1603 = vmul.f32 %v1587, %v1602
  %v1604 = vadd.f32 %v1603, 0.112945676
  %v1605 = vmul.f32 %v1587, %v1604
  %v1606 = vadd.f32 %v1605, 0.4994258
  %v1607 = vmul.f32 %v1587, %v1606
  %v1608 = vadd.f32 %v1607, 1.0
  %v1609 = vrcp.pop %v1608
  %v1610 = vmul.f32 %v1608, %v1609
  %v1611 = vsub.f32 1.0, %v1610
  %v1612 = vmul.f32 %v1609, %v1611
  %v1613 = vadd.f32 %v1609, %v1612
  %vm1614 = vweird.f32 %v1608
  %vm1615 = vweird.f32 %v1609
  %vm1616 = vmor %vm1614, %vm1615
  %v1617 = vsel %vm1616, %v1609, %v1613
  %v1618 = vand.u32 2147483647, %v1608
  %vm1619 = vcmp.eq.f32.partialorder %v1618, 8.507059e+37
  %v1620 = vand.u32 %v1608, 2147483648
  %v1621 = vor.u32 1.1754944e-38, %v1620
  %v1622 = vsel %vm1619, %v1621, %v1617
  %v1623 = vmul.f32 %v1598, %v1622
  %v1624 = vmin.f32 %v1623, 1.0
  %v1625 = vmax.f32 %v1624, -1.0
  %v1626 = vmul.f32 %v977, %v977
  %v1627 = vmin.f32 16.0, %v1626
  %v1628 = vmul.f32 %v1627, 2.1237322e-06
  %v1629 = vadd.f32 %v1628, 0.00028619796
  %v1630 = vmul.f32 %v1627, %v1629
  %v1631 = vadd.f32 %v1630, 0.0036580483
  %v1632 = vmul.f32 %v1627, %v1631
  %v1633 = vadd.f32 %v1632, 0.05243302
  %v1634 = vmul.f32 %v1627, %v1633
  %v1635 = vadd.f32 %v1634, 0.18741608
  %v1636 = vmul.f32 %v1627, %v1635
  %v1637 = vadd.f32 %v1636, 1.1283791
  %v1638 = vmul.f32 %v977, %v1637
  %v1639 = vmul.f32 %v1627, 3.8918573e-05
  %v1640 = vadd.f32 %v1639, 0.001143296
  %v1641 = vmul.f32 %v1627, %v1640
  %v1642 = vadd.f32 %v1641, 0.014752088
  %v1643 = vmul.f32 %v1627, %v1642
  %v1644 = vadd.f32 %v1643, 0.112945676
  %v1645 = vmul.f32 %v1627, %v1644
  %v1646 = vadd.f32 %v1645, 0.4994258
  %v1647 = vmul.f32 %v1627, %v1646
  %v1648 = vadd.f32 %v1647, 1.0
  %v1649 = vrcp.pop %v1648
  %v1650 = vmul.f32 %v1648, %v1649
  %v1651 = vsub.f32 1.0, %v1650
  %v1652 = vmul.f32 %v1649, %v1651
  %v1653 = vadd.f32 %v1649, %v1652
  %vm1654 = vweird.f32 %v1648
  %vm1655 = vweird.f32 %v1649
  %vm1656 = vmor %vm1654, %vm1655
  %v1657 = vsel %vm1656, %v1649, %v1653
  %v1658 = vand.u32 2147483647, %v1648
  %vm1659 = vcmp.eq.f32.partialorder %v1658, 8.507059e+37
  %v1660 = vand.u32 %v1648, 2147483648
  %v1661 = vor.u32 1.1754944e-38, %v1660
  %v1662 = vsel %vm1659, %v1661, %v1657
  %v1663 = vmul.f32 %v1638, %v1662
  %v1664 = vmin.f32 %v1663, 1.0
  %v1665 = vmax.f32 %v1664, -1.0
  %v1666 = vmul.f32 %v978, %v978
  %v1667 = vmin.f32 16.0, %v1666
  %v1668 = vmul.f32 %v1667, 2.1237322e-06
  %v1669 = vadd.f32 %v1668, 0.00028619796
  %v1670 = vmul.f32 %v1667, %v1669
  %v1671 = vadd.f32 %v1670, 0.0036580483
  %v1672 = vmul.f32 %v1667, %v1671
  %v1673 = vadd.f32 %v1672, 0.05243302
  %v1674 = vmul.f32 %v1667, %v1673
  %v1675 = vadd.f32 %v1674, 0.18741608
  %v1676 = vmul.f32 %v1667, %v1675
  %v1677 = vadd.f32 %v1676, 1.1283791
  %v1678 = vmul.f32 %v978, %v1677
  %v1679 = vmul.f32 %v1667, 3.8918573e-05
  %v1680 = vadd.f32 %v1679, 0.001143296
  %v1681 = vmul.f32 %v1667, %v1680
  %v1682 = vadd.f32 %v1681, 0.014752088
  %v1683 = vmul.f32 %v1667, %v1682
  %v1684 = vadd.f32 %v1683, 0.112945676
  %v1685 = vmul.f32 %v1667, %v1684
  %v1686 = vadd.f32 %v1685, 0.4994258
  %v1687 = vmul.f32 %v1667, %v1686
  %v1688 = vadd.f32 %v1687, 1.0
  %v1689 = vrcp.pop %v1688
  %v1690 = vmul.f32 %v1688, %v1689
  %v1691 = vsub.f32 1.0, %v1690
  %v1692 = vmul.f32 %v1689, %v1691
  %v1693 = vadd.f32 %v1689, %v1692
  %vm1694 = vweird.f32 %v1688
  %vm1695 = vweird.f32 %v1689
  %vm1696 = vmor %vm1694, %vm1695
  %v1697 = vsel %vm1696, %v1689, %v1693
  %v1698 = vand.u32 2147483647, %v1688
  %vm1699 = vcmp.eq.f32.partialorder %v1698, 8.507059e+37
  %v1700 = vand.u32 %v1688, 2147483648
  %v1701 = vor.u32 1.1754944e-38, %v1700
  %v1702 = vsel %vm1699, %v1701, %v1697
  %v1703 = vmul.f32 %v1678, %v1702
  %v1704 = vmin.f32 %v1703, 1.0
  %v1705 = vmax.f32 %v1704, -1.0
  %v1706 = vmul.f32 %v979, %v979
  %v1707 = vmin.f32 16.0, %v1706
  %v1708 = vmul.f32 %v1707, 2.1237322e-06
  %v1709 = vadd.f32 %v1708, 0.00028619796
  %v1710 = vmul.f32 %v1707, %v1709
  %v1711 = vadd.f32 %v1710, 0.0036580483
  %v1712 = vmul.f32 %v1707, %v1711
  %v1713 = vadd.f32 %v1712, 0.05243302
  %v1714 = vmul.f32 %v1707, %v1713
  %v1715 = vadd.f32 %v1714, 0.18741608
  %v1716 = vmul.f32 %v1707, %v1715
  %v1717 = vadd.f32 %v1716, 1.1283791
  %v1718 = vmul.f32 %v979, %v1717
  %v1719 = vmul.f32 %v1707, 3.8918573e-05
  %v1720 = vadd.f32 %v1719, 0.001143296
  %v1721 = vmul.f32 %v1707, %v1720
  %v1722 = vadd.f32 %v1721, 0.014752088
  %v1723 = vmul.f32 %v1707, %v1722
  %v1724 = vadd.f32 %v1723, 0.112945676
  %v1725 = vmul.f32 %v1707, %v1724
  %v1726 = vadd.f32 %v1725, 0.4994258
  %v1727 = vmul.f32 %v1707, %v1726
  %v1728 = vadd.f32 %v1727, 1.0
  %v1729 = vrcp.pop %v1728
  %v1730 = vmul.f32 %v1728, %v1729
  %v1731 = vsub.f32 1.0, %v1730
  %v1732 = vmul.f32 %v1729, %v1731
  %v1733 = vadd.f32 %v1729, %v1732
  %vm1734 = vweird.f32 %v1728
  %vm1735 = vweird.f32 %v1729
  %vm1736 = vmor %vm1734, %vm1735
  %v1737 = vsel %vm1736, %v1729, %v1733
  %v1738 = vand.u32 2147483647, %v1728
  %vm1739 = vcmp.eq.f32.partialorder %v1738, 8.507059e+37
  %v1740 = vand.u32 %v1728, 2147483648
  %v1741 = vor.u32 1.1754944e-38, %v1740
  %v1742 = vsel %vm1739, %v1741, %v1737
  %v1743 = vmul.f32 %v1718, %v1742
  %v1744 = vmin.f32 %v1743, 1.0
  %v1745 = vmax.f32 %v1744, -1.0
  %v1746 = vmul.f32 %v980, %v980
  %v1747 = vmin.f32 16.0, %v1746
  %v1748 = vmul.f32 %v1747, 2.1237322e-06
  %v1749 = vadd.f32 %v1748, 0.00028619796
  %v1750 = vmul.f32 %v1747, %v1749
  %v1751 = vadd.f32 %v1750, 0.0036580483
  %v1752 = vmul.f32 %v1747, %v1751
  %v1753 = vadd.f32 %v1752, 0.05243302
  %v1754 = vmul.f32 %v1747, %v1753
  %v1755 = vadd.f32 %v1754, 0.18741608
  %v1756 = vmul.f32 %v1747, %v1755
  %v1757 = vadd.f32 %v1756, 1.1283791
  %v1758 = vmul.f32 %v980, %v1757
  %v1759 = vmul.f32 %v1747, 3.8918573e-05
  %v1760 = vadd.f32 %v1759, 0.001143296
  %v1761 = vmul.f32 %v1747, %v1760
  %v1762 = vadd.f32 %v1761, 0.014752088
  %v1763 = vmul.f32 %v1747, %v1762
  %v1764 = vadd.f32 %v1763, 0.112945676
  %v1765 = vmul.f32 %v1747, %v1764
  %v1766 = vadd.f32 %v1765, 0.4994258
  %v1767 = vmul.f32 %v1747, %v1766
  %v1768 = vadd.f32 %v1767, 1.0
  %v1769 = vrcp.pop %v1768
  %v1770 = vmul.f32 %v1768, %v1769
  %v1771 = vsub.f32 1.0, %v1770
  %v1772 = vmul.f32 %v1769, %v1771
  %v1773 = vadd.f32 %v1769, %v1772
  %vm1774 = vweird.f32 %v1768
  %vm1775 = vweird.f32 %v1769
  %vm1776 = vmor %vm1774, %vm1775
  %v1777 = vsel %vm1776, %v1769, %v1773
  %v1778 = vand.u32 2147483647, %v1768
  %vm1779 = vcmp.eq.f32.partialorder %v1778, 8.507059e+37
  %v1780 = vand.u32 %v1768, 2147483648
  %v1781 = vor.u32 1.1754944e-38, %v1780
  %v1782 = vsel %vm1779, %v1781, %v1777
  %v1783 = vmul.f32 %v1758, %v1782
  %v1784 = vmin.f32 %v1783, 1.0
  %v1785 = vmax.f32 %v1784, -1.0
  %v1786 = vmul.f32 %v981, %v981
  %v1787 = vmin.f32 16.0, %v1786
  %v1788 = vmul.f32 %v1787, 2.1237322e-06
  %v1789 = vadd.f32 %v1788, 0.00028619796
  %v1790 = vmul.f32 %v1787, %v1789
  %v1791 = vadd.f32 %v1790, 0.0036580483
  %v1792 = vmul.f32 %v1787, %v1791
  %v1793 = vadd.f32 %v1792, 0.05243302
  %v1794 = vmul.f32 %v1787, %v1793
  %v1795 = vadd.f32 %v1794, 0.18741608
  %v1796 = vmul.f32 %v1787, %v1795
  %v1797 = vadd.f32 %v1796, 1.1283791
  %v1798 = vmul.f32 %v981, %v1797
  %v1799 = vmul.f32 %v1787, 3.8918573e-05
  %v1800 = vadd.f32 %v1799, 0.001143296
  %v1801 = vmul.f32 %v1787, %v1800
  %v1802 = vadd.f32 %v1801, 0.014752088
  %v1803 = vmul.f32 %v1787, %v1802
  %v1804 = vadd.f32 %v1803, 0.112945676
  %v1805 = vmul.f32 %v1787, %v1804
  %v1806 = vadd.f32 %v1805, 0.4994258
  %v1807 = vmul.f32 %v1787, %v1806
  %v1808 = vadd.f32 %v1807, 1.0
  %v1809 = vrcp.pop %v1808
  %v1810 = vmul.f32 %v1808, %v1809
  %v1811 = vsub.f32 1.0, %v1810
  %v1812 = vmul.f32 %v1809, %v1811
  %v1813 = vadd.f32 %v1809, %v1812
  %vm1814 = vweird.f32 %v1808
  %vm1815 = vweird.f32 %v1809
  %vm1816 = vmor %vm1814, %vm1815
  %v1817 = vsel %vm1816, %v1809, %v1813
  %v1818 = vand.u32 2147483647, %v1808
  %vm1819 = vcmp.eq.f32.partialorder %v1818, 8.507059e+37
  %v1820 = vand.u32 %v1808, 2147483648
  %v1821 = vor.u32 1.1754944e-38, %v1820
  %v1822 = vsel %vm1819, %v1821, %v1817
  %v1823 = vmul.f32 %v1798, %v1822
  %v1824 = vmin.f32 %v1823, 1.0
  %v1825 = vmax.f32 %v1824, -1.0
  %v1826 = vmul.f32 %v982, %v982
  %v1827 = vmin.f32 16.0, %v1826
  %v1828 = vmul.f32 %v1827, 2.1237322e-06
  %v1829 = vadd.f32 %v1828, 0.00028619796
  %v1830 = vmul.f32 %v1827, %v1829
  %v1831 = vadd.f32 %v1830, 0.0036580483
  %v1832 = vmul.f32 %v1827, %v1831
  %v1833 = vadd.f32 %v1832, 0.05243302
  %v1834 = vmul.f32 %v1827, %v1833
  %v1835 = vadd.f32 %v1834, 0.18741608
  %v1836 = vmul.f32 %v1827, %v1835
  %v1837 = vadd.f32 %v1836, 1.1283791
  %v1838 = vmul.f32 %v982, %v1837
  %v1839 = vmul.f32 %v1827, 3.8918573e-05
  %v1840 = vadd.f32 %v1839, 0.001143296
  %v1841 = vmul.f32 %v1827, %v1840
  %v1842 = vadd.f32 %v1841, 0.014752088
  %v1843 = vmul.f32 %v1827, %v1842
  %v1844 = vadd.f32 %v1843, 0.112945676
  %v1845 = vmul.f32 %v1827, %v1844
  %v1846 = vadd.f32 %v1845, 0.4994258
  %v1847 = vmul.f32 %v1827, %v1846
  %v1848 = vadd.f32 %v1847, 1.0
  %v1849 = vrcp.pop %v1848
  %v1850 = vmul.f32 %v1848, %v1849
  %v1851 = vsub.f32 1.0, %v1850
  %v1852 = vmul.f32 %v1849, %v1851
  %v1853 = vadd.f32 %v1849, %v1852
  %vm1854 = vweird.f32 %v1848
  %vm1855 = vweird.f32 %v1849
  %vm1856 = vmor %vm1854, %vm1855
  %v1857 = vsel %vm1856, %v1849, %v1853
  %v1858 = vand.u32 2147483647, %v1848
  %vm1859 = vcmp.eq.f32.partialorder %v1858, 8.507059e+37
  %v1860 = vand.u32 %v1848, 2147483648
  %v1861 = vor.u32 1.1754944e-38, %v1860
  %v1862 = vsel %vm1859, %v1861, %v1857
  %v1863 = vmul.f32 %v1838, %v1862
  %v1864 = vmin.f32 %v1863, 1.0
  %v1865 = vmax.f32 %v1864, -1.0
  %v1866 = vmul.f32 %v983, %v983
  %v1867 = vmin.f32 16.0, %v1866
  %v1868 = vmul.f32 %v1867, 2.1237322e-06
  %v1869 = vadd.f32 %v1868, 0.00028619796
  %v1870 = vmul.f32 %v1867, %v1869
  %v1871 = vadd.f32 %v1870, 0.0036580483
  %v1872 = vmul.f32 %v1867, %v1871
  %v1873 = vadd.f32 %v1872, 0.05243302
  %v1874 = vmul.f32 %v1867, %v1873
  %v1875 = vadd.f32 %v1874, 0.18741608
  %v1876 = vmul.f32 %v1867, %v1875
  %v1877 = vadd.f32 %v1876, 1.1283791
  %v1878 = vmul.f32 %v983, %v1877
  %v1879 = vmul.f32 %v1867, 3.8918573e-05
  %v1880 = vadd.f32 %v1879, 0.001143296
  %v1881 = vmul.f32 %v1867, %v1880
  %v1882 = vadd.f32 %v1881, 0.014752088
  %v1883 = vmul.f32 %v1867, %v1882
  %v1884 = vadd.f32 %v1883, 0.112945676
  %v1885 = vmul.f32 %v1867, %v1884
  %v1886 = vadd.f32 %v1885, 0.4994258
  %v1887 = vmul.f32 %v1867, %v1886
  %v1888 = vadd.f32 %v1887, 1.0
  %v1889 = vrcp.pop %v1888
  %v1890 = vmul.f32 %v1888, %v1889
  %v1891 = vsub.f32 1.0, %v1890
  %v1892 = vmul.f32 %v1889, %v1891
  %v1893 = vadd.f32 %v1889, %v1892
  %vm1894 = vweird.f32 %v1888
  %vm1895 = vweird.f32 %v1889
  %vm1896 = vmor %vm1894, %vm1895
  %v1897 = vsel %vm1896, %v1889, %v1893
  %v1898 = vand.u32 2147483647, %v1888
  %vm1899 = vcmp.eq.f32.partialorder %v1898, 8.507059e+37
  %v1900 = vand.u32 %v1888, 2147483648
  %v1901 = vor.u32 1.1754944e-38, %v1900
  %v1902 = vsel %vm1899, %v1901, %v1897
  %v1903 = vmul.f32 %v1878, %v1902
  %v1904 = vmin.f32 %v1903, 1.0
  %v1905 = vmax.f32 %v1904, -1.0
  %v1906 = vmul.f32 %v984, %v984
  %v1907 = vmin.f32 16.0, %v1906
  %v1908 = vmul.f32 %v1907, 2.1237322e-06
  %v1909 = vadd.f32 %v1908, 0.00028619796
  %v1910 = vmul.f32 %v1907, %v1909
  %v1911 = vadd.f32 %v1910, 0.0036580483
  %v1912 = vmul.f32 %v1907, %v1911
  %v1913 = vadd.f32 %v1912, 0.05243302
  %v1914 = vmul.f32 %v1907, %v1913
  %v1915 = vadd.f32 %v1914, 0.18741608
  %v1916 = vmul.f32 %v1907, %v1915
  %v1917 = vadd.f32 %v1916, 1.1283791
  %v1918 = vmul.f32 %v984, %v1917
  %v1919 = vmul.f32 %v1907, 3.8918573e-05
  %v1920 = vadd.f32 %v1919, 0.001143296
  %v1921 = vmul.f32 %v1907, %v1920
  %v1922 = vadd.f32 %v1921, 0.014752088
  %v1923 = vmul.f32 %v1907, %v1922
  %v1924 = vadd.f32 %v1923, 0.112945676
  %v1925 = vmul.f32 %v1907, %v1924
  %v1926 = vadd.f32 %v1925, 0.4994258
  %v1927 = vmul.f32 %v1907, %v1926
  %v1928 = vadd.f32 %v1927, 1.0
  %v1929 = vrcp.pop %v1928
  %v1930 = vmul.f32 %v1928, %v1929
  %v1931 = vsub.f32 1.0, %v1930
  %v1932 = vmul.f32 %v1929, %v1931
  %v1933 = vadd.f32 %v1929, %v1932
  %vm1934 = vweird.f32 %v1928
  %vm1935 = vweird.f32 %v1929
  %vm1936 = vmor %vm1934, %vm1935
  %v1937 = vsel %vm1936, %v1929, %v1933
  %v1938 = vand.u32 2147483647, %v1928
  %vm1939 = vcmp.eq.f32.partialorder %v1938, 8.507059e+37
  %v1940 = vand.u32 %v1928, 2147483648
  %v1941 = vor.u32 1.1754944e-38, %v1940
  %v1942 = vsel %vm1939, %v1941, %v1937
  %v1943 = vmul.f32 %v1918, %v1942
  %v1944 = vmin.f32 %v1943, 1.0
  %v1945 = vmax.f32 %v1944, -1.0
  %v1946 = vmul.f32 %v985, %v985
  %v1947 = vmin.f32 16.0, %v1946
  %v1948 = vmul.f32 %v1947, 2.1237322e-06
  %v1949 = vadd.f32 %v1948, 0.00028619796
  %v1950 = vmul.f32 %v1947, %v1949
  %v1951 = vadd.f32 %v1950, 0.0036580483
  %v1952 = vmul.f32 %v1947, %v1951
  %v1953 = vadd.f32 %v1952, 0.05243302
  %v1954 = vmul.f32 %v1947, %v1953
  %v1955 = vadd.f32 %v1954, 0.18741608
  %v1956 = vmul.f32 %v1947, %v1955
  %v1957 = vadd.f32 %v1956, 1.1283791
  %v1958 = vmul.f32 %v985, %v1957
  %v1959 = vmul.f32 %v1947, 3.8918573e-05
  %v1960 = vadd.f32 %v1959, 0.001143296
  %v1961 = vmul.f32 %v1947, %v1960
  %v1962 = vadd.f32 %v1961, 0.014752088
  %v1963 = vmul.f32 %v1947, %v1962
  %v1964 = vadd.f32 %v1963, 0.112945676
  %v1965 = vmul.f32 %v1947, %v1964
  %v1966 = vadd.f32 %v1965, 0.4994258
  %v1967 = vmul.f32 %v1947, %v1966
  %v1968 = vadd.f32 %v1967, 1.0
  %v1969 = vrcp.pop %v1968
  %v1970 = vmul.f32 %v1968, %v1969
  %v1971 = vsub.f32 1.0, %v1970
  %v1972 = vmul.f32 %v1969, %v1971
  %v1973 = vadd.f32 %v1969, %v1972
  %vm1974 = vweird.f32 %v1968
  %vm1975 = vweird.f32 %v1969
  %vm1976 = vmor %vm1974, %vm1975
  %v1977 = vsel %vm1976, %v1969, %v1973
  %v1978 = vand.u32 2147483647, %v1968
  %vm1979 = vcmp.eq.f32.partialorder %v1978, 8.507059e+37
  %v1980 = vand.u32 %v1968, 2147483648
  %v1981 = vor.u32 1.1754944e-38, %v1980
  %v1982 = vsel %vm1979, %v1981, %v1977
  %v1983 = vmul.f32 %v1958, %v1982
  %v1984 = vmin.f32 %v1983, 1.0
  %v1985 = vmax.f32 %v1984, -1.0
  %v1986 = vmul.f32 %v986, %v986
  %v1987 = vmin.f32 16.0, %v1986
  %v1988 = vmul.f32 %v1987, 2.1237322e-06
  %v1989 = vadd.f32 %v1988, 0.00028619796
  %v1990 = vmul.f32 %v1987, %v1989
  %v1991 = vadd.f32 %v1990, 0.0036580483
  %v1992 = vmul.f32 %v1987, %v1991
  %v1993 = vadd.f32 %v1992, 0.05243302
  %v1994 = vmul.f32 %v1987, %v1993
  %v1995 = vadd.f32 %v1994, 0.18741608
  %v1996 = vmul.f32 %v1987, %v1995
  %v1997 = vadd.f32 %v1996, 1.1283791
  %v1998 = vmul.f32 %v986, %v1997
  %v1999 = vmul.f32 %v1987, 3.8918573e-05
  %v2000 = vadd.f32 %v1999, 0.001143296
  %v2001 = vmul.f32 %v1987, %v2000
  %v2002 = vadd.f32 %v2001, 0.014752088
  %v2003 = vmul.f32 %v1987, %v2002
  %v2004 = vadd.f32 %v2003, 0.112945676
  %v2005 = vmul.f32 %v1987, %v2004
  %v2006 = vadd.f32 %v2005, 0.4994258
  %v2007 = vmul.f32 %v1987, %v2006
  %v2008 = vadd.f32 %v2007, 1.0
  %v2009 = vrcp.pop %v2008
  %v2010 = vmul.f32 %v2008, %v2009
  %v2011 = vsub.f32 1.0, %v2010
  %v2012 = vmul.f32 %v2009, %v2011
  %v2013 = vadd.f32 %v2009, %v2012
  %vm2014 = vweird.f32 %v2008
  %vm2015 = vweird.f32 %v2009
  %vm2016 = vmor %vm2014, %vm2015
  %v2017 = vsel %vm2016, %v2009, %v2013
  %v2018 = vand.u32 2147483647, %v2008
  %vm2019 = vcmp.eq.f32.partialorder %v2018, 8.507059e+37
  %v2020 = vand.u32 %v2008, 2147483648
  %v2021 = vor.u32 1.1754944e-38, %v2020
  %v2022 = vsel %vm2019, %v2021, %v2017
  %v2023 = vmul.f32 %v1998, %v2022
  %v2024 = vmin.f32 %v2023, 1.0
  %v2025 = vmax.f32 %v2024, -1.0
  %v2026 = vmul.f32 %v987, %v987
  %v2027 = vmin.f32 16.0, %v2026
  %v2028 = vmul.f32 %v2027, 2.1237322e-06
  %v2029 = vadd.f32 %v2028, 0.00028619796
  %v2030 = vmul.f32 %v2027, %v2029
  %v2031 = vadd.f32 %v2030, 0.0036580483
  %v2032 = vmul.f32 %v2027, %v2031
  %v2033 = vadd.f32 %v2032, 0.05243302
  %v2034 = vmul.f32 %v2027, %v2033
  %v2035 = vadd.f32 %v2034, 0.18741608
  %v2036 = vmul.f32 %v2027, %v2035
  %v2037 = vadd.f32 %v2036, 1.1283791
  %v2038 = vmul.f32 %v987, %v2037
  %v2039 = vmul.f32 %v2027, 3.8918573e-05
  %v2040 = vadd.f32 %v2039, 0.001143296
  %v2041 = vmul.f32 %v2027, %v2040
  %v2042 = vadd.f32 %v2041, 0.014752088
  %v2043 = vmul.f32 %v2027, %v2042
  %v2044 = vadd.f32 %v2043, 0.112945676
  %v2045 = vmul.f32 %v2027, %v2044
  %v2046 = vadd.f32 %v2045, 0.4994258
  %v2047 = vmul.f32 %v2027, %v2046
  %v2048 = vadd.f32 %v2047, 1.0
  %v2049 = vrcp.pop %v2048
  %v2050 = vmul.f32 %v2048, %v2049
  %v2051 = vsub.f32 1.0, %v2050
  %v2052 = vmul.f32 %v2049, %v2051
  %v2053 = vadd.f32 %v2049, %v2052
  %vm2054 = vweird.f32 %v2048
  %vm2055 = vweird.f32 %v2049
  %vm2056 = vmor %vm2054, %vm2055
  %v2057 = vsel %vm2056, %v2049, %v2053
  %v2058 = vand.u32 2147483647, %v2048
  %vm2059 = vcmp.eq.f32.partialorder %v2058, 8.507059e+37
  %v2060 = vand.u32 %v2048, 2147483648
  %v2061 = vor.u32 1.1754944e-38, %v2060
  %v2062 = vsel %vm2059, %v2061, %v2057
  %v2063 = vmul.f32 %v2038, %v2062
  %v2064 = vmin.f32 %v2063, 1.0
  %v2065 = vmax.f32 %v2064, -1.0
  %v2066 = vmul.f32 %v988, %v988
  %v2067 = vmin.f32 16.0, %v2066
  %v2068 = vmul.f32 %v2067, 2.1237322e-06
  %v2069 = vadd.f32 %v2068, 0.00028619796
  %v2070 = vmul.f32 %v2067, %v2069
  %v2071 = vadd.f32 %v2070, 0.0036580483
  %v2072 = vmul.f32 %v2067, %v2071
  %v2073 = vadd.f32 %v2072, 0.05243302
  %v2074 = vmul.f32 %v2067, %v2073
  %v2075 = vadd.f32 %v2074, 0.18741608
  %v2076 = vmul.f32 %v2067, %v2075
  %v2077 = vadd.f32 %v2076, 1.1283791
  %v2078 = vmul.f32 %v988, %v2077
  %v2079 = vmul.f32 %v2067, 3.8918573e-05
  %v2080 = vadd.f32 %v2079, 0.001143296
  %v2081 = vmul.f32 %v2067, %v2080
  %v2082 = vadd.f32 %v2081, 0.014752088
  %v2083 = vmul.f32 %v2067, %v2082
  %v2084 = vadd.f32 %v2083, 0.112945676
  %v2085 = vmul.f32 %v2067, %v2084
  %v2086 = vadd.f32 %v2085, 0.4994258
  %v2087 = vmul.f32 %v2067, %v2086
  %v2088 = vadd.f32 %v2087, 1.0
  %v2089 = vrcp.pop %v2088
  %v2090 = vmul.f32 %v2088, %v2089
  %v2091 = vsub.f32 1.0, %v2090
  %v2092 = vmul.f32 %v2089, %v2091
  %v2093 = vadd.f32 %v2089, %v2092
  %vm2094 = vweird.f32 %v2088
  %vm2095 = vweird.f32 %v2089
  %vm2096 = vmor %vm2094, %vm2095
  %v2097 = vsel %vm2096, %v2089, %v2093
  %v2098 = vand.u32 2147483647, %v2088
  %vm2099 = vcmp.eq.f32.partialorder %v2098, 8.507059e+37
  %v2100 = vand.u32 %v2088, 2147483648
  %v2101 = vor.u32 1.1754944e-38, %v2100
  %v2102 = vsel %vm2099, %v2101, %v2097
  %v2103 = vmul.f32 %v2078, %v2102
  %v2104 = vmin.f32 %v2103, 1.0
  %v2105 = vmax.f32 %v2104, -1.0
  %v2106 = vmul.f32 %v989, %v989
  %v2107 = vmin.f32 16.0, %v2106
  %v2108 = vmul.f32 %v2107, 2.1237322e-06
  %v2109 = vadd.f32 %v2108, 0.00028619796
  %v2110 = vmul.f32 %v2107, %v2109
  %v2111 = vadd.f32 %v2110, 0.0036580483
  %v2112 = vmul.f32 %v2107, %v2111
  %v2113 = vadd.f32 %v2112, 0.05243302
  %v2114 = vmul.f32 %v2107, %v2113
  %v2115 = vadd.f32 %v2114, 0.18741608
  %v2116 = vmul.f32 %v2107, %v2115
  %v2117 = vadd.f32 %v2116, 1.1283791
  %v2118 = vmul.f32 %v989, %v2117
  %v2119 = vmul.f32 %v2107, 3.8918573e-05
  %v2120 = vadd.f32 %v2119, 0.001143296
  %v2121 = vmul.f32 %v2107, %v2120
  %v2122 = vadd.f32 %v2121, 0.014752088
  %v2123 = vmul.f32 %v2107, %v2122
  %v2124 = vadd.f32 %v2123, 0.112945676
  %v2125 = vmul.f32 %v2107, %v2124
  %v2126 = vadd.f32 %v2125, 0.4994258
  %v2127 = vmul.f32 %v2107, %v2126
  %v2128 = vadd.f32 %v2127, 1.0
  %v2129 = vrcp.pop %v2128
  %v2130 = vmul.f32 %v2128, %v2129
  %v2131 = vsub.f32 1.0, %v2130
  %v2132 = vmul.f32 %v2129, %v2131
  %v2133 = vadd.f32 %v2129, %v2132
  %vm2134 = vweird.f32 %v2128
  %vm2135 = vweird.f32 %v2129
  %vm2136 = vmor %vm2134, %vm2135
  %v2137 = vsel %vm2136, %v2129, %v2133
  %v2138 = vand.u32 2147483647, %v2128
  %vm2139 = vcmp.eq.f32.partialorder %v2138, 8.507059e+37
  %v2140 = vand.u32 %v2128, 2147483648
  %v2141 = vor.u32 1.1754944e-38, %v2140
  %v2142 = vsel %vm2139, %v2141, %v2137
  %v2143 = vmul.f32 %v2118, %v2142
  %v2144 = vmin.f32 %v2143, 1.0
  %v2145 = vmax.f32 %v2144, -1.0
  %v2146 = vmul.f32 %v990, %v990
  %v2147 = vmin.f32 16.0, %v2146
  %v2148 = vmul.f32 %v2147, 2.1237322e-06
  %v2149 = vadd.f32 %v2148, 0.00028619796
  %v2150 = vmul.f32 %v2147, %v2149
  %v2151 = vadd.f32 %v2150, 0.0036580483
  %v2152 = vmul.f32 %v2147, %v2151
  %v2153 = vadd.f32 %v2152, 0.05243302
  %v2154 = vmul.f32 %v2147, %v2153
  %v2155 = vadd.f32 %v2154, 0.18741608
  %v2156 = vmul.f32 %v2147, %v2155
  %v2157 = vadd.f32 %v2156, 1.1283791
  %v2158 = vmul.f32 %v990, %v2157
  %v2159 = vmul.f32 %v2147, 3.8918573e-05
  %v2160 = vadd.f32 %v2159, 0.001143296
  %v2161 = vmul.f32 %v2147, %v2160
  %v2162 = vadd.f32 %v2161, 0.014752088
  %v2163 = vmul.f32 %v2147, %v2162
  %v2164 = vadd.f32 %v2163, 0.112945676
  %v2165 = vmul.f32 %v2147, %v2164
  %v2166 = vadd.f32 %v2165, 0.4994258
  %v2167 = vmul.f32 %v2147, %v2166
  %v2168 = vadd.f32 %v2167, 1.0
  %v2169 = vrcp.pop %v2168
  %v2170 = vmul.f32 %v2168, %v2169
  %v2171 = vsub.f32 1.0, %v2170
  %v2172 = vmul.f32 %v2169, %v2171
  %v2173 = vadd.f32 %v2169, %v2172
  %vm2174 = vweird.f32 %v2168
  %vm2175 = vweird.f32 %v2169
  %vm2176 = vmor %vm2174, %vm2175
  %v2177 = vsel %vm2176, %v2169, %v2173
  %v2178 = vand.u32 2147483647, %v2168
  %vm2179 = vcmp.eq.f32.partialorder %v2178, 8.507059e+37
  %v2180 = vand.u32 %v2168, 2147483648
  %v2181 = vor.u32 1.1754944e-38, %v2180
  %v2182 = vsel %vm2179, %v2181, %v2177
  %v2183 = vmul.f32 %v2158, %v2182
  %v2184 = vmin.f32 %v2183, 1.0
  %v2185 = vmax.f32 %v2184, -1.0
  %v2186 = vmul.f32 %v991, %v991
  %v2187 = vmin.f32 16.0, %v2186
  %v2188 = vmul.f32 %v2187, 2.1237322e-06
  %v2189 = vadd.f32 %v2188, 0.00028619796
  %v2190 = vmul.f32 %v2187, %v2189
  %v2191 = vadd.f32 %v2190, 0.0036580483
  %v2192 = vmul.f32 %v2187, %v2191
  %v2193 = vadd.f32 %v2192, 0.05243302
  %v2194 = vmul.f32 %v2187, %v2193
  %v2195 = vadd.f32 %v2194, 0.18741608
  %v2196 = vmul.f32 %v2187, %v2195
  %v2197 = vadd.f32 %v2196, 1.1283791
  %v2198 = vmul.f32 %v991, %v2197
  %v2199 = vmul.f32 %v2187, 3.8918573e-05
  %v2200 = vadd.f32 %v2199, 0.001143296
  %v2201 = vmul.f32 %v2187, %v2200
  %v2202 = vadd.f32 %v2201, 0.014752088
  %v2203 = vmul.f32 %v2187, %v2202
  %v2204 = vadd.f32 %v2203, 0.112945676
  %v2205 = vmul.f32 %v2187, %v2204
  %v2206 = vadd.f32 %v2205, 0.4994258
  %v2207 = vmul.f32 %v2187, %v2206
  %v2208 = vadd.f32 %v2207, 1.0
  %v2209 = vrcp.pop %v2208
  %v2210 = vmul.f32 %v2208, %v2209
  %v2211 = vsub.f32 1.0, %v2210
  %v2212 = vmul.f32 %v2209, %v2211
  %v2213 = vadd.f32 %v2209, %v2212
  %vm2214 = vweird.f32 %v2208
  %vm2215 = vweird.f32 %v2209
  %vm2216 = vmor %vm2214, %vm2215
  %v2217 = vsel %vm2216, %v2209, %v2213
  %v2218 = vand.u32 2147483647, %v2208
  %vm2219 = vcmp.eq.f32.partialorder %v2218, 8.507059e+37
  %v2220 = vand.u32 %v2208, 2147483648
  %v2221 = vor.u32 1.1754944e-38, %v2220
  %v2222 = vsel %vm2219, %v2221, %v2217
  %v2223 = vmul.f32 %v2198, %v2222
  %v2224 = vmin.f32 %v2223, 1.0
  %v2225 = vmax.f32 %v2224, -1.0
  %v2226 = vmul.f32 %v992, %v992
  %v2227 = vmin.f32 16.0, %v2226
  %v2228 = vmul.f32 %v2227, 2.1237322e-06
  %v2229 = vadd.f32 %v2228, 0.00028619796
  %v2230 = vmul.f32 %v2227, %v2229
  %v2231 = vadd.f32 %v2230, 0.0036580483
  %v2232 = vmul.f32 %v2227, %v2231
  %v2233 = vadd.f32 %v2232, 0.05243302
  %v2234 = vmul.f32 %v2227, %v2233
  %v2235 = vadd.f32 %v2234, 0.18741608
  %v2236 = vmul.f32 %v2227, %v2235
  %v2237 = vadd.f32 %v2236, 1.1283791
  %v2238 = vmul.f32 %v992, %v2237
  %v2239 = vmul.f32 %v2227, 3.8918573e-05
  %v2240 = vadd.f32 %v2239, 0.001143296
  %v2241 = vmul.f32 %v2227, %v2240
  %v2242 = vadd.f32 %v2241, 0.014752088
  %v2243 = vmul.f32 %v2227, %v2242
  %v2244 = vadd.f32 %v2243, 0.112945676
  %v2245 = vmul.f32 %v2227, %v2244
  %v2246 = vadd.f32 %v2245, 0.4994258
  %v2247 = vmul.f32 %v2227, %v2246
  %v2248 = vadd.f32 %v2247, 1.0
  %v2249 = vrcp.pop %v2248
  %v2250 = vmul.f32 %v2248, %v2249
  %v2251 = vsub.f32 1.0, %v2250
  %v2252 = vmul.f32 %v2249, %v2251
  %v2253 = vadd.f32 %v2249, %v2252
  %vm2254 = vweird.f32 %v2248
  %vm2255 = vweird.f32 %v2249
  %vm2256 = vmor %vm2254, %vm2255
  %v2257 = vsel %vm2256, %v2249, %v2253
  %v2258 = vand.u32 2147483647, %v2248
  %vm2259 = vcmp.eq.f32.partialorder %v2258, 8.507059e+37
  %v2260 = vand.u32 %v2248, 2147483648
  %v2261 = vor.u32 1.1754944e-38, %v2260
  %v2262 = vsel %vm2259, %v2261, %v2257
  %v2263 = vmul.f32 %v2238, %v2262
  %v2264 = vmin.f32 %v2263, 1.0
  %v2265 = vmax.f32 %v2264, -1.0
  %v2266 = vmul.f32 %v993, %v993
  %v2267 = vmin.f32 16.0, %v2266
  %v2268 = vmul.f32 %v2267, 2.1237322e-06
  %v2269 = vadd.f32 %v2268, 0.00028619796
  %v2270 = vmul.f32 %v2267, %v2269
  %v2271 = vadd.f32 %v2270, 0.0036580483
  %v2272 = vmul.f32 %v2267, %v2271
  %v2273 = vadd.f32 %v2272, 0.05243302
  %v2274 = vmul.f32 %v2267, %v2273
  %v2275 = vadd.f32 %v2274, 0.18741608
  %v2276 = vmul.f32 %v2267, %v2275
  %v2277 = vadd.f32 %v2276, 1.1283791
  %v2278 = vmul.f32 %v993, %v2277
  %v2279 = vmul.f32 %v2267, 3.8918573e-05
  %v2280 = vadd.f32 %v2279, 0.001143296
  %v2281 = vmul.f32 %v2267, %v2280
  %v2282 = vadd.f32 %v2281, 0.014752088
  %v2283 = vmul.f32 %v2267, %v2282
  %v2284 = vadd.f32 %v2283, 0.112945676
  %v2285 = vmul.f32 %v2267, %v2284
  %v2286 = vadd.f32 %v2285, 0.4994258
  %v2287 = vmul.f32 %v2267, %v2286
  %v2288 = vadd.f32 %v2287, 1.0
  %v2289 = vrcp.pop %v2288
  %v2290 = vmul.f32 %v2288, %v2289
  %v2291 = vsub.f32 1.0, %v2290
  %v2292 = vmul.f32 %v2289, %v2291
  %v2293 = vadd.f32 %v2289, %v2292
  %vm2294 = vweird.f32 %v2288
  %vm2295 = vweird.f32 %v2289
  %vm2296 = vmor %vm2294, %vm2295
  %v2297 = vsel %vm2296, %v2289, %v2293
  %v2298 = vand.u32 2147483647, %v2288
  %vm2299 = vcmp.eq.f32.partialorder %v2298, 8.507059e+37
  %v2300 = vand.u32 %v2288, 2147483648
  %v2301 = vor.u32 1.1754944e-38, %v2300
  %v2302 = vsel %vm2299, %v2301, %v2297
  %v2303 = vmul.f32 %v2278, %v2302
  %v2304 = vmin.f32 %v2303, 1.0
  %v2305 = vmax.f32 %v2304, -1.0
  %v2306 = vmul.f32 %v994, %v994
  %v2307 = vmin.f32 16.0, %v2306
  %v2308 = vmul.f32 %v2307, 2.1237322e-06
  %v2309 = vadd.f32 %v2308, 0.00028619796
  %v2310 = vmul.f32 %v2307, %v2309
  %v2311 = vadd.f32 %v2310, 0.0036580483
  %v2312 = vmul.f32 %v2307, %v2311
  %v2313 = vadd.f32 %v2312, 0.05243302
  %v2314 = vmul.f32 %v2307, %v2313
  %v2315 = vadd.f32 %v2314, 0.18741608
  %v2316 = vmul.f32 %v2307, %v2315
  %v2317 = vadd.f32 %v2316, 1.1283791
  %v2318 = vmul.f32 %v994, %v2317
  %v2319 = vmul.f32 %v2307, 3.8918573e-05
  %v2320 = vadd.f32 %v2319, 0.001143296
  %v2321 = vmul.f32 %v2307, %v2320
  %v2322 = vadd.f32 %v2321, 0.014752088
  %v2323 = vmul.f32 %v2307, %v2322
  %v2324 = vadd.f32 %v2323, 0.112945676
  %v2325 = vmul.f32 %v2307, %v2324
  %v2326 = vadd.f32 %v2325, 0.4994258
  %v2327 = vmul.f32 %v2307, %v2326
  %v2328 = vadd.f32 %v2327, 1.0
  %v2329 = vrcp.pop %v2328
  %v2330 = vmul.f32 %v2328, %v2329
  %v2331 = vsub.f32 1.0, %v2330
  %v2332 = vmul.f32 %v2329, %v2331
  %v2333 = vadd.f32 %v2329, %v2332
  %vm2334 = vweird.f32 %v2328
  %vm2335 = vweird.f32 %v2329
  %vm2336 = vmor %vm2334, %vm2335
  %v2337 = vsel %vm2336, %v2329, %v2333
  %v2338 = vand.u32 2147483647, %v2328
  %vm2339 = vcmp.eq.f32.partialorder %v2338, 8.507059e+37
  %v2340 = vand.u32 %v2328, 2147483648
  %v2341 = vor.u32 1.1754944e-38, %v2340
  %v2342 = vsel %vm2339, %v2341, %v2337
  %v2343 = vmul.f32 %v2318, %v2342
  %v2344 = vmin.f32 %v2343, 1.0
  %v2345 = vmax.f32 %v2344, -1.0
  %v2346 = vmul.f32 %v995, %v995
  %v2347 = vmin.f32 16.0, %v2346
  %v2348 = vmul.f32 %v2347, 2.1237322e-06
  %v2349 = vadd.f32 %v2348, 0.00028619796
  %v2350 = vmul.f32 %v2347, %v2349
  %v2351 = vadd.f32 %v2350, 0.0036580483
  %v2352 = vmul.f32 %v2347, %v2351
  %v2353 = vadd.f32 %v2352, 0.05243302
  %v2354 = vmul.f32 %v2347, %v2353
  %v2355 = vadd.f32 %v2354, 0.18741608
  %v2356 = vmul.f32 %v2347, %v2355
  %v2357 = vadd.f32 %v2356, 1.1283791
  %v2358 = vmul.f32 %v995, %v2357
  %v2359 = vmul.f32 %v2347, 3.8918573e-05
  %v2360 = vadd.f32 %v2359, 0.001143296
  %v2361 = vmul.f32 %v2347, %v2360
  %v2362 = vadd.f32 %v2361, 0.014752088
  %v2363 = vmul.f32 %v2347, %v2362
  %v2364 = vadd.f32 %v2363, 0.112945676
  %v2365 = vmul.f32 %v2347, %v2364
  %v2366 = vadd.f32 %v2365, 0.4994258
  %v2367 = vmul.f32 %v2347, %v2366
  %v2368 = vadd.f32 %v2367, 1.0
  %v2369 = vrcp.pop %v2368
  %v2370 = vmul.f32 %v2368, %v2369
  %v2371 = vsub.f32 1.0, %v2370
  %v2372 = vmul.f32 %v2369, %v2371
  %v2373 = vadd.f32 %v2369, %v2372
  %vm2374 = vweird.f32 %v2368
  %vm2375 = vweird.f32 %v2369
  %vm2376 = vmor %vm2374, %vm2375
  %v2377 = vsel %vm2376, %v2369, %v2373
  %v2378 = vand.u32 2147483647, %v2368
  %vm2379 = vcmp.eq.f32.partialorder %v2378, 8.507059e+37
  %v2380 = vand.u32 %v2368, 2147483648
  %v2381 = vor.u32 1.1754944e-38, %v2380
  %v2382 = vsel %vm2379, %v2381, %v2377
  %v2383 = vmul.f32 %v2358, %v2382
  %v2384 = vmin.f32 %v2383, 1.0
  %v2385 = vmax.f32 %v2384, -1.0
  %v2386 = vmul.f32 %v996, %v996
  %v2387 = vmin.f32 16.0, %v2386
  %v2388 = vmul.f32 %v2387, 2.1237322e-06
  %v2389 = vadd.f32 %v2388, 0.00028619796
  %v2390 = vmul.f32 %v2387, %v2389
  %v2391 = vadd.f32 %v2390, 0.0036580483
  %v2392 = vmul.f32 %v2387, %v2391
  %v2393 = vadd.f32 %v2392, 0.05243302
  %v2394 = vmul.f32 %v2387, %v2393
  %v2395 = vadd.f32 %v2394, 0.18741608
  %v2396 = vmul.f32 %v2387, %v2395
  %v2397 = vadd.f32 %v2396, 1.1283791
  %v2398 = vmul.f32 %v996, %v2397
  %v2399 = vmul.f32 %v2387, 3.8918573e-05
  %v2400 = vadd.f32 %v2399, 0.001143296
  %v2401 = vmul.f32 %v2387, %v2400
  %v2402 = vadd.f32 %v2401, 0.014752088
  %v2403 = vmul.f32 %v2387, %v2402
  %v2404 = vadd.f32 %v2403, 0.112945676
  %v2405 = vmul.f32 %v2387, %v2404
  %v2406 = vadd.f32 %v2405, 0.4994258
  %v2407 = vmul.f32 %v2387, %v2406
  %v2408 = vadd.f32 %v2407, 1.0
  %v2409 = vrcp.pop %v2408
  %v2410 = vmul.f32 %v2408, %v2409
  %v2411 = vsub.f32 1.0, %v2410
  %v2412 = vmul.f32 %v2409, %v2411
  %v2413 = vadd.f32 %v2409, %v2412
  %vm2414 = vweird.f32 %v2408
  %vm2415 = vweird.f32 %v2409
  %vm2416 = vmor %vm2414, %vm2415
  %v2417 = vsel %vm2416, %v2409, %v2413
  %v2418 = vand.u32 2147483647, %v2408
  %vm2419 = vcmp.eq.f32.partialorder %v2418, 8.507059e+37
  %v2420 = vand.u32 %v2408, 2147483648
  %v2421 = vor.u32 1.1754944e-38, %v2420
  %v2422 = vsel %vm2419, %v2421, %v2417
  %v2423 = vmul.f32 %v2398, %v2422
  %v2424 = vmin.f32 %v2423, 1.0
  %v2425 = vmax.f32 %v2424, -1.0
  %v2426 = vmul.f32 %v997, %v997
  %v2427 = vmin.f32 16.0, %v2426
  %v2428 = vmul.f32 %v2427, 2.1237322e-06
  %v2429 = vadd.f32 %v2428, 0.00028619796
  %v2430 = vmul.f32 %v2427, %v2429
  %v2431 = vadd.f32 %v2430, 0.0036580483
  %v2432 = vmul.f32 %v2427, %v2431
  %v2433 = vadd.f32 %v2432, 0.05243302
  %v2434 = vmul.f32 %v2427, %v2433
  %v2435 = vadd.f32 %v2434, 0.18741608
  %v2436 = vmul.f32 %v2427, %v2435
  %v2437 = vadd.f32 %v2436, 1.1283791
  %v2438 = vmul.f32 %v997, %v2437
  %v2439 = vmul.f32 %v2427, 3.8918573e-05
  %v2440 = vadd.f32 %v2439, 0.001143296
  %v2441 = vmul.f32 %v2427, %v2440
  %v2442 = vadd.f32 %v2441, 0.014752088
  %v2443 = vmul.f32 %v2427, %v2442
  %v2444 = vadd.f32 %v2443, 0.112945676
  %v2445 = vmul.f32 %v2427, %v2444
  %v2446 = vadd.f32 %v2445, 0.4994258
  %v2447 = vmul.f32 %v2427, %v2446
  %v2448 = vadd.f32 %v2447, 1.0
  %v2449 = vrcp.pop %v2448
  %v2450 = vmul.f32 %v2448, %v2449
  %v2451 = vsub.f32 1.0, %v2450
  %v2452 = vmul.f32 %v2449, %v2451
  %v2453 = vadd.f32 %v2449, %v2452
  %vm2454 = vweird.f32 %v2448
  %vm2455 = vweird.f32 %v2449
  %vm2456 = vmor %vm2454, %vm2455
  %v2457 = vsel %vm2456, %v2449, %v2453
  %v2458 = vand.u32 2147483647, %v2448
  %vm2459 = vcmp.eq.f32.partialorder %v2458, 8.507059e+37
  %v2460 = vand.u32 %v2448, 2147483648
  %v2461 = vor.u32 1.1754944e-38, %v2460
  %v2462 = vsel %vm2459, %v2461, %v2457
  %v2463 = vmul.f32 %v2438, %v2462
  %v2464 = vmin.f32 %v2463, 1.0
  %v2465 = vmax.f32 %v2464, -1.0
  %v2466 = vmul.f32 %v998, %v998
  %v2467 = vmin.f32 16.0, %v2466
  %v2468 = vmul.f32 %v2467, 2.1237322e-06
  %v2469 = vadd.f32 %v2468, 0.00028619796
  %v2470 = vmul.f32 %v2467, %v2469
  %v2471 = vadd.f32 %v2470, 0.0036580483
  %v2472 = vmul.f32 %v2467, %v2471
  %v2473 = vadd.f32 %v2472, 0.05243302
  %v2474 = vmul.f32 %v2467, %v2473
  %v2475 = vadd.f32 %v2474, 0.18741608
  %v2476 = vmul.f32 %v2467, %v2475
  %v2477 = vadd.f32 %v2476, 1.1283791
  %v2478 = vmul.f32 %v998, %v2477
  %v2479 = vmul.f32 %v2467, 3.8918573e-05
  %v2480 = vadd.f32 %v2479, 0.001143296
  %v2481 = vmul.f32 %v2467, %v2480
  %v2482 = vadd.f32 %v2481, 0.014752088
  %v2483 = vmul.f32 %v2467, %v2482
  %v2484 = vadd.f32 %v2483, 0.112945676
  %v2485 = vmul.f32 %v2467, %v2484
  %v2486 = vadd.f32 %v2485, 0.4994258
  %v2487 = vmul.f32 %v2467, %v2486
  %v2488 = vadd.f32 %v2487, 1.0
  %v2489 = vrcp.pop %v2488
  %v2490 = vmul.f32 %v2488, %v2489
  %v2491 = vsub.f32 1.0, %v2490
  %v2492 = vmul.f32 %v2489, %v2491
  %v2493 = vadd.f32 %v2489, %v2492
  %vm2494 = vweird.f32 %v2488
  %vm2495 = vweird.f32 %v2489
  %vm2496 = vmor %vm2494, %vm2495
  %v2497 = vsel %vm2496, %v2489, %v2493
  %v2498 = vand.u32 2147483647, %v2488
  %vm2499 = vcmp.eq.f32.partialorder %v2498, 8.507059e+37
  %v2500 = vand.u32 %v2488, 2147483648
  %v2501 = vor.u32 1.1754944e-38, %v2500
  %v2502 = vsel %vm2499, %v2501, %v2497
  %v2503 = vmul.f32 %v2478, %v2502
  %v2504 = vmin.f32 %v2503, 1.0
  %v2505 = vmax.f32 %v2504, -1.0
  %v2506 = vmul.f32 %v999, %v999
  %v2507 = vmin.f32 16.0, %v2506
  %v2508 = vmul.f32 %v2507, 2.1237322e-06
  %v2509 = vadd.f32 %v2508, 0.00028619796
  %v2510 = vmul.f32 %v2507, %v2509
  %v2511 = vadd.f32 %v2510, 0.0036580483
  %v2512 = vmul.f32 %v2507, %v2511
  %v2513 = vadd.f32 %v2512, 0.05243302
  %v2514 = vmul.f32 %v2507, %v2513
  %v2515 = vadd.f32 %v2514, 0.18741608
  %v2516 = vmul.f32 %v2507, %v2515
  %v2517 = vadd.f32 %v2516, 1.1283791
  %v2518 = vmul.f32 %v999, %v2517
  %v2519 = vmul.f32 %v2507, 3.8918573e-05
  %v2520 = vadd.f32 %v2519, 0.001143296
  %v2521 = vmul.f32 %v2507, %v2520
  %v2522 = vadd.f32 %v2521, 0.014752088
  %v2523 = vmul.f32 %v2507, %v2522
  %v2524 = vadd.f32 %v2523, 0.112945676
  %v2525 = vmul.f32 %v2507, %v2524
  %v2526 = vadd.f32 %v2525, 0.4994258
  %v2527 = vmul.f32 %v2507, %v2526
  %v2528 = vadd.f32 %v2527, 1.0
  %v2529 = vrcp.pop %v2528
  %v2530 = vmul.f32 %v2528, %v2529
  %v2531 = vsub.f32 1.0, %v2530
  %v2532 = vmul.f32 %v2529, %v2531
  %v2533 = vadd.f32 %v2529, %v2532
  %vm2534 = vweird.f32 %v2528
  %vm2535 = vweird.f32 %v2529
  %vm2536 = vmor %vm2534, %vm2535
  %v2537 = vsel %vm2536, %v2529, %v2533
  %v2538 = vand.u32 2147483647, %v2528
  %vm2539 = vcmp.eq.f32.partialorder %v2538, 8.507059e+37
  %v2540 = vand.u32 %v2528, 2147483648
  %v2541 = vor.u32 1.1754944e-38, %v2540
  %v2542 = vsel %vm2539, %v2541, %v2537
  %v2543 = vmul.f32 %v2518, %v2542
  %v2544 = vmin.f32 %v2543, 1.0
  %v2545 = vmax.f32 %v2544, -1.0
  %v2546 = vmul.f32 %v1000, %v1000
  %v2547 = vmin.f32 16.0, %v2546
  %v2548 = vmul.f32 %v2547, 2.1237322e-06
  %v2549 = vadd.f32 %v2548, 0.00028619796
  %v2550 = vmul.f32 %v2547, %v2549
  %v2551 = vadd.f32 %v2550, 0.0036580483
  %v2552 = vmul.f32 %v2547, %v2551
  %v2553 = vadd.f32 %v2552, 0.05243302
  %v2554 = vmul.f32 %v2547, %v2553
  %v2555 = vadd.f32 %v2554, 0.18741608
  %v2556 = vmul.f32 %v2547, %v2555
  %v2557 = vadd.f32 %v2556, 1.1283791
  %v2558 = vmul.f32 %v1000, %v2557
  %v2559 = vmul.f32 %v2547, 3.8918573e-05
  %v2560 = vadd.f32 %v2559, 0.001143296
  %v2561 = vmul.f32 %v2547, %v2560
  %v2562 = vadd.f32 %v2561, 0.014752088
  %v2563 = vmul.f32 %v2547, %v2562
  %v2564 = vadd.f32 %v2563, 0.112945676
  %v2565 = vmul.f32 %v2547, %v2564
  %v2566 = vadd.f32 %v2565, 0.4994258
  %v2567 = vmul.f32 %v2547, %v2566
  %v2568 = vadd.f32 %v2567, 1.0
  %v2569 = vrcp.pop %v2568
  %v2570 = vmul.f32 %v2568, %v2569
  %v2571 = vsub.f32 1.0, %v2570
  %v2572 = vmul.f32 %v2569, %v2571
  %v2573 = vadd.f32 %v2569, %v2572
  %vm2574 = vweird.f32 %v2568
  %vm2575 = vweird.f32 %v2569
  %vm2576 = vmor %vm2574, %vm2575
  %v2577 = vsel %vm2576, %v2569, %v2573
  %v2578 = vand.u32 2147483647, %v2568
  %vm2579 = vcmp.eq.f32.partialorder %v2578, 8.507059e+37
  %v2580 = vand.u32 %v2568, 2147483648
  %v2581 = vor.u32 1.1754944e-38, %v2580
  %v2582 = vsel %vm2579, %v2581, %v2577
  %v2583 = vmul.f32 %v2558, %v2582
  %v2584 = vmin.f32 %v2583, 1.0
  %v2585 = vmax.f32 %v2584, -1.0
  %v2586 = vmul.f32 %v1001, %v1001
  %v2587 = vmin.f32 16.0, %v2586
  %v2588 = vmul.f32 %v2587, 2.1237322e-06
  %v2589 = vadd.f32 %v2588, 0.00028619796
  %v2590 = vmul.f32 %v2587, %v2589
  %v2591 = vadd.f32 %v2590, 0.0036580483
  %v2592 = vmul.f32 %v2587, %v2591
  %v2593 = vadd.f32 %v2592, 0.05243302
  %v2594 = vmul.f32 %v2587, %v2593
  %v2595 = vadd.f32 %v2594, 0.18741608
  %v2596 = vmul.f32 %v2587, %v2595
  %v2597 = vadd.f32 %v2596, 1.1283791
  %v2598 = vmul.f32 %v1001, %v2597
  %v2599 = vmul.f32 %v2587, 3.8918573e-05
  %v2600 = vadd.f32 %v2599, 0.001143296
  %v2601 = vmul.f32 %v2587, %v2600
  %v2602 = vadd.f32 %v2601, 0.014752088
  %v2603 = vmul.f32 %v2587, %v2602
  %v2604 = vadd.f32 %v2603, 0.112945676
  %v2605 = vmul.f32 %v2587, %v2604
  %v2606 = vadd.f32 %v2605, 0.4994258
  %v2607 = vmul.f32 %v2587, %v2606
  %v2608 = vadd.f32 %v2607, 1.0
  %v2609 = vrcp.pop %v2608
  %v2610 = vmul.f32 %v2608, %v2609
  %v2611 = vsub.f32 1.0, %v2610
  %v2612 = vmul.f32 %v2609, %v2611
  %v2613 = vadd.f32 %v2609, %v2612
  %vm2614 = vweird.f32 %v2608
  %vm2615 = vweird.f32 %v2609
  %vm2616 = vmor %vm2614, %vm2615
  %v2617 = vsel %vm2616, %v2609, %v2613
  %v2618 = vand.u32 2147483647, %v2608
  %vm2619 = vcmp.eq.f32.partialorder %v2618, 8.507059e+37
  %v2620 = vand.u32 %v2608, 2147483648
  %v2621 = vor.u32 1.1754944e-38, %v2620
  %v2622 = vsel %vm2619, %v2621, %v2617
  %v2623 = vmul.f32 %v2598, %v2622
  %v2624 = vmin.f32 %v2623, 1.0
  %v2625 = vmax.f32 %v2624, -1.0
  %v2626 = vmul.f32 %v1002, %v1002
  %v2627 = vmin.f32 16.0, %v2626
  %v2628 = vmul.f32 %v2627, 2.1237322e-06
  %v2629 = vadd.f32 %v2628, 0.00028619796
  %v2630 = vmul.f32 %v2627, %v2629
  %v2631 = vadd.f32 %v2630, 0.0036580483
  %v2632 = vmul.f32 %v2627, %v2631
  %v2633 = vadd.f32 %v2632, 0.05243302
  %v2634 = vmul.f32 %v2627, %v2633
  %v2635 = vadd.f32 %v2634, 0.18741608
  %v2636 = vmul.f32 %v2627, %v2635
  %v2637 = vadd.f32 %v2636, 1.1283791
  %v2638 = vmul.f32 %v1002, %v2637
  %v2639 = vmul.f32 %v2627, 3.8918573e-05
  %v2640 = vadd.f32 %v2639, 0.001143296
  %v2641 = vmul.f32 %v2627, %v2640
  %v2642 = vadd.f32 %v2641, 0.014752088
  %v2643 = vmul.f32 %v2627, %v2642
  %v2644 = vadd.f32 %v2643, 0.112945676
  %v2645 = vmul.f32 %v2627, %v2644
  %v2646 = vadd.f32 %v2645, 0.4994258
  %v2647 = vmul.f32 %v2627, %v2646
  %v2648 = vadd.f32 %v2647, 1.0
  %v2649 = vrcp.pop %v2648
  %v2650 = vmul.f32 %v2648, %v2649
  %v2651 = vsub.f32 1.0, %v2650
  %v2652 = vmul.f32 %v2649, %v2651
  %v2653 = vadd.f32 %v2649, %v2652
  %vm2654 = vweird.f32 %v2648
  %vm2655 = vweird.f32 %v2649
  %vm2656 = vmor %vm2654, %vm2655
  %v2657 = vsel %vm2656, %v2649, %v2653
  %v2658 = vand.u32 2147483647, %v2648
  %vm2659 = vcmp.eq.f32.partialorder %v2658, 8.507059e+37
  %v2660 = vand.u32 %v2648, 2147483648
  %v2661 = vor.u32 1.1754944e-38, %v2660
  %v2662 = vsel %vm2659, %v2661, %v2657
  %v2663 = vmul.f32 %v2638, %v2662
  %v2664 = vmin.f32 %v2663, 1.0
  %v2665 = vmax.f32 %v2664, -1.0
  %v2666 = vmul.f32 %v1003, %v1003
  %v2667 = vmin.f32 16.0, %v2666
  %v2668 = vmul.f32 %v2667, 2.1237322e-06
  %v2669 = vadd.f32 %v2668, 0.00028619796
  %v2670 = vmul.f32 %v2667, %v2669
  %v2671 = vadd.f32 %v2670, 0.0036580483
  %v2672 = vmul.f32 %v2667, %v2671
  %v2673 = vadd.f32 %v2672, 0.05243302
  %v2674 = vmul.f32 %v2667, %v2673
  %v2675 = vadd.f32 %v2674, 0.18741608
  %v2676 = vmul.f32 %v2667, %v2675
  %v2677 = vadd.f32 %v2676, 1.1283791
  %v2678 = vmul.f32 %v1003, %v2677
  %v2679 = vmul.f32 %v2667, 3.8918573e-05
  %v2680 = vadd.f32 %v2679, 0.001143296
  %v2681 = vmul.f32 %v2667, %v2680
  %v2682 = vadd.f32 %v2681, 0.014752088
  %v2683 = vmul.f32 %v2667, %v2682
  %v2684 = vadd.f32 %v2683, 0.112945676
  %v2685 = vmul.f32 %v2667, %v2684
  %v2686 = vadd.f32 %v2685, 0.4994258
  %v2687 = vmul.f32 %v2667, %v2686
  %v2688 = vadd.f32 %v2687, 1.0
  %v2689 = vrcp.pop %v2688
  %v2690 = vmul.f32 %v2688, %v2689
  %v2691 = vsub.f32 1.0, %v2690
  %v2692 = vmul.f32 %v2689, %v2691
  %v2693 = vadd.f32 %v2689, %v2692
  %vm2694 = vweird.f32 %v2688
  %vm2695 = vweird.f32 %v2689
  %vm2696 = vmor %vm2694, %vm2695
  %v2697 = vsel %vm2696, %v2689, %v2693
  %v2698 = vand.u32 2147483647, %v2688
  %vm2699 = vcmp.eq.f32.partialorder %v2698, 8.507059e+37
  %v2700 = vand.u32 %v2688, 2147483648
  %v2701 = vor.u32 1.1754944e-38, %v2700
  %v2702 = vsel %vm2699, %v2701, %v2697
  %v2703 = vmul.f32 %v2678, %v2702
  %v2704 = vmin.f32 %v2703, 1.0
  %v2705 = vmax.f32 %v2704, -1.0
  %v2706 = vmul.f32 %v1004, %v1004
  %v2707 = vmin.f32 16.0, %v2706
  %v2708 = vmul.f32 %v2707, 2.1237322e-06
  %v2709 = vadd.f32 %v2708, 0.00028619796
  %v2710 = vmul.f32 %v2707, %v2709
  %v2711 = vadd.f32 %v2710, 0.0036580483
  %v2712 = vmul.f32 %v2707, %v2711
  %v2713 = vadd.f32 %v2712, 0.05243302
  %v2714 = vmul.f32 %v2707, %v2713
  %v2715 = vadd.f32 %v2714, 0.18741608
  %v2716 = vmul.f32 %v2707, %v2715
  %v2717 = vadd.f32 %v2716, 1.1283791
  %v2718 = vmul.f32 %v1004, %v2717
  %v2719 = vmul.f32 %v2707, 3.8918573e-05
  %v2720 = vadd.f32 %v2719, 0.001143296
  %v2721 = vmul.f32 %v2707, %v2720
  %v2722 = vadd.f32 %v2721, 0.014752088
  %v2723 = vmul.f32 %v2707, %v2722
  %v2724 = vadd.f32 %v2723, 0.112945676
  %v2725 = vmul.f32 %v2707, %v2724
  %v2726 = vadd.f32 %v2725, 0.4994258
  %v2727 = vmul.f32 %v2707, %v2726
  %v2728 = vadd.f32 %v2727, 1.0
  %v2729 = vrcp.pop %v2728
  %v2730 = vmul.f32 %v2728, %v2729
  %v2731 = vsub.f32 1.0, %v2730
  %v2732 = vmul.f32 %v2729, %v2731
  %v2733 = vadd.f32 %v2729, %v2732
  %vm2734 = vweird.f32 %v2728
  %vm2735 = vweird.f32 %v2729
  %vm2736 = vmor %vm2734, %vm2735
  %v2737 = vsel %vm2736, %v2729, %v2733
  %v2738 = vand.u32 2147483647, %v2728
  %vm2739 = vcmp.eq.f32.partialorder %v2738, 8.507059e+37
  %v2740 = vand.u32 %v2728, 2147483648
  %v2741 = vor.u32 1.1754944e-38, %v2740
  %v2742 = vsel %vm2739, %v2741, %v2737
  %v2743 = vmul.f32 %v2718, %v2742
  %v2744 = vmin.f32 %v2743, 1.0
  %v2745 = vmax.f32 %v2744, -1.0
  %v2746 = vmul.f32 %v1005, %v1005
  %v2747 = vmin.f32 16.0, %v2746
  %v2748 = vmul.f32 %v2747, 2.1237322e-06
  %v2749 = vadd.f32 %v2748, 0.00028619796
  %v2750 = vmul.f32 %v2747, %v2749
  %v2751 = vadd.f32 %v2750, 0.0036580483
  %v2752 = vmul.f32 %v2747, %v2751
  %v2753 = vadd.f32 %v2752, 0.05243302
  %v2754 = vmul.f32 %v2747, %v2753
  %v2755 = vadd.f32 %v2754, 0.18741608
  %v2756 = vmul.f32 %v2747, %v2755
  %v2757 = vadd.f32 %v2756, 1.1283791
  %v2758 = vmul.f32 %v1005, %v2757
  %v2759 = vmul.f32 %v2747, 3.8918573e-05
  %v2760 = vadd.f32 %v2759, 0.001143296
  %v2761 = vmul.f32 %v2747, %v2760
  %v2762 = vadd.f32 %v2761, 0.014752088
  %v2763 = vmul.f32 %v2747, %v2762
  %v2764 = vadd.f32 %v2763, 0.112945676
  %v2765 = vmul.f32 %v2747, %v2764
  %v2766 = vadd.f32 %v2765, 0.4994258
  %v2767 = vmul.f32 %v2747, %v2766
  %v2768 = vadd.f32 %v2767, 1.0
  %v2769 = vrcp.pop %v2768
  %v2770 = vmul.f32 %v2768, %v2769
  %v2771 = vsub.f32 1.0, %v2770
  %v2772 = vmul.f32 %v2769, %v2771
  %v2773 = vadd.f32 %v2769, %v2772
  %vm2774 = vweird.f32 %v2768
  %vm2775 = vweird.f32 %v2769
  %vm2776 = vmor %vm2774, %vm2775
  %v2777 = vsel %vm2776, %v2769, %v2773
  %v2778 = vand.u32 2147483647, %v2768
  %vm2779 = vcmp.eq.f32.partialorder %v2778, 8.507059e+37
  %v2780 = vand.u32 %v2768, 2147483648
  %v2781 = vor.u32 1.1754944e-38, %v2780
  %v2782 = vsel %vm2779, %v2781, %v2777
  %v2783 = vmul.f32 %v2758, %v2782
  %v2784 = vmin.f32 %v2783, 1.0
  %v2785 = vmax.f32 %v2784, -1.0
  %v2786 = vmul.f32 %v1006, %v1006
  %v2787 = vmin.f32 16.0, %v2786
  %v2788 = vmul.f32 %v2787, 2.1237322e-06
  %v2789 = vadd.f32 %v2788, 0.00028619796
  %v2790 = vmul.f32 %v2787, %v2789
  %v2791 = vadd.f32 %v2790, 0.0036580483
  %v2792 = vmul.f32 %v2787, %v2791
  %v2793 = vadd.f32 %v2792, 0.05243302
  %v2794 = vmul.f32 %v2787, %v2793
  %v2795 = vadd.f32 %v2794, 0.18741608
  %v2796 = vmul.f32 %v2787, %v2795
  %v2797 = vadd.f32 %v2796, 1.1283791
  %v2798 = vmul.f32 %v1006, %v2797
  %v2799 = vmul.f32 %v2787, 3.8918573e-05
  %v2800 = vadd.f32 %v2799, 0.001143296
  %v2801 = vmul.f32 %v2787, %v2800
  %v2802 = vadd.f32 %v2801, 0.014752088
  %v2803 = vmul.f32 %v2787, %v2802
  %v2804 = vadd.f32 %v2803, 0.112945676
  %v2805 = vmul.f32 %v2787, %v2804
  %v2806 = vadd.f32 %v2805, 0.4994258
  %v2807 = vmul.f32 %v2787, %v2806
  %v2808 = vadd.f32 %v2807, 1.0
  %v2809 = vrcp.pop %v2808
  %v2810 = vmul.f32 %v2808, %v2809
  %v2811 = vsub.f32 1.0, %v2810
  %v2812 = vmul.f32 %v2809, %v2811
  %v2813 = vadd.f32 %v2809, %v2812
  %vm2814 = vweird.f32 %v2808
  %vm2815 = vweird.f32 %v2809
  %vm2816 = vmor %vm2814, %vm2815
  %v2817 = vsel %vm2816, %v2809, %v2813
  %v2818 = vand.u32 2147483647, %v2808
  %vm2819 = vcmp.eq.f32.partialorder %v2818, 8.507059e+37
  %v2820 = vand.u32 %v2808, 2147483648
  %v2821 = vor.u32 1.1754944e-38, %v2820
  %v2822 = vsel %vm2819, %v2821, %v2817
  %v2823 = vmul.f32 %v2798, %v2822
  %v2824 = vmin.f32 %v2823, 1.0
  %v2825 = vmax.f32 %v2824, -1.0
  %v2826 = vmul.f32 %v1007, %v1007
  %v2827 = vmin.f32 16.0, %v2826
  %v2828 = vmul.f32 %v2827, 2.1237322e-06
  %v2829 = vadd.f32 %v2828, 0.00028619796
  %v2830 = vmul.f32 %v2827, %v2829
  %v2831 = vadd.f32 %v2830, 0.0036580483
  %v2832 = vmul.f32 %v2827, %v2831
  %v2833 = vadd.f32 %v2832, 0.05243302
  %v2834 = vmul.f32 %v2827, %v2833
  %v2835 = vadd.f32 %v2834, 0.18741608
  %v2836 = vmul.f32 %v2827, %v2835
  %v2837 = vadd.f32 %v2836, 1.1283791
  %v2838 = vmul.f32 %v1007, %v2837
  %v2839 = vmul.f32 %v2827, 3.8918573e-05
  %v2840 = vadd.f32 %v2839, 0.001143296
  %v2841 = vmul.f32 %v2827, %v2840
  %v2842 = vadd.f32 %v2841, 0.014752088
  %v2843 = vmul.f32 %v2827, %v2842
  %v2844 = vadd.f32 %v2843, 0.112945676
  %v2845 = vmul.f32 %v2827, %v2844
  %v2846 = vadd.f32 %v2845, 0.4994258
  %v2847 = vmul.f32 %v2827, %v2846
  %v2848 = vadd.f32 %v2847, 1.0
  %v2849 = vrcp.pop %v2848
  %v2850 = vmul.f32 %v2848, %v2849
  %v2851 = vsub.f32 1.0, %v2850
  %v2852 = vmul.f32 %v2849, %v2851
  %v2853 = vadd.f32 %v2849, %v2852
  %vm2854 = vweird.f32 %v2848
  %vm2855 = vweird.f32 %v2849
  %vm2856 = vmor %vm2854, %vm2855
  %v2857 = vsel %vm2856, %v2849, %v2853
  %v2858 = vand.u32 2147483647, %v2848
  %vm2859 = vcmp.eq.f32.partialorder %v2858, 8.507059e+37
  %v2860 = vand.u32 %v2848, 2147483648
  %v2861 = vor.u32 1.1754944e-38, %v2860
  %v2862 = vsel %vm2859, %v2861, %v2857
  %v2863 = vmul.f32 %v2838, %v2862
  %v2864 = vmin.f32 %v2863, 1.0
  %v2865 = vmax.f32 %v2864, -1.0
  %v2866 = vmul.f32 %v1008, %v1008
  %v2867 = vmin.f32 16.0, %v2866
  %v2868 = vmul.f32 %v2867, 2.1237322e-06
  %v2869 = vadd.f32 %v2868, 0.00028619796
  %v2870 = vmul.f32 %v2867, %v2869
  %v2871 = vadd.f32 %v2870, 0.0036580483
  %v2872 = vmul.f32 %v2867, %v2871
  %v2873 = vadd.f32 %v2872, 0.05243302
  %v2874 = vmul.f32 %v2867, %v2873
  %v2875 = vadd.f32 %v2874, 0.18741608
  %v2876 = vmul.f32 %v2867, %v2875
  %v2877 = vadd.f32 %v2876, 1.1283791
  %v2878 = vmul.f32 %v1008, %v2877
  %v2879 = vmul.f32 %v2867, 3.8918573e-05
  %v2880 = vadd.f32 %v2879, 0.001143296
  %v2881 = vmul.f32 %v2867, %v2880
  %v2882 = vadd.f32 %v2881, 0.014752088
  %v2883 = vmul.f32 %v2867, %v2882
  %v2884 = vadd.f32 %v2883, 0.112945676
  %v2885 = vmul.f32 %v2867, %v2884
  %v2886 = vadd.f32 %v2885, 0.4994258
  %v2887 = vmul.f32 %v2867, %v2886
  %v2888 = vadd.f32 %v2887, 1.0
  %v2889 = vrcp.pop %v2888
  %v2890 = vmul.f32 %v2888, %v2889
  %v2891 = vsub.f32 1.0, %v2890
  %v2892 = vmul.f32 %v2889, %v2891
  %v2893 = vadd.f32 %v2889, %v2892
  %vm2894 = vweird.f32 %v2888
  %vm2895 = vweird.f32 %v2889
  %vm2896 = vmor %vm2894, %vm2895
  %v2897 = vsel %vm2896, %v2889, %v2893
  %v2898 = vand.u32 2147483647, %v2888
  %vm2899 = vcmp.eq.f32.partialorder %v2898, 8.507059e+37
  %v2900 = vand.u32 %v2888, 2147483648
  %v2901 = vor.u32 1.1754944e-38, %v2900
  %v2902 = vsel %vm2899, %v2901, %v2897
  %v2903 = vmul.f32 %v2878, %v2902
  %v2904 = vmin.f32 %v2903, 1.0
  %v2905 = vmax.f32 %v2904, -1.0
  %v2906 = vmul.f32 %v1009, %v1009
  %v2907 = vmin.f32 16.0, %v2906
  %v2908 = vmul.f32 %v2907, 2.1237322e-06
  %v2909 = vadd.f32 %v2908, 0.00028619796
  %v2910 = vmul.f32 %v2907, %v2909
  %v2911 = vadd.f32 %v2910, 0.0036580483
  %v2912 = vmul.f32 %v2907, %v2911
  %v2913 = vadd.f32 %v2912, 0.05243302
  %v2914 = vmul.f32 %v2907, %v2913
  %v2915 = vadd.f32 %v2914, 0.18741608
  %v2916 = vmul.f32 %v2907, %v2915
  %v2917 = vadd.f32 %v2916, 1.1283791
  %v2918 = vmul.f32 %v1009, %v2917
  %v2919 = vmul.f32 %v2907, 3.8918573e-05
  %v2920 = vadd.f32 %v2919, 0.001143296
  %v2921 = vmul.f32 %v2907, %v2920
  %v2922 = vadd.f32 %v2921, 0.014752088
  %v2923 = vmul.f32 %v2907, %v2922
  %v2924 = vadd.f32 %v2923, 0.112945676
  %v2925 = vmul.f32 %v2907, %v2924
  %v2926 = vadd.f32 %v2925, 0.4994258
  %v2927 = vmul.f32 %v2907, %v2926
  %v2928 = vadd.f32 %v2927, 1.0
  %v2929 = vrcp.pop %v2928
  %v2930 = vmul.f32 %v2928, %v2929
  %v2931 = vsub.f32 1.0, %v2930
  %v2932 = vmul.f32 %v2929, %v2931
  %v2933 = vadd.f32 %v2929, %v2932
  %vm2934 = vweird.f32 %v2928
  %vm2935 = vweird.f32 %v2929
  %vm2936 = vmor %vm2934, %vm2935
  %v2937 = vsel %vm2936, %v2929, %v2933
  %v2938 = vand.u32 2147483647, %v2928
  %vm2939 = vcmp.eq.f32.partialorder %v2938, 8.507059e+37
  %v2940 = vand.u32 %v2928, 2147483648
  %v2941 = vor.u32 1.1754944e-38, %v2940
  %v2942 = vsel %vm2939, %v2941, %v2937
  %v2943 = vmul.f32 %v2918, %v2942
  %v2944 = vmin.f32 %v2943, 1.0
  %v2945 = vmax.f32 %v2944, -1.0
  %v2946 = vmul.f32 %v1010, %v1010
  %v2947 = vmin.f32 16.0, %v2946
  %v2948 = vmul.f32 %v2947, 2.1237322e-06
  %v2949 = vadd.f32 %v2948, 0.00028619796
  %v2950 = vmul.f32 %v2947, %v2949
  %v2951 = vadd.f32 %v2950, 0.0036580483
  %v2952 = vmul.f32 %v2947, %v2951
  %v2953 = vadd.f32 %v2952, 0.05243302
  %v2954 = vmul.f32 %v2947, %v2953
  %v2955 = vadd.f32 %v2954, 0.18741608
  %v2956 = vmul.f32 %v2947, %v2955
  %v2957 = vadd.f32 %v2956, 1.1283791
  %v2958 = vmul.f32 %v1010, %v2957
  %v2959 = vmul.f32 %v2947, 3.8918573e-05
  %v2960 = vadd.f32 %v2959, 0.001143296
  %v2961 = vmul.f32 %v2947, %v2960
  %v2962 = vadd.f32 %v2961, 0.014752088
  %v2963 = vmul.f32 %v2947, %v2962
  %v2964 = vadd.f32 %v2963, 0.112945676
  %v2965 = vmul.f32 %v2947, %v2964
  %v2966 = vadd.f32 %v2965, 0.4994258
  %v2967 = vmul.f32 %v2947, %v2966
  %v2968 = vadd.f32 %v2967, 1.0
  %v2969 = vrcp.pop %v2968
  %v2970 = vmul.f32 %v2968, %v2969
  %v2971 = vsub.f32 1.0, %v2970
  %v2972 = vmul.f32 %v2969, %v2971
  %v2973 = vadd.f32 %v2969, %v2972
  %vm2974 = vweird.f32 %v2968
  %vm2975 = vweird.f32 %v2969
  %vm2976 = vmor %vm2974, %vm2975
  %v2977 = vsel %vm2976, %v2969, %v2973
  %v2978 = vand.u32 2147483647, %v2968
  %vm2979 = vcmp.eq.f32.partialorder %v2978, 8.507059e+37
  %v2980 = vand.u32 %v2968, 2147483648
  %v2981 = vor.u32 1.1754944e-38, %v2980
  %v2982 = vsel %vm2979, %v2981, %v2977
  %v2983 = vmul.f32 %v2958, %v2982
  %v2984 = vmin.f32 %v2983, 1.0
  %v2985 = vmax.f32 %v2984, -1.0
  %v2986 = vmul.f32 %v1011, %v1011
  %v2987 = vmin.f32 16.0, %v2986
  %v2988 = vmul.f32 %v2987, 2.1237322e-06
  %v2989 = vadd.f32 %v2988, 0.00028619796
  %v2990 = vmul.f32 %v2987, %v2989
  %v2991 = vadd.f32 %v2990, 0.0036580483
  %v2992 = vmul.f32 %v2987, %v2991
  %v2993 = vadd.f32 %v2992, 0.05243302
  %v2994 = vmul.f32 %v2987, %v2993
  %v2995 = vadd.f32 %v2994, 0.18741608
  %v2996 = vmul.f32 %v2987, %v2995
  %v2997 = vadd.f32 %v2996, 1.1283791
  %v2998 = vmul.f32 %v1011, %v2997
  %v2999 = vmul.f32 %v2987, 3.8918573e-05
  %v3000 = vadd.f32 %v2999, 0.001143296
  %v3001 = vmul.f32 %v2987, %v3000
  %v3002 = vadd.f32 %v3001, 0.014752088
  %v3003 = vmul.f32 %v2987, %v3002
  %v3004 = vadd.f32 %v3003, 0.112945676
  %v3005 = vmul.f32 %v2987, %v3004
  %v3006 = vadd.f32 %v3005, 0.4994258
  %v3007 = vmul.f32 %v2987, %v3006
  %v3008 = vadd.f32 %v3007, 1.0
  %v3009 = vrcp.pop %v3008
  %v3010 = vmul.f32 %v3008, %v3009
  %v3011 = vsub.f32 1.0, %v3010
  %v3012 = vmul.f32 %v3009, %v3011
  %v3013 = vadd.f32 %v3009, %v3012
  %vm3014 = vweird.f32 %v3008
  %vm3015 = vweird.f32 %v3009
  %vm3016 = vmor %vm3014, %vm3015
  %v3017 = vsel %vm3016, %v3009, %v3013
  %v3018 = vand.u32 2147483647, %v3008
  %vm3019 = vcmp.eq.f32.partialorder %v3018, 8.507059e+37
  %v3020 = vand.u32 %v3008, 2147483648
  %v3021 = vor.u32 1.1754944e-38, %v3020
  %v3022 = vsel %vm3019, %v3021, %v3017
  %v3023 = vmul.f32 %v2998, %v3022
  %v3024 = vmin.f32 %v3023, 1.0
  %v3025 = vmax.f32 %v3024, -1.0
  %v3026 = vmul.f32 %v1012, %v1012
  %v3027 = vmin.f32 16.0, %v3026
  %v3028 = vmul.f32 %v3027, 2.1237322e-06
  %v3029 = vadd.f32 %v3028, 0.00028619796
  %v3030 = vmul.f32 %v3027, %v3029
  %v3031 = vadd.f32 %v3030, 0.0036580483
  %v3032 = vmul.f32 %v3027, %v3031
  %v3033 = vadd.f32 %v3032, 0.05243302
  %v3034 = vmul.f32 %v3027, %v3033
  %v3035 = vadd.f32 %v3034, 0.18741608
  %v3036 = vmul.f32 %v3027, %v3035
  %v3037 = vadd.f32 %v3036, 1.1283791
  %v3038 = vmul.f32 %v1012, %v3037
  %v3039 = vmul.f32 %v3027, 3.8918573e-05
  %v3040 = vadd.f32 %v3039, 0.001143296
  %v3041 = vmul.f32 %v3027, %v3040
  %v3042 = vadd.f32 %v3041, 0.014752088
  %v3043 = vmul.f32 %v3027, %v3042
  %v3044 = vadd.f32 %v3043, 0.112945676
  %v3045 = vmul.f32 %v3027, %v3044
  %v3046 = vadd.f32 %v3045, 0.4994258
  %v3047 = vmul.f32 %v3027, %v3046
  %v3048 = vadd.f32 %v3047, 1.0
  %v3049 = vrcp.pop %v3048
  %v3050 = vmul.f32 %v3048, %v3049
  %v3051 = vsub.f32 1.0, %v3050
  %v3052 = vmul.f32 %v3049, %v3051
  %v3053 = vadd.f32 %v3049, %v3052
  %vm3054 = vweird.f32 %v3048
  %vm3055 = vweird.f32 %v3049
  %vm3056 = vmor %vm3054, %vm3055
  %v3057 = vsel %vm3056, %v3049, %v3053
  %v3058 = vand.u32 2147483647, %v3048
  %vm3059 = vcmp.eq.f32.partialorder %v3058, 8.507059e+37
  %v3060 = vand.u32 %v3048, 2147483648
  %v3061 = vor.u32 1.1754944e-38, %v3060
  %v3062 = vsel %vm3059, %v3061, %v3057
  %v3063 = vmul.f32 %v3038, %v3062
  %v3064 = vmin.f32 %v3063, 1.0
  %v3065 = vmax.f32 %v3064, -1.0
  %v3066 = vmul.f32 %v1013, %v1013
  %v3067 = vmin.f32 16.0, %v3066
  %v3068 = vmul.f32 %v3067, 2.1237322e-06
  %v3069 = vadd.f32 %v3068, 0.00028619796
  %v3070 = vmul.f32 %v3067, %v3069
  %v3071 = vadd.f32 %v3070, 0.0036580483
  %v3072 = vmul.f32 %v3067, %v3071
  %v3073 = vadd.f32 %v3072, 0.05243302
  %v3074 = vmul.f32 %v3067, %v3073
  %v3075 = vadd.f32 %v3074, 0.18741608
  %v3076 = vmul.f32 %v3067, %v3075
  %v3077 = vadd.f32 %v3076, 1.1283791
  %v3078 = vmul.f32 %v1013, %v3077
  %v3079 = vmul.f32 %v3067, 3.8918573e-05
  %v3080 = vadd.f32 %v3079, 0.001143296
  %v3081 = vmul.f32 %v3067, %v3080
  %v3082 = vadd.f32 %v3081, 0.014752088
  %v3083 = vmul.f32 %v3067, %v3082
  %v3084 = vadd.f32 %v3083, 0.112945676
  %v3085 = vmul.f32 %v3067, %v3084
  %v3086 = vadd.f32 %v3085, 0.4994258
  %v3087 = vmul.f32 %v3067, %v3086
  %v3088 = vadd.f32 %v3087, 1.0
  %v3089 = vrcp.pop %v3088
  %v3090 = vmul.f32 %v3088, %v3089
  %v3091 = vsub.f32 1.0, %v3090
  %v3092 = vmul.f32 %v3089, %v3091
  %v3093 = vadd.f32 %v3089, %v3092
  %vm3094 = vweird.f32 %v3088
  %vm3095 = vweird.f32 %v3089
  %vm3096 = vmor %vm3094, %vm3095
  %v3097 = vsel %vm3096, %v3089, %v3093
  %v3098 = vand.u32 2147483647, %v3088
  %vm3099 = vcmp.eq.f32.partialorder %v3098, 8.507059e+37
  %v3100 = vand.u32 %v3088, 2147483648
  %v3101 = vor.u32 1.1754944e-38, %v3100
  %v3102 = vsel %vm3099, %v3101, %v3097
  %v3103 = vmul.f32 %v3078, %v3102
  %v3104 = vmin.f32 %v3103, 1.0
  %v3105 = vmax.f32 %v3104, -1.0
  %v3106 = vmul.f32 %v1014, %v1014
  %v3107 = vmin.f32 16.0, %v3106
  %v3108 = vmul.f32 %v3107, 2.1237322e-06
  %v3109 = vadd.f32 %v3108, 0.00028619796
  %v3110 = vmul.f32 %v3107, %v3109
  %v3111 = vadd.f32 %v3110, 0.0036580483
  %v3112 = vmul.f32 %v3107, %v3111
  %v3113 = vadd.f32 %v3112, 0.05243302
  %v3114 = vmul.f32 %v3107, %v3113
  %v3115 = vadd.f32 %v3114, 0.18741608
  %v3116 = vmul.f32 %v3107, %v3115
  %v3117 = vadd.f32 %v3116, 1.1283791
  %v3118 = vmul.f32 %v1014, %v3117
  %v3119 = vmul.f32 %v3107, 3.8918573e-05
  %v3120 = vadd.f32 %v3119, 0.001143296
  %v3121 = vmul.f32 %v3107, %v3120
  %v3122 = vadd.f32 %v3121, 0.014752088
  %v3123 = vmul.f32 %v3107, %v3122
  %v3124 = vadd.f32 %v3123, 0.112945676
  %v3125 = vmul.f32 %v3107, %v3124
  %v3126 = vadd.f32 %v3125, 0.4994258
  %v3127 = vmul.f32 %v3107, %v3126
  %v3128 = vadd.f32 %v3127, 1.0
  %v3129 = vrcp.pop %v3128
  %v3130 = vmul.f32 %v3128, %v3129
  %v3131 = vsub.f32 1.0, %v3130
  %v3132 = vmul.f32 %v3129, %v3131
  %v3133 = vadd.f32 %v3129, %v3132
  %vm3134 = vweird.f32 %v3128
  %vm3135 = vweird.f32 %v3129
  %vm3136 = vmor %vm3134, %vm3135
  %v3137 = vsel %vm3136, %v3129, %v3133
  %v3138 = vand.u32 2147483647, %v3128
  %vm3139 = vcmp.eq.f32.partialorder %v3138, 8.507059e+37
  %v3140 = vand.u32 %v3128, 2147483648
  %v3141 = vor.u32 1.1754944e-38, %v3140
  %v3142 = vsel %vm3139, %v3141, %v3137
  %v3143 = vmul.f32 %v3118, %v3142
  %v3144 = vmin.f32 %v3143, 1.0
  %v3145 = vmax.f32 %v3144, -1.0
  %v3146 = vmul.f32 %v1015, %v1015
  %v3147 = vmin.f32 16.0, %v3146
  %v3148 = vmul.f32 %v3147, 2.1237322e-06
  %v3149 = vadd.f32 %v3148, 0.00028619796
  %v3150 = vmul.f32 %v3147, %v3149
  %v3151 = vadd.f32 %v3150, 0.0036580483
  %v3152 = vmul.f32 %v3147, %v3151
  %v3153 = vadd.f32 %v3152, 0.05243302
  %v3154 = vmul.f32 %v3147, %v3153
  %v3155 = vadd.f32 %v3154, 0.18741608
  %v3156 = vmul.f32 %v3147, %v3155
  %v3157 = vadd.f32 %v3156, 1.1283791
  %v3158 = vmul.f32 %v1015, %v3157
  %v3159 = vmul.f32 %v3147, 3.8918573e-05
  %v3160 = vadd.f32 %v3159, 0.001143296
  %v3161 = vmul.f32 %v3147, %v3160
  %v3162 = vadd.f32 %v3161, 0.014752088
  %v3163 = vmul.f32 %v3147, %v3162
  %v3164 = vadd.f32 %v3163, 0.112945676
  %v3165 = vmul.f32 %v3147, %v3164
  %v3166 = vadd.f32 %v3165, 0.4994258
  %v3167 = vmul.f32 %v3147, %v3166
  %v3168 = vadd.f32 %v3167, 1.0
  %v3169 = vrcp.pop %v3168
  %v3170 = vmul.f32 %v3168, %v3169
  %v3171 = vsub.f32 1.0, %v3170
  %v3172 = vmul.f32 %v3169, %v3171
  %v3173 = vadd.f32 %v3169, %v3172
  %vm3174 = vweird.f32 %v3168
  %vm3175 = vweird.f32 %v3169
  %vm3176 = vmor %vm3174, %vm3175
  %v3177 = vsel %vm3176, %v3169, %v3173
  %v3178 = vand.u32 2147483647, %v3168
  %vm3179 = vcmp.eq.f32.partialorder %v3178, 8.507059e+37
  %v3180 = vand.u32 %v3168, 2147483648
  %v3181 = vor.u32 1.1754944e-38, %v3180
  %v3182 = vsel %vm3179, %v3181, %v3177
  %v3183 = vmul.f32 %v3158, %v3182
  %v3184 = vmin.f32 %v3183, 1.0
  %v3185 = vmax.f32 %v3184, -1.0
  %v3186 = vmul.f32 %v1016, %v1016
  %v3187 = vmin.f32 16.0, %v3186
  %v3188 = vmul.f32 %v3187, 2.1237322e-06
  %v3189 = vadd.f32 %v3188, 0.00028619796
  %v3190 = vmul.f32 %v3187, %v3189
  %v3191 = vadd.f32 %v3190, 0.0036580483
  %v3192 = vmul.f32 %v3187, %v3191
  %v3193 = vadd.f32 %v3192, 0.05243302
  %v3194 = vmul.f32 %v3187, %v3193
  %v3195 = vadd.f32 %v3194, 0.18741608
  %v3196 = vmul.f32 %v3187, %v3195
  %v3197 = vadd.f32 %v3196, 1.1283791
  %v3198 = vmul.f32 %v1016, %v3197
  %v3199 = vmul.f32 %v3187, 3.8918573e-05
  %v3200 = vadd.f32 %v3199, 0.001143296
  %v3201 = vmul.f32 %v3187, %v3200
  %v3202 = vadd.f32 %v3201, 0.014752088
  %v3203 = vmul.f32 %v3187, %v3202
  %v3204 = vadd.f32 %v3203, 0.112945676
  %v3205 = vmul.f32 %v3187, %v3204
  %v3206 = vadd.f32 %v3205, 0.4994258
  %v3207 = vmul.f32 %v3187, %v3206
  %v3208 = vadd.f32 %v3207, 1.0
  %v3209 = vrcp.pop %v3208
  %v3210 = vmul.f32 %v3208, %v3209
  %v3211 = vsub.f32 1.0, %v3210
  %v3212 = vmul.f32 %v3209, %v3211
  %v3213 = vadd.f32 %v3209, %v3212
  %vm3214 = vweird.f32 %v3208
  %vm3215 = vweird.f32 %v3209
  %vm3216 = vmor %vm3214, %vm3215
  %v3217 = vsel %vm3216, %v3209, %v3213
  %v3218 = vand.u32 2147483647, %v3208
  %vm3219 = vcmp.eq.f32.partialorder %v3218, 8.507059e+37
  %v3220 = vand.u32 %v3208, 2147483648
  %v3221 = vor.u32 1.1754944e-38, %v3220
  %v3222 = vsel %vm3219, %v3221, %v3217
  %v3223 = vmul.f32 %v3198, %v3222
  %v3224 = vmin.f32 %v3223, 1.0
  %v3225 = vmax.f32 %v3224, -1.0
  %v3226 = vmul.f32 %v1017, %v1017
  %v3227 = vmin.f32 16.0, %v3226
  %v3228 = vmul.f32 %v3227, 2.1237322e-06
  %v3229 = vadd.f32 %v3228, 0.00028619796
  %v3230 = vmul.f32 %v3227, %v3229
  %v3231 = vadd.f32 %v3230, 0.0036580483
  %v3232 = vmul.f32 %v3227, %v3231
  %v3233 = vadd.f32 %v3232, 0.05243302
  %v3234 = vmul.f32 %v3227, %v3233
  %v3235 = vadd.f32 %v3234, 0.18741608
  %v3236 = vmul.f32 %v3227, %v3235
  %v3237 = vadd.f32 %v3236, 1.1283791
  %v3238 = vmul.f32 %v1017, %v3237
  %v3239 = vmul.f32 %v3227, 3.8918573e-05
  %v3240 = vadd.f32 %v3239, 0.001143296
  %v3241 = vmul.f32 %v3227, %v3240
  %v3242 = vadd.f32 %v3241, 0.014752088
  %v3243 = vmul.f32 %v3227, %v3242
  %v3244 = vadd.f32 %v3243, 0.112945676
  %v3245 = vmul.f32 %v3227, %v3244
  %v3246 = vadd.f32 %v3245, 0.4994258
  %v3247 = vmul.f32 %v3227, %v3246
  %v3248 = vadd.f32 %v3247, 1.0
  %v3249 = vrcp.pop %v3248
  %v3250 = vmul.f32 %v3248, %v3249
  %v3251 = vsub.f32 1.0, %v3250
  %v3252 = vmul.f32 %v3249, %v3251
  %v3253 = vadd.f32 %v3249, %v3252
  %vm3254 = vweird.f32 %v3248
  %vm3255 = vweird.f32 %v3249
  %vm3256 = vmor %vm3254, %vm3255
  %v3257 = vsel %vm3256, %v3249, %v3253
  %v3258 = vand.u32 2147483647, %v3248
  %vm3259 = vcmp.eq.f32.partialorder %v3258, 8.507059e+37
  %v3260 = vand.u32 %v3248, 2147483648
  %v3261 = vor.u32 1.1754944e-38, %v3260
  %v3262 = vsel %vm3259, %v3261, %v3257
  %v3263 = vmul.f32 %v3238, %v3262
  %v3264 = vmin.f32 %v3263, 1.0
  %v3265 = vmax.f32 %v3264, -1.0
  %v3266 = vmul.f32 %v1018, %v1018
  %v3267 = vmin.f32 16.0, %v3266
  %v3268 = vmul.f32 %v3267, 2.1237322e-06
  %v3269 = vadd.f32 %v3268, 0.00028619796
  %v3270 = vmul.f32 %v3267, %v3269
  %v3271 = vadd.f32 %v3270, 0.0036580483
  %v3272 = vmul.f32 %v3267, %v3271
  %v3273 = vadd.f32 %v3272, 0.05243302
  %v3274 = vmul.f32 %v3267, %v3273
  %v3275 = vadd.f32 %v3274, 0.18741608
  %v3276 = vmul.f32 %v3267, %v3275
  %v3277 = vadd.f32 %v3276, 1.1283791
  %v3278 = vmul.f32 %v1018, %v3277
  %v3279 = vmul.f32 %v3267, 3.8918573e-05
  %v3280 = vadd.f32 %v3279, 0.001143296
  %v3281 = vmul.f32 %v3267, %v3280
  %v3282 = vadd.f32 %v3281, 0.014752088
  %v3283 = vmul.f32 %v3267, %v3282
  %v3284 = vadd.f32 %v3283, 0.112945676
  %v3285 = vmul.f32 %v3267, %v3284
  %v3286 = vadd.f32 %v3285, 0.4994258
  %v3287 = vmul.f32 %v3267, %v3286
  %v3288 = vadd.f32 %v3287, 1.0
  %v3289 = vrcp.pop %v3288
  %v3290 = vmul.f32 %v3288, %v3289
  %v3291 = vsub.f32 1.0, %v3290
  %v3292 = vmul.f32 %v3289, %v3291
  %v3293 = vadd.f32 %v3289, %v3292
  %vm3294 = vweird.f32 %v3288
  %vm3295 = vweird.f32 %v3289
  %vm3296 = vmor %vm3294, %vm3295
  %v3297 = vsel %vm3296, %v3289, %v3293
  %v3298 = vand.u32 2147483647, %v3288
  %vm3299 = vcmp.eq.f32.partialorder %v3298, 8.507059e+37
  %v3300 = vand.u32 %v3288, 2147483648
  %v3301 = vor.u32 1.1754944e-38, %v3300
  %v3302 = vsel %vm3299, %v3301, %v3297
  %v3303 = vmul.f32 %v3278, %v3302
  %v3304 = vmin.f32 %v3303, 1.0
  %v3305 = vmax.f32 %v3304, -1.0
  %v3306 = vmul.f32 %v1019, %v1019
  %v3307 = vmin.f32 16.0, %v3306
  %v3308 = vmul.f32 %v3307, 2.1237322e-06
  %v3309 = vadd.f32 %v3308, 0.00028619796
  %v3310 = vmul.f32 %v3307, %v3309
  %v3311 = vadd.f32 %v3310, 0.0036580483
  %v3312 = vmul.f32 %v3307, %v3311
  %v3313 = vadd.f32 %v3312, 0.05243302
  %v3314 = vmul.f32 %v3307, %v3313
  %v3315 = vadd.f32 %v3314, 0.18741608
  %v3316 = vmul.f32 %v3307, %v3315
  %v3317 = vadd.f32 %v3316, 1.1283791
  %v3318 = vmul.f32 %v1019, %v3317
  %v3319 = vmul.f32 %v3307, 3.8918573e-05
  %v3320 = vadd.f32 %v3319, 0.001143296
  %v3321 = vmul.f32 %v3307, %v3320
  %v3322 = vadd.f32 %v3321, 0.014752088
  %v3323 = vmul.f32 %v3307, %v3322
  %v3324 = vadd.f32 %v3323, 0.112945676
  %v3325 = vmul.f32 %v3307, %v3324
  %v3326 = vadd.f32 %v3325, 0.4994258
  %v3327 = vmul.f32 %v3307, %v3326
  %v3328 = vadd.f32 %v3327, 1.0
  %v3329 = vrcp.pop %v3328
  %v3330 = vmul.f32 %v3328, %v3329
  %v3331 = vsub.f32 1.0, %v3330
  %v3332 = vmul.f32 %v3329, %v3331
  %v3333 = vadd.f32 %v3329, %v3332
  %vm3334 = vweird.f32 %v3328
  %vm3335 = vweird.f32 %v3329
  %vm3336 = vmor %vm3334, %vm3335
  %v3337 = vsel %vm3336, %v3329, %v3333
  %v3338 = vand.u32 2147483647, %v3328
  %vm3339 = vcmp.eq.f32.partialorder %v3338, 8.507059e+37
  %v3340 = vand.u32 %v3328, 2147483648
  %v3341 = vor.u32 1.1754944e-38, %v3340
  %v3342 = vsel %vm3339, %v3341, %v3337
  %v3343 = vmul.f32 %v3318, %v3342
  %v3344 = vmin.f32 %v3343, 1.0
  %v3345 = vmax.f32 %v3344, -1.0
  %v3346 = vmul.f32 %v1020, %v1020
  %v3347 = vmin.f32 16.0, %v3346
  %v3348 = vmul.f32 %v3347, 2.1237322e-06
  %v3349 = vadd.f32 %v3348, 0.00028619796
  %v3350 = vmul.f32 %v3347, %v3349
  %v3351 = vadd.f32 %v3350, 0.0036580483
  %v3352 = vmul.f32 %v3347, %v3351
  %v3353 = vadd.f32 %v3352, 0.05243302
  %v3354 = vmul.f32 %v3347, %v3353
  %v3355 = vadd.f32 %v3354, 0.18741608
  %v3356 = vmul.f32 %v3347, %v3355
  %v3357 = vadd.f32 %v3356, 1.1283791
  %v3358 = vmul.f32 %v1020, %v3357
  %v3359 = vmul.f32 %v3347, 3.8918573e-05
  %v3360 = vadd.f32 %v3359, 0.001143296
  %v3361 = vmul.f32 %v3347, %v3360
  %v3362 = vadd.f32 %v3361, 0.014752088
  %v3363 = vmul.f32 %v3347, %v3362
  %v3364 = vadd.f32 %v3363, 0.112945676
  %v3365 = vmul.f32 %v3347, %v3364
  %v3366 = vadd.f32 %v3365, 0.4994258
  %v3367 = vmul.f32 %v3347, %v3366
  %v3368 = vadd.f32 %v3367, 1.0
  %v3369 = vrcp.pop %v3368
  %v3370 = vmul.f32 %v3368, %v3369
  %v3371 = vsub.f32 1.0, %v3370
  %v3372 = vmul.f32 %v3369, %v3371
  %v3373 = vadd.f32 %v3369, %v3372
  %vm3374 = vweird.f32 %v3368
  %vm3375 = vweird.f32 %v3369
  %vm3376 = vmor %vm3374, %vm3375
  %v3377 = vsel %vm3376, %v3369, %v3373
  %v3378 = vand.u32 2147483647, %v3368
  %vm3379 = vcmp.eq.f32.partialorder %v3378, 8.507059e+37
  %v3380 = vand.u32 %v3368, 2147483648
  %v3381 = vor.u32 1.1754944e-38, %v3380
  %v3382 = vsel %vm3379, %v3381, %v3377
  %v3383 = vmul.f32 %v3358, %v3382
  %v3384 = vmin.f32 %v3383, 1.0
  %v3385 = vmax.f32 %v3384, -1.0
  %v3386 = vmul.f32 %v1021, %v1021
  %v3387 = vmin.f32 16.0, %v3386
  %v3388 = vmul.f32 %v3387, 2.1237322e-06
  %v3389 = vadd.f32 %v3388, 0.00028619796
  %v3390 = vmul.f32 %v3387, %v3389
  %v3391 = vadd.f32 %v3390, 0.0036580483
  %v3392 = vmul.f32 %v3387, %v3391
  %v3393 = vadd.f32 %v3392, 0.05243302
  %v3394 = vmul.f32 %v3387, %v3393
  %v3395 = vadd.f32 %v3394, 0.18741608
  %v3396 = vmul.f32 %v3387, %v3395
  %v3397 = vadd.f32 %v3396, 1.1283791
  %v3398 = vmul.f32 %v1021, %v3397
  %v3399 = vmul.f32 %v3387, 3.8918573e-05
  %v3400 = vadd.f32 %v3399, 0.001143296
  %v3401 = vmul.f32 %v3387, %v3400
  %v3402 = vadd.f32 %v3401, 0.014752088
  %v3403 = vmul.f32 %v3387, %v3402
  %v3404 = vadd.f32 %v3403, 0.112945676
  %v3405 = vmul.f32 %v3387, %v3404
  %v3406 = vadd.f32 %v3405, 0.4994258
  %v3407 = vmul.f32 %v3387, %v3406
  %v3408 = vadd.f32 %v3407, 1.0
  %v3409 = vrcp.pop %v3408
  %v3410 = vmul.f32 %v3408, %v3409
  %v3411 = vsub.f32 1.0, %v3410
  %v3412 = vmul.f32 %v3409, %v3411
  %v3413 = vadd.f32 %v3409, %v3412
  %vm3414 = vweird.f32 %v3408
  %vm3415 = vweird.f32 %v3409
  %vm3416 = vmor %vm3414, %vm3415
  %v3417 = vsel %vm3416, %v3409, %v3413
  %v3418 = vand.u32 2147483647, %v3408
  %vm3419 = vcmp.eq.f32.partialorder %v3418, 8.507059e+37
  %v3420 = vand.u32 %v3408, 2147483648
  %v3421 = vor.u32 1.1754944e-38, %v3420
  %v3422 = vsel %vm3419, %v3421, %v3417
  %v3423 = vmul.f32 %v3398, %v3422
  %v3424 = vmin.f32 %v3423, 1.0
  %v3425 = vmax.f32 %v3424, -1.0
  %v3426 = vmul.f32 %v1022, %v1022
  %v3427 = vmin.f32 16.0, %v3426
  %v3428 = vmul.f32 %v3427, 2.1237322e-06
  %v3429 = vadd.f32 %v3428, 0.00028619796
  %v3430 = vmul.f32 %v3427, %v3429
  %v3431 = vadd.f32 %v3430, 0.0036580483
  %v3432 = vmul.f32 %v3427, %v3431
  %v3433 = vadd.f32 %v3432, 0.05243302
  %v3434 = vmul.f32 %v3427, %v3433
  %v3435 = vadd.f32 %v3434, 0.18741608
  %v3436 = vmul.f32 %v3427, %v3435
  %v3437 = vadd.f32 %v3436, 1.1283791
  %v3438 = vmul.f32 %v1022, %v3437
  %v3439 = vmul.f32 %v3427, 3.8918573e-05
  %v3440 = vadd.f32 %v3439, 0.001143296
  %v3441 = vmul.f32 %v3427, %v3440
  %v3442 = vadd.f32 %v3441, 0.014752088
  %v3443 = vmul.f32 %v3427, %v3442
  %v3444 = vadd.f32 %v3443, 0.112945676
  %v3445 = vmul.f32 %v3427, %v3444
  %v3446 = vadd.f32 %v3445, 0.4994258
  %v3447 = vmul.f32 %v3427, %v3446
  %v3448 = vadd.f32 %v3447, 1.0
  %v3449 = vrcp.pop %v3448
  %v3450 = vmul.f32 %v3448, %v3449
  %v3451 = vsub.f32 1.0, %v3450
  %v3452 = vmul.f32 %v3449, %v3451
  %v3453 = vadd.f32 %v3449, %v3452
  %vm3454 = vweird.f32 %v3448
  %vm3455 = vweird.f32 %v3449
  %vm3456 = vmor %vm3454, %vm3455
  %v3457 = vsel %vm3456, %v3449, %v3453
  %v3458 = vand.u32 2147483647, %v3448
  %vm3459 = vcmp.eq.f32.partialorder %v3458, 8.507059e+37
  %v3460 = vand.u32 %v3448, 2147483648
  %v3461 = vor.u32 1.1754944e-38, %v3460
  %v3462 = vsel %vm3459, %v3461, %v3457
  %v3463 = vmul.f32 %v3438, %v3462
  %v3464 = vmin.f32 %v3463, 1.0
  %v3465 = vmax.f32 %v3464, -1.0
  %v3466 = vmul.f32 %v1023, %v1023
  %v3467 = vmin.f32 16.0, %v3466
  %v3468 = vmul.f32 %v3467, 2.1237322e-06
  %v3469 = vadd.f32 %v3468, 0.00028619796
  %v3470 = vmul.f32 %v3467, %v3469
  %v3471 = vadd.f32 %v3470, 0.0036580483
  %v3472 = vmul.f32 %v3467, %v3471
  %v3473 = vadd.f32 %v3472, 0.05243302
  %v3474 = vmul.f32 %v3467, %v3473
  %v3475 = vadd.f32 %v3474, 0.18741608
  %v3476 = vmul.f32 %v3467, %v3475
  %v3477 = vadd.f32 %v3476, 1.1283791
  %v3478 = vmul.f32 %v1023, %v3477
  %v3479 = vmul.f32 %v3467, 3.8918573e-05
  %v3480 = vadd.f32 %v3479, 0.001143296
  %v3481 = vmul.f32 %v3467, %v3480
  %v3482 = vadd.f32 %v3481, 0.014752088
  %v3483 = vmul.f32 %v3467, %v3482
  %v3484 = vadd.f32 %v3483, 0.112945676
  %v3485 = vmul.f32 %v3467, %v3484
  %v3486 = vadd.f32 %v3485, 0.4994258
  %v3487 = vmul.f32 %v3467, %v3486
  %v3488 = vadd.f32 %v3487, 1.0
  %v3489 = vrcp.pop %v3488
  %v3490 = vmul.f32 %v3488, %v3489
  %v3491 = vsub.f32 1.0, %v3490
  %v3492 = vmul.f32 %v3489, %v3491
  %v3493 = vadd.f32 %v3489, %v3492
  %vm3494 = vweird.f32 %v3488
  %vm3495 = vweird.f32 %v3489
  %vm3496 = vmor %vm3494, %vm3495
  %v3497 = vsel %vm3496, %v3489, %v3493
  %v3498 = vand.u32 2147483647, %v3488
  %vm3499 = vcmp.eq.f32.partialorder %v3498, 8.507059e+37
  %v3500 = vand.u32 %v3488, 2147483648
  %v3501 = vor.u32 1.1754944e-38, %v3500
  %v3502 = vsel %vm3499, %v3501, %v3497
  %v3503 = vmul.f32 %v3478, %v3502
  %v3504 = vmin.f32 %v3503, 1.0
  %v3505 = vmax.f32 %v3504, -1.0
  %v3506 = vmul.f32 %v1024, %v1024
  %v3507 = vmin.f32 16.0, %v3506
  %v3508 = vmul.f32 %v3507, 2.1237322e-06
  %v3509 = vadd.f32 %v3508, 0.00028619796
  %v3510 = vmul.f32 %v3507, %v3509
  %v3511 = vadd.f32 %v3510, 0.0036580483
  %v3512 = vmul.f32 %v3507, %v3511
  %v3513 = vadd.f32 %v3512, 0.05243302
  %v3514 = vmul.f32 %v3507, %v3513
  %v3515 = vadd.f32 %v3514, 0.18741608
  %v3516 = vmul.f32 %v3507, %v3515
  %v3517 = vadd.f32 %v3516, 1.1283791
  %v3518 = vmul.f32 %v1024, %v3517
  %v3519 = vmul.f32 %v3507, 3.8918573e-05
  %v3520 = vadd.f32 %v3519, 0.001143296
  %v3521 = vmul.f32 %v3507, %v3520
  %v3522 = vadd.f32 %v3521, 0.014752088
  %v3523 = vmul.f32 %v3507, %v3522
  %v3524 = vadd.f32 %v3523, 0.112945676
  %v3525 = vmul.f32 %v3507, %v3524
  %v3526 = vadd.f32 %v3525, 0.4994258
  %v3527 = vmul.f32 %v3507, %v3526
  %v3528 = vadd.f32 %v3527, 1.0
  %v3529 = vrcp.pop %v3528
  %v3530 = vmul.f32 %v3528, %v3529
  %v3531 = vsub.f32 1.0, %v3530
  %v3532 = vmul.f32 %v3529, %v3531
  %v3533 = vadd.f32 %v3529, %v3532
  %vm3534 = vweird.f32 %v3528
  %vm3535 = vweird.f32 %v3529
  %vm3536 = vmor %vm3534, %vm3535
  %v3537 = vsel %vm3536, %v3529, %v3533
  %v3538 = vand.u32 2147483647, %v3528
  %vm3539 = vcmp.eq.f32.partialorder %v3538, 8.507059e+37
  %v3540 = vand.u32 %v3528, 2147483648
  %v3541 = vor.u32 1.1754944e-38, %v3540
  %v3542 = vsel %vm3539, %v3541, %v3537
  %v3543 = vmul.f32 %v3518, %v3542
  %v3544 = vmin.f32 %v3543, 1.0
  %v3545 = vmax.f32 %v3544, -1.0
  %v3546 = vmul.f32 %v1025, %v1025
  %v3547 = vmin.f32 16.0, %v3546
  %v3548 = vmul.f32 %v3547, 2.1237322e-06
  %v3549 = vadd.f32 %v3548, 0.00028619796
  %v3550 = vmul.f32 %v3547, %v3549
  %v3551 = vadd.f32 %v3550, 0.0036580483
  %v3552 = vmul.f32 %v3547, %v3551
  %v3553 = vadd.f32 %v3552, 0.05243302
  %v3554 = vmul.f32 %v3547, %v3553
  %v3555 = vadd.f32 %v3554, 0.18741608
  %v3556 = vmul.f32 %v3547, %v3555
  %v3557 = vadd.f32 %v3556, 1.1283791
  %v3558 = vmul.f32 %v1025, %v3557
  %v3559 = vmul.f32 %v3547, 3.8918573e-05
  %v3560 = vadd.f32 %v3559, 0.001143296
  %v3561 = vmul.f32 %v3547, %v3560
  %v3562 = vadd.f32 %v3561, 0.014752088
  %v3563 = vmul.f32 %v3547, %v3562
  %v3564 = vadd.f32 %v3563, 0.112945676
  %v3565 = vmul.f32 %v3547, %v3564
  %v3566 = vadd.f32 %v3565, 0.4994258
  %v3567 = vmul.f32 %v3547, %v3566
  %v3568 = vadd.f32 %v3567, 1.0
  %v3569 = vrcp.pop %v3568
  %v3570 = vmul.f32 %v3568, %v3569
  %v3571 = vsub.f32 1.0, %v3570
  %v3572 = vmul.f32 %v3569, %v3571
  %v3573 = vadd.f32 %v3569, %v3572
  %vm3574 = vweird.f32 %v3568
  %vm3575 = vweird.f32 %v3569
  %vm3576 = vmor %vm3574, %vm3575
  %v3577 = vsel %vm3576, %v3569, %v3573
  %v3578 = vand.u32 2147483647, %v3568
  %vm3579 = vcmp.eq.f32.partialorder %v3578, 8.507059e+37
  %v3580 = vand.u32 %v3568, 2147483648
  %v3581 = vor.u32 1.1754944e-38, %v3580
  %v3582 = vsel %vm3579, %v3581, %v3577
  %v3583 = vmul.f32 %v3558, %v3582
  %v3584 = vmin.f32 %v3583, 1.0
  %v3585 = vmax.f32 %v3584, -1.0
  %v3586 = vadd.f32 %v1065, 1.0
  %v3587 = vadd.f32 %v1105, 1.0
  %v3588 = vadd.f32 %v1145, 1.0
  %v3589 = vadd.f32 %v1185, 1.0
  %v3590 = vadd.f32 %v1225, 1.0
  %v3591 = vadd.f32 %v1265, 1.0
  %v3592 = vadd.f32 %v1305, 1.0
  %v3593 = vadd.f32 %v1345, 1.0
  %v3594 = vadd.f32 %v1385, 1.0
  %v3595 = vadd.f32 %v1425, 1.0
  %v3596 = vadd.f32 %v1465, 1.0
  %v3597 = vadd.f32 %v1505, 1.0
  %v3598 = vadd.f32 %v1545, 1.0
  %v3599 = vadd.f32 %v1585, 1.0
  %v3600 = vadd.f32 %v1625, 1.0
  %v3601 = vadd.f32 %v1665, 1.0
  %v3602 = vadd.f32 %v1705, 1.0
  %v3603 = vadd.f32 %v1745, 1.0
  %v3604 = vadd.f32 %v1785, 1.0
  %v3605 = vadd.f32 %v1825, 1.0
  %v3606 = vadd.f32 %v1865, 1.0
  %v3607 = vadd.f32 %v1905, 1.0
  %v3608 = vadd.f32 %v1945, 1.0
  %v3609 = vadd.f32 %v1985, 1.0
  %v3610 = vadd.f32 %v2025, 1.0
  %v3611 = vadd.f32 %v2065, 1.0
  %v3612 = vadd.f32 %v2105, 1.0
  %v3613 = vadd.f32 %v2145, 1.0
  %v3614 = vadd.f32 %v2185, 1.0
  %v3615 = vadd.f32 %v2225, 1.0
  %v3616 = vadd.f32 %v2265, 1.0
  %v3617 = vadd.f32 %v2305, 1.0
  %v3618 = vadd.f32 %v2345, 1.0
  %v3619 = vadd.f32 %v2385, 1.0
  %v3620 = vadd.f32 %v2425, 1.0
  %v3621 = vadd.f32 %v2465, 1.0
  %v3622 = vadd.f32 %v2505, 1.0
  %v3623 = vadd.f32 %v2545, 1.0
  %v3624 = vadd.f32 %v2585, 1.0
  %v3625 = vadd.f32 %v2625, 1.0
  %v3626 = vadd.f32 %v2665, 1.0
  %v3627 = vadd.f32 %v2705, 1.0
  %v3628 = vadd.f32 %v2745, 1.0
  %v3629 = vadd.f32 %v2785, 1.0
  %v3630 = vadd.f32 %v2825, 1.0
  %v3631 = vadd.f32 %v2865, 1.0
  %v3632 = vadd.f32 %v2905, 1.0
  %v3633 = vadd.f32 %v2945, 1.0
  %v3634 = vadd.f32 %v2985, 1.0
  %v3635 = vadd.f32 %v3025, 1.0
  %v3636 = vadd.f32 %v3065, 1.0
  %v3637 = vadd.f32 %v3105, 1.0
  %v3638 = vadd.f32 %v3145, 1.0
  %v3639 = vadd.f32 %v3185, 1.0
  %v3640 = vadd.f32 %v3225, 1.0
  %v3641 = vadd.f32 %v3265, 1.0
  %v3642 = vadd.f32 %v3305, 1.0
  %v3643 = vadd.f32 %v3345, 1.0
  %v3644 = vadd.f32 %v3385, 1.0
  %v3645 = vadd.f32 %v3425, 1.0
  %v3646 = vadd.f32 %v3465, 1.0
  %v3647 = vadd.f32 %v3505, 1.0
  %v3648 = vadd.f32 %v3545, 1.0
  %v3649 = vadd.f32 %v3585, 1.0
  %v3650 = vmul.f32 %v898, %v3586
  %v3651 = vmul.f32 %v899, %v3587
  %v3652 = vmul.f32 %v900, %v3588
  %v3653 = vmul.f32 %v901, %v3589
  %v3654 = vmul.f32 %v902, %v3590
  %v3655 = vmul.f32 %v903, %v3591
  %v3656 = vmul.f32 %v904, %v3592
  %v3657 = vmul.f32 %v905, %v3593
  %v3658 = vmul.f32 %v906, %v3594
  %v3659 = vmul.f32 %v907, %v3595
  %v3660 = vmul.f32 %v908, %v3596
  %v3661 = vmul.f32 %v909, %v3597
  %v3662 = vmul.f32 %v910, %v3598
  %v3663 = vmul.f32 %v911, %v3599
  %v3664 = vmul.f32 %v912, %v3600
  %v3665 = vmul.f32 %v913, %v3601
  %v3666 = vmul.f32 %v914, %v3602
  %v3667 = vmul.f32 %v915, %v3603
  %v3668 = vmul.f32 %v916, %v3604
  %v3669 = vmul.f32 %v917, %v3605
  %v3670 = vmul.f32 %v918, %v3606
  %v3671 = vmul.f32 %v919, %v3607
  %v3672 = vmul.f32 %v920, %v3608
  %v3673 = vmul.f32 %v921, %v3609
  %v3674 = vmul.f32 %v922, %v3610
  %v3675 = vmul.f32 %v923, %v3611
  %v3676 = vmul.f32 %v924, %v3612
  %v3677 = vmul.f32 %v925, %v3613
  %v3678 = vmul.f32 %v926, %v3614
  %v3679 = vmul.f32 %v927, %v3615
  %v3680 = vmul.f32 %v928, %v3616
  %v3681 = vmul.f32 %v929, %v3617
  %v3682 = vmul.f32 %v930, %v3618
  %v3683 = vmul.f32 %v931, %v3619
  %v3684 = vmul.f32 %v932, %v3620
  %v3685 = vmul.f32 %v933, %v3621
  %v3686 = vmul.f32 %v934, %v3622
  %v3687 = vmul.f32 %v935, %v3623
  %v3688 = vmul.f32 %v936, %v3624
  %v3689 = vmul.f32 %v937, %v3625
  %v3690 = vmul.f32 %v938, %v3626
  %v3691 = vmul.f32 %v939, %v3627
  %v3692 = vmul.f32 %v940, %v3628
  %v3693 = vmul.f32 %v941, %v3629
  %v3694 = vmul.f32 %v942, %v3630
  %v3695 = vmul.f32 %v943, %v3631
  %v3696 = vmul.f32 %v944, %v3632
  %v3697 = vmul.f32 %v945, %v3633
  %v3698 = vmul.f32 %v946, %v3634
  %v3699 = vmul.f32 %v947, %v3635
  %v3700 = vmul.f32 %v948, %v3636
  %v3701 = vmul.f32 %v949, %v3637
  %v3702 = vmul.f32 %v950, %v3638
  %v3703 = vmul.f32 %v951, %v3639
  %v3704 = vmul.f32 %v952, %v3640
  %v3705 = vmul.f32 %v953, %v3641
  %v3706 = vmul.f32 %v954, %v3642
  %v3707 = vmul.f32 %v955, %v3643
  %v3708 = vmul.f32 %v956, %v3644
  %v3709 = vmul.f32 %v957, %v3645
  %v3710 = vmul.f32 %v958, %v3646
  %v3711 = vmul.f32 %v959, %v3647
  %v3712 = vmul.f32 %v960, %v3648
  %v3713 = vmul.f32 %v961, %v3649
  %v3714 = vld [vmem:[%s3] sm:$0xff]
  %v3715 = vld [vmem:[%s3 + $0x8] sm:$0xff]
  %v3716 = vld [vmem:[%s3 + $0x10] sm:$0xff]
  %v3717 = vld [vmem:[%s3 + $0x18] sm:$0xff]
  %v3718 = vld [vmem:[%s3 + $0x20] sm:$0xff]
  %v3719 = vld [vmem:[%s3 + $0x28] sm:$0xff]
  %v3720 = vld [vmem:[%s3 + $0x30] sm:$0xff]
  %v3721 = vld [vmem:[%s3 + $0x38] sm:$0xff]
  %v3722 = vld [vmem:[%s3 + $0x40] sm:$0xff]
  %v3723 = vld [vmem:[%s3 + $0x48] sm:$0xff]
  %v3724 = vld [vmem:[%s3 + $0x50] sm:$0xff]
  %v3725 = vld [vmem:[%s3 + $0x58] sm:$0xff]
  %v3726 = vld [vmem:[%s3 + $0x60] sm:$0xff]
  %v3727 = vld [vmem:[%s3 + $0x68] sm:$0xff]
  %v3728 = vld [vmem:[%s3 + $0x70] sm:$0xff]
  %v3729 = vld [vmem:[%s3 + $0x78] sm:$0xff]
  %v3730 = vld [vmem:[%s3 + $0x80] sm:$0xff]
  %v3731 = vld [vmem:[%s3 + $0x88] sm:$0xff]
  %v3732 = vld [vmem:[%s3 + $0x90] sm:$0xff]
  %v3733 = vld [vmem:[%s3 + $0x98] sm:$0xff]
  %v3734 = vld [vmem:[%s3 + $0xa0] sm:$0xff]
  %v3735 = vld [vmem:[%s3 + $0xa8] sm:$0xff]
  %v3736 = vld [vmem:[%s3 + $0xb0] sm:$0xff]
  %v3737 = vld [vmem:[%s3 + $0xb8] sm:$0xff]
  %v3738 = vld [vmem:[%s3 + $0xc0] sm:$0xff]
  %v3739 = vld [vmem:[%s3 + $0xc8] sm:$0xff]
  %v3740 = vld [vmem:[%s3 + $0xd0] sm:$0xff]
  %v3741 = vld [vmem:[%s3 + $0xd8] sm:$0xff]
  %v3742 = vld [vmem:[%s3 + $0xe0] sm:$0xff]
  %v3743 = vld [vmem:[%s3 + $0xe8] sm:$0xff]
  %v3744 = vld [vmem:[%s3 + $0xf0] sm:$0xff]
  %v3745 = vld [vmem:[%s3 + $0xf8] sm:$0xff]
  %v3746 = vld [vmem:[%s3 + $0x100] sm:$0xff]
  %v3747 = vld [vmem:[%s3 + $0x108] sm:$0xff]
  %v3748 = vld [vmem:[%s3 + $0x110] sm:$0xff]
  %v3749 = vld [vmem:[%s3 + $0x118] sm:$0xff]
  %v3750 = vld [vmem:[%s3 + $0x120] sm:$0xff]
  %v3751 = vld [vmem:[%s3 + $0x128] sm:$0xff]
  %v3752 = vld [vmem:[%s3 + $0x130] sm:$0xff]
  %v3753 = vld [vmem:[%s3 + $0x138] sm:$0xff]
  %v3754 = vld [vmem:[%s3 + $0x140] sm:$0xff]
  %v3755 = vld [vmem:[%s3 + $0x148] sm:$0xff]
  %v3756 = vld [vmem:[%s3 + $0x150] sm:$0xff]
  %v3757 = vld [vmem:[%s3 + $0x158] sm:$0xff]
  %v3758 = vld [vmem:[%s3 + $0x160] sm:$0xff]
  %v3759 = vld [vmem:[%s3 + $0x168] sm:$0xff]
  %v3760 = vld [vmem:[%s3 + $0x170] sm:$0xff]
  %v3761 = vld [vmem:[%s3 + $0x178] sm:$0xff]
  %v3762 = vld [vmem:[%s3 + $0x180] sm:$0xff]
  %v3763 = vld [vmem:[%s3 + $0x188] sm:$0xff]
  %v3764 = vld [vmem:[%s3 + $0x190] sm:$0xff]
  %v3765 = vld [vmem:[%s3 + $0x198] sm:$0xff]
  %v3766 = vld [vmem:[%s3 + $0x1a0] sm:$0xff]
  %v3767 = vld [vmem:[%s3 + $0x1a8] sm:$0xff]
  %v3768 = vld [vmem:[%s3 + $0x1b0] sm:$0xff]
  %v3769 = vld [vmem:[%s3 + $0x1b8] sm:$0xff]
  %v3770 = vld [vmem:[%s3 + $0x1c0] sm:$0xff]
  %v3771 = vld [vmem:[%s3 + $0x1c8] sm:$0xff]
  %v3772 = vld [vmem:[%s3 + $0x1d0] sm:$0xff]
  %v3773 = vld [vmem:[%s3 + $0x1d8] sm:$0xff]
  %v3774 = vld [vmem:[%s3 + $0x1e0] sm:$0xff]
  %v3775 = vld [vmem:[%s3 + $0x1e8] sm:$0xff]
  %v3776 = vld [vmem:[%s3 + $0x1f0] sm:$0xff]
  %v3777 = vld [vmem:[%s3 + $0x1f8] sm:$0xff]
  %v3778 = vld [vmem:[%s3 + $0x200] sm:$0xff]
  %v3779 = vld [vmem:[%s3 + $0x208] sm:$0xff]
  %v3780 = vld [vmem:[%s3 + $0x210] sm:$0xff]
  %v3781 = vld [vmem:[%s3 + $0x218] sm:$0xff]
  %v3782 = vld [vmem:[%s3 + $0x220] sm:$0xff]
  %v3783 = vld [vmem:[%s3 + $0x228] sm:$0xff]
  %v3784 = vld [vmem:[%s3 + $0x230] sm:$0xff]
  %v3785 = vld [vmem:[%s3 + $0x238] sm:$0xff]
  %v3786 = vld [vmem:[%s3 + $0x240] sm:$0xff]
  %v3787 = vld [vmem:[%s3 + $0x248] sm:$0xff]
  %v3788 = vld [vmem:[%s3 + $0x250] sm:$0xff]
  %v3789 = vld [vmem:[%s3 + $0x258] sm:$0xff]
  %v3790 = vld [vmem:[%s3 + $0x260] sm:$0xff]
  %v3791 = vld [vmem:[%s3 + $0x268] sm:$0xff]
  %v3792 = vld [vmem:[%s3 + $0x270] sm:$0xff]
  %v3793 = vld [vmem:[%s3 + $0x278] sm:$0xff]
  %v3794 = vld [vmem:[%s3 + $0x280] sm:$0xff]
  %v3795 = vld [vmem:[%s3 + $0x288] sm:$0xff]
  %v3796 = vld [vmem:[%s3 + $0x290] sm:$0xff]
  %v3797 = vld [vmem:[%s3 + $0x298] sm:$0xff]
  %v3798 = vld [vmem:[%s3 + $0x2a0] sm:$0xff]
  %v3799 = vld [vmem:[%s3 + $0x2a8] sm:$0xff]
  %v3800 = vld [vmem:[%s3 + $0x2b0] sm:$0xff]
  %v3801 = vld [vmem:[%s3 + $0x2b8] sm:$0xff]
  %v3802 = vld [vmem:[%s3 + $0x2c0] sm:$0xff]
  %v3803 = vld [vmem:[%s3 + $0x2c8] sm:$0xff]
  %v3804 = vld [vmem:[%s3 + $0x2d0] sm:$0xff]
  %v3805 = vld [vmem:[%s3 + $0x2d8] sm:$0xff]
  %v3806 = vld [vmem:[%s3 + $0x2e0] sm:$0xff]
  %v3807 = vld [vmem:[%s3 + $0x2e8] sm:$0xff]
  %v3808 = vld [vmem:[%s3 + $0x2f0] sm:$0xff]
  %v3809 = vld [vmem:[%s3 + $0x2f8] sm:$0xff]
  %v3810 = vld [vmem:[%s3 + $0x300] sm:$0xff]
  %v3811 = vld [vmem:[%s3 + $0x308] sm:$0xff]
  %v3812 = vld [vmem:[%s3 + $0x310] sm:$0xff]
  %v3813 = vld [vmem:[%s3 + $0x318] sm:$0xff]
  %v3814 = vld [vmem:[%s3 + $0x320] sm:$0xff]
  %v3815 = vld [vmem:[%s3 + $0x328] sm:$0xff]
  %v3816 = vld [vmem:[%s3 + $0x330] sm:$0xff]
  %v3817 = vld [vmem:[%s3 + $0x338] sm:$0xff]
  %v3818 = vld [vmem:[%s3 + $0x340] sm:$0xff]
  %v3819 = vld [vmem:[%s3 + $0x348] sm:$0xff]
  %v3820 = vld [vmem:[%s3 + $0x350] sm:$0xff]
  %v3821 = vld [vmem:[%s3 + $0x358] sm:$0xff]
  %v3822 = vld [vmem:[%s3 + $0x360] sm:$0xff]
  %v3823 = vld [vmem:[%s3 + $0x368] sm:$0xff]
  %v3824 = vld [vmem:[%s3 + $0x370] sm:$0xff]
  %v3825 = vld [vmem:[%s3 + $0x378] sm:$0xff]
  %v3826 = vld [vmem:[%s3 + $0x380] sm:$0xff]
  %v3827 = vld [vmem:[%s3 + $0x388] sm:$0xff]
  %v3828 = vld [vmem:[%s3 + $0x390] sm:$0xff]
  %v3829 = vld [vmem:[%s3 + $0x398] sm:$0xff]
  %v3830 = vld [vmem:[%s3 + $0x3a0] sm:$0xff]
  %v3831 = vld [vmem:[%s3 + $0x3a8] sm:$0xff]
  %v3832 = vld [vmem:[%s3 + $0x3b0] sm:$0xff]
  %v3833 = vld [vmem:[%s3 + $0x3b8] sm:$0xff]
  %v3834 = vld [vmem:[%s3 + $0x3c0] sm:$0xff]
  %v3835 = vld [vmem:[%s3 + $0x3c8] sm:$0xff]
  %v3836 = vld [vmem:[%s3 + $0x3d0] sm:$0xff]
  %v3837 = vld [vmem:[%s3 + $0x3d8] sm:$0xff]
  %v3838 = vld [vmem:[%s3 + $0x3e0] sm:$0xff]
  %v3839 = vld [vmem:[%s3 + $0x3e8] sm:$0xff]
  %v3840 = vld [vmem:[%s3 + $0x3f0] sm:$0xff]
  %v3841 = vld [vmem:[%s3 + $0x3f8] sm:$0xff]
  %v3842 = vld [vmem:[%s4] sm:$0xff]
  %v3843 = vld [vmem:[%s4 + $0x8] sm:$0xff]
  %v3844 = vld [vmem:[%s4 + $0x10] sm:$0xff]
  %v3845 = vld [vmem:[%s4 + $0x18] sm:$0xff]
  %v3846 = vld [vmem:[%s4 + $0x20] sm:$0xff]
  %v3847 = vld [vmem:[%s4 + $0x28] sm:$0xff]
  %v3848 = vld [vmem:[%s4 + $0x30] sm:$0xff]
  %v3849 = vld [vmem:[%s4 + $0x38] sm:$0xff]
  %v3850 = vld [vmem:[%s4 + $0x40] sm:$0xff]
  %v3851 = vld [vmem:[%s4 + $0x48] sm:$0xff]
  %v3852 = vld [vmem:[%s4 + $0x50] sm:$0xff]
  %v3853 = vld [vmem:[%s4 + $0x58] sm:$0xff]
  %v3854 = vld [vmem:[%s4 + $0x60] sm:$0xff]
  %v3855 = vld [vmem:[%s4 + $0x68] sm:$0xff]
  %v3856 = vld [vmem:[%s4 + $0x70] sm:$0xff]
  %v3857 = vld [vmem:[%s4 + $0x78] sm:$0xff]
  %v3858 = vld [vmem:[%s4 + $0x80] sm:$0xff]
  %v3859 = vld [vmem:[%s4 + $0x88] sm:$0xff]
  %v3860 = vld [vmem:[%s4 + $0x90] sm:$0xff]
  %v3861 = vld [vmem:[%s4 + $0x98] sm:$0xff]
  %v3862 = vld [vmem:[%s4 + $0xa0] sm:$0xff]
  %v3863 = vld [vmem:[%s4 + $0xa8] sm:$0xff]
  %v3864 = vld [vmem:[%s4 + $0xb0] sm:$0xff]
  %v3865 = vld [vmem:[%s4 + $0xb8] sm:$0xff]
  %v3866 = vld [vmem:[%s4 + $0xc0] sm:$0xff]
  %v3867 = vld [vmem:[%s4 + $0xc8] sm:$0xff]
  %v3868 = vld [vmem:[%s4 + $0xd0] sm:$0xff]
  %v3869 = vld [vmem:[%s4 + $0xd8] sm:$0xff]
  %v3870 = vld [vmem:[%s4 + $0xe0] sm:$0xff]
  %v3871 = vld [vmem:[%s4 + $0xe8] sm:$0xff]
  %v3872 = vld [vmem:[%s4 + $0xf0] sm:$0xff]
  %v3873 = vld [vmem:[%s4 + $0xf8] sm:$0xff]
  %3875 = vset.pattern.permute.xlu0 0
  %3876 = vperm.xlu0 %3875, %v3842
  %v3877 = vpop.permute.xlu0 %3876
  %3880 = vset.pattern.permute.xlu0 0
  %3881 = vperm.xlu0 %3880, %v3843
  %v3882 = vpop.permute.xlu0 %3881
  %3885 = vset.pattern.permute.xlu0 0
  %3886 = vperm.xlu0 %3885, %v3844
  %v3887 = vpop.permute.xlu0 %3886
  %3890 = vset.pattern.permute.xlu0 0
  %3891 = vperm.xlu0 %3890, %v3845
  %v3892 = vpop.permute.xlu0 %3891
  %3895 = vset.pattern.permute.xlu0 0
  %3896 = vperm.xlu0 %3895, %v3846
  %v3897 = vpop.permute.xlu0 %3896
  %3900 = vset.pattern.permute.xlu0 0
  %3901 = vperm.xlu0 %3900, %v3847
  %v3902 = vpop.permute.xlu0 %3901
  %3905 = vset.pattern.permute.xlu0 0
  %3906 = vperm.xlu0 %3905, %v3848
  %v3907 = vpop.permute.xlu0 %3906
  %3910 = vset.pattern.permute.xlu0 0
  %3911 = vperm.xlu0 %3910, %v3849
  %v3912 = vpop.permute.xlu0 %3911
  %3915 = vset.pattern.permute.xlu0 0
  %3916 = vperm.xlu0 %3915, %v3850
  %v3917 = vpop.permute.xlu0 %3916
  %3920 = vset.pattern.permute.xlu0 0
  %3921 = vperm.xlu0 %3920, %v3851
  %v3922 = vpop.permute.xlu0 %3921
  %3925 = vset.pattern.permute.xlu0 0
  %3926 = vperm.xlu0 %3925, %v3852
  %v3927 = vpop.permute.xlu0 %3926
  %3930 = vset.pattern.permute.xlu0 0
  %3931 = vperm.xlu0 %3930, %v3853
  %v3932 = vpop.permute.xlu0 %3931
  %3935 = vset.pattern.permute.xlu0 0
  %3936 = vperm.xlu0 %3935, %v3854
  %v3937 = vpop.permute.xlu0 %3936
  %3940 = vset.pattern.permute.xlu0 0
  %3941 = vperm.xlu0 %3940, %v3855
  %v3942 = vpop.permute.xlu0 %3941
  %3945 = vset.pattern.permute.xlu0 0
  %3946 = vperm.xlu0 %3945, %v3856
  %v3947 = vpop.permute.xlu0 %3946
  %3950 = vset.pattern.permute.xlu0 0
  %3951 = vperm.xlu0 %3950, %v3857
  %v3952 = vpop.permute.xlu0 %3951
  %3955 = vset.pattern.permute.xlu0 0
  %3956 = vperm.xlu0 %3955, %v3858
  %v3957 = vpop.permute.xlu0 %3956
  %3960 = vset.pattern.permute.xlu0 0
  %3961 = vperm.xlu0 %3960, %v3859
  %v3962 = vpop.permute.xlu0 %3961
  %3965 = vset.pattern.permute.xlu0 0
  %3966 = vperm.xlu0 %3965, %v3860
  %v3967 = vpop.permute.xlu0 %3966
  %3970 = vset.pattern.permute.xlu0 0
  %3971 = vperm.xlu0 %3970, %v3861
  %v3972 = vpop.permute.xlu0 %3971
  %3975 = vset.pattern.permute.xlu0 0
  %3976 = vperm.xlu0 %3975, %v3862
  %v3977 = vpop.permute.xlu0 %3976
  %3980 = vset.pattern.permute.xlu0 0
  %3981 = vperm.xlu0 %3980, %v3863
  %v3982 = vpop.permute.xlu0 %3981
  %3985 = vset.pattern.permute.xlu0 0
  %3986 = vperm.xlu0 %3985, %v3864
  %v3987 = vpop.permute.xlu0 %3986
  %3990 = vset.pattern.permute.xlu0 0
  %3991 = vperm.xlu0 %3990, %v3865
  %v3992 = vpop.permute.xlu0 %3991
  %3995 = vset.pattern.permute.xlu0 0
  %3996 = vperm.xlu0 %3995, %v3866
  %v3997 = vpop.permute.xlu0 %3996
  %4000 = vset.pattern.permute.xlu0 0
  %4001 = vperm.xlu0 %4000, %v3867
  %v4002 = vpop.permute.xlu0 %4001
  %4005 = vset.pattern.permute.xlu0 0
  %4006 = vperm.xlu0 %4005, %v3868
  %v4007 = vpop.permute.xlu0 %4006
  %4010 = vset.pattern.permute.xlu0 0
  %4011 = vperm.xlu0 %4010, %v3869
  %v4012 = vpop.permute.xlu0 %4011
  %4015 = vset.pattern.permute.xlu0 0
  %4016 = vperm.xlu0 %4015, %v3870
  %v4017 = vpop.permute.xlu0 %4016
  %4020 = vset.pattern.permute.xlu0 0
  %4021 = vperm.xlu0 %4020, %v3871
  %v4022 = vpop.permute.xlu0 %4021
  %4025 = vset.pattern.permute.xlu0 0
  %4026 = vperm.xlu0 %4025, %v3872
  %v4027 = vpop.permute.xlu0 %4026
  %4030 = vset.pattern.permute.xlu0 0
  %4031 = vperm.xlu0 %4030, %v3873
  %v4032 = vpop.permute.xlu0 %4031
  %4034 = vmatpush.msra.mxu0 %v3665
  %4035 = vmatpush.msra.mxu0 %v3664
  %4036 = vmatpush.msra.mxu0 %v3663
  %4037 = vmatpush.msra.mxu0 %v3662
  %4038 = vmatpush.msra.mxu0 %v3661
  %4039 = vmatpush.msra.mxu0 %v3660
  %4040 = vmatpush.msra.mxu0 %v3659
  %4041 = vmatpush.msra.mxu0 %v3658
  %4042 = vmatpush.msra.mxu0 %v3657
  %4043 = vmatpush.msra.mxu0 %v3656
  %4044 = vmatpush.msra.mxu0 %v3655
  %4045 = vmatpush.msra.mxu0 %v3654
  %4046 = vmatpush.msra.mxu0 %v3653
  %4047 = vmatpush.msra.mxu0 %v3652
  %4048 = vmatpush.msra.mxu0 %v3651
  %4049 = vmatpush.msra.mxu0 %v3650
  %4050 = vmatmul.f32.gmra.mxu0 %v3714
  %v4051 = vpop.f32.mrf.mxu0
  %v4052 = vadd.f32 %v3877, %v4051
  %4053 = vmatmul.f32.gmra.mxu0 %v3718
  %v4054 = vpop.f32.mrf.mxu0
  %v4055 = vadd.f32 %v3882, %v4054
  %4056 = vmatmul.f32.gmra.mxu0 %v3722
  %v4057 = vpop.f32.mrf.mxu0
  %v4058 = vadd.f32 %v3887, %v4057
  %4059 = vmatmul.f32.gmra.mxu0 %v3726
  %v4060 = vpop.f32.mrf.mxu0
  %v4061 = vadd.f32 %v3892, %v4060
  %4062 = vmatmul.f32.gmra.mxu0 %v3730
  %v4063 = vpop.f32.mrf.mxu0
  %v4064 = vadd.f32 %v3897, %v4063
  %4065 = vmatmul.f32.gmra.mxu0 %v3734
  %v4066 = vpop.f32.mrf.mxu0
  %v4067 = vadd.f32 %v3902, %v4066
  %4068 = vmatmul.f32.gmra.mxu0 %v3738
  %v4069 = vpop.f32.mrf.mxu0
  %v4070 = vadd.f32 %v3907, %v4069
  %4071 = vmatmul.f32.gmra.mxu0 %v3742
  %v4072 = vpop.f32.mrf.mxu0
  %v4073 = vadd.f32 %v3912, %v4072
  %4074 = vmatmul.f32.gmra.mxu0 %v3746
  %v4075 = vpop.f32.mrf.mxu0
  %v4076 = vadd.f32 %v3917, %v4075
  %4077 = vmatmul.f32.gmra.mxu0 %v3750
  %v4078 = vpop.f32.mrf.mxu0
  %v4079 = vadd.f32 %v3922, %v4078
  %4080 = vmatmul.f32.gmra.mxu0 %v3754
  %v4081 = vpop.f32.mrf.mxu0
  %v4082 = vadd.f32 %v3927, %v4081
  %4083 = vmatmul.f32.gmra.mxu0 %v3758
  %v4084 = vpop.f32.mrf.mxu0
  %v4085 = vadd.f32 %v3932, %v4084
  %4086 = vmatmul.f32.gmra.mxu0 %v3762
  %v4087 = vpop.f32.mrf.mxu0
  %v4088 = vadd.f32 %v3937, %v4087
  %4089 = vmatmul.f32.gmra.mxu0 %v3766
  %v4090 = vpop.f32.mrf.mxu0
  %v4091 = vadd.f32 %v3942, %v4090
  %4092 = vmatmul.f32.gmra.mxu0 %v3770
  %v4093 = vpop.f32.mrf.mxu0
  %v4094 = vadd.f32 %v3947, %v4093
  %4095 = vmatmul.f32.gmra.mxu0 %v3774
  %v4096 = vpop.f32.mrf.mxu0
  %v4097 = vadd.f32 %v3952, %v4096
  %4098 = vmatmul.f32.gmra.mxu0 %v3778
  %v4099 = vpop.f32.mrf.mxu0
  %v4100 = vadd.f32 %v3957, %v4099
  %4101 = vmatmul.f32.gmra.mxu0 %v3782
  %v4102 = vpop.f32.mrf.mxu0
  %v4103 = vadd.f32 %v3962, %v4102
  %4104 = vmatmul.f32.gmra.mxu0 %v3786
  %v4105 = vpop.f32.mrf.mxu0
  %v4106 = vadd.f32 %v3967, %v4105
  %4107 = vmatmul.f32.gmra.mxu0 %v3790
  %v4108 = vpop.f32.mrf.mxu0
  %v4109 = vadd.f32 %v3972, %v4108
  %4110 = vmatmul.f32.gmra.mxu0 %v3794
  %v4111 = vpop.f32.mrf.mxu0
  %v4112 = vadd.f32 %v3977, %v4111
  %4113 = vmatmul.f32.gmra.mxu0 %v3798
  %v4114 = vpop.f32.mrf.mxu0
  %v4115 = vadd.f32 %v3982, %v4114
  %4116 = vmatmul.f32.gmra.mxu0 %v3802
  %v4117 = vpop.f32.mrf.mxu0
  %v4118 = vadd.f32 %v3987, %v4117
  %4119 = vmatmul.f32.gmra.mxu0 %v3806
  %v4120 = vpop.f32.mrf.mxu0
  %v4121 = vadd.f32 %v3992, %v4120
  %4122 = vmatmul.f32.gmra.mxu0 %v3810
  %v4123 = vpop.f32.mrf.mxu0
  %v4124 = vadd.f32 %v3997, %v4123
  %4125 = vmatmul.f32.gmra.mxu0 %v3814
  %v4126 = vpop.f32.mrf.mxu0
  %v4127 = vadd.f32 %v4002, %v4126
  %4128 = vmatmul.f32.gmra.mxu0 %v3818
  %v4129 = vpop.f32.mrf.mxu0
  %v4130 = vadd.f32 %v4007, %v4129
  %4131 = vmatmul.f32.gmra.mxu0 %v3822
  %v4132 = vpop.f32.mrf.mxu0
  %v4133 = vadd.f32 %v4012, %v4132
  %4134 = vmatmul.f32.gmra.mxu0 %v3826
  %v4135 = vpop.f32.mrf.mxu0
  %v4136 = vadd.f32 %v4017, %v4135
  %4137 = vmatmul.f32.gmra.mxu0 %v3830
  %v4138 = vpop.f32.mrf.mxu0
  %v4139 = vadd.f32 %v4022, %v4138
  %4140 = vmatmul.f32.gmra.mxu0 %v3834
  %v4141 = vpop.f32.mrf.mxu0
  %v4142 = vadd.f32 %v4027, %v4141
  %4143 = vmatmul.f32.gmra.mxu0 %v3838
  %v4144 = vpop.f32.mrf.mxu0
  %v4145 = vadd.f32 %v4032, %v4144
  %4146 = vdwg.mxu0
  %4147 = vmatpush.msra.mxu0 %v3681
  %4148 = vmatpush.msra.mxu0 %v3680
  %4149 = vmatpush.msra.mxu0 %v3679
  %4150 = vmatpush.msra.mxu0 %v3678
  %4151 = vmatpush.msra.mxu0 %v3677
  %4152 = vmatpush.msra.mxu0 %v3676
  %4153 = vmatpush.msra.mxu0 %v3675
  %4154 = vmatpush.msra.mxu0 %v3674
  %4155 = vmatpush.msra.mxu0 %v3673
  %4156 = vmatpush.msra.mxu0 %v3672
  %4157 = vmatpush.msra.mxu0 %v3671
  %4158 = vmatpush.msra.mxu0 %v3670
  %4159 = vmatpush.msra.mxu0 %v3669
  %4160 = vmatpush.msra.mxu0 %v3668
  %4161 = vmatpush.msra.mxu0 %v3667
  %4162 = vmatpush.msra.mxu0 %v3666
  %4163 = vmatmul.f32.gmra.mxu0 %v3715
  %v4164 = vpop.f32.mrf.mxu0
  %v4165 = vadd.f32 %v4052, %v4164
  %4166 = vmatmul.f32.gmra.mxu0 %v3719
  %v4167 = vpop.f32.mrf.mxu0
  %v4168 = vadd.f32 %v4055, %v4167
  %4169 = vmatmul.f32.gmra.mxu0 %v3723
  %v4170 = vpop.f32.mrf.mxu0
  %v4171 = vadd.f32 %v4058, %v4170
  %4172 = vmatmul.f32.gmra.mxu0 %v3727
  %v4173 = vpop.f32.mrf.mxu0
  %v4174 = vadd.f32 %v4061, %v4173
  %4175 = vmatmul.f32.gmra.mxu0 %v3731
  %v4176 = vpop.f32.mrf.mxu0
  %v4177 = vadd.f32 %v4064, %v4176
  %4178 = vmatmul.f32.gmra.mxu0 %v3735
  %v4179 = vpop.f32.mrf.mxu0
  %v4180 = vadd.f32 %v4067, %v4179
  %4181 = vmatmul.f32.gmra.mxu0 %v3739
  %v4182 = vpop.f32.mrf.mxu0
  %v4183 = vadd.f32 %v4070, %v4182
  %4184 = vmatmul.f32.gmra.mxu0 %v3743
  %v4185 = vpop.f32.mrf.mxu0
  %v4186 = vadd.f32 %v4073, %v4185
  %4187 = vmatmul.f32.gmra.mxu0 %v3747
  %v4188 = vpop.f32.mrf.mxu0
  %v4189 = vadd.f32 %v4076, %v4188
  %4190 = vmatmul.f32.gmra.mxu0 %v3751
  %v4191 = vpop.f32.mrf.mxu0
  %v4192 = vadd.f32 %v4079, %v4191
  %4193 = vmatmul.f32.gmra.mxu0 %v3755
  %v4194 = vpop.f32.mrf.mxu0
  %v4195 = vadd.f32 %v4082, %v4194
  %4196 = vmatmul.f32.gmra.mxu0 %v3759
  %v4197 = vpop.f32.mrf.mxu0
  %v4198 = vadd.f32 %v4085, %v4197
  %4199 = vmatmul.f32.gmra.mxu0 %v3763
  %v4200 = vpop.f32.mrf.mxu0
  %v4201 = vadd.f32 %v4088, %v4200
  %4202 = vmatmul.f32.gmra.mxu0 %v3767
  %v4203 = vpop.f32.mrf.mxu0
  %v4204 = vadd.f32 %v4091, %v4203
  %4205 = vmatmul.f32.gmra.mxu0 %v3771
  %v4206 = vpop.f32.mrf.mxu0
  %v4207 = vadd.f32 %v4094, %v4206
  %4208 = vmatmul.f32.gmra.mxu0 %v3775
  %v4209 = vpop.f32.mrf.mxu0
  %v4210 = vadd.f32 %v4097, %v4209
  %4211 = vmatmul.f32.gmra.mxu0 %v3779
  %v4212 = vpop.f32.mrf.mxu0
  %v4213 = vadd.f32 %v4100, %v4212
  %4214 = vmatmul.f32.gmra.mxu0 %v3783
  %v4215 = vpop.f32.mrf.mxu0
  %v4216 = vadd.f32 %v4103, %v4215
  %4217 = vmatmul.f32.gmra.mxu0 %v3787
  %v4218 = vpop.f32.mrf.mxu0
  %v4219 = vadd.f32 %v4106, %v4218
  %4220 = vmatmul.f32.gmra.mxu0 %v3791
  %v4221 = vpop.f32.mrf.mxu0
  %v4222 = vadd.f32 %v4109, %v4221
  %4223 = vmatmul.f32.gmra.mxu0 %v3795
  %v4224 = vpop.f32.mrf.mxu0
  %v4225 = vadd.f32 %v4112, %v4224
  %4226 = vmatmul.f32.gmra.mxu0 %v3799
  %v4227 = vpop.f32.mrf.mxu0
  %v4228 = vadd.f32 %v4115, %v4227
  %4229 = vmatmul.f32.gmra.mxu0 %v3803
  %v4230 = vpop.f32.mrf.mxu0
  %v4231 = vadd.f32 %v4118, %v4230
  %4232 = vmatmul.f32.gmra.mxu0 %v3807
  %v4233 = vpop.f32.mrf.mxu0
  %v4234 = vadd.f32 %v4121, %v4233
  %4235 = vmatmul.f32.gmra.mxu0 %v3811
  %v4236 = vpop.f32.mrf.mxu0
  %v4237 = vadd.f32 %v4124, %v4236
  %4238 = vmatmul.f32.gmra.mxu0 %v3815
  %v4239 = vpop.f32.mrf.mxu0
  %v4240 = vadd.f32 %v4127, %v4239
  %4241 = vmatmul.f32.gmra.mxu0 %v3819
  %v4242 = vpop.f32.mrf.mxu0
  %v4243 = vadd.f32 %v4130, %v4242
  %4244 = vmatmul.f32.gmra.mxu0 %v3823
  %v4245 = vpop.f32.mrf.mxu0
  %v4246 = vadd.f32 %v4133, %v4245
  %4247 = vmatmul.f32.gmra.mxu0 %v3827
  %v4248 = vpop.f32.mrf.mxu0
  %v4249 = vadd.f32 %v4136, %v4248
  %4250 = vmatmul.f32.gmra.mxu0 %v3831
  %v4251 = vpop.f32.mrf.mxu0
  %v4252 = vadd.f32 %v4139, %v4251
  %4253 = vmatmul.f32.gmra.mxu0 %v3835
  %v4254 = vpop.f32.mrf.mxu0
  %v4255 = vadd.f32 %v4142, %v4254
  %4256 = vmatmul.f32.gmra.mxu0 %v3839
  %v4257 = vpop.f32.mrf.mxu0
  %v4258 = vadd.f32 %v4145, %v4257
  %4259 = vdwg.mxu0
  %4260 = vmatpush.msra.mxu0 %v3697
  %4261 = vmatpush.msra.mxu0 %v3696
  %4262 = vmatpush.msra.mxu0 %v3695
  %4263 = vmatpush.msra.mxu0 %v3694
  %4264 = vmatpush.msra.mxu0 %v3693
  %4265 = vmatpush.msra.mxu0 %v3692
  %4266 = vmatpush.msra.mxu0 %v3691
  %4267 = vmatpush.msra.mxu0 %v3690
  %4268 = vmatpush.msra.mxu0 %v3689
  %4269 = vmatpush.msra.mxu0 %v3688
  %4270 = vmatpush.msra.mxu0 %v3687
  %4271 = vmatpush.msra.mxu0 %v3686
  %4272 = vmatpush.msra.mxu0 %v3685
  %4273 = vmatpush.msra.mxu0 %v3684
  %4274 = vmatpush.msra.mxu0 %v3683
  %4275 = vmatpush.msra.mxu0 %v3682
  %4276 = vmatmul.f32.gmra.mxu0 %v3716
  %v4277 = vpop.f32.mrf.mxu0
  %v4278 = vadd.f32 %v4165, %v4277
  %4279 = vmatmul.f32.gmra.mxu0 %v3720
  %v4280 = vpop.f32.mrf.mxu0
  %v4281 = vadd.f32 %v4168, %v4280
  %4282 = vmatmul.f32.gmra.mxu0 %v3724
  %v4283 = vpop.f32.mrf.mxu0
  %v4284 = vadd.f32 %v4171, %v4283
  %4285 = vmatmul.f32.gmra.mxu0 %v3728
  %v4286 = vpop.f32.mrf.mxu0
  %v4287 = vadd.f32 %v4174, %v4286
  %4288 = vmatmul.f32.gmra.mxu0 %v3732
  %v4289 = vpop.f32.mrf.mxu0
  %v4290 = vadd.f32 %v4177, %v4289
  %4291 = vmatmul.f32.gmra.mxu0 %v3736
  %v4292 = vpop.f32.mrf.mxu0
  %v4293 = vadd.f32 %v4180, %v4292
  %4294 = vmatmul.f32.gmra.mxu0 %v3740
  %v4295 = vpop.f32.mrf.mxu0
  %v4296 = vadd.f32 %v4183, %v4295
  %4297 = vmatmul.f32.gmra.mxu0 %v3744
  %v4298 = vpop.f32.mrf.mxu0
  %v4299 = vadd.f32 %v4186, %v4298
  %4300 = vmatmul.f32.gmra.mxu0 %v3748
  %v4301 = vpop.f32.mrf.mxu0
  %v4302 = vadd.f32 %v4189, %v4301
  %4303 = vmatmul.f32.gmra.mxu0 %v3752
  %v4304 = vpop.f32.mrf.mxu0
  %v4305 = vadd.f32 %v4192, %v4304
  %4306 = vmatmul.f32.gmra.mxu0 %v3756
  %v4307 = vpop.f32.mrf.mxu0
  %v4308 = vadd.f32 %v4195, %v4307
  %4309 = vmatmul.f32.gmra.mxu0 %v3760
  %v4310 = vpop.f32.mrf.mxu0
  %v4311 = vadd.f32 %v4198, %v4310
  %4312 = vmatmul.f32.gmra.mxu0 %v3764
  %v4313 = vpop.f32.mrf.mxu0
  %v4314 = vadd.f32 %v4201, %v4313
  %4315 = vmatmul.f32.gmra.mxu0 %v3768
  %v4316 = vpop.f32.mrf.mxu0
  %v4317 = vadd.f32 %v4204, %v4316
  %4318 = vmatmul.f32.gmra.mxu0 %v3772
  %v4319 = vpop.f32.mrf.mxu0
  %v4320 = vadd.f32 %v4207, %v4319
  %4321 = vmatmul.f32.gmra.mxu0 %v3776
  %v4322 = vpop.f32.mrf.mxu0
  %v4323 = vadd.f32 %v4210, %v4322
  %4324 = vmatmul.f32.gmra.mxu0 %v3780
  %v4325 = vpop.f32.mrf.mxu0
  %v4326 = vadd.f32 %v4213, %v4325
  %4327 = vmatmul.f32.gmra.mxu0 %v3784
  %v4328 = vpop.f32.mrf.mxu0
  %v4329 = vadd.f32 %v4216, %v4328
  %4330 = vmatmul.f32.gmra.mxu0 %v3788
  %v4331 = vpop.f32.mrf.mxu0
  %v4332 = vadd.f32 %v4219, %v4331
  %4333 = vmatmul.f32.gmra.mxu0 %v3792
  %v4334 = vpop.f32.mrf.mxu0
  %v4335 = vadd.f32 %v4222, %v4334
  %4336 = vmatmul.f32.gmra.mxu0 %v3796
  %v4337 = vpop.f32.mrf.mxu0
  %v4338 = vadd.f32 %v4225, %v4337
  %4339 = vmatmul.f32.gmra.mxu0 %v3800
  %v4340 = vpop.f32.mrf.mxu0
  %v4341 = vadd.f32 %v4228, %v4340
  %4342 = vmatmul.f32.gmra.mxu0 %v3804
  %v4343 = vpop.f32.mrf.mxu0
  %v4344 = vadd.f32 %v4231, %v4343
  %4345 = vmatmul.f32.gmra.mxu0 %v3808
  %v4346 = vpop.f32.mrf.mxu0
  %v4347 = vadd.f32 %v4234, %v4346
  %4348 = vmatmul.f32.gmra.mxu0 %v3812
  %v4349 = vpop.f32.mrf.mxu0
  %v4350 = vadd.f32 %v4237, %v4349
  %4351 = vmatmul.f32.gmra.mxu0 %v3816
  %v4352 = vpop.f32.mrf.mxu0
  %v4353 = vadd.f32 %v4240, %v4352
  %4354 = vmatmul.f32.gmra.mxu0 %v3820
  %v4355 = vpop.f32.mrf.mxu0
  %v4356 = vadd.f32 %v4243, %v4355
  %4357 = vmatmul.f32.gmra.mxu0 %v3824
  %v4358 = vpop.f32.mrf.mxu0
  %v4359 = vadd.f32 %v4246, %v4358
  %4360 = vmatmul.f32.gmra.mxu0 %v3828
  %v4361 = vpop.f32.mrf.mxu0
  %v4362 = vadd.f32 %v4249, %v4361
  %4363 = vmatmul.f32.gmra.mxu0 %v3832
  %v4364 = vpop.f32.mrf.mxu0
  %v4365 = vadd.f32 %v4252, %v4364
  %4366 = vmatmul.f32.gmra.mxu0 %v3836
  %v4367 = vpop.f32.mrf.mxu0
  %v4368 = vadd.f32 %v4255, %v4367
  %4369 = vmatmul.f32.gmra.mxu0 %v3840
  %v4370 = vpop.f32.mrf.mxu0
  %v4371 = vadd.f32 %v4258, %v4370
  %4372 = vdwg.mxu0
  %4373 = vmatpush.msra.mxu0 %v3713
  %4374 = vmatpush.msra.mxu0 %v3712
  %4375 = vmatpush.msra.mxu0 %v3711
  %4376 = vmatpush.msra.mxu0 %v3710
  %4377 = vmatpush.msra.mxu0 %v3709
  %4378 = vmatpush.msra.mxu0 %v3708
  %4379 = vmatpush.msra.mxu0 %v3707
  %4380 = vmatpush.msra.mxu0 %v3706
  %4381 = vmatpush.msra.mxu0 %v3705
  %4382 = vmatpush.msra.mxu0 %v3704
  %4383 = vmatpush.msra.mxu0 %v3703
  %4384 = vmatpush.msra.mxu0 %v3702
  %4385 = vmatpush.msra.mxu0 %v3701
  %4386 = vmatpush.msra.mxu0 %v3700
  %4387 = vmatpush.msra.mxu0 %v3699
  %4388 = vmatpush.msra.mxu0 %v3698
  %4389 = vmatmul.f32.gmra.mxu0 %v3717
  %v4390 = vpop.f32.mrf.mxu0
  %v4391 = vadd.f32 %v4278, %v4390
  %4392 = vmatmul.f32.gmra.mxu0 %v3721
  %v4393 = vpop.f32.mrf.mxu0
  %v4394 = vadd.f32 %v4281, %v4393
  %4395 = vmatmul.f32.gmra.mxu0 %v3725
  %v4396 = vpop.f32.mrf.mxu0
  %v4397 = vadd.f32 %v4284, %v4396
  %4398 = vmatmul.f32.gmra.mxu0 %v3729
  %v4399 = vpop.f32.mrf.mxu0
  %v4400 = vadd.f32 %v4287, %v4399
  %4401 = vmatmul.f32.gmra.mxu0 %v3733
  %v4402 = vpop.f32.mrf.mxu0
  %v4403 = vadd.f32 %v4290, %v4402
  %4404 = vmatmul.f32.gmra.mxu0 %v3737
  %v4405 = vpop.f32.mrf.mxu0
  %v4406 = vadd.f32 %v4293, %v4405
  %4407 = vmatmul.f32.gmra.mxu0 %v3741
  %v4408 = vpop.f32.mrf.mxu0
  %v4409 = vadd.f32 %v4296, %v4408
  %4410 = vmatmul.f32.gmra.mxu0 %v3745
  %v4411 = vpop.f32.mrf.mxu0
  %v4412 = vadd.f32 %v4299, %v4411
  %4413 = vmatmul.f32.gmra.mxu0 %v3749
  %v4414 = vpop.f32.mrf.mxu0
  %v4415 = vadd.f32 %v4302, %v4414
  %4416 = vmatmul.f32.gmra.mxu0 %v3753
  %v4417 = vpop.f32.mrf.mxu0
  %v4418 = vadd.f32 %v4305, %v4417
  %4419 = vmatmul.f32.gmra.mxu0 %v3757
  %v4420 = vpop.f32.mrf.mxu0
  %v4421 = vadd.f32 %v4308, %v4420
  %4422 = vmatmul.f32.gmra.mxu0 %v3761
  %v4423 = vpop.f32.mrf.mxu0
  %v4424 = vadd.f32 %v4311, %v4423
  %4425 = vmatmul.f32.gmra.mxu0 %v3765
  %v4426 = vpop.f32.mrf.mxu0
  %v4427 = vadd.f32 %v4314, %v4426
  %4428 = vmatmul.f32.gmra.mxu0 %v3769
  %v4429 = vpop.f32.mrf.mxu0
  %v4430 = vadd.f32 %v4317, %v4429
  %4431 = vmatmul.f32.gmra.mxu0 %v3773
  %v4432 = vpop.f32.mrf.mxu0
  %v4433 = vadd.f32 %v4320, %v4432
  %4434 = vmatmul.f32.gmra.mxu0 %v3777
  %v4435 = vpop.f32.mrf.mxu0
  %v4436 = vadd.f32 %v4323, %v4435
  %4437 = vmatmul.f32.gmra.mxu0 %v3781
  %v4438 = vpop.f32.mrf.mxu0
  %v4439 = vadd.f32 %v4326, %v4438
  %4440 = vmatmul.f32.gmra.mxu0 %v3785
  %v4441 = vpop.f32.mrf.mxu0
  %v4442 = vadd.f32 %v4329, %v4441
  %4443 = vmatmul.f32.gmra.mxu0 %v3789
  %v4444 = vpop.f32.mrf.mxu0
  %v4445 = vadd.f32 %v4332, %v4444
  %4446 = vmatmul.f32.gmra.mxu0 %v3793
  %v4447 = vpop.f32.mrf.mxu0
  %v4448 = vadd.f32 %v4335, %v4447
  %4449 = vmatmul.f32.gmra.mxu0 %v3797
  %v4450 = vpop.f32.mrf.mxu0
  %v4451 = vadd.f32 %v4338, %v4450
  %4452 = vmatmul.f32.gmra.mxu0 %v3801
  %v4453 = vpop.f32.mrf.mxu0
  %v4454 = vadd.f32 %v4341, %v4453
  %4455 = vmatmul.f32.gmra.mxu0 %v3805
  %v4456 = vpop.f32.mrf.mxu0
  %v4457 = vadd.f32 %v4344, %v4456
  %4458 = vmatmul.f32.gmra.mxu0 %v3809
  %v4459 = vpop.f32.mrf.mxu0
  %v4460 = vadd.f32 %v4347, %v4459
  %4461 = vmatmul.f32.gmra.mxu0 %v3813
  %v4462 = vpop.f32.mrf.mxu0
  %v4463 = vadd.f32 %v4350, %v4462
  %4464 = vmatmul.f32.gmra.mxu0 %v3817
  %v4465 = vpop.f32.mrf.mxu0
  %v4466 = vadd.f32 %v4353, %v4465
  %4467 = vmatmul.f32.gmra.mxu0 %v3821
  %v4468 = vpop.f32.mrf.mxu0
  %v4469 = vadd.f32 %v4356, %v4468
  %4470 = vmatmul.f32.gmra.mxu0 %v3825
  %v4471 = vpop.f32.mrf.mxu0
  %v4472 = vadd.f32 %v4359, %v4471
  %4473 = vmatmul.f32.gmra.mxu0 %v3829
  %v4474 = vpop.f32.mrf.mxu0
  %v4475 = vadd.f32 %v4362, %v4474
  %4476 = vmatmul.f32.gmra.mxu0 %v3833
  %v4477 = vpop.f32.mrf.mxu0
  %v4478 = vadd.f32 %v4365, %v4477
  %4479 = vmatmul.f32.gmra.mxu0 %v3837
  %v4480 = vpop.f32.mrf.mxu0
  %v4481 = vadd.f32 %v4368, %v4480
  %4482 = vmatmul.f32.gmra.mxu0 %v3841
  %v4483 = vpop.f32.mrf.mxu0
  %v4484 = vadd.f32 %v4371, %v4483
  %4485 = vdwg.mxu0
  %v4486 = vmul.f32 %v4391, 0.5
  %v4487 = vmul.f32 %v4394, 0.5
  %v4488 = vmul.f32 %v4397, 0.5
  %v4489 = vmul.f32 %v4400, 0.5
  %v4490 = vmul.f32 %v4403, 0.5
  %v4491 = vmul.f32 %v4406, 0.5
  %v4492 = vmul.f32 %v4409, 0.5
  %v4493 = vmul.f32 %v4412, 0.5
  %v4494 = vmul.f32 %v4415, 0.5
  %v4495 = vmul.f32 %v4418, 0.5
  %v4496 = vmul.f32 %v4421, 0.5
  %v4497 = vmul.f32 %v4424, 0.5
  %v4498 = vmul.f32 %v4427, 0.5
  %v4499 = vmul.f32 %v4430, 0.5
  %v4500 = vmul.f32 %v4433, 0.5
  %v4501 = vmul.f32 %v4436, 0.5
  %v4502 = vmul.f32 %v4439, 0.5
  %v4503 = vmul.f32 %v4442, 0.5
  %v4504 = vmul.f32 %v4445, 0.5
  %v4505 = vmul.f32 %v4448, 0.5
  %v4506 = vmul.f32 %v4451, 0.5
  %v4507 = vmul.f32 %v4454, 0.5
  %v4508 = vmul.f32 %v4457, 0.5
  %v4509 = vmul.f32 %v4460, 0.5
  %v4510 = vmul.f32 %v4463, 0.5
  %v4511 = vmul.f32 %v4466, 0.5
  %v4512 = vmul.f32 %v4469, 0.5
  %v4513 = vmul.f32 %v4472, 0.5
  %v4514 = vmul.f32 %v4475, 0.5
  %v4515 = vmul.f32 %v4478, 0.5
  %v4516 = vmul.f32 %v4481, 0.5
  %v4517 = vmul.f32 %v4484, 0.5
  %v4518 = vmul.f32 %v4391, 0.70710677
  %v4519 = vmul.f32 %v4394, 0.70710677
  %v4520 = vmul.f32 %v4397, 0.70710677
  %v4521 = vmul.f32 %v4400, 0.70710677
  %v4522 = vmul.f32 %v4403, 0.70710677
  %v4523 = vmul.f32 %v4406, 0.70710677
  %v4524 = vmul.f32 %v4409, 0.70710677
  %v4525 = vmul.f32 %v4412, 0.70710677
  %v4526 = vmul.f32 %v4415, 0.70710677
  %v4527 = vmul.f32 %v4418, 0.70710677
  %v4528 = vmul.f32 %v4421, 0.70710677
  %v4529 = vmul.f32 %v4424, 0.70710677
  %v4530 = vmul.f32 %v4427, 0.70710677
  %v4531 = vmul.f32 %v4430, 0.70710677
  %v4532 = vmul.f32 %v4433, 0.70710677
  %v4533 = vmul.f32 %v4436, 0.70710677
  %v4534 = vmul.f32 %v4439, 0.70710677
  %v4535 = vmul.f32 %v4442, 0.70710677
  %v4536 = vmul.f32 %v4445, 0.70710677
  %v4537 = vmul.f32 %v4448, 0.70710677
  %v4538 = vmul.f32 %v4451, 0.70710677
  %v4539 = vmul.f32 %v4454, 0.70710677
  %v4540 = vmul.f32 %v4457, 0.70710677
  %v4541 = vmul.f32 %v4460, 0.70710677
  %v4542 = vmul.f32 %v4463, 0.70710677
  %v4543 = vmul.f32 %v4466, 0.70710677
  %v4544 = vmul.f32 %v4469, 0.70710677
  %v4545 = vmul.f32 %v4472, 0.70710677
  %v4546 = vmul.f32 %v4475, 0.70710677
  %v4547 = vmul.f32 %v4478, 0.70710677
  %v4548 = vmul.f32 %v4481, 0.70710677
  %v4549 = vmul.f32 %v4484, 0.70710677
  %v4550 = vmul.f32 %v4518, %v4518
  %v4551 = vmin.f32 16.0, %v4550
  %v4552 = vmul.f32 %v4551, 2.1237322e-06
  %v4553 = vadd.f32 %v4552, 0.00028619796
  %v4554 = vmul.f32 %v4551, %v4553
  %v4555 = vadd.f32 %v4554, 0.0036580483
  %v4556 = vmul.f32 %v4551, %v4555
  %v4557 = vadd.f32 %v4556, 0.05243302
  %v4558 = vmul.f32 %v4551, %v4557
  %v4559 = vadd.f32 %v4558, 0.18741608
  %v4560 = vmul.f32 %v4551, %v4559
  %v4561 = vadd.f32 %v4560, 1.1283791
  %v4562 = vmul.f32 %v4518, %v4561
  %v4563 = vmul.f32 %v4551, 3.8918573e-05
  %v4564 = vadd.f32 %v4563, 0.001143296
  %v4565 = vmul.f32 %v4551, %v4564
  %v4566 = vadd.f32 %v4565, 0.014752088
  %v4567 = vmul.f32 %v4551, %v4566
  %v4568 = vadd.f32 %v4567, 0.112945676
  %v4569 = vmul.f32 %v4551, %v4568
  %v4570 = vadd.f32 %v4569, 0.4994258
  %v4571 = vmul.f32 %v4551, %v4570
  %v4572 = vadd.f32 %v4571, 1.0
  %v4573 = vrcp.pop %v4572
  %v4574 = vmul.f32 %v4572, %v4573
  %v4575 = vsub.f32 1.0, %v4574
  %v4576 = vmul.f32 %v4573, %v4575
  %v4577 = vadd.f32 %v4573, %v4576
  %vm4578 = vweird.f32 %v4572
  %vm4579 = vweird.f32 %v4573
  %vm4580 = vmor %vm4578, %vm4579
  %v4581 = vsel %vm4580, %v4573, %v4577
  %v4582 = vand.u32 2147483647, %v4572
  %vm4583 = vcmp.eq.f32.partialorder %v4582, 8.507059e+37
  %v4584 = vand.u32 %v4572, 2147483648
  %v4585 = vor.u32 1.1754944e-38, %v4584
  %v4586 = vsel %vm4583, %v4585, %v4581
  %v4587 = vmul.f32 %v4562, %v4586
  %v4588 = vmin.f32 %v4587, 1.0
  %v4589 = vmax.f32 %v4588, -1.0
  %v4590 = vmul.f32 %v4519, %v4519
  %v4591 = vmin.f32 16.0, %v4590
  %v4592 = vmul.f32 %v4591, 2.1237322e-06
  %v4593 = vadd.f32 %v4592, 0.00028619796
  %v4594 = vmul.f32 %v4591, %v4593
  %v4595 = vadd.f32 %v4594, 0.0036580483
  %v4596 = vmul.f32 %v4591, %v4595
  %v4597 = vadd.f32 %v4596, 0.05243302
  %v4598 = vmul.f32 %v4591, %v4597
  %v4599 = vadd.f32 %v4598, 0.18741608
  %v4600 = vmul.f32 %v4591, %v4599
  %v4601 = vadd.f32 %v4600, 1.1283791
  %v4602 = vmul.f32 %v4519, %v4601
  %v4603 = vmul.f32 %v4591, 3.8918573e-05
  %v4604 = vadd.f32 %v4603, 0.001143296
  %v4605 = vmul.f32 %v4591, %v4604
  %v4606 = vadd.f32 %v4605, 0.014752088
  %v4607 = vmul.f32 %v4591, %v4606
  %v4608 = vadd.f32 %v4607, 0.112945676
  %v4609 = vmul.f32 %v4591, %v4608
  %v4610 = vadd.f32 %v4609, 0.4994258
  %v4611 = vmul.f32 %v4591, %v4610
  %v4612 = vadd.f32 %v4611, 1.0
  %v4613 = vrcp.pop %v4612
  %v4614 = vmul.f32 %v4612, %v4613
  %v4615 = vsub.f32 1.0, %v4614
  %v4616 = vmul.f32 %v4613, %v4615
  %v4617 = vadd.f32 %v4613, %v4616
  %vm4618 = vweird.f32 %v4612
  %vm4619 = vweird.f32 %v4613
  %vm4620 = vmor %vm4618, %vm4619
  %v4621 = vsel %vm4620, %v4613, %v4617
  %v4622 = vand.u32 2147483647, %v4612
  %vm4623 = vcmp.eq.f32.partialorder %v4622, 8.507059e+37
  %v4624 = vand.u32 %v4612, 2147483648
  %v4625 = vor.u32 1.1754944e-38, %v4624
  %v4626 = vsel %vm4623, %v4625, %v4621
  %v4627 = vmul.f32 %v4602, %v4626
  %v4628 = vmin.f32 %v4627, 1.0
  %v4629 = vmax.f32 %v4628, -1.0
  %v4630 = vmul.f32 %v4520, %v4520
  %v4631 = vmin.f32 16.0, %v4630
  %v4632 = vmul.f32 %v4631, 2.1237322e-06
  %v4633 = vadd.f32 %v4632, 0.00028619796
  %v4634 = vmul.f32 %v4631, %v4633
  %v4635 = vadd.f32 %v4634, 0.0036580483
  %v4636 = vmul.f32 %v4631, %v4635
  %v4637 = vadd.f32 %v4636, 0.05243302
  %v4638 = vmul.f32 %v4631, %v4637
  %v4639 = vadd.f32 %v4638, 0.18741608
  %v4640 = vmul.f32 %v4631, %v4639
  %v4641 = vadd.f32 %v4640, 1.1283791
  %v4642 = vmul.f32 %v4520, %v4641
  %v4643 = vmul.f32 %v4631, 3.8918573e-05
  %v4644 = vadd.f32 %v4643, 0.001143296
  %v4645 = vmul.f32 %v4631, %v4644
  %v4646 = vadd.f32 %v4645, 0.014752088
  %v4647 = vmul.f32 %v4631, %v4646
  %v4648 = vadd.f32 %v4647, 0.112945676
  %v4649 = vmul.f32 %v4631, %v4648
  %v4650 = vadd.f32 %v4649, 0.4994258
  %v4651 = vmul.f32 %v4631, %v4650
  %v4652 = vadd.f32 %v4651, 1.0
  %v4653 = vrcp.pop %v4652
  %v4654 = vmul.f32 %v4652, %v4653
  %v4655 = vsub.f32 1.0, %v4654
  %v4656 = vmul.f32 %v4653, %v4655
  %v4657 = vadd.f32 %v4653, %v4656
  %vm4658 = vweird.f32 %v4652
  %vm4659 = vweird.f32 %v4653
  %vm4660 = vmor %vm4658, %vm4659
  %v4661 = vsel %vm4660, %v4653, %v4657
  %v4662 = vand.u32 2147483647, %v4652
  %vm4663 = vcmp.eq.f32.partialorder %v4662, 8.507059e+37
  %v4664 = vand.u32 %v4652, 2147483648
  %v4665 = vor.u32 1.1754944e-38, %v4664
  %v4666 = vsel %vm4663, %v4665, %v4661
  %v4667 = vmul.f32 %v4642, %v4666
  %v4668 = vmin.f32 %v4667, 1.0
  %v4669 = vmax.f32 %v4668, -1.0
  %v4670 = vmul.f32 %v4521, %v4521
  %v4671 = vmin.f32 16.0, %v4670
  %v4672 = vmul.f32 %v4671, 2.1237322e-06
  %v4673 = vadd.f32 %v4672, 0.00028619796
  %v4674 = vmul.f32 %v4671, %v4673
  %v4675 = vadd.f32 %v4674, 0.0036580483
  %v4676 = vmul.f32 %v4671, %v4675
  %v4677 = vadd.f32 %v4676, 0.05243302
  %v4678 = vmul.f32 %v4671, %v4677
  %v4679 = vadd.f32 %v4678, 0.18741608
  %v4680 = vmul.f32 %v4671, %v4679
  %v4681 = vadd.f32 %v4680, 1.1283791
  %v4682 = vmul.f32 %v4521, %v4681
  %v4683 = vmul.f32 %v4671, 3.8918573e-05
  %v4684 = vadd.f32 %v4683, 0.001143296
  %v4685 = vmul.f32 %v4671, %v4684
  %v4686 = vadd.f32 %v4685, 0.014752088
  %v4687 = vmul.f32 %v4671, %v4686
  %v4688 = vadd.f32 %v4687, 0.112945676
  %v4689 = vmul.f32 %v4671, %v4688
  %v4690 = vadd.f32 %v4689, 0.4994258
  %v4691 = vmul.f32 %v4671, %v4690
  %v4692 = vadd.f32 %v4691, 1.0
  %v4693 = vrcp.pop %v4692
  %v4694 = vmul.f32 %v4692, %v4693
  %v4695 = vsub.f32 1.0, %v4694
  %v4696 = vmul.f32 %v4693, %v4695
  %v4697 = vadd.f32 %v4693, %v4696
  %vm4698 = vweird.f32 %v4692
  %vm4699 = vweird.f32 %v4693
  %vm4700 = vmor %vm4698, %vm4699
  %v4701 = vsel %vm4700, %v4693, %v4697
  %v4702 = vand.u32 2147483647, %v4692
  %vm4703 = vcmp.eq.f32.partialorder %v4702, 8.507059e+37
  %v4704 = vand.u32 %v4692, 2147483648
  %v4705 = vor.u32 1.1754944e-38, %v4704
  %v4706 = vsel %vm4703, %v4705, %v4701
  %v4707 = vmul.f32 %v4682, %v4706
  %v4708 = vmin.f32 %v4707, 1.0
  %v4709 = vmax.f32 %v4708, -1.0
  %v4710 = vmul.f32 %v4522, %v4522
  %v4711 = vmin.f32 16.0, %v4710
  %v4712 = vmul.f32 %v4711, 2.1237322e-06
  %v4713 = vadd.f32 %v4712, 0.00028619796
  %v4714 = vmul.f32 %v4711, %v4713
  %v4715 = vadd.f32 %v4714, 0.0036580483
  %v4716 = vmul.f32 %v4711, %v4715
  %v4717 = vadd.f32 %v4716, 0.05243302
  %v4718 = vmul.f32 %v4711, %v4717
  %v4719 = vadd.f32 %v4718, 0.18741608
  %v4720 = vmul.f32 %v4711, %v4719
  %v4721 = vadd.f32 %v4720, 1.1283791
  %v4722 = vmul.f32 %v4522, %v4721
  %v4723 = vmul.f32 %v4711, 3.8918573e-05
  %v4724 = vadd.f32 %v4723, 0.001143296
  %v4725 = vmul.f32 %v4711, %v4724
  %v4726 = vadd.f32 %v4725, 0.014752088
  %v4727 = vmul.f32 %v4711, %v4726
  %v4728 = vadd.f32 %v4727, 0.112945676
  %v4729 = vmul.f32 %v4711, %v4728
  %v4730 = vadd.f32 %v4729, 0.4994258
  %v4731 = vmul.f32 %v4711, %v4730
  %v4732 = vadd.f32 %v4731, 1.0
  %v4733 = vrcp.pop %v4732
  %v4734 = vmul.f32 %v4732, %v4733
  %v4735 = vsub.f32 1.0, %v4734
  %v4736 = vmul.f32 %v4733, %v4735
  %v4737 = vadd.f32 %v4733, %v4736
  %vm4738 = vweird.f32 %v4732
  %vm4739 = vweird.f32 %v4733
  %vm4740 = vmor %vm4738, %vm4739
  %v4741 = vsel %vm4740, %v4733, %v4737
  %v4742 = vand.u32 2147483647, %v4732
  %vm4743 = vcmp.eq.f32.partialorder %v4742, 8.507059e+37
  %v4744 = vand.u32 %v4732, 2147483648
  %v4745 = vor.u32 1.1754944e-38, %v4744
  %v4746 = vsel %vm4743, %v4745, %v4741
  %v4747 = vmul.f32 %v4722, %v4746
  %v4748 = vmin.f32 %v4747, 1.0
  %v4749 = vmax.f32 %v4748, -1.0
  %v4750 = vmul.f32 %v4523, %v4523
  %v4751 = vmin.f32 16.0, %v4750
  %v4752 = vmul.f32 %v4751, 2.1237322e-06
  %v4753 = vadd.f32 %v4752, 0.00028619796
  %v4754 = vmul.f32 %v4751, %v4753
  %v4755 = vadd.f32 %v4754, 0.0036580483
  %v4756 = vmul.f32 %v4751, %v4755
  %v4757 = vadd.f32 %v4756, 0.05243302
  %v4758 = vmul.f32 %v4751, %v4757
  %v4759 = vadd.f32 %v4758, 0.18741608
  %v4760 = vmul.f32 %v4751, %v4759
  %v4761 = vadd.f32 %v4760, 1.1283791
  %v4762 = vmul.f32 %v4523, %v4761
  %v4763 = vmul.f32 %v4751, 3.8918573e-05
  %v4764 = vadd.f32 %v4763, 0.001143296
  %v4765 = vmul.f32 %v4751, %v4764
  %v4766 = vadd.f32 %v4765, 0.014752088
  %v4767 = vmul.f32 %v4751, %v4766
  %v4768 = vadd.f32 %v4767, 0.112945676
  %v4769 = vmul.f32 %v4751, %v4768
  %v4770 = vadd.f32 %v4769, 0.4994258
  %v4771 = vmul.f32 %v4751, %v4770
  %v4772 = vadd.f32 %v4771, 1.0
  %v4773 = vrcp.pop %v4772
  %v4774 = vmul.f32 %v4772, %v4773
  %v4775 = vsub.f32 1.0, %v4774
  %v4776 = vmul.f32 %v4773, %v4775
  %v4777 = vadd.f32 %v4773, %v4776
  %vm4778 = vweird.f32 %v4772
  %vm4779 = vweird.f32 %v4773
  %vm4780 = vmor %vm4778, %vm4779
  %v4781 = vsel %vm4780, %v4773, %v4777
  %v4782 = vand.u32 2147483647, %v4772
  %vm4783 = vcmp.eq.f32.partialorder %v4782, 8.507059e+37
  %v4784 = vand.u32 %v4772, 2147483648
  %v4785 = vor.u32 1.1754944e-38, %v4784
  %v4786 = vsel %vm4783, %v4785, %v4781
  %v4787 = vmul.f32 %v4762, %v4786
  %v4788 = vmin.f32 %v4787, 1.0
  %v4789 = vmax.f32 %v4788, -1.0
  %v4790 = vmul.f32 %v4524, %v4524
  %v4791 = vmin.f32 16.0, %v4790
  %v4792 = vmul.f32 %v4791, 2.1237322e-06
  %v4793 = vadd.f32 %v4792, 0.00028619796
  %v4794 = vmul.f32 %v4791, %v4793
  %v4795 = vadd.f32 %v4794, 0.0036580483
  %v4796 = vmul.f32 %v4791, %v4795
  %v4797 = vadd.f32 %v4796, 0.05243302
  %v4798 = vmul.f32 %v4791, %v4797
  %v4799 = vadd.f32 %v4798, 0.18741608
  %v4800 = vmul.f32 %v4791, %v4799
  %v4801 = vadd.f32 %v4800, 1.1283791
  %v4802 = vmul.f32 %v4524, %v4801
  %v4803 = vmul.f32 %v4791, 3.8918573e-05
  %v4804 = vadd.f32 %v4803, 0.001143296
  %v4805 = vmul.f32 %v4791, %v4804
  %v4806 = vadd.f32 %v4805, 0.014752088
  %v4807 = vmul.f32 %v4791, %v4806
  %v4808 = vadd.f32 %v4807, 0.112945676
  %v4809 = vmul.f32 %v4791, %v4808
  %v4810 = vadd.f32 %v4809, 0.4994258
  %v4811 = vmul.f32 %v4791, %v4810
  %v4812 = vadd.f32 %v4811, 1.0
  %v4813 = vrcp.pop %v4812
  %v4814 = vmul.f32 %v4812, %v4813
  %v4815 = vsub.f32 1.0, %v4814
  %v4816 = vmul.f32 %v4813, %v4815
  %v4817 = vadd.f32 %v4813, %v4816
  %vm4818 = vweird.f32 %v4812
  %vm4819 = vweird.f32 %v4813
  %vm4820 = vmor %vm4818, %vm4819
  %v4821 = vsel %vm4820, %v4813, %v4817
  %v4822 = vand.u32 2147483647, %v4812
  %vm4823 = vcmp.eq.f32.partialorder %v4822, 8.507059e+37
  %v4824 = vand.u32 %v4812, 2147483648
  %v4825 = vor.u32 1.1754944e-38, %v4824
  %v4826 = vsel %vm4823, %v4825, %v4821
  %v4827 = vmul.f32 %v4802, %v4826
  %v4828 = vmin.f32 %v4827, 1.0
  %v4829 = vmax.f32 %v4828, -1.0
  %v4830 = vmul.f32 %v4525, %v4525
  %v4831 = vmin.f32 16.0, %v4830
  %v4832 = vmul.f32 %v4831, 2.1237322e-06
  %v4833 = vadd.f32 %v4832, 0.00028619796
  %v4834 = vmul.f32 %v4831, %v4833
  %v4835 = vadd.f32 %v4834, 0.0036580483
  %v4836 = vmul.f32 %v4831, %v4835
  %v4837 = vadd.f32 %v4836, 0.05243302
  %v4838 = vmul.f32 %v4831, %v4837
  %v4839 = vadd.f32 %v4838, 0.18741608
  %v4840 = vmul.f32 %v4831, %v4839
  %v4841 = vadd.f32 %v4840, 1.1283791
  %v4842 = vmul.f32 %v4525, %v4841
  %v4843 = vmul.f32 %v4831, 3.8918573e-05
  %v4844 = vadd.f32 %v4843, 0.001143296
  %v4845 = vmul.f32 %v4831, %v4844
  %v4846 = vadd.f32 %v4845, 0.014752088
  %v4847 = vmul.f32 %v4831, %v4846
  %v4848 = vadd.f32 %v4847, 0.112945676
  %v4849 = vmul.f32 %v4831, %v4848
  %v4850 = vadd.f32 %v4849, 0.4994258
  %v4851 = vmul.f32 %v4831, %v4850
  %v4852 = vadd.f32 %v4851, 1.0
  %v4853 = vrcp.pop %v4852
  %v4854 = vmul.f32 %v4852, %v4853
  %v4855 = vsub.f32 1.0, %v4854
  %v4856 = vmul.f32 %v4853, %v4855
  %v4857 = vadd.f32 %v4853, %v4856
  %vm4858 = vweird.f32 %v4852
  %vm4859 = vweird.f32 %v4853
  %vm4860 = vmor %vm4858, %vm4859
  %v4861 = vsel %vm4860, %v4853, %v4857
  %v4862 = vand.u32 2147483647, %v4852
  %vm4863 = vcmp.eq.f32.partialorder %v4862, 8.507059e+37
  %v4864 = vand.u32 %v4852, 2147483648
  %v4865 = vor.u32 1.1754944e-38, %v4864
  %v4866 = vsel %vm4863, %v4865, %v4861
  %v4867 = vmul.f32 %v4842, %v4866
  %v4868 = vmin.f32 %v4867, 1.0
  %v4869 = vmax.f32 %v4868, -1.0
  %v4870 = vmul.f32 %v4526, %v4526
  %v4871 = vmin.f32 16.0, %v4870
  %v4872 = vmul.f32 %v4871, 2.1237322e-06
  %v4873 = vadd.f32 %v4872, 0.00028619796
  %v4874 = vmul.f32 %v4871, %v4873
  %v4875 = vadd.f32 %v4874, 0.0036580483
  %v4876 = vmul.f32 %v4871, %v4875
  %v4877 = vadd.f32 %v4876, 0.05243302
  %v4878 = vmul.f32 %v4871, %v4877
  %v4879 = vadd.f32 %v4878, 0.18741608
  %v4880 = vmul.f32 %v4871, %v4879
  %v4881 = vadd.f32 %v4880, 1.1283791
  %v4882 = vmul.f32 %v4526, %v4881
  %v4883 = vmul.f32 %v4871, 3.8918573e-05
  %v4884 = vadd.f32 %v4883, 0.001143296
  %v4885 = vmul.f32 %v4871, %v4884
  %v4886 = vadd.f32 %v4885, 0.014752088
  %v4887 = vmul.f32 %v4871, %v4886
  %v4888 = vadd.f32 %v4887, 0.112945676
  %v4889 = vmul.f32 %v4871, %v4888
  %v4890 = vadd.f32 %v4889, 0.4994258
  %v4891 = vmul.f32 %v4871, %v4890
  %v4892 = vadd.f32 %v4891, 1.0
  %v4893 = vrcp.pop %v4892
  %v4894 = vmul.f32 %v4892, %v4893
  %v4895 = vsub.f32 1.0, %v4894
  %v4896 = vmul.f32 %v4893, %v4895
  %v4897 = vadd.f32 %v4893, %v4896
  %vm4898 = vweird.f32 %v4892
  %vm4899 = vweird.f32 %v4893
  %vm4900 = vmor %vm4898, %vm4899
  %v4901 = vsel %vm4900, %v4893, %v4897
  %v4902 = vand.u32 2147483647, %v4892
  %vm4903 = vcmp.eq.f32.partialorder %v4902, 8.507059e+37
  %v4904 = vand.u32 %v4892, 2147483648
  %v4905 = vor.u32 1.1754944e-38, %v4904
  %v4906 = vsel %vm4903, %v4905, %v4901
  %v4907 = vmul.f32 %v4882, %v4906
  %v4908 = vmin.f32 %v4907, 1.0
  %v4909 = vmax.f32 %v4908, -1.0
  %v4910 = vmul.f32 %v4527, %v4527
  %v4911 = vmin.f32 16.0, %v4910
  %v4912 = vmul.f32 %v4911, 2.1237322e-06
  %v4913 = vadd.f32 %v4912, 0.00028619796
  %v4914 = vmul.f32 %v4911, %v4913
  %v4915 = vadd.f32 %v4914, 0.0036580483
  %v4916 = vmul.f32 %v4911, %v4915
  %v4917 = vadd.f32 %v4916, 0.05243302
  %v4918 = vmul.f32 %v4911, %v4917
  %v4919 = vadd.f32 %v4918, 0.18741608
  %v4920 = vmul.f32 %v4911, %v4919
  %v4921 = vadd.f32 %v4920, 1.1283791
  %v4922 = vmul.f32 %v4527, %v4921
  %v4923 = vmul.f32 %v4911, 3.8918573e-05
  %v4924 = vadd.f32 %v4923, 0.001143296
  %v4925 = vmul.f32 %v4911, %v4924
  %v4926 = vadd.f32 %v4925, 0.014752088
  %v4927 = vmul.f32 %v4911, %v4926
  %v4928 = vadd.f32 %v4927, 0.112945676
  %v4929 = vmul.f32 %v4911, %v4928
  %v4930 = vadd.f32 %v4929, 0.4994258
  %v4931 = vmul.f32 %v4911, %v4930
  %v4932 = vadd.f32 %v4931, 1.0
  %v4933 = vrcp.pop %v4932
  %v4934 = vmul.f32 %v4932, %v4933
  %v4935 = vsub.f32 1.0, %v4934
  %v4936 = vmul.f32 %v4933, %v4935
  %v4937 = vadd.f32 %v4933, %v4936
  %vm4938 = vweird.f32 %v4932
  %vm4939 = vweird.f32 %v4933
  %vm4940 = vmor %vm4938, %vm4939
  %v4941 = vsel %vm4940, %v4933, %v4937
  %v4942 = vand.u32 2147483647, %v4932
  %vm4943 = vcmp.eq.f32.partialorder %v4942, 8.507059e+37
  %v4944 = vand.u32 %v4932, 2147483648
  %v4945 = vor.u32 1.1754944e-38, %v4944
  %v4946 = vsel %vm4943, %v4945, %v4941
  %v4947 = vmul.f32 %v4922, %v4946
  %v4948 = vmin.f32 %v4947, 1.0
  %v4949 = vmax.f32 %v4948, -1.0
  %v4950 = vmul.f32 %v4528, %v4528
  %v4951 = vmin.f32 16.0, %v4950
  %v4952 = vmul.f32 %v4951, 2.1237322e-06
  %v4953 = vadd.f32 %v4952, 0.00028619796
  %v4954 = vmul.f32 %v4951, %v4953
  %v4955 = vadd.f32 %v4954, 0.0036580483
  %v4956 = vmul.f32 %v4951, %v4955
  %v4957 = vadd.f32 %v4956, 0.05243302
  %v4958 = vmul.f32 %v4951, %v4957
  %v4959 = vadd.f32 %v4958, 0.18741608
  %v4960 = vmul.f32 %v4951, %v4959
  %v4961 = vadd.f32 %v4960, 1.1283791
  %v4962 = vmul.f32 %v4528, %v4961
  %v4963 = vmul.f32 %v4951, 3.8918573e-05
  %v4964 = vadd.f32 %v4963, 0.001143296
  %v4965 = vmul.f32 %v4951, %v4964
  %v4966 = vadd.f32 %v4965, 0.014752088
  %v4967 = vmul.f32 %v4951, %v4966
  %v4968 = vadd.f32 %v4967, 0.112945676
  %v4969 = vmul.f32 %v4951, %v4968
  %v4970 = vadd.f32 %v4969, 0.4994258
  %v4971 = vmul.f32 %v4951, %v4970
  %v4972 = vadd.f32 %v4971, 1.0
  %v4973 = vrcp.pop %v4972
  %v4974 = vmul.f32 %v4972, %v4973
  %v4975 = vsub.f32 1.0, %v4974
  %v4976 = vmul.f32 %v4973, %v4975
  %v4977 = vadd.f32 %v4973, %v4976
  %vm4978 = vweird.f32 %v4972
  %vm4979 = vweird.f32 %v4973
  %vm4980 = vmor %vm4978, %vm4979
  %v4981 = vsel %vm4980, %v4973, %v4977
  %v4982 = vand.u32 2147483647, %v4972
  %vm4983 = vcmp.eq.f32.partialorder %v4982, 8.507059e+37
  %v4984 = vand.u32 %v4972, 2147483648
  %v4985 = vor.u32 1.1754944e-38, %v4984
  %v4986 = vsel %vm4983, %v4985, %v4981
  %v4987 = vmul.f32 %v4962, %v4986
  %v4988 = vmin.f32 %v4987, 1.0
  %v4989 = vmax.f32 %v4988, -1.0
  %v4990 = vmul.f32 %v4529, %v4529
  %v4991 = vmin.f32 16.0, %v4990
  %v4992 = vmul.f32 %v4991, 2.1237322e-06
  %v4993 = vadd.f32 %v4992, 0.00028619796
  %v4994 = vmul.f32 %v4991, %v4993
  %v4995 = vadd.f32 %v4994, 0.0036580483
  %v4996 = vmul.f32 %v4991, %v4995
  %v4997 = vadd.f32 %v4996, 0.05243302
  %v4998 = vmul.f32 %v4991, %v4997
  %v4999 = vadd.f32 %v4998, 0.18741608
  %v5000 = vmul.f32 %v4991, %v4999
  %v5001 = vadd.f32 %v5000, 1.1283791
  %v5002 = vmul.f32 %v4529, %v5001
  %v5003 = vmul.f32 %v4991, 3.8918573e-05
  %v5004 = vadd.f32 %v5003, 0.001143296
  %v5005 = vmul.f32 %v4991, %v5004
  %v5006 = vadd.f32 %v5005, 0.014752088
  %v5007 = vmul.f32 %v4991, %v5006
  %v5008 = vadd.f32 %v5007, 0.112945676
  %v5009 = vmul.f32 %v4991, %v5008
  %v5010 = vadd.f32 %v5009, 0.4994258
  %v5011 = vmul.f32 %v4991, %v5010
  %v5012 = vadd.f32 %v5011, 1.0
  %v5013 = vrcp.pop %v5012
  %v5014 = vmul.f32 %v5012, %v5013
  %v5015 = vsub.f32 1.0, %v5014
  %v5016 = vmul.f32 %v5013, %v5015
  %v5017 = vadd.f32 %v5013, %v5016
  %vm5018 = vweird.f32 %v5012
  %vm5019 = vweird.f32 %v5013
  %vm5020 = vmor %vm5018, %vm5019
  %v5021 = vsel %vm5020, %v5013, %v5017
  %v5022 = vand.u32 2147483647, %v5012
  %vm5023 = vcmp.eq.f32.partialorder %v5022, 8.507059e+37
  %v5024 = vand.u32 %v5012, 2147483648
  %v5025 = vor.u32 1.1754944e-38, %v5024
  %v5026 = vsel %vm5023, %v5025, %v5021
  %v5027 = vmul.f32 %v5002, %v5026
  %v5028 = vmin.f32 %v5027, 1.0
  %v5029 = vmax.f32 %v5028, -1.0
  %v5030 = vmul.f32 %v4530, %v4530
  %v5031 = vmin.f32 16.0, %v5030
  %v5032 = vmul.f32 %v5031, 2.1237322e-06
  %v5033 = vadd.f32 %v5032, 0.00028619796
  %v5034 = vmul.f32 %v5031, %v5033
  %v5035 = vadd.f32 %v5034, 0.0036580483
  %v5036 = vmul.f32 %v5031, %v5035
  %v5037 = vadd.f32 %v5036, 0.05243302
  %v5038 = vmul.f32 %v5031, %v5037
  %v5039 = vadd.f32 %v5038, 0.18741608
  %v5040 = vmul.f32 %v5031, %v5039
  %v5041 = vadd.f32 %v5040, 1.1283791
  %v5042 = vmul.f32 %v4530, %v5041
  %v5043 = vmul.f32 %v5031, 3.8918573e-05
  %v5044 = vadd.f32 %v5043, 0.001143296
  %v5045 = vmul.f32 %v5031, %v5044
  %v5046 = vadd.f32 %v5045, 0.014752088
  %v5047 = vmul.f32 %v5031, %v5046
  %v5048 = vadd.f32 %v5047, 0.112945676
  %v5049 = vmul.f32 %v5031, %v5048
  %v5050 = vadd.f32 %v5049, 0.4994258
  %v5051 = vmul.f32 %v5031, %v5050
  %v5052 = vadd.f32 %v5051, 1.0
  %v5053 = vrcp.pop %v5052
  %v5054 = vmul.f32 %v5052, %v5053
  %v5055 = vsub.f32 1.0, %v5054
  %v5056 = vmul.f32 %v5053, %v5055
  %v5057 = vadd.f32 %v5053, %v5056
  %vm5058 = vweird.f32 %v5052
  %vm5059 = vweird.f32 %v5053
  %vm5060 = vmor %vm5058, %vm5059
  %v5061 = vsel %vm5060, %v5053, %v5057
  %v5062 = vand.u32 2147483647, %v5052
  %vm5063 = vcmp.eq.f32.partialorder %v5062, 8.507059e+37
  %v5064 = vand.u32 %v5052, 2147483648
  %v5065 = vor.u32 1.1754944e-38, %v5064
  %v5066 = vsel %vm5063, %v5065, %v5061
  %v5067 = vmul.f32 %v5042, %v5066
  %v5068 = vmin.f32 %v5067, 1.0
  %v5069 = vmax.f32 %v5068, -1.0
  %v5070 = vmul.f32 %v4531, %v4531
  %v5071 = vmin.f32 16.0, %v5070
  %v5072 = vmul.f32 %v5071, 2.1237322e-06
  %v5073 = vadd.f32 %v5072, 0.00028619796
  %v5074 = vmul.f32 %v5071, %v5073
  %v5075 = vadd.f32 %v5074, 0.0036580483
  %v5076 = vmul.f32 %v5071, %v5075
  %v5077 = vadd.f32 %v5076, 0.05243302
  %v5078 = vmul.f32 %v5071, %v5077
  %v5079 = vadd.f32 %v5078, 0.18741608
  %v5080 = vmul.f32 %v5071, %v5079
  %v5081 = vadd.f32 %v5080, 1.1283791
  %v5082 = vmul.f32 %v4531, %v5081
  %v5083 = vmul.f32 %v5071, 3.8918573e-05
  %v5084 = vadd.f32 %v5083, 0.001143296
  %v5085 = vmul.f32 %v5071, %v5084
  %v5086 = vadd.f32 %v5085, 0.014752088
  %v5087 = vmul.f32 %v5071, %v5086
  %v5088 = vadd.f32 %v5087, 0.112945676
  %v5089 = vmul.f32 %v5071, %v5088
  %v5090 = vadd.f32 %v5089, 0.4994258
  %v5091 = vmul.f32 %v5071, %v5090
  %v5092 = vadd.f32 %v5091, 1.0
  %v5093 = vrcp.pop %v5092
  %v5094 = vmul.f32 %v5092, %v5093
  %v5095 = vsub.f32 1.0, %v5094
  %v5096 = vmul.f32 %v5093, %v5095
  %v5097 = vadd.f32 %v5093, %v5096
  %vm5098 = vweird.f32 %v5092
  %vm5099 = vweird.f32 %v5093
  %vm5100 = vmor %vm5098, %vm5099
  %v5101 = vsel %vm5100, %v5093, %v5097
  %v5102 = vand.u32 2147483647, %v5092
  %vm5103 = vcmp.eq.f32.partialorder %v5102, 8.507059e+37
  %v5104 = vand.u32 %v5092, 2147483648
  %v5105 = vor.u32 1.1754944e-38, %v5104
  %v5106 = vsel %vm5103, %v5105, %v5101
  %v5107 = vmul.f32 %v5082, %v5106
  %v5108 = vmin.f32 %v5107, 1.0
  %v5109 = vmax.f32 %v5108, -1.0
  %v5110 = vmul.f32 %v4532, %v4532
  %v5111 = vmin.f32 16.0, %v5110
  %v5112 = vmul.f32 %v5111, 2.1237322e-06
  %v5113 = vadd.f32 %v5112, 0.00028619796
  %v5114 = vmul.f32 %v5111, %v5113
  %v5115 = vadd.f32 %v5114, 0.0036580483
  %v5116 = vmul.f32 %v5111, %v5115
  %v5117 = vadd.f32 %v5116, 0.05243302
  %v5118 = vmul.f32 %v5111, %v5117
  %v5119 = vadd.f32 %v5118, 0.18741608
  %v5120 = vmul.f32 %v5111, %v5119
  %v5121 = vadd.f32 %v5120, 1.1283791
  %v5122 = vmul.f32 %v4532, %v5121
  %v5123 = vmul.f32 %v5111, 3.8918573e-05
  %v5124 = vadd.f32 %v5123, 0.001143296
  %v5125 = vmul.f32 %v5111, %v5124
  %v5126 = vadd.f32 %v5125, 0.014752088
  %v5127 = vmul.f32 %v5111, %v5126
  %v5128 = vadd.f32 %v5127, 0.112945676
  %v5129 = vmul.f32 %v5111, %v5128
  %v5130 = vadd.f32 %v5129, 0.4994258
  %v5131 = vmul.f32 %v5111, %v5130
  %v5132 = vadd.f32 %v5131, 1.0
  %v5133 = vrcp.pop %v5132
  %v5134 = vmul.f32 %v5132, %v5133
  %v5135 = vsub.f32 1.0, %v5134
  %v5136 = vmul.f32 %v5133, %v5135
  %v5137 = vadd.f32 %v5133, %v5136
  %vm5138 = vweird.f32 %v5132
  %vm5139 = vweird.f32 %v5133
  %vm5140 = vmor %vm5138, %vm5139
  %v5141 = vsel %vm5140, %v5133, %v5137
  %v5142 = vand.u32 2147483647, %v5132
  %vm5143 = vcmp.eq.f32.partialorder %v5142, 8.507059e+37
  %v5144 = vand.u32 %v5132, 2147483648
  %v5145 = vor.u32 1.1754944e-38, %v5144
  %v5146 = vsel %vm5143, %v5145, %v5141
  %v5147 = vmul.f32 %v5122, %v5146
  %v5148 = vmin.f32 %v5147, 1.0
  %v5149 = vmax.f32 %v5148, -1.0
  %v5150 = vmul.f32 %v4533, %v4533
  %v5151 = vmin.f32 16.0, %v5150
  %v5152 = vmul.f32 %v5151, 2.1237322e-06
  %v5153 = vadd.f32 %v5152, 0.00028619796
  %v5154 = vmul.f32 %v5151, %v5153
  %v5155 = vadd.f32 %v5154, 0.0036580483
  %v5156 = vmul.f32 %v5151, %v5155
  %v5157 = vadd.f32 %v5156, 0.05243302
  %v5158 = vmul.f32 %v5151, %v5157
  %v5159 = vadd.f32 %v5158, 0.18741608
  %v5160 = vmul.f32 %v5151, %v5159
  %v5161 = vadd.f32 %v5160, 1.1283791
  %v5162 = vmul.f32 %v4533, %v5161
  %v5163 = vmul.f32 %v5151, 3.8918573e-05
  %v5164 = vadd.f32 %v5163, 0.001143296
  %v5165 = vmul.f32 %v5151, %v5164
  %v5166 = vadd.f32 %v5165, 0.014752088
  %v5167 = vmul.f32 %v5151, %v5166
  %v5168 = vadd.f32 %v5167, 0.112945676
  %v5169 = vmul.f32 %v5151, %v5168
  %v5170 = vadd.f32 %v5169, 0.4994258
  %v5171 = vmul.f32 %v5151, %v5170
  %v5172 = vadd.f32 %v5171, 1.0
  %v5173 = vrcp.pop %v5172
  %v5174 = vmul.f32 %v5172, %v5173
  %v5175 = vsub.f32 1.0, %v5174
  %v5176 = vmul.f32 %v5173, %v5175
  %v5177 = vadd.f32 %v5173, %v5176
  %vm5178 = vweird.f32 %v5172
  %vm5179 = vweird.f32 %v5173
  %vm5180 = vmor %vm5178, %vm5179
  %v5181 = vsel %vm5180, %v5173, %v5177
  %v5182 = vand.u32 2147483647, %v5172
  %vm5183 = vcmp.eq.f32.partialorder %v5182, 8.507059e+37
  %v5184 = vand.u32 %v5172, 2147483648
  %v5185 = vor.u32 1.1754944e-38, %v5184
  %v5186 = vsel %vm5183, %v5185, %v5181
  %v5187 = vmul.f32 %v5162, %v5186
  %v5188 = vmin.f32 %v5187, 1.0
  %v5189 = vmax.f32 %v5188, -1.0
  %v5190 = vmul.f32 %v4534, %v4534
  %v5191 = vmin.f32 16.0, %v5190
  %v5192 = vmul.f32 %v5191, 2.1237322e-06
  %v5193 = vadd.f32 %v5192, 0.00028619796
  %v5194 = vmul.f32 %v5191, %v5193
  %v5195 = vadd.f32 %v5194, 0.0036580483
  %v5196 = vmul.f32 %v5191, %v5195
  %v5197 = vadd.f32 %v5196, 0.05243302
  %v5198 = vmul.f32 %v5191, %v5197
  %v5199 = vadd.f32 %v5198, 0.18741608
  %v5200 = vmul.f32 %v5191, %v5199
  %v5201 = vadd.f32 %v5200, 1.1283791
  %v5202 = vmul.f32 %v4534, %v5201
  %v5203 = vmul.f32 %v5191, 3.8918573e-05
  %v5204 = vadd.f32 %v5203, 0.001143296
  %v5205 = vmul.f32 %v5191, %v5204
  %v5206 = vadd.f32 %v5205, 0.014752088
  %v5207 = vmul.f32 %v5191, %v5206
  %v5208 = vadd.f32 %v5207, 0.112945676
  %v5209 = vmul.f32 %v5191, %v5208
  %v5210 = vadd.f32 %v5209, 0.4994258
  %v5211 = vmul.f32 %v5191, %v5210
  %v5212 = vadd.f32 %v5211, 1.0
  %v5213 = vrcp.pop %v5212
  %v5214 = vmul.f32 %v5212, %v5213
  %v5215 = vsub.f32 1.0, %v5214
  %v5216 = vmul.f32 %v5213, %v5215
  %v5217 = vadd.f32 %v5213, %v5216
  %vm5218 = vweird.f32 %v5212
  %vm5219 = vweird.f32 %v5213
  %vm5220 = vmor %vm5218, %vm5219
  %v5221 = vsel %vm5220, %v5213, %v5217
  %v5222 = vand.u32 2147483647, %v5212
  %vm5223 = vcmp.eq.f32.partialorder %v5222, 8.507059e+37
  %v5224 = vand.u32 %v5212, 2147483648
  %v5225 = vor.u32 1.1754944e-38, %v5224
  %v5226 = vsel %vm5223, %v5225, %v5221
  %v5227 = vmul.f32 %v5202, %v5226
  %v5228 = vmin.f32 %v5227, 1.0
  %v5229 = vmax.f32 %v5228, -1.0
  %v5230 = vmul.f32 %v4535, %v4535
  %v5231 = vmin.f32 16.0, %v5230
  %v5232 = vmul.f32 %v5231, 2.1237322e-06
  %v5233 = vadd.f32 %v5232, 0.00028619796
  %v5234 = vmul.f32 %v5231, %v5233
  %v5235 = vadd.f32 %v5234, 0.0036580483
  %v5236 = vmul.f32 %v5231, %v5235
  %v5237 = vadd.f32 %v5236, 0.05243302
  %v5238 = vmul.f32 %v5231, %v5237
  %v5239 = vadd.f32 %v5238, 0.18741608
  %v5240 = vmul.f32 %v5231, %v5239
  %v5241 = vadd.f32 %v5240, 1.1283791
  %v5242 = vmul.f32 %v4535, %v5241
  %v5243 = vmul.f32 %v5231, 3.8918573e-05
  %v5244 = vadd.f32 %v5243, 0.001143296
  %v5245 = vmul.f32 %v5231, %v5244
  %v5246 = vadd.f32 %v5245, 0.014752088
  %v5247 = vmul.f32 %v5231, %v5246
  %v5248 = vadd.f32 %v5247, 0.112945676
  %v5249 = vmul.f32 %v5231, %v5248
  %v5250 = vadd.f32 %v5249, 0.4994258
  %v5251 = vmul.f32 %v5231, %v5250
  %v5252 = vadd.f32 %v5251, 1.0
  %v5253 = vrcp.pop %v5252
  %v5254 = vmul.f32 %v5252, %v5253
  %v5255 = vsub.f32 1.0, %v5254
  %v5256 = vmul.f32 %v5253, %v5255
  %v5257 = vadd.f32 %v5253, %v5256
  %vm5258 = vweird.f32 %v5252
  %vm5259 = vweird.f32 %v5253
  %vm5260 = vmor %vm5258, %vm5259
  %v5261 = vsel %vm5260, %v5253, %v5257
  %v5262 = vand.u32 2147483647, %v5252
  %vm5263 = vcmp.eq.f32.partialorder %v5262, 8.507059e+37
  %v5264 = vand.u32 %v5252, 2147483648
  %v5265 = vor.u32 1.1754944e-38, %v5264
  %v5266 = vsel %vm5263, %v5265, %v5261
  %v5267 = vmul.f32 %v5242, %v5266
  %v5268 = vmin.f32 %v5267, 1.0
  %v5269 = vmax.f32 %v5268, -1.0
  %v5270 = vmul.f32 %v4536, %v4536
  %v5271 = vmin.f32 16.0, %v5270
  %v5272 = vmul.f32 %v5271, 2.1237322e-06
  %v5273 = vadd.f32 %v5272, 0.00028619796
  %v5274 = vmul.f32 %v5271, %v5273
  %v5275 = vadd.f32 %v5274, 0.0036580483
  %v5276 = vmul.f32 %v5271, %v5275
  %v5277 = vadd.f32 %v5276, 0.05243302
  %v5278 = vmul.f32 %v5271, %v5277
  %v5279 = vadd.f32 %v5278, 0.18741608
  %v5280 = vmul.f32 %v5271, %v5279
  %v5281 = vadd.f32 %v5280, 1.1283791
  %v5282 = vmul.f32 %v4536, %v5281
  %v5283 = vmul.f32 %v5271, 3.8918573e-05
  %v5284 = vadd.f32 %v5283, 0.001143296
  %v5285 = vmul.f32 %v5271, %v5284
  %v5286 = vadd.f32 %v5285, 0.014752088
  %v5287 = vmul.f32 %v5271, %v5286
  %v5288 = vadd.f32 %v5287, 0.112945676
  %v5289 = vmul.f32 %v5271, %v5288
  %v5290 = vadd.f32 %v5289, 0.4994258
  %v5291 = vmul.f32 %v5271, %v5290
  %v5292 = vadd.f32 %v5291, 1.0
  %v5293 = vrcp.pop %v5292
  %v5294 = vmul.f32 %v5292, %v5293
  %v5295 = vsub.f32 1.0, %v5294
  %v5296 = vmul.f32 %v5293, %v5295
  %v5297 = vadd.f32 %v5293, %v5296
  %vm5298 = vweird.f32 %v5292
  %vm5299 = vweird.f32 %v5293
  %vm5300 = vmor %vm5298, %vm5299
  %v5301 = vsel %vm5300, %v5293, %v5297
  %v5302 = vand.u32 2147483647, %v5292
  %vm5303 = vcmp.eq.f32.partialorder %v5302, 8.507059e+37
  %v5304 = vand.u32 %v5292, 2147483648
  %v5305 = vor.u32 1.1754944e-38, %v5304
  %v5306 = vsel %vm5303, %v5305, %v5301
  %v5307 = vmul.f32 %v5282, %v5306
  %v5308 = vmin.f32 %v5307, 1.0
  %v5309 = vmax.f32 %v5308, -1.0
  %v5310 = vmul.f32 %v4537, %v4537
  %v5311 = vmin.f32 16.0, %v5310
  %v5312 = vmul.f32 %v5311, 2.1237322e-06
  %v5313 = vadd.f32 %v5312, 0.00028619796
  %v5314 = vmul.f32 %v5311, %v5313
  %v5315 = vadd.f32 %v5314, 0.0036580483
  %v5316 = vmul.f32 %v5311, %v5315
  %v5317 = vadd.f32 %v5316, 0.05243302
  %v5318 = vmul.f32 %v5311, %v5317
  %v5319 = vadd.f32 %v5318, 0.18741608
  %v5320 = vmul.f32 %v5311, %v5319
  %v5321 = vadd.f32 %v5320, 1.1283791
  %v5322 = vmul.f32 %v4537, %v5321
  %v5323 = vmul.f32 %v5311, 3.8918573e-05
  %v5324 = vadd.f32 %v5323, 0.001143296
  %v5325 = vmul.f32 %v5311, %v5324
  %v5326 = vadd.f32 %v5325, 0.014752088
  %v5327 = vmul.f32 %v5311, %v5326
  %v5328 = vadd.f32 %v5327, 0.112945676
  %v5329 = vmul.f32 %v5311, %v5328
  %v5330 = vadd.f32 %v5329, 0.4994258
  %v5331 = vmul.f32 %v5311, %v5330
  %v5332 = vadd.f32 %v5331, 1.0
  %v5333 = vrcp.pop %v5332
  %v5334 = vmul.f32 %v5332, %v5333
  %v5335 = vsub.f32 1.0, %v5334
  %v5336 = vmul.f32 %v5333, %v5335
  %v5337 = vadd.f32 %v5333, %v5336
  %vm5338 = vweird.f32 %v5332
  %vm5339 = vweird.f32 %v5333
  %vm5340 = vmor %vm5338, %vm5339
  %v5341 = vsel %vm5340, %v5333, %v5337
  %v5342 = vand.u32 2147483647, %v5332
  %vm5343 = vcmp.eq.f32.partialorder %v5342, 8.507059e+37
  %v5344 = vand.u32 %v5332, 2147483648
  %v5345 = vor.u32 1.1754944e-38, %v5344
  %v5346 = vsel %vm5343, %v5345, %v5341
  %v5347 = vmul.f32 %v5322, %v5346
  %v5348 = vmin.f32 %v5347, 1.0
  %v5349 = vmax.f32 %v5348, -1.0
  %v5350 = vmul.f32 %v4538, %v4538
  %v5351 = vmin.f32 16.0, %v5350
  %v5352 = vmul.f32 %v5351, 2.1237322e-06
  %v5353 = vadd.f32 %v5352, 0.00028619796
  %v5354 = vmul.f32 %v5351, %v5353
  %v5355 = vadd.f32 %v5354, 0.0036580483
  %v5356 = vmul.f32 %v5351, %v5355
  %v5357 = vadd.f32 %v5356, 0.05243302
  %v5358 = vmul.f32 %v5351, %v5357
  %v5359 = vadd.f32 %v5358, 0.18741608
  %v5360 = vmul.f32 %v5351, %v5359
  %v5361 = vadd.f32 %v5360, 1.1283791
  %v5362 = vmul.f32 %v4538, %v5361
  %v5363 = vmul.f32 %v5351, 3.8918573e-05
  %v5364 = vadd.f32 %v5363, 0.001143296
  %v5365 = vmul.f32 %v5351, %v5364
  %v5366 = vadd.f32 %v5365, 0.014752088
  %v5367 = vmul.f32 %v5351, %v5366
  %v5368 = vadd.f32 %v5367, 0.112945676
  %v5369 = vmul.f32 %v5351, %v5368
  %v5370 = vadd.f32 %v5369, 0.4994258
  %v5371 = vmul.f32 %v5351, %v5370
  %v5372 = vadd.f32 %v5371, 1.0
  %v5373 = vrcp.pop %v5372
  %v5374 = vmul.f32 %v5372, %v5373
  %v5375 = vsub.f32 1.0, %v5374
  %v5376 = vmul.f32 %v5373, %v5375
  %v5377 = vadd.f32 %v5373, %v5376
  %vm5378 = vweird.f32 %v5372
  %vm5379 = vweird.f32 %v5373
  %vm5380 = vmor %vm5378, %vm5379
  %v5381 = vsel %vm5380, %v5373, %v5377
  %v5382 = vand.u32 2147483647, %v5372
  %vm5383 = vcmp.eq.f32.partialorder %v5382, 8.507059e+37
  %v5384 = vand.u32 %v5372, 2147483648
  %v5385 = vor.u32 1.1754944e-38, %v5384
  %v5386 = vsel %vm5383, %v5385, %v5381
  %v5387 = vmul.f32 %v5362, %v5386
  %v5388 = vmin.f32 %v5387, 1.0
  %v5389 = vmax.f32 %v5388, -1.0
  %v5390 = vmul.f32 %v4539, %v4539
  %v5391 = vmin.f32 16.0, %v5390
  %v5392 = vmul.f32 %v5391, 2.1237322e-06
  %v5393 = vadd.f32 %v5392, 0.00028619796
  %v5394 = vmul.f32 %v5391, %v5393
  %v5395 = vadd.f32 %v5394, 0.0036580483
  %v5396 = vmul.f32 %v5391, %v5395
  %v5397 = vadd.f32 %v5396, 0.05243302
  %v5398 = vmul.f32 %v5391, %v5397
  %v5399 = vadd.f32 %v5398, 0.18741608
  %v5400 = vmul.f32 %v5391, %v5399
  %v5401 = vadd.f32 %v5400, 1.1283791
  %v5402 = vmul.f32 %v4539, %v5401
  %v5403 = vmul.f32 %v5391, 3.8918573e-05
  %v5404 = vadd.f32 %v5403, 0.001143296
  %v5405 = vmul.f32 %v5391, %v5404
  %v5406 = vadd.f32 %v5405, 0.014752088
  %v5407 = vmul.f32 %v5391, %v5406
  %v5408 = vadd.f32 %v5407, 0.112945676
  %v5409 = vmul.f32 %v5391, %v5408
  %v5410 = vadd.f32 %v5409, 0.4994258
  %v5411 = vmul.f32 %v5391, %v5410
  %v5412 = vadd.f32 %v5411, 1.0
  %v5413 = vrcp.pop %v5412
  %v5414 = vmul.f32 %v5412, %v5413
  %v5415 = vsub.f32 1.0, %v5414
  %v5416 = vmul.f32 %v5413, %v5415
  %v5417 = vadd.f32 %v5413, %v5416
  %vm5418 = vweird.f32 %v5412
  %vm5419 = vweird.f32 %v5413
  %vm5420 = vmor %vm5418, %vm5419
  %v5421 = vsel %vm5420, %v5413, %v5417
  %v5422 = vand.u32 2147483647, %v5412
  %vm5423 = vcmp.eq.f32.partialorder %v5422, 8.507059e+37
  %v5424 = vand.u32 %v5412, 2147483648
  %v5425 = vor.u32 1.1754944e-38, %v5424
  %v5426 = vsel %vm5423, %v5425, %v5421
  %v5427 = vmul.f32 %v5402, %v5426
  %v5428 = vmin.f32 %v5427, 1.0
  %v5429 = vmax.f32 %v5428, -1.0
  %v5430 = vmul.f32 %v4540, %v4540
  %v5431 = vmin.f32 16.0, %v5430
  %v5432 = vmul.f32 %v5431, 2.1237322e-06
  %v5433 = vadd.f32 %v5432, 0.00028619796
  %v5434 = vmul.f32 %v5431, %v5433
  %v5435 = vadd.f32 %v5434, 0.0036580483
  %v5436 = vmul.f32 %v5431, %v5435
  %v5437 = vadd.f32 %v5436, 0.05243302
  %v5438 = vmul.f32 %v5431, %v5437
  %v5439 = vadd.f32 %v5438, 0.18741608
  %v5440 = vmul.f32 %v5431, %v5439
  %v5441 = vadd.f32 %v5440, 1.1283791
  %v5442 = vmul.f32 %v4540, %v5441
  %v5443 = vmul.f32 %v5431, 3.8918573e-05
  %v5444 = vadd.f32 %v5443, 0.001143296
  %v5445 = vmul.f32 %v5431, %v5444
  %v5446 = vadd.f32 %v5445, 0.014752088
  %v5447 = vmul.f32 %v5431, %v5446
  %v5448 = vadd.f32 %v5447, 0.112945676
  %v5449 = vmul.f32 %v5431, %v5448
  %v5450 = vadd.f32 %v5449, 0.4994258
  %v5451 = vmul.f32 %v5431, %v5450
  %v5452 = vadd.f32 %v5451, 1.0
  %v5453 = vrcp.pop %v5452
  %v5454 = vmul.f32 %v5452, %v5453
  %v5455 = vsub.f32 1.0, %v5454
  %v5456 = vmul.f32 %v5453, %v5455
  %v5457 = vadd.f32 %v5453, %v5456
  %vm5458 = vweird.f32 %v5452
  %vm5459 = vweird.f32 %v5453
  %vm5460 = vmor %vm5458, %vm5459
  %v5461 = vsel %vm5460, %v5453, %v5457
  %v5462 = vand.u32 2147483647, %v5452
  %vm5463 = vcmp.eq.f32.partialorder %v5462, 8.507059e+37
  %v5464 = vand.u32 %v5452, 2147483648
  %v5465 = vor.u32 1.1754944e-38, %v5464
  %v5466 = vsel %vm5463, %v5465, %v5461
  %v5467 = vmul.f32 %v5442, %v5466
  %v5468 = vmin.f32 %v5467, 1.0
  %v5469 = vmax.f32 %v5468, -1.0
  %v5470 = vmul.f32 %v4541, %v4541
  %v5471 = vmin.f32 16.0, %v5470
  %v5472 = vmul.f32 %v5471, 2.1237322e-06
  %v5473 = vadd.f32 %v5472, 0.00028619796
  %v5474 = vmul.f32 %v5471, %v5473
  %v5475 = vadd.f32 %v5474, 0.0036580483
  %v5476 = vmul.f32 %v5471, %v5475
  %v5477 = vadd.f32 %v5476, 0.05243302
  %v5478 = vmul.f32 %v5471, %v5477
  %v5479 = vadd.f32 %v5478, 0.18741608
  %v5480 = vmul.f32 %v5471, %v5479
  %v5481 = vadd.f32 %v5480, 1.1283791
  %v5482 = vmul.f32 %v4541, %v5481
  %v5483 = vmul.f32 %v5471, 3.8918573e-05
  %v5484 = vadd.f32 %v5483, 0.001143296
  %v5485 = vmul.f32 %v5471, %v5484
  %v5486 = vadd.f32 %v5485, 0.014752088
  %v5487 = vmul.f32 %v5471, %v5486
  %v5488 = vadd.f32 %v5487, 0.112945676
  %v5489 = vmul.f32 %v5471, %v5488
  %v5490 = vadd.f32 %v5489, 0.4994258
  %v5491 = vmul.f32 %v5471, %v5490
  %v5492 = vadd.f32 %v5491, 1.0
  %v5493 = vrcp.pop %v5492
  %v5494 = vmul.f32 %v5492, %v5493
  %v5495 = vsub.f32 1.0, %v5494
  %v5496 = vmul.f32 %v5493, %v5495
  %v5497 = vadd.f32 %v5493, %v5496
  %vm5498 = vweird.f32 %v5492
  %vm5499 = vweird.f32 %v5493
  %vm5500 = vmor %vm5498, %vm5499
  %v5501 = vsel %vm5500, %v5493, %v5497
  %v5502 = vand.u32 2147483647, %v5492
  %vm5503 = vcmp.eq.f32.partialorder %v5502, 8.507059e+37
  %v5504 = vand.u32 %v5492, 2147483648
  %v5505 = vor.u32 1.1754944e-38, %v5504
  %v5506 = vsel %vm5503, %v5505, %v5501
  %v5507 = vmul.f32 %v5482, %v5506
  %v5508 = vmin.f32 %v5507, 1.0
  %v5509 = vmax.f32 %v5508, -1.0
  %v5510 = vmul.f32 %v4542, %v4542
  %v5511 = vmin.f32 16.0, %v5510
  %v5512 = vmul.f32 %v5511, 2.1237322e-06
  %v5513 = vadd.f32 %v5512, 0.00028619796
  %v5514 = vmul.f32 %v5511, %v5513
  %v5515 = vadd.f32 %v5514, 0.0036580483
  %v5516 = vmul.f32 %v5511, %v5515
  %v5517 = vadd.f32 %v5516, 0.05243302
  %v5518 = vmul.f32 %v5511, %v5517
  %v5519 = vadd.f32 %v5518, 0.18741608
  %v5520 = vmul.f32 %v5511, %v5519
  %v5521 = vadd.f32 %v5520, 1.1283791
  %v5522 = vmul.f32 %v4542, %v5521
  %v5523 = vmul.f32 %v5511, 3.8918573e-05
  %v5524 = vadd.f32 %v5523, 0.001143296
  %v5525 = vmul.f32 %v5511, %v5524
  %v5526 = vadd.f32 %v5525, 0.014752088
  %v5527 = vmul.f32 %v5511, %v5526
  %v5528 = vadd.f32 %v5527, 0.112945676
  %v5529 = vmul.f32 %v5511, %v5528
  %v5530 = vadd.f32 %v5529, 0.4994258
  %v5531 = vmul.f32 %v5511, %v5530
  %v5532 = vadd.f32 %v5531, 1.0
  %v5533 = vrcp.pop %v5532
  %v5534 = vmul.f32 %v5532, %v5533
  %v5535 = vsub.f32 1.0, %v5534
  %v5536 = vmul.f32 %v5533, %v5535
  %v5537 = vadd.f32 %v5533, %v5536
  %vm5538 = vweird.f32 %v5532
  %vm5539 = vweird.f32 %v5533
  %vm5540 = vmor %vm5538, %vm5539
  %v5541 = vsel %vm5540, %v5533, %v5537
  %v5542 = vand.u32 2147483647, %v5532
  %vm5543 = vcmp.eq.f32.partialorder %v5542, 8.507059e+37
  %v5544 = vand.u32 %v5532, 2147483648
  %v5545 = vor.u32 1.1754944e-38, %v5544
  %v5546 = vsel %vm5543, %v5545, %v5541
  %v5547 = vmul.f32 %v5522, %v5546
  %v5548 = vmin.f32 %v5547, 1.0
  %v5549 = vmax.f32 %v5548, -1.0
  %v5550 = vmul.f32 %v4543, %v4543
  %v5551 = vmin.f32 16.0, %v5550
  %v5552 = vmul.f32 %v5551, 2.1237322e-06
  %v5553 = vadd.f32 %v5552, 0.00028619796
  %v5554 = vmul.f32 %v5551, %v5553
  %v5555 = vadd.f32 %v5554, 0.0036580483
  %v5556 = vmul.f32 %v5551, %v5555
  %v5557 = vadd.f32 %v5556, 0.05243302
  %v5558 = vmul.f32 %v5551, %v5557
  %v5559 = vadd.f32 %v5558, 0.18741608
  %v5560 = vmul.f32 %v5551, %v5559
  %v5561 = vadd.f32 %v5560, 1.1283791
  %v5562 = vmul.f32 %v4543, %v5561
  %v5563 = vmul.f32 %v5551, 3.8918573e-05
  %v5564 = vadd.f32 %v5563, 0.001143296
  %v5565 = vmul.f32 %v5551, %v5564
  %v5566 = vadd.f32 %v5565, 0.014752088
  %v5567 = vmul.f32 %v5551, %v5566
  %v5568 = vadd.f32 %v5567, 0.112945676
  %v5569 = vmul.f32 %v5551, %v5568
  %v5570 = vadd.f32 %v5569, 0.4994258
  %v5571 = vmul.f32 %v5551, %v5570
  %v5572 = vadd.f32 %v5571, 1.0
  %v5573 = vrcp.pop %v5572
  %v5574 = vmul.f32 %v5572, %v5573
  %v5575 = vsub.f32 1.0, %v5574
  %v5576 = vmul.f32 %v5573, %v5575
  %v5577 = vadd.f32 %v5573, %v5576
  %vm5578 = vweird.f32 %v5572
  %vm5579 = vweird.f32 %v5573
  %vm5580 = vmor %vm5578, %vm5579
  %v5581 = vsel %vm5580, %v5573, %v5577
  %v5582 = vand.u32 2147483647, %v5572
  %vm5583 = vcmp.eq.f32.partialorder %v5582, 8.507059e+37
  %v5584 = vand.u32 %v5572, 2147483648
  %v5585 = vor.u32 1.1754944e-38, %v5584
  %v5586 = vsel %vm5583, %v5585, %v5581
  %v5587 = vmul.f32 %v5562, %v5586
  %v5588 = vmin.f32 %v5587, 1.0
  %v5589 = vmax.f32 %v5588, -1.0
  %v5590 = vmul.f32 %v4544, %v4544
  %v5591 = vmin.f32 16.0, %v5590
  %v5592 = vmul.f32 %v5591, 2.1237322e-06
  %v5593 = vadd.f32 %v5592, 0.00028619796
  %v5594 = vmul.f32 %v5591, %v5593
  %v5595 = vadd.f32 %v5594, 0.0036580483
  %v5596 = vmul.f32 %v5591, %v5595
  %v5597 = vadd.f32 %v5596, 0.05243302
  %v5598 = vmul.f32 %v5591, %v5597
  %v5599 = vadd.f32 %v5598, 0.18741608
  %v5600 = vmul.f32 %v5591, %v5599
  %v5601 = vadd.f32 %v5600, 1.1283791
  %v5602 = vmul.f32 %v4544, %v5601
  %v5603 = vmul.f32 %v5591, 3.8918573e-05
  %v5604 = vadd.f32 %v5603, 0.001143296
  %v5605 = vmul.f32 %v5591, %v5604
  %v5606 = vadd.f32 %v5605, 0.014752088
  %v5607 = vmul.f32 %v5591, %v5606
  %v5608 = vadd.f32 %v5607, 0.112945676
  %v5609 = vmul.f32 %v5591, %v5608
  %v5610 = vadd.f32 %v5609, 0.4994258
  %v5611 = vmul.f32 %v5591, %v5610
  %v5612 = vadd.f32 %v5611, 1.0
  %v5613 = vrcp.pop %v5612
  %v5614 = vmul.f32 %v5612, %v5613
  %v5615 = vsub.f32 1.0, %v5614
  %v5616 = vmul.f32 %v5613, %v5615
  %v5617 = vadd.f32 %v5613, %v5616
  %vm5618 = vweird.f32 %v5612
  %vm5619 = vweird.f32 %v5613
  %vm5620 = vmor %vm5618, %vm5619
  %v5621 = vsel %vm5620, %v5613, %v5617
  %v5622 = vand.u32 2147483647, %v5612
  %vm5623 = vcmp.eq.f32.partialorder %v5622, 8.507059e+37
  %v5624 = vand.u32 %v5612, 2147483648
  %v5625 = vor.u32 1.1754944e-38, %v5624
  %v5626 = vsel %vm5623, %v5625, %v5621
  %v5627 = vmul.f32 %v5602, %v5626
  %v5628 = vmin.f32 %v5627, 1.0
  %v5629 = vmax.f32 %v5628, -1.0
  %v5630 = vmul.f32 %v4545, %v4545
  %v5631 = vmin.f32 16.0, %v5630
  %v5632 = vmul.f32 %v5631, 2.1237322e-06
  %v5633 = vadd.f32 %v5632, 0.00028619796
  %v5634 = vmul.f32 %v5631, %v5633
  %v5635 = vadd.f32 %v5634, 0.0036580483
  %v5636 = vmul.f32 %v5631, %v5635
  %v5637 = vadd.f32 %v5636, 0.05243302
  %v5638 = vmul.f32 %v5631, %v5637
  %v5639 = vadd.f32 %v5638, 0.18741608
  %v5640 = vmul.f32 %v5631, %v5639
  %v5641 = vadd.f32 %v5640, 1.1283791
  %v5642 = vmul.f32 %v4545, %v5641
  %v5643 = vmul.f32 %v5631, 3.8918573e-05
  %v5644 = vadd.f32 %v5643, 0.001143296
  %v5645 = vmul.f32 %v5631, %v5644
  %v5646 = vadd.f32 %v5645, 0.014752088
  %v5647 = vmul.f32 %v5631, %v5646
  %v5648 = vadd.f32 %v5647, 0.112945676
  %v5649 = vmul.f32 %v5631, %v5648
  %v5650 = vadd.f32 %v5649, 0.4994258
  %v5651 = vmul.f32 %v5631, %v5650
  %v5652 = vadd.f32 %v5651, 1.0
  %v5653 = vrcp.pop %v5652
  %v5654 = vmul.f32 %v5652, %v5653
  %v5655 = vsub.f32 1.0, %v5654
  %v5656 = vmul.f32 %v5653, %v5655
  %v5657 = vadd.f32 %v5653, %v5656
  %vm5658 = vweird.f32 %v5652
  %vm5659 = vweird.f32 %v5653
  %vm5660 = vmor %vm5658, %vm5659
  %v5661 = vsel %vm5660, %v5653, %v5657
  %v5662 = vand.u32 2147483647, %v5652
  %vm5663 = vcmp.eq.f32.partialorder %v5662, 8.507059e+37
  %v5664 = vand.u32 %v5652, 2147483648
  %v5665 = vor.u32 1.1754944e-38, %v5664
  %v5666 = vsel %vm5663, %v5665, %v5661
  %v5667 = vmul.f32 %v5642, %v5666
  %v5668 = vmin.f32 %v5667, 1.0
  %v5669 = vmax.f32 %v5668, -1.0
  %v5670 = vmul.f32 %v4546, %v4546
  %v5671 = vmin.f32 16.0, %v5670
  %v5672 = vmul.f32 %v5671, 2.1237322e-06
  %v5673 = vadd.f32 %v5672, 0.00028619796
  %v5674 = vmul.f32 %v5671, %v5673
  %v5675 = vadd.f32 %v5674, 0.0036580483
  %v5676 = vmul.f32 %v5671, %v5675
  %v5677 = vadd.f32 %v5676, 0.05243302
  %v5678 = vmul.f32 %v5671, %v5677
  %v5679 = vadd.f32 %v5678, 0.18741608
  %v5680 = vmul.f32 %v5671, %v5679
  %v5681 = vadd.f32 %v5680, 1.1283791
  %v5682 = vmul.f32 %v4546, %v5681
  %v5683 = vmul.f32 %v5671, 3.8918573e-05
  %v5684 = vadd.f32 %v5683, 0.001143296
  %v5685 = vmul.f32 %v5671, %v5684
  %v5686 = vadd.f32 %v5685, 0.014752088
  %v5687 = vmul.f32 %v5671, %v5686
  %v5688 = vadd.f32 %v5687, 0.112945676
  %v5689 = vmul.f32 %v5671, %v5688
  %v5690 = vadd.f32 %v5689, 0.4994258
  %v5691 = vmul.f32 %v5671, %v5690
  %v5692 = vadd.f32 %v5691, 1.0
  %v5693 = vrcp.pop %v5692
  %v5694 = vmul.f32 %v5692, %v5693
  %v5695 = vsub.f32 1.0, %v5694
  %v5696 = vmul.f32 %v5693, %v5695
  %v5697 = vadd.f32 %v5693, %v5696
  %vm5698 = vweird.f32 %v5692
  %vm5699 = vweird.f32 %v5693
  %vm5700 = vmor %vm5698, %vm5699
  %v5701 = vsel %vm5700, %v5693, %v5697
  %v5702 = vand.u32 2147483647, %v5692
  %vm5703 = vcmp.eq.f32.partialorder %v5702, 8.507059e+37
  %v5704 = vand.u32 %v5692, 2147483648
  %v5705 = vor.u32 1.1754944e-38, %v5704
  %v5706 = vsel %vm5703, %v5705, %v5701
  %v5707 = vmul.f32 %v5682, %v5706
  %v5708 = vmin.f32 %v5707, 1.0
  %v5709 = vmax.f32 %v5708, -1.0
  %v5710 = vmul.f32 %v4547, %v4547
  %v5711 = vmin.f32 16.0, %v5710
  %v5712 = vmul.f32 %v5711, 2.1237322e-06
  %v5713 = vadd.f32 %v5712, 0.00028619796
  %v5714 = vmul.f32 %v5711, %v5713
  %v5715 = vadd.f32 %v5714, 0.0036580483
  %v5716 = vmul.f32 %v5711, %v5715
  %v5717 = vadd.f32 %v5716, 0.05243302
  %v5718 = vmul.f32 %v5711, %v5717
  %v5719 = vadd.f32 %v5718, 0.18741608
  %v5720 = vmul.f32 %v5711, %v5719
  %v5721 = vadd.f32 %v5720, 1.1283791
  %v5722 = vmul.f32 %v4547, %v5721
  %v5723 = vmul.f32 %v5711, 3.8918573e-05
  %v5724 = vadd.f32 %v5723, 0.001143296
  %v5725 = vmul.f32 %v5711, %v5724
  %v5726 = vadd.f32 %v5725, 0.014752088
  %v5727 = vmul.f32 %v5711, %v5726
  %v5728 = vadd.f32 %v5727, 0.112945676
  %v5729 = vmul.f32 %v5711, %v5728
  %v5730 = vadd.f32 %v5729, 0.4994258
  %v5731 = vmul.f32 %v5711, %v5730
  %v5732 = vadd.f32 %v5731, 1.0
  %v5733 = vrcp.pop %v5732
  %v5734 = vmul.f32 %v5732, %v5733
  %v5735 = vsub.f32 1.0, %v5734
  %v5736 = vmul.f32 %v5733, %v5735
  %v5737 = vadd.f32 %v5733, %v5736
  %vm5738 = vweird.f32 %v5732
  %vm5739 = vweird.f32 %v5733
  %vm5740 = vmor %vm5738, %vm5739
  %v5741 = vsel %vm5740, %v5733, %v5737
  %v5742 = vand.u32 2147483647, %v5732
  %vm5743 = vcmp.eq.f32.partialorder %v5742, 8.507059e+37
  %v5744 = vand.u32 %v5732, 2147483648
  %v5745 = vor.u32 1.1754944e-38, %v5744
  %v5746 = vsel %vm5743, %v5745, %v5741
  %v5747 = vmul.f32 %v5722, %v5746
  %v5748 = vmin.f32 %v5747, 1.0
  %v5749 = vmax.f32 %v5748, -1.0
  %v5750 = vmul.f32 %v4548, %v4548
  %v5751 = vmin.f32 16.0, %v5750
  %v5752 = vmul.f32 %v5751, 2.1237322e-06
  %v5753 = vadd.f32 %v5752, 0.00028619796
  %v5754 = vmul.f32 %v5751, %v5753
  %v5755 = vadd.f32 %v5754, 0.0036580483
  %v5756 = vmul.f32 %v5751, %v5755
  %v5757 = vadd.f32 %v5756, 0.05243302
  %v5758 = vmul.f32 %v5751, %v5757
  %v5759 = vadd.f32 %v5758, 0.18741608
  %v5760 = vmul.f32 %v5751, %v5759
  %v5761 = vadd.f32 %v5760, 1.1283791
  %v5762 = vmul.f32 %v4548, %v5761
  %v5763 = vmul.f32 %v5751, 3.8918573e-05
  %v5764 = vadd.f32 %v5763, 0.001143296
  %v5765 = vmul.f32 %v5751, %v5764
  %v5766 = vadd.f32 %v5765, 0.014752088
  %v5767 = vmul.f32 %v5751, %v5766
  %v5768 = vadd.f32 %v5767, 0.112945676
  %v5769 = vmul.f32 %v5751, %v5768
  %v5770 = vadd.f32 %v5769, 0.4994258
  %v5771 = vmul.f32 %v5751, %v5770
  %v5772 = vadd.f32 %v5771, 1.0
  %v5773 = vrcp.pop %v5772
  %v5774 = vmul.f32 %v5772, %v5773
  %v5775 = vsub.f32 1.0, %v5774
  %v5776 = vmul.f32 %v5773, %v5775
  %v5777 = vadd.f32 %v5773, %v5776
  %vm5778 = vweird.f32 %v5772
  %vm5779 = vweird.f32 %v5773
  %vm5780 = vmor %vm5778, %vm5779
  %v5781 = vsel %vm5780, %v5773, %v5777
  %v5782 = vand.u32 2147483647, %v5772
  %vm5783 = vcmp.eq.f32.partialorder %v5782, 8.507059e+37
  %v5784 = vand.u32 %v5772, 2147483648
  %v5785 = vor.u32 1.1754944e-38, %v5784
  %v5786 = vsel %vm5783, %v5785, %v5781
  %v5787 = vmul.f32 %v5762, %v5786
  %v5788 = vmin.f32 %v5787, 1.0
  %v5789 = vmax.f32 %v5788, -1.0
  %v5790 = vmul.f32 %v4549, %v4549
  %v5791 = vmin.f32 16.0, %v5790
  %v5792 = vmul.f32 %v5791, 2.1237322e-06
  %v5793 = vadd.f32 %v5792, 0.00028619796
  %v5794 = vmul.f32 %v5791, %v5793
  %v5795 = vadd.f32 %v5794, 0.0036580483
  %v5796 = vmul.f32 %v5791, %v5795
  %v5797 = vadd.f32 %v5796, 0.05243302
  %v5798 = vmul.f32 %v5791, %v5797
  %v5799 = vadd.f32 %v5798, 0.18741608
  %v5800 = vmul.f32 %v5791, %v5799
  %v5801 = vadd.f32 %v5800, 1.1283791
  %v5802 = vmul.f32 %v4549, %v5801
  %v5803 = vmul.f32 %v5791, 3.8918573e-05
  %v5804 = vadd.f32 %v5803, 0.001143296
  %v5805 = vmul.f32 %v5791, %v5804
  %v5806 = vadd.f32 %v5805, 0.014752088
  %v5807 = vmul.f32 %v5791, %v5806
  %v5808 = vadd.f32 %v5807, 0.112945676
  %v5809 = vmul.f32 %v5791, %v5808
  %v5810 = vadd.f32 %v5809, 0.4994258
  %v5811 = vmul.f32 %v5791, %v5810
  %v5812 = vadd.f32 %v5811, 1.0
  %v5813 = vrcp.pop %v5812
  %v5814 = vmul.f32 %v5812, %v5813
  %v5815 = vsub.f32 1.0, %v5814
  %v5816 = vmul.f32 %v5813, %v5815
  %v5817 = vadd.f32 %v5813, %v5816
  %vm5818 = vweird.f32 %v5812
  %vm5819 = vweird.f32 %v5813
  %vm5820 = vmor %vm5818, %vm5819
  %v5821 = vsel %vm5820, %v5813, %v5817
  %v5822 = vand.u32 2147483647, %v5812
  %vm5823 = vcmp.eq.f32.partialorder %v5822, 8.507059e+37
  %v5824 = vand.u32 %v5812, 2147483648
  %v5825 = vor.u32 1.1754944e-38, %v5824
  %v5826 = vsel %vm5823, %v5825, %v5821
  %v5827 = vmul.f32 %v5802, %v5826
  %v5828 = vmin.f32 %v5827, 1.0
  %v5829 = vmax.f32 %v5828, -1.0
  %v5830 = vadd.f32 %v4589, 1.0
  %v5831 = vadd.f32 %v4629, 1.0
  %v5832 = vadd.f32 %v4669, 1.0
  %v5833 = vadd.f32 %v4709, 1.0
  %v5834 = vadd.f32 %v4749, 1.0
  %v5835 = vadd.f32 %v4789, 1.0
  %v5836 = vadd.f32 %v4829, 1.0
  %v5837 = vadd.f32 %v4869, 1.0
  %v5838 = vadd.f32 %v4909, 1.0
  %v5839 = vadd.f32 %v4949, 1.0
  %v5840 = vadd.f32 %v4989, 1.0
  %v5841 = vadd.f32 %v5029, 1.0
  %v5842 = vadd.f32 %v5069, 1.0
  %v5843 = vadd.f32 %v5109, 1.0
  %v5844 = vadd.f32 %v5149, 1.0
  %v5845 = vadd.f32 %v5189, 1.0
  %v5846 = vadd.f32 %v5229, 1.0
  %v5847 = vadd.f32 %v5269, 1.0
  %v5848 = vadd.f32 %v5309, 1.0
  %v5849 = vadd.f32 %v5349, 1.0
  %v5850 = vadd.f32 %v5389, 1.0
  %v5851 = vadd.f32 %v5429, 1.0
  %v5852 = vadd.f32 %v5469, 1.0
  %v5853 = vadd.f32 %v5509, 1.0
  %v5854 = vadd.f32 %v5549, 1.0
  %v5855 = vadd.f32 %v5589, 1.0
  %v5856 = vadd.f32 %v5629, 1.0
  %v5857 = vadd.f32 %v5669, 1.0
  %v5858 = vadd.f32 %v5709, 1.0
  %v5859 = vadd.f32 %v5749, 1.0
  %v5860 = vadd.f32 %v5789, 1.0
  %v5861 = vadd.f32 %v5829, 1.0
  %v5862 = vmul.f32 %v4486, %v5830
  %v5863 = vmul.f32 %v4487, %v5831
  %v5864 = vmul.f32 %v4488, %v5832
  %v5865 = vmul.f32 %v4489, %v5833
  %v5866 = vmul.f32 %v4490, %v5834
  %v5867 = vmul.f32 %v4491, %v5835
  %v5868 = vmul.f32 %v4492, %v5836
  %v5869 = vmul.f32 %v4493, %v5837
  %v5870 = vmul.f32 %v4494, %v5838
  %v5871 = vmul.f32 %v4495, %v5839
  %v5872 = vmul.f32 %v4496, %v5840
  %v5873 = vmul.f32 %v4497, %v5841
  %v5874 = vmul.f32 %v4498, %v5842
  %v5875 = vmul.f32 %v4499, %v5843
  %v5876 = vmul.f32 %v4500, %v5844
  %v5877 = vmul.f32 %v4501, %v5845
  %v5878 = vmul.f32 %v4502, %v5846
  %v5879 = vmul.f32 %v4503, %v5847
  %v5880 = vmul.f32 %v4504, %v5848
  %v5881 = vmul.f32 %v4505, %v5849
  %v5882 = vmul.f32 %v4506, %v5850
  %v5883 = vmul.f32 %v4507, %v5851
  %v5884 = vmul.f32 %v4508, %v5852
  %v5885 = vmul.f32 %v4509, %v5853
  %v5886 = vmul.f32 %v4510, %v5854
  %v5887 = vmul.f32 %v4511, %v5855
  %v5888 = vmul.f32 %v4512, %v5856
  %v5889 = vmul.f32 %v4513, %v5857
  %v5890 = vmul.f32 %v4514, %v5858
  %v5891 = vmul.f32 %v4515, %v5859
  %v5892 = vmul.f32 %v4516, %v5860
  %v5893 = vmul.f32 %v4517, %v5861
  %v5894 = vld [vmem:[%s5] sm:$0xff]
  %v5895 = vld [vmem:[%s5 + $0x8] sm:$0xff]
  %v5896 = vld [vmem:[%s5 + $0x10] sm:$0xff]
  %v5897 = vld [vmem:[%s5 + $0x18] sm:$0xff]
  %v5898 = vld [vmem:[%s5 + $0x20] sm:$0xff]
  %v5899 = vld [vmem:[%s5 + $0x28] sm:$0xff]
  %v5900 = vld [vmem:[%s5 + $0x30] sm:$0xff]
  %v5901 = vld [vmem:[%s5 + $0x38] sm:$0xff]
  %v5902 = vld [vmem:[%s5 + $0x40] sm:$0xff]
  %v5903 = vld [vmem:[%s5 + $0x48] sm:$0xff]
  %v5904 = vld [vmem:[%s5 + $0x50] sm:$0xff]
  %v5905 = vld [vmem:[%s5 + $0x58] sm:$0xff]
  %v5906 = vld [vmem:[%s5 + $0x60] sm:$0xff]
  %v5907 = vld [vmem:[%s5 + $0x68] sm:$0xff]
  %v5908 = vld [vmem:[%s5 + $0x70] sm:$0xff]
  %v5909 = vld [vmem:[%s5 + $0x78] sm:$0xff]
  %v5910 = vld [vmem:[%s6] sm:$0xff]
  %v5911 = vld [vmem:[%s6 + $0x8] sm:$0xff]
  %v5912 = vld [vmem:[%s6 + $0x10] sm:$0xff]
  %v5913 = vld [vmem:[%s6 + $0x18] sm:$0xff]
  %v5914 = vld [vmem:[%s6 + $0x20] sm:$0xff]
  %v5915 = vld [vmem:[%s6 + $0x28] sm:$0xff]
  %v5916 = vld [vmem:[%s6 + $0x30] sm:$0xff]
  %v5917 = vld [vmem:[%s6 + $0x38] sm:$0xff]
  %5919 = vset.pattern.permute.xlu0 0
  %5920 = vperm.xlu0 %5919, %v5910
  %v5921 = vpop.permute.xlu0 %5920
  %5924 = vset.pattern.permute.xlu0 0
  %5925 = vperm.xlu0 %5924, %v5911
  %v5926 = vpop.permute.xlu0 %5925
  %5929 = vset.pattern.permute.xlu0 0
  %5930 = vperm.xlu0 %5929, %v5912
  %v5931 = vpop.permute.xlu0 %5930
  %5934 = vset.pattern.permute.xlu0 0
  %5935 = vperm.xlu0 %5934, %v5913
  %v5936 = vpop.permute.xlu0 %5935
  %5939 = vset.pattern.permute.xlu0 0
  %5940 = vperm.xlu0 %5939, %v5914
  %v5941 = vpop.permute.xlu0 %5940
  %5944 = vset.pattern.permute.xlu0 0
  %5945 = vperm.xlu0 %5944, %v5915
  %v5946 = vpop.permute.xlu0 %5945
  %5949 = vset.pattern.permute.xlu0 0
  %5950 = vperm.xlu0 %5949, %v5916
  %v5951 = vpop.permute.xlu0 %5950
  %5954 = vset.pattern.permute.xlu0 0
  %5955 = vperm.xlu0 %5954, %v5917
  %v5956 = vpop.permute.xlu0 %5955
  %5958 = vmatpush.msra.mxu0 %v5877
  %5959 = vmatpush.msra.mxu0 %v5876
  %5960 = vmatpush.msra.mxu0 %v5875
  %5961 = vmatpush.msra.mxu0 %v5874
  %5962 = vmatpush.msra.mxu0 %v5873
  %5963 = vmatpush.msra.mxu0 %v5872
  %5964 = vmatpush.msra.mxu0 %v5871
  %5965 = vmatpush.msra.mxu0 %v5870
  %5966 = vmatpush.msra.mxu0 %v5869
  %5967 = vmatpush.msra.mxu0 %v5868
  %5968 = vmatpush.msra.mxu0 %v5867
  %5969 = vmatpush.msra.mxu0 %v5866
  %5970 = vmatpush.msra.mxu0 %v5865
  %5971 = vmatpush.msra.mxu0 %v5864
  %5972 = vmatpush.msra.mxu0 %v5863
  %5973 = vmatpush.msra.mxu0 %v5862
  %5974 = vmatmul.f32.gmra.mxu0 %v5894
  %v5975 = vpop.f32.mrf.mxu0
  %v5976 = vadd.f32 %v5921, %v5975
  %5977 = vmatmul.f32.gmra.mxu0 %v5896
  %v5978 = vpop.f32.mrf.mxu0
  %v5979 = vadd.f32 %v5926, %v5978
  %5980 = vmatmul.f32.gmra.mxu0 %v5898
  %v5981 = vpop.f32.mrf.mxu0
  %v5982 = vadd.f32 %v5931, %v5981
  %5983 = vmatmul.f32.gmra.mxu0 %v5900
  %v5984 = vpop.f32.mrf.mxu0
  %v5985 = vadd.f32 %v5936, %v5984
  %5986 = vmatmul.f32.gmra.mxu0 %v5902
  %v5987 = vpop.f32.mrf.mxu0
  %v5988 = vadd.f32 %v5941, %v5987
  %5989 = vmatmul.f32.gmra.mxu0 %v5904
  %v5990 = vpop.f32.mrf.mxu0
  %v5991 = vadd.f32 %v5946, %v5990
  %5992 = vmatmul.f32.gmra.mxu0 %v5906
  %v5993 = vpop.f32.mrf.mxu0
  %v5994 = vadd.f32 %v5951, %v5993
  %5995 = vmatmul.f32.gmra.mxu0 %v5908
  %v5996 = vpop.f32.mrf.mxu0
  %v5997 = vadd.f32 %v5956, %v5996
  %5998 = vdwg.mxu0
  %5999 = vmatpush.msra.mxu0 %v5893
  %6000 = vmatpush.msra.mxu0 %v5892
  %6001 = vmatpush.msra.mxu0 %v5891
  %6002 = vmatpush.msra.mxu0 %v5890
  %6003 = vmatpush.msra.mxu0 %v5889
  %6004 = vmatpush.msra.mxu0 %v5888
  %6005 = vmatpush.msra.mxu0 %v5887
  %6006 = vmatpush.msra.mxu0 %v5886
  %6007 = vmatpush.msra.mxu0 %v5885
  %6008 = vmatpush.msra.mxu0 %v5884
  %6009 = vmatpush.msra.mxu0 %v5883
  %6010 = vmatpush.msra.mxu0 %v5882
  %6011 = vmatpush.msra.mxu0 %v5881
  %6012 = vmatpush.msra.mxu0 %v5880
  %6013 = vmatpush.msra.mxu0 %v5879
  %6014 = vmatpush.msra.mxu0 %v5878
  %6015 = vmatmul.f32.gmra.mxu0 %v5895
  %v6016 = vpop.f32.mrf.mxu0
  %v6017 = vadd.f32 %v5976, %v6016
  %6018 = vmatmul.f32.gmra.mxu0 %v5897
  %v6019 = vpop.f32.mrf.mxu0
  %v6020 = vadd.f32 %v5979, %v6019
  %6021 = vmatmul.f32.gmra.mxu0 %v5899
  %v6022 = vpop.f32.mrf.mxu0
  %v6023 = vadd.f32 %v5982, %v6022
  %6024 = vmatmul.f32.gmra.mxu0 %v5901
  %v6025 = vpop.f32.mrf.mxu0
  %v6026 = vadd.f32 %v5985, %v6025
  %6027 = vmatmul.f32.gmra.mxu0 %v5903
  %v6028 = vpop.f32.mrf.mxu0
  %v6029 = vadd.f32 %v5988, %v6028
  %6030 = vmatmul.f32.gmra.mxu0 %v5905
  %v6031 = vpop.f32.mrf.mxu0
  %v6032 = vadd.f32 %v5991, %v6031
  %6033 = vmatmul.f32.gmra.mxu0 %v5907
  %v6034 = vpop.f32.mrf.mxu0
  %v6035 = vadd.f32 %v5994, %v6034
  %6036 = vmatmul.f32.gmra.mxu0 %v5909
  %v6037 = vpop.f32.mrf.mxu0
  %v6038 = vadd.f32 %v5997, %v6037
  %6039 = vdwg.mxu0
  %v6040 = vmul.f32 %v6017, 0.5
  %v6041 = vmul.f32 %v6020, 0.5
  %v6042 = vmul.f32 %v6023, 0.5
  %v6043 = vmul.f32 %v6026, 0.5
  %v6044 = vmul.f32 %v6029, 0.5
  %v6045 = vmul.f32 %v6032, 0.5
  %v6046 = vmul.f32 %v6035, 0.5
  %v6047 = vmul.f32 %v6038, 0.5
  %v6048 = vmul.f32 %v6017, 0.70710677
  %v6049 = vmul.f32 %v6020, 0.70710677
  %v6050 = vmul.f32 %v6023, 0.70710677
  %v6051 = vmul.f32 %v6026, 0.70710677
  %v6052 = vmul.f32 %v6029, 0.70710677
  %v6053 = vmul.f32 %v6032, 0.70710677
  %v6054 = vmul.f32 %v6035, 0.70710677
  %v6055 = vmul.f32 %v6038, 0.70710677
  %v6056 = vmul.f32 %v6048, %v6048
  %v6057 = vmin.f32 16.0, %v6056
  %v6058 = vmul.f32 %v6057, 2.1237322e-06
  %v6059 = vadd.f32 %v6058, 0.00028619796
  %v6060 = vmul.f32 %v6057, %v6059
  %v6061 = vadd.f32 %v6060, 0.0036580483
  %v6062 = vmul.f32 %v6057, %v6061
  %v6063 = vadd.f32 %v6062, 0.05243302
  %v6064 = vmul.f32 %v6057, %v6063
  %v6065 = vadd.f32 %v6064, 0.18741608
  %v6066 = vmul.f32 %v6057, %v6065
  %v6067 = vadd.f32 %v6066, 1.1283791
  %v6068 = vmul.f32 %v6048, %v6067
  %v6069 = vmul.f32 %v6057, 3.8918573e-05
  %v6070 = vadd.f32 %v6069, 0.001143296
  %v6071 = vmul.f32 %v6057, %v6070
  %v6072 = vadd.f32 %v6071, 0.014752088
  %v6073 = vmul.f32 %v6057, %v6072
  %v6074 = vadd.f32 %v6073, 0.112945676
  %v6075 = vmul.f32 %v6057, %v6074
  %v6076 = vadd.f32 %v6075, 0.4994258
  %v6077 = vmul.f32 %v6057, %v6076
  %v6078 = vadd.f32 %v6077, 1.0
  %v6079 = vrcp.pop %v6078
  %v6080 = vmul.f32 %v6078, %v6079
  %v6081 = vsub.f32 1.0, %v6080
  %v6082 = vmul.f32 %v6079, %v6081
  %v6083 = vadd.f32 %v6079, %v6082
  %vm6084 = vweird.f32 %v6078
  %vm6085 = vweird.f32 %v6079
  %vm6086 = vmor %vm6084, %vm6085
  %v6087 = vsel %vm6086, %v6079, %v6083
  %v6088 = vand.u32 2147483647, %v6078
  %vm6089 = vcmp.eq.f32.partialorder %v6088, 8.507059e+37
  %v6090 = vand.u32 %v6078, 2147483648
  %v6091 = vor.u32 1.1754944e-38, %v6090
  %v6092 = vsel %vm6089, %v6091, %v6087
  %v6093 = vmul.f32 %v6068, %v6092
  %v6094 = vmin.f32 %v6093, 1.0
  %v6095 = vmax.f32 %v6094, -1.0
  %v6096 = vmul.f32 %v6049, %v6049
  %v6097 = vmin.f32 16.0, %v6096
  %v6098 = vmul.f32 %v6097, 2.1237322e-06
  %v6099 = vadd.f32 %v6098, 0.00028619796
  %v6100 = vmul.f32 %v6097, %v6099
  %v6101 = vadd.f32 %v6100, 0.0036580483
  %v6102 = vmul.f32 %v6097, %v6101
  %v6103 = vadd.f32 %v6102, 0.05243302
  %v6104 = vmul.f32 %v6097, %v6103
  %v6105 = vadd.f32 %v6104, 0.18741608
  %v6106 = vmul.f32 %v6097, %v6105
  %v6107 = vadd.f32 %v6106, 1.1283791
  %v6108 = vmul.f32 %v6049, %v6107
  %v6109 = vmul.f32 %v6097, 3.8918573e-05
  %v6110 = vadd.f32 %v6109, 0.001143296
  %v6111 = vmul.f32 %v6097, %v6110
  %v6112 = vadd.f32 %v6111, 0.014752088
  %v6113 = vmul.f32 %v6097, %v6112
  %v6114 = vadd.f32 %v6113, 0.112945676
  %v6115 = vmul.f32 %v6097, %v6114
  %v6116 = vadd.f32 %v6115, 0.4994258
  %v6117 = vmul.f32 %v6097, %v6116
  %v6118 = vadd.f32 %v6117, 1.0
  %v6119 = vrcp.pop %v6118
  %v6120 = vmul.f32 %v6118, %v6119
  %v6121 = vsub.f32 1.0, %v6120
  %v6122 = vmul.f32 %v6119, %v6121
  %v6123 = vadd.f32 %v6119, %v6122
  %vm6124 = vweird.f32 %v6118
  %vm6125 = vweird.f32 %v6119
  %vm6126 = vmor %vm6124, %vm6125
  %v6127 = vsel %vm6126, %v6119, %v6123
  %v6128 = vand.u32 2147483647, %v6118
  %vm6129 = vcmp.eq.f32.partialorder %v6128, 8.507059e+37
  %v6130 = vand.u32 %v6118, 2147483648
  %v6131 = vor.u32 1.1754944e-38, %v6130
  %v6132 = vsel %vm6129, %v6131, %v6127
  %v6133 = vmul.f32 %v6108, %v6132
  %v6134 = vmin.f32 %v6133, 1.0
  %v6135 = vmax.f32 %v6134, -1.0
  %v6136 = vmul.f32 %v6050, %v6050
  %v6137 = vmin.f32 16.0, %v6136
  %v6138 = vmul.f32 %v6137, 2.1237322e-06
  %v6139 = vadd.f32 %v6138, 0.00028619796
  %v6140 = vmul.f32 %v6137, %v6139
  %v6141 = vadd.f32 %v6140, 0.0036580483
  %v6142 = vmul.f32 %v6137, %v6141
  %v6143 = vadd.f32 %v6142, 0.05243302
  %v6144 = vmul.f32 %v6137, %v6143
  %v6145 = vadd.f32 %v6144, 0.18741608
  %v6146 = vmul.f32 %v6137, %v6145
  %v6147 = vadd.f32 %v6146, 1.1283791
  %v6148 = vmul.f32 %v6050, %v6147
  %v6149 = vmul.f32 %v6137, 3.8918573e-05
  %v6150 = vadd.f32 %v6149, 0.001143296
  %v6151 = vmul.f32 %v6137, %v6150
  %v6152 = vadd.f32 %v6151, 0.014752088
  %v6153 = vmul.f32 %v6137, %v6152
  %v6154 = vadd.f32 %v6153, 0.112945676
  %v6155 = vmul.f32 %v6137, %v6154
  %v6156 = vadd.f32 %v6155, 0.4994258
  %v6157 = vmul.f32 %v6137, %v6156
  %v6158 = vadd.f32 %v6157, 1.0
  %v6159 = vrcp.pop %v6158
  %v6160 = vmul.f32 %v6158, %v6159
  %v6161 = vsub.f32 1.0, %v6160
  %v6162 = vmul.f32 %v6159, %v6161
  %v6163 = vadd.f32 %v6159, %v6162
  %vm6164 = vweird.f32 %v6158
  %vm6165 = vweird.f32 %v6159
  %vm6166 = vmor %vm6164, %vm6165
  %v6167 = vsel %vm6166, %v6159, %v6163
  %v6168 = vand.u32 2147483647, %v6158
  %vm6169 = vcmp.eq.f32.partialorder %v6168, 8.507059e+37
  %v6170 = vand.u32 %v6158, 2147483648
  %v6171 = vor.u32 1.1754944e-38, %v6170
  %v6172 = vsel %vm6169, %v6171, %v6167
  %v6173 = vmul.f32 %v6148, %v6172
  %v6174 = vmin.f32 %v6173, 1.0
  %v6175 = vmax.f32 %v6174, -1.0
  %v6176 = vmul.f32 %v6051, %v6051
  %v6177 = vmin.f32 16.0, %v6176
  %v6178 = vmul.f32 %v6177, 2.1237322e-06
  %v6179 = vadd.f32 %v6178, 0.00028619796
  %v6180 = vmul.f32 %v6177, %v6179
  %v6181 = vadd.f32 %v6180, 0.0036580483
  %v6182 = vmul.f32 %v6177, %v6181
  %v6183 = vadd.f32 %v6182, 0.05243302
  %v6184 = vmul.f32 %v6177, %v6183
  %v6185 = vadd.f32 %v6184, 0.18741608
  %v6186 = vmul.f32 %v6177, %v6185
  %v6187 = vadd.f32 %v6186, 1.1283791
  %v6188 = vmul.f32 %v6051, %v6187
  %v6189 = vmul.f32 %v6177, 3.8918573e-05
  %v6190 = vadd.f32 %v6189, 0.001143296
  %v6191 = vmul.f32 %v6177, %v6190
  %v6192 = vadd.f32 %v6191, 0.014752088
  %v6193 = vmul.f32 %v6177, %v6192
  %v6194 = vadd.f32 %v6193, 0.112945676
  %v6195 = vmul.f32 %v6177, %v6194
  %v6196 = vadd.f32 %v6195, 0.4994258
  %v6197 = vmul.f32 %v6177, %v6196
  %v6198 = vadd.f32 %v6197, 1.0
  %v6199 = vrcp.pop %v6198
  %v6200 = vmul.f32 %v6198, %v6199
  %v6201 = vsub.f32 1.0, %v6200
  %v6202 = vmul.f32 %v6199, %v6201
  %v6203 = vadd.f32 %v6199, %v6202
  %vm6204 = vweird.f32 %v6198
  %vm6205 = vweird.f32 %v6199
  %vm6206 = vmor %vm6204, %vm6205
  %v6207 = vsel %vm6206, %v6199, %v6203
  %v6208 = vand.u32 2147483647, %v6198
  %vm6209 = vcmp.eq.f32.partialorder %v6208, 8.507059e+37
  %v6210 = vand.u32 %v6198, 2147483648
  %v6211 = vor.u32 1.1754944e-38, %v6210
  %v6212 = vsel %vm6209, %v6211, %v6207
  %v6213 = vmul.f32 %v6188, %v6212
  %v6214 = vmin.f32 %v6213, 1.0
  %v6215 = vmax.f32 %v6214, -1.0
  %v6216 = vmul.f32 %v6052, %v6052
  %v6217 = vmin.f32 16.0, %v6216
  %v6218 = vmul.f32 %v6217, 2.1237322e-06
  %v6219 = vadd.f32 %v6218, 0.00028619796
  %v6220 = vmul.f32 %v6217, %v6219
  %v6221 = vadd.f32 %v6220, 0.0036580483
  %v6222 = vmul.f32 %v6217, %v6221
  %v6223 = vadd.f32 %v6222, 0.05243302
  %v6224 = vmul.f32 %v6217, %v6223
  %v6225 = vadd.f32 %v6224, 0.18741608
  %v6226 = vmul.f32 %v6217, %v6225
  %v6227 = vadd.f32 %v6226, 1.1283791
  %v6228 = vmul.f32 %v6052, %v6227
  %v6229 = vmul.f32 %v6217, 3.8918573e-05
  %v6230 = vadd.f32 %v6229, 0.001143296
  %v6231 = vmul.f32 %v6217, %v6230
  %v6232 = vadd.f32 %v6231, 0.014752088
  %v6233 = vmul.f32 %v6217, %v6232
  %v6234 = vadd.f32 %v6233, 0.112945676
  %v6235 = vmul.f32 %v6217, %v6234
  %v6236 = vadd.f32 %v6235, 0.4994258
  %v6237 = vmul.f32 %v6217, %v6236
  %v6238 = vadd.f32 %v6237, 1.0
  %v6239 = vrcp.pop %v6238
  %v6240 = vmul.f32 %v6238, %v6239
  %v6241 = vsub.f32 1.0, %v6240
  %v6242 = vmul.f32 %v6239, %v6241
  %v6243 = vadd.f32 %v6239, %v6242
  %vm6244 = vweird.f32 %v6238
  %vm6245 = vweird.f32 %v6239
  %vm6246 = vmor %vm6244, %vm6245
  %v6247 = vsel %vm6246, %v6239, %v6243
  %v6248 = vand.u32 2147483647, %v6238
  %vm6249 = vcmp.eq.f32.partialorder %v6248, 8.507059e+37
  %v6250 = vand.u32 %v6238, 2147483648
  %v6251 = vor.u32 1.1754944e-38, %v6250
  %v6252 = vsel %vm6249, %v6251, %v6247
  %v6253 = vmul.f32 %v6228, %v6252
  %v6254 = vmin.f32 %v6253, 1.0
  %v6255 = vmax.f32 %v6254, -1.0
  %v6256 = vmul.f32 %v6053, %v6053
  %v6257 = vmin.f32 16.0, %v6256
  %v6258 = vmul.f32 %v6257, 2.1237322e-06
  %v6259 = vadd.f32 %v6258, 0.00028619796
  %v6260 = vmul.f32 %v6257, %v6259
  %v6261 = vadd.f32 %v6260, 0.0036580483
  %v6262 = vmul.f32 %v6257, %v6261
  %v6263 = vadd.f32 %v6262, 0.05243302
  %v6264 = vmul.f32 %v6257, %v6263
  %v6265 = vadd.f32 %v6264, 0.18741608
  %v6266 = vmul.f32 %v6257, %v6265
  %v6267 = vadd.f32 %v6266, 1.1283791
  %v6268 = vmul.f32 %v6053, %v6267
  %v6269 = vmul.f32 %v6257, 3.8918573e-05
  %v6270 = vadd.f32 %v6269, 0.001143296
  %v6271 = vmul.f32 %v6257, %v6270
  %v6272 = vadd.f32 %v6271, 0.014752088
  %v6273 = vmul.f32 %v6257, %v6272
  %v6274 = vadd.f32 %v6273, 0.112945676
  %v6275 = vmul.f32 %v6257, %v6274
  %v6276 = vadd.f32 %v6275, 0.4994258
  %v6277 = vmul.f32 %v6257, %v6276
  %v6278 = vadd.f32 %v6277, 1.0
  %v6279 = vrcp.pop %v6278
  %v6280 = vmul.f32 %v6278, %v6279
  %v6281 = vsub.f32 1.0, %v6280
  %v6282 = vmul.f32 %v6279, %v6281
  %v6283 = vadd.f32 %v6279, %v6282
  %vm6284 = vweird.f32 %v6278
  %vm6285 = vweird.f32 %v6279
  %vm6286 = vmor %vm6284, %vm6285
  %v6287 = vsel %vm6286, %v6279, %v6283
  %v6288 = vand.u32 2147483647, %v6278
  %vm6289 = vcmp.eq.f32.partialorder %v6288, 8.507059e+37
  %v6290 = vand.u32 %v6278, 2147483648
  %v6291 = vor.u32 1.1754944e-38, %v6290
  %v6292 = vsel %vm6289, %v6291, %v6287
  %v6293 = vmul.f32 %v6268, %v6292
  %v6294 = vmin.f32 %v6293, 1.0
  %v6295 = vmax.f32 %v6294, -1.0
  %v6296 = vmul.f32 %v6054, %v6054
  %v6297 = vmin.f32 16.0, %v6296
  %v6298 = vmul.f32 %v6297, 2.1237322e-06
  %v6299 = vadd.f32 %v6298, 0.00028619796
  %v6300 = vmul.f32 %v6297, %v6299
  %v6301 = vadd.f32 %v6300, 0.0036580483
  %v6302 = vmul.f32 %v6297, %v6301
  %v6303 = vadd.f32 %v6302, 0.05243302
  %v6304 = vmul.f32 %v6297, %v6303
  %v6305 = vadd.f32 %v6304, 0.18741608
  %v6306 = vmul.f32 %v6297, %v6305
  %v6307 = vadd.f32 %v6306, 1.1283791
  %v6308 = vmul.f32 %v6054, %v6307
  %v6309 = vmul.f32 %v6297, 3.8918573e-05
  %v6310 = vadd.f32 %v6309, 0.001143296
  %v6311 = vmul.f32 %v6297, %v6310
  %v6312 = vadd.f32 %v6311, 0.014752088
  %v6313 = vmul.f32 %v6297, %v6312
  %v6314 = vadd.f32 %v6313, 0.112945676
  %v6315 = vmul.f32 %v6297, %v6314
  %v6316 = vadd.f32 %v6315, 0.4994258
  %v6317 = vmul.f32 %v6297, %v6316
  %v6318 = vadd.f32 %v6317, 1.0
  %v6319 = vrcp.pop %v6318
  %v6320 = vmul.f32 %v6318, %v6319
  %v6321 = vsub.f32 1.0, %v6320
  %v6322 = vmul.f32 %v6319, %v6321
  %v6323 = vadd.f32 %v6319, %v6322
  %vm6324 = vweird.f32 %v6318
  %vm6325 = vweird.f32 %v6319
  %vm6326 = vmor %vm6324, %vm6325
  %v6327 = vsel %vm6326, %v6319, %v6323
  %v6328 = vand.u32 2147483647, %v6318
  %vm6329 = vcmp.eq.f32.partialorder %v6328, 8.507059e+37
  %v6330 = vand.u32 %v6318, 2147483648
  %v6331 = vor.u32 1.1754944e-38, %v6330
  %v6332 = vsel %vm6329, %v6331, %v6327
  %v6333 = vmul.f32 %v6308, %v6332
  %v6334 = vmin.f32 %v6333, 1.0
  %v6335 = vmax.f32 %v6334, -1.0
  %v6336 = vmul.f32 %v6055, %v6055
  %v6337 = vmin.f32 16.0, %v6336
  %v6338 = vmul.f32 %v6337, 2.1237322e-06
  %v6339 = vadd.f32 %v6338, 0.00028619796
  %v6340 = vmul.f32 %v6337, %v6339
  %v6341 = vadd.f32 %v6340, 0.0036580483
  %v6342 = vmul.f32 %v6337, %v6341
  %v6343 = vadd.f32 %v6342, 0.05243302
  %v6344 = vmul.f32 %v6337, %v6343
  %v6345 = vadd.f32 %v6344, 0.18741608
  %v6346 = vmul.f32 %v6337, %v6345
  %v6347 = vadd.f32 %v6346, 1.1283791
  %v6348 = vmul.f32 %v6055, %v6347
  %v6349 = vmul.f32 %v6337, 3.8918573e-05
  %v6350 = vadd.f32 %v6349, 0.001143296
  %v6351 = vmul.f32 %v6337, %v6350
  %v6352 = vadd.f32 %v6351, 0.014752088
  %v6353 = vmul.f32 %v6337, %v6352
  %v6354 = vadd.f32 %v6353, 0.112945676
  %v6355 = vmul.f32 %v6337, %v6354
  %v6356 = vadd.f32 %v6355, 0.4994258
  %v6357 = vmul.f32 %v6337, %v6356
  %v6358 = vadd.f32 %v6357, 1.0
  %v6359 = vrcp.pop %v6358
  %v6360 = vmul.f32 %v6358, %v6359
  %v6361 = vsub.f32 1.0, %v6360
  %v6362 = vmul.f32 %v6359, %v6361
  %v6363 = vadd.f32 %v6359, %v6362
  %vm6364 = vweird.f32 %v6358
  %vm6365 = vweird.f32 %v6359
  %vm6366 = vmor %vm6364, %vm6365
  %v6367 = vsel %vm6366, %v6359, %v6363
  %v6368 = vand.u32 2147483647, %v6358
  %vm6369 = vcmp.eq.f32.partialorder %v6368, 8.507059e+37
  %v6370 = vand.u32 %v6358, 2147483648
  %v6371 = vor.u32 1.1754944e-38, %v6370
  %v6372 = vsel %vm6369, %v6371, %v6367
  %v6373 = vmul.f32 %v6348, %v6372
  %v6374 = vmin.f32 %v6373, 1.0
  %v6375 = vmax.f32 %v6374, -1.0
  %v6376 = vadd.f32 %v6095, 1.0
  %v6377 = vadd.f32 %v6135, 1.0
  %v6378 = vadd.f32 %v6175, 1.0
  %v6379 = vadd.f32 %v6215, 1.0
  %v6380 = vadd.f32 %v6255, 1.0
  %v6381 = vadd.f32 %v6295, 1.0
  %v6382 = vadd.f32 %v6335, 1.0
  %v6383 = vadd.f32 %v6375, 1.0
  %v6384 = vmul.f32 %v6040, %v6376
  %v6385 = vmul.f32 %v6041, %v6377
  %v6386 = vmul.f32 %v6042, %v6378
  %v6387 = vmul.f32 %v6043, %v6379
  %v6388 = vmul.f32 %v6044, %v6380
  %v6389 = vmul.f32 %v6045, %v6381
  %v6390 = vmul.f32 %v6046, %v6382
  %v6391 = vmul.f32 %v6047, %v6383
  %v6392 = vld [vmem:[%s7] sm:$0xff]
  %v6393 = vld [vmem:[%s7 + $0x8] sm:$0xff]
  %v6394 = vld [vmem:[%s7 + $0x10] sm:$0xff]
  %v6395 = vld [vmem:[%s7 + $0x18] sm:$0xff]
  %v6396 = vld [vmem:[%s8] sm:$0xff]
  %v6397 = vld [vmem:[%s8 + $0x8] sm:$0xff]
  %v6398 = vld [vmem:[%s8 + $0x10] sm:$0xff]
  %v6399 = vld [vmem:[%s8 + $0x18] sm:$0xff]
  %6401 = vset.pattern.permute.xlu0 0
  %6402 = vperm.xlu0 %6401, %v6396
  %v6403 = vpop.permute.xlu0 %6402
  %6406 = vset.pattern.permute.xlu0 0
  %6407 = vperm.xlu0 %6406, %v6397
  %v6408 = vpop.permute.xlu0 %6407
  %6411 = vset.pattern.permute.xlu0 0
  %6412 = vperm.xlu0 %6411, %v6398
  %v6413 = vpop.permute.xlu0 %6412
  %6416 = vset.pattern.permute.xlu0 0
  %6417 = vperm.xlu0 %6416, %v6399
  %v6418 = vpop.permute.xlu0 %6417
  %v6421 = vsel %vm496, %v6392, 0
  %v6424 = vsel %vm496, %v6393, 0
  %v6427 = vsel %vm496, %v6394, 0
  %v6430 = vsel %vm496, %v6395, 0
  %6432 = vmatpush.msra.mxu0 0.0
  %6433 = vmatpush.msra.mxu0 0.0
  %6434 = vmatpush.msra.mxu0 0.0
  %6435 = vmatpush.msra.mxu0 0.0
  %6436 = vmatpush.msra.mxu0 0.0
  %6437 = vmatpush.msra.mxu0 0.0
  %6438 = vmatpush.msra.mxu0 0.0
  %6439 = vmatpush.msra.mxu0 0.0
  %6440 = vmatpush.msra.mxu0 %v6391
  %6441 = vmatpush.msra.mxu0 %v6390
  %6442 = vmatpush.msra.mxu0 %v6389
  %6443 = vmatpush.msra.mxu0 %v6388
  %6444 = vmatpush.msra.mxu0 %v6387
  %6445 = vmatpush.msra.mxu0 %v6386
  %6446 = vmatpush.msra.mxu0 %v6385
  %6447 = vmatpush.msra.mxu0 %v6384
  %6448 = vmatmul.f32.gmra.mxu0 %v6421
  %v6449 = vpop.f32.mrf.mxu0
  %v6450 = vadd.f32 %v6403, %v6449
  %6451 = vmatmul.f32.gmra.mxu0 %v6424
  %v6452 = vpop.f32.mrf.mxu0
  %v6453 = vadd.f32 %v6408, %v6452
  %6454 = vmatmul.f32.gmra.mxu0 %v6427
  %v6455 = vpop.f32.mrf.mxu0
  %v6456 = vadd.f32 %v6413, %v6455
  %6457 = vmatmul.f32.gmra.mxu0 %v6430
  %v6458 = vpop.f32.mrf.mxu0
  %v6459 = vadd.f32 %v6418, %v6458
  %6460 = vdwg.mxu0
  %v6461 = vmul.f32 %v6450, 0.5
  %v6462 = vmul.f32 %v6453, 0.5
  %v6463 = vmul.f32 %v6456, 0.5
  %v6464 = vmul.f32 %v6459, 0.5
  %v6465 = vmul.f32 %v6450, 0.70710677
  %v6466 = vmul.f32 %v6453, 0.70710677
  %v6467 = vmul.f32 %v6456, 0.70710677
  %v6468 = vmul.f32 %v6459, 0.70710677
  %v6469 = vmul.f32 %v6465, %v6465
  %v6470 = vmin.f32 16.0, %v6469
  %v6471 = vmul.f32 %v6470, 2.1237322e-06
  %v6472 = vadd.f32 %v6471, 0.00028619796
  %v6473 = vmul.f32 %v6470, %v6472
  %v6474 = vadd.f32 %v6473, 0.0036580483
  %v6475 = vmul.f32 %v6470, %v6474
  %v6476 = vadd.f32 %v6475, 0.05243302
  %v6477 = vmul.f32 %v6470, %v6476
  %v6478 = vadd.f32 %v6477, 0.18741608
  %v6479 = vmul.f32 %v6470, %v6478
  %v6480 = vadd.f32 %v6479, 1.1283791
  %v6481 = vmul.f32 %v6465, %v6480
  %v6482 = vmul.f32 %v6470, 3.8918573e-05
  %v6483 = vadd.f32 %v6482, 0.001143296
  %v6484 = vmul.f32 %v6470, %v6483
  %v6485 = vadd.f32 %v6484, 0.014752088
  %v6486 = vmul.f32 %v6470, %v6485
  %v6487 = vadd.f32 %v6486, 0.112945676
  %v6488 = vmul.f32 %v6470, %v6487
  %v6489 = vadd.f32 %v6488, 0.4994258
  %v6490 = vmul.f32 %v6470, %v6489
  %v6491 = vadd.f32 %v6490, 1.0
  %v6492 = vrcp.pop %v6491
  %v6493 = vmul.f32 %v6491, %v6492
  %v6494 = vsub.f32 1.0, %v6493
  %v6495 = vmul.f32 %v6492, %v6494
  %v6496 = vadd.f32 %v6492, %v6495
  %vm6497 = vweird.f32 %v6491
  %vm6498 = vweird.f32 %v6492
  %vm6499 = vmor %vm6497, %vm6498
  %v6500 = vsel %vm6499, %v6492, %v6496
  %v6501 = vand.u32 2147483647, %v6491
  %vm6502 = vcmp.eq.f32.partialorder %v6501, 8.507059e+37
  %v6503 = vand.u32 %v6491, 2147483648
  %v6504 = vor.u32 1.1754944e-38, %v6503
  %v6505 = vsel %vm6502, %v6504, %v6500
  %v6506 = vmul.f32 %v6481, %v6505
  %v6507 = vmin.f32 %v6506, 1.0
  %v6508 = vmax.f32 %v6507, -1.0
  %v6509 = vmul.f32 %v6466, %v6466
  %v6510 = vmin.f32 16.0, %v6509
  %v6511 = vmul.f32 %v6510, 2.1237322e-06
  %v6512 = vadd.f32 %v6511, 0.00028619796
  %v6513 = vmul.f32 %v6510, %v6512
  %v6514 = vadd.f32 %v6513, 0.0036580483
  %v6515 = vmul.f32 %v6510, %v6514
  %v6516 = vadd.f32 %v6515, 0.05243302
  %v6517 = vmul.f32 %v6510, %v6516
  %v6518 = vadd.f32 %v6517, 0.18741608
  %v6519 = vmul.f32 %v6510, %v6518
  %v6520 = vadd.f32 %v6519, 1.1283791
  %v6521 = vmul.f32 %v6466, %v6520
  %v6522 = vmul.f32 %v6510, 3.8918573e-05
  %v6523 = vadd.f32 %v6522, 0.001143296
  %v6524 = vmul.f32 %v6510, %v6523
  %v6525 = vadd.f32 %v6524, 0.014752088
  %v6526 = vmul.f32 %v6510, %v6525
  %v6527 = vadd.f32 %v6526, 0.112945676
  %v6528 = vmul.f32 %v6510, %v6527
  %v6529 = vadd.f32 %v6528, 0.4994258
  %v6530 = vmul.f32 %v6510, %v6529
  %v6531 = vadd.f32 %v6530, 1.0
  %v6532 = vrcp.pop %v6531
  %v6533 = vmul.f32 %v6531, %v6532
  %v6534 = vsub.f32 1.0, %v6533
  %v6535 = vmul.f32 %v6532, %v6534
  %v6536 = vadd.f32 %v6532, %v6535
  %vm6537 = vweird.f32 %v6531
  %vm6538 = vweird.f32 %v6532
  %vm6539 = vmor %vm6537, %vm6538
  %v6540 = vsel %vm6539, %v6532, %v6536
  %v6541 = vand.u32 2147483647, %v6531
  %vm6542 = vcmp.eq.f32.partialorder %v6541, 8.507059e+37
  %v6543 = vand.u32 %v6531, 2147483648
  %v6544 = vor.u32 1.1754944e-38, %v6543
  %v6545 = vsel %vm6542, %v6544, %v6540
  %v6546 = vmul.f32 %v6521, %v6545
  %v6547 = vmin.f32 %v6546, 1.0
  %v6548 = vmax.f32 %v6547, -1.0
  %v6549 = vmul.f32 %v6467, %v6467
  %v6550 = vmin.f32 16.0, %v6549
  %v6551 = vmul.f32 %v6550, 2.1237322e-06
  %v6552 = vadd.f32 %v6551, 0.00028619796
  %v6553 = vmul.f32 %v6550, %v6552
  %v6554 = vadd.f32 %v6553, 0.0036580483
  %v6555 = vmul.f32 %v6550, %v6554
  %v6556 = vadd.f32 %v6555, 0.05243302
  %v6557 = vmul.f32 %v6550, %v6556
  %v6558 = vadd.f32 %v6557, 0.18741608
  %v6559 = vmul.f32 %v6550, %v6558
  %v6560 = vadd.f32 %v6559, 1.1283791
  %v6561 = vmul.f32 %v6467, %v6560
  %v6562 = vmul.f32 %v6550, 3.8918573e-05
  %v6563 = vadd.f32 %v6562, 0.001143296
  %v6564 = vmul.f32 %v6550, %v6563
  %v6565 = vadd.f32 %v6564, 0.014752088
  %v6566 = vmul.f32 %v6550, %v6565
  %v6567 = vadd.f32 %v6566, 0.112945676
  %v6568 = vmul.f32 %v6550, %v6567
  %v6569 = vadd.f32 %v6568, 0.4994258
  %v6570 = vmul.f32 %v6550, %v6569
  %v6571 = vadd.f32 %v6570, 1.0
  %v6572 = vrcp.pop %v6571
  %v6573 = vmul.f32 %v6571, %v6572
  %v6574 = vsub.f32 1.0, %v6573
  %v6575 = vmul.f32 %v6572, %v6574
  %v6576 = vadd.f32 %v6572, %v6575
  %vm6577 = vweird.f32 %v6571
  %vm6578 = vweird.f32 %v6572
  %vm6579 = vmor %vm6577, %vm6578
  %v6580 = vsel %vm6579, %v6572, %v6576
  %v6581 = vand.u32 2147483647, %v6571
  %vm6582 = vcmp.eq.f32.partialorder %v6581, 8.507059e+37
  %v6583 = vand.u32 %v6571, 2147483648
  %v6584 = vor.u32 1.1754944e-38, %v6583
  %v6585 = vsel %vm6582, %v6584, %v6580
  %v6586 = vmul.f32 %v6561, %v6585
  %v6587 = vmin.f32 %v6586, 1.0
  %v6588 = vmax.f32 %v6587, -1.0
  %v6589 = vmul.f32 %v6468, %v6468
  %v6590 = vmin.f32 16.0, %v6589
  %v6591 = vmul.f32 %v6590, 2.1237322e-06
  %v6592 = vadd.f32 %v6591, 0.00028619796
  %v6593 = vmul.f32 %v6590, %v6592
  %v6594 = vadd.f32 %v6593, 0.0036580483
  %v6595 = vmul.f32 %v6590, %v6594
  %v6596 = vadd.f32 %v6595, 0.05243302
  %v6597 = vmul.f32 %v6590, %v6596
  %v6598 = vadd.f32 %v6597, 0.18741608
  %v6599 = vmul.f32 %v6590, %v6598
  %v6600 = vadd.f32 %v6599, 1.1283791
  %v6601 = vmul.f32 %v6468, %v6600
  %v6602 = vmul.f32 %v6590, 3.8918573e-05
  %v6603 = vadd.f32 %v6602, 0.001143296
  %v6604 = vmul.f32 %v6590, %v6603
  %v6605 = vadd.f32 %v6604, 0.014752088
  %v6606 = vmul.f32 %v6590, %v6605
  %v6607 = vadd.f32 %v6606, 0.112945676
  %v6608 = vmul.f32 %v6590, %v6607
  %v6609 = vadd.f32 %v6608, 0.4994258
  %v6610 = vmul.f32 %v6590, %v6609
  %v6611 = vadd.f32 %v6610, 1.0
  %v6612 = vrcp.pop %v6611
  %v6613 = vmul.f32 %v6611, %v6612
  %v6614 = vsub.f32 1.0, %v6613
  %v6615 = vmul.f32 %v6612, %v6614
  %v6616 = vadd.f32 %v6612, %v6615
  %vm6617 = vweird.f32 %v6611
  %vm6618 = vweird.f32 %v6612
  %vm6619 = vmor %vm6617, %vm6618
  %v6620 = vsel %vm6619, %v6612, %v6616
  %v6621 = vand.u32 2147483647, %v6611
  %vm6622 = vcmp.eq.f32.partialorder %v6621, 8.507059e+37
  %v6623 = vand.u32 %v6611, 2147483648
  %v6624 = vor.u32 1.1754944e-38, %v6623
  %v6625 = vsel %vm6622, %v6624, %v6620
  %v6626 = vmul.f32 %v6601, %v6625
  %v6627 = vmin.f32 %v6626, 1.0
  %v6628 = vmax.f32 %v6627, -1.0
  %v6629 = vadd.f32 %v6508, 1.0
  %v6630 = vadd.f32 %v6548, 1.0
  %v6631 = vadd.f32 %v6588, 1.0
  %v6632 = vadd.f32 %v6628, 1.0
  %v6633 = vmul.f32 %v6461, %v6629
  %v6634 = vmul.f32 %v6462, %v6630
  %v6635 = vmul.f32 %v6463, %v6631
  %v6636 = vmul.f32 %v6464, %v6632
  %v6637 = vld [vmem:[%s9] sm:$0xff]
  %v6638 = vld [vmem:[%s9 + $0x8] sm:$0xff]
  %v6639 = vld [vmem:[%s9 + $0x10] sm:$0xff]
  %v6640 = vld [vmem:[%s9 + $0x18] sm:$0xff]
  %6642 = vset.pattern.permute.xlu0 0
  %6643 = vperm.xlu0 %6642, %v6637
  %v6644 = vpop.permute.xlu0 %6643
  %6647 = vset.pattern.permute.xlu0 0
  %6648 = vperm.xlu0 %6647, %v6638
  %v6649 = vpop.permute.xlu0 %6648
  %6652 = vset.pattern.permute.xlu0 0
  %6653 = vperm.xlu0 %6652, %v6639
  %v6654 = vpop.permute.xlu0 %6653
  %6657 = vset.pattern.permute.xlu0 0
  %6658 = vperm.xlu0 %6657, %v6640
  %v6659 = vpop.permute.xlu0 %6658
  %v6661 = vmul.f32 %v6644, %v6633
  %v6662 = vmul.f32 %v6649, %v6634
  %v6663 = vmul.f32 %v6654, %v6635
  %v6664 = vmul.f32 %v6659, %v6636
  %v6665 = vadd.f32 %v6661, %v6662
  %v6666 = vadd.f32 %v6665, %v6663
  %v6667 = vadd.f32 %v6666, %v6664
  %v6668 = vrot.slane %v6667, 4
  %v6669 = vadd.f32 %v6667, %v6668
  %v6670 = vrot.slane %v6669, 2
  %v6671 = vadd.f32 %v6669, %v6670
  %v6672 = vrot.slane %v6671, 1
  %v6673 = vadd.f32 %v6671, %v6672
  %v6674 = vld [vmem:[#allocation2] sm:$0x1]
  %6676 = vset.pattern.permute.xlu0 0
  %6677 = vperm.xlu0 %6676, %v6674
  %v6678 = vpop.permute.xlu0 %6677
  %v6680 = vperm.slane %v6678, 0
  %v6681 = vadd.f32 %v6673, %v6680
  %v6682 = vsub.f32 0.0, %v6681
  %v6683 = vmul.f32 %v6682, 1.442695
  %v6684 = vpow.pop %v6683
  %v6685 = vadd.f32 %v6684, 1.0
  %v6686 = vrcp.pop %v6685
  %v6687 = vmul.f32 %v6685, %v6686
  %v6688 = vsub.f32 1.0, %v6687
  %v6689 = vmul.f32 %v6686, %v6688
  %v6690 = vadd.f32 %v6686, %v6689
  %vm6691 = vweird.f32 %v6685
  %vm6692 = vweird.f32 %v6686
  %vm6693 = vmor %vm6691, %vm6692
  %v6694 = vsel %vm6693, %v6686, %v6690
  %v6695 = vand.u32 2147483647, %v6685
  %vm6696 = vcmp.eq.f32.partialorder %v6695, 8.507059e+37
  %v6697 = vand.u32 %v6685, 2147483648
  %v6698 = vor.u32 1.1754944e-38, %v6697
  %v6699 = vsel %vm6696, %v6698, %v6694
  %v6700 = vmul.f32 1.0, %v6699
  %6701 = vst [vmem:[%s11] sm:$0x1] %v6700
  // Predicated region
  $region46: #{d_mnist_forward.1} parent=0 // pred_check
    _
  $region47: #{d_mnist_forward.1} parent=0 // pred_check_branch
    %6703 = sbr.rel (0) target = $region49
  $region48: #{d_mnist_forward.1} parent=0 // pred_region
    _
  $region49: #{d_mnist_forward.1} parent=0 // pred_fallthru
    _
  // Predicated region
  $region50: #{d_mnist_forward.1} parent=0 // pred_check
    _
  $region51: #{d_mnist_forward.1} parent=0 // pred_check_branch
    %6705 = sbr.rel (0) target = $region53
  $region52: #{d_mnist_forward.1} parent=0 // pred_region
    _
  $region53: #{d_mnist_forward.1} parent=0 // pred_fallthru
    _

</llo_original>
